<compile_context>
chip_gen: v5e
topology: v5e:2x2
jax: 0.10.0
libtpu: 0.0.40
codegen_flags: <defaults>
</compile_context>

<pallas_src>
import functools

import jax
import jax.numpy as jnp
from jax.experimental import pallas as pl
from jax.experimental.pallas import tpu as pltpu


# ----------------------------- fused Pallas kernel -----------------------------

def fused_forward_kernel(
    x_ref, in_w_ref, in_b_ref,
    wqkv_ref, ek_ref, ev_ref, wo_ref, bo_ref,
    g1_ref, b1_ref, fw1_ref, fb1_ref, fw2_ref, fb2_ref, g2_ref, b2_ref,
    cls_w_ref, cls_b_ref,
    out_ref,
    *, num_layers, num_heads, dim_head, embed_dim, n_nodes,
):
    f32 = jnp.float32
    bf16 = jnp.bfloat16
    D = embed_dim

    def mm(a_bf, b_bf, dims=(((1,), (0,)), ((), ()))):
        # Operands are already bf16 (casts hoisted by caller); f32 accumulation.
        return jax.lax.dot_general(a_bf, b_bf, dimension_numbers=dims,
                                   preferred_element_type=f32)

    def layer_norm(s, g, b):
        # PyTorch LayerNorm: biased variance, eps=1e-5, all f32.
        mu = jnp.mean(s, axis=-1, keepdims=True)
        var = jnp.mean(jnp.square(s - mu), axis=-1, keepdims=True)
        return (s - mu) * jax.lax.rsqrt(var + 1e-5) * g + b

    # input_proj (dropout = identity at inference)
    h = mm(x_ref[...].astype(bf16), in_w_ref[...]) + in_b_ref[...]        # (N, D) f32

    # TODO(synk): for deep configs switch to grid=(L,) with an 'arbitrary' layer
    # axis so next-layer weights double-buffer behind compute; at L=2 the
    # unrolled Python loop is the right choice.
    for l in range(num_layers):
        x = h
        x_bf = x.astype(bf16)                                             # cast once/layer

        # Fused QKV: one (N, D) @ (D, 3D) matmul; softmax scale pre-folded into
        # the Q columns host-side.  Slices below are 128-lane aligned.
        qkv = mm(x_bf, wqkv_ref[l])                                       # (N, 3D) f32
        q_bf = qkv[:, :D].astype(bf16)
        k_bf = qkv[:, D:2 * D].astype(bf16)
        v_bf = qkv[:, 2 * D:].astype(bf16)

        # Linformer sequence projection: kp = E_k[:N]^T @ K (contract axis 0;
        # no host-side transpose, no in-kernel .T).
        ek = ek_ref[l][:n_nodes]                                          # (N, kproj) bf16
        ev = ev_ref[l][:n_nodes]
        kp_bf = mm(ek, k_bf, (((0,), (0,)), ((), ()))).astype(bf16)       # (kproj, D)
        vp_bf = mm(ev, v_bf, (((0,), (0,)), ((), ()))).astype(bf16)       # (kproj, D)

        # Per-head attention; heads concatenated, then ONE K=D output projection
        # (instead of 4 shallow K=dim_head matmuls).
        head_outs = []
        for hd in range(num_heads):
            sl = slice(hd * dim_head, (hd + 1) * dim_head)
            dots = mm(q_bf[:, sl], kp_bf[:, sl], (((1,), (1,)), ((), ())))  # (N, kproj) f32
            m = jnp.max(dots, axis=-1, keepdims=True)
            p = jnp.exp(dots - m)                                           # f32
            attn = p * pl.reciprocal(jnp.sum(p, axis=-1, keepdims=True),
                                     approx=True)
            head_outs.append(mm(attn.astype(bf16), vp_bf[:, sl]))           # (N, dh) f32

        o_bf = jnp.concatenate(head_outs, axis=-1).astype(bf16)            # (N, D) bf16
        attn_out = mm(o_bf, wo_ref[l]) + bo_ref[l]                          # (N, D) f32

        h = layer_norm(x + attn_out, g1_ref[l], b1_ref[l])
        h_bf = h.astype(bf16)
        ffn = jnp.maximum(mm(h_bf, fw1_ref[l]) + fb1_ref[l], 0.0)          # (N, 4D) f32
        ffn = mm(ffn.astype(bf16), fw2_ref[l]) + fb2_ref[l]                # (N, D) f32
        h = layer_norm(h + ffn, g2_ref[l], b2_ref[l])

    # classifier: Linear(D, 1) + Sigmoid, emitted into a lane-dense (N, 128)
    # slab (cls_w zero-padded to 128 lanes); host takes column 0.
    out_ref[...] = jax.nn.sigmoid(mm(h.astype(bf16), cls_w_ref[...]) + cls_b_ref[...])


# ----------------------------- parameters -----------------------------

def init_params(key, in_dim, embed_dim, num_layers, seq_len, proj_k):
    """PyTorch-shaped parameters (used directly by the pure-JAX reference)."""
    keys = iter(jax.random.split(key, 32))
    L, D, K = num_layers, embed_dim, proj_k

    def w(shape):   # matmul weights stored bf16 (halves HBM/VMEM traffic)
        return (jax.random.normal(next(keys), shape, jnp.float32) * 0.02
                ).astype(jnp.bfloat16)

    def b(shape):   # biases / LN params stay f32
        return jax.random.normal(next(keys), shape, jnp.float32) * 0.02

    def g(shape):
        return 1.0 + jax.random.normal(next(keys), shape, jnp.float32) * 0.02

    return dict(
        in_w=w((in_dim, D)), in_b=b((1, D)),
        wq=w((L, D, D)), wk=w((L, D, D)), wv=w((L, D, D)),     # no-bias projections
        ek=w((L, seq_len, K)), ev=w((L, seq_len, K)),          # Linformer E matrices
        wo=w((L, D, D)), bo=b((L, 1, D)),
        g1=g((L, 1, D)), b1=b((L, 1, D)),
        fw1=w((L, D, 4 * D)), fb1=b((L, 1, 4 * D)),
        fw2=w((L, 4 * D, D)), fb2=b((L, 1, D)),
        g2=g((L, 1, D)), b2=b((L, 1, D)),
        cls_w=w((D, 1)), cls_b=b((1, 1)),
    )


def prepare_params(params, num_heads):
    """One-time host-side weight prep for the fused kernel:
       - stack wq|wk|wv -> wqkv (L, D, 3D), softmax scale folded into wq cols
       - zero-pad classifier weight/bias to 128 lanes (lane-dense final store)
    """
    D = params["in_w"].shape[1]
    dh = D // num_heads
    scale = jnp.float32(dh ** -0.5)
    wq_scaled = (params["wq"].astype(jnp.float32) * scale).astype(jnp.bfloat16)
    wqkv = jnp.concatenate([wq_scaled, params["wk"], params["wv"]], axis=-1)

    cls_w_pad = jnp.zeros((D, 128), jnp.bfloat16).at[:, :1].set(params["cls_w"])
    cls_b_pad = jnp.zeros((1, 128), jnp.float32).at[:, :1].set(params["cls_b"])

    kp = {k: v for k, v in params.items() if k not in ("wq", "wk", "wv",
                                                       "cls_w", "cls_b")}
    kp["wqkv"] = wqkv
    kp["cls_w_pad"] = cls_w_pad
    kp["cls_b_pad"] = cls_b_pad
    return kp


# ----------------------------- model wrapper -----------------------------

def forward(x, kparams, num_heads):
    """x: (N, in_dim) f32. Returns (sigmoid logits (N,), attn_maps list of (N, N))."""
    N = x.shape[0]
    D = kparams["in_w"].shape[1]
    L = kparams["wqkv"].shape[0]

    kernel = functools.partial(
        fused_forward_kernel,
        num_layers=L, num_heads=num_heads, dim_head=D // num_heads,
        embed_dim=D, n_nodes=N)

    out = pl.pallas_call(
        kernel,
        out_shape=jax.ShapeDtypeStruct((N, 128), jnp.float32),   # lane-dense slab
        compiler_params=pltpu.CompilerParams(vmem_limit_bytes=16 * 1024 * 1024),
    )(x, kparams["in_w"], kparams["in_b"],
      kparams["wqkv"], kparams["ek"], kparams["ev"],
      kparams["wo"], kparams["bo"], kparams["g1"], kparams["b1"],
      kparams["fw1"], kparams["fb1"], kparams["fw2"], kparams["fb2"],
      kparams["g2"], kparams["b2"], kparams["cls_w_pad"], kparams["cls_b_pad"])

    logits = out[:, 0]
    # PyTorch module appends torch.zeros(N, N) per block.
    attn_maps = [jnp.zeros((N, N), jnp.float32) for _ in range(L)]
    return logits, attn_maps


# --------------------------- pure-JAX reference ---------------------------

def ref_forward(x, params, num_heads):
    D = params["in_w"].shape[1]
    dh = D // num_heads
    N = x.shape[0]
    f = lambda a: a.astype(jnp.float32)

    def ln(s, g, b):
        m = jnp.mean(s, -1, keepdims=True)
        v = jnp.mean((s - m) ** 2, -1, keepdims=True)
        return (s - m) / jnp.sqrt(v + 1e-5) * g + b

    h = x @ f(params["in_w"]) + params["in_b"]
    for l in range(params["wq"].shape[0]):
        q = h @ f(params["wq"][l])
        k = h @ f(params["wk"][l])
        v = h @ f(params["wv"][l])
        kp = f(params["ek"][l][:N]).T @ k
        vp = f(params["ev"][l][:N]).T @ v
        outs = []
        for hd in range(num_heads):
            sl = slice(hd * dh, (hd + 1) * dh)
            d = (q[:, sl] @ kp[:, sl].T) * dh ** -0.5
            a = jax.nn.softmax(d, axis=-1)
            outs.append(a @ vp[:, sl])
        attn_out = jnp.concatenate(outs, -1) @ f(params["wo"][l]) + params["bo"][l]
        h = ln(h + attn_out, params["g1"][l], params["b1"][l])
        ffn = jnp.maximum(h @ f(params["fw1"][l]) + params["fb1"][l], 0.0)
        ffn = ffn @ f(params["fw2"][l]) + params["fb2"][l]
        h = ln(h + ffn, params["g2"][l], params["b2"][l])
    return jax.nn.sigmoid(h @ f(params["cls_w"]) + params["cls_b"])[:, 0]


# --------------------------------- main -----------------------------------

if __name__ == "__main__":
    # Small, lane-dense shapes consistent with the module defaults
    # (embed_dim=128, num_heads=4, num_layers=2, proj_k=64).
    in_dim, embed_dim, num_heads, num_layers = 16, 128, 4, 2
    seq_len, proj_k = 128, 64
    N = 96  # number of graph nodes (kv_len = N <= seq_len)

    key = jax.random.PRNGKey(0)
    kx, kp = jax.random.split(key)
    x = jax.random.normal(kx, (N, in_dim), jnp.float32)
    params = init_params(kp, in_dim, embed_dim, num_layers, seq_len, proj_k)
    kparams = prepare_params(params, num_heads)

    logits, attn_maps = forward(x, kparams, num_heads)
    logits = jax.block_until_ready(logits)
    for a in attn_maps:
        jax.block_until_ready(a)

    ref = ref_forward(x, params, num_heads)
    assert logits.shape == (N,)
    assert all(a.shape == (N, N) for a in attn_maps)
    # bf16 MXU operands (+ scale folded into bf16 wq) vs f32 reference ->
    # modest tolerance on sigmoid outputs.
    assert jnp.allclose(logits, ref, atol=2e-2, rtol=2e-2), float(
        jnp.max(jnp.abs(logits - ref)))

    print("KERNEL_OK")
</pallas_src>

<mosaic_0001>
module attributes {stable_mosaic.version = 11 : i64} {
  func.func @fused_forward_kernel(%arg0: memref<96x16xf32, #tpu.memory_space<vmem>>, %arg1: memref<16x128xbf16, #tpu.memory_space<vmem>>, %arg2: memref<1x128xf32, #tpu.memory_space<vmem>>, %arg3: memref<2x128x384xbf16, #tpu.memory_space<vmem>>, %arg4: memref<2x128x64xbf16, #tpu.memory_space<vmem>>, %arg5: memref<2x128x64xbf16, #tpu.memory_space<vmem>>, %arg6: memref<2x128x128xbf16, #tpu.memory_space<vmem>>, %arg7: memref<2x1x128xf32, #tpu.memory_space<vmem>>, %arg8: memref<2x1x128xf32, #tpu.memory_space<vmem>>, %arg9: memref<2x1x128xf32, #tpu.memory_space<vmem>>, %arg10: memref<2x128x512xbf16, #tpu.memory_space<vmem>>, %arg11: memref<2x1x512xf32, #tpu.memory_space<vmem>>, %arg12: memref<2x512x128xbf16, #tpu.memory_space<vmem>>, %arg13: memref<2x1x128xf32, #tpu.memory_space<vmem>>, %arg14: memref<2x1x128xf32, #tpu.memory_space<vmem>>, %arg15: memref<2x1x128xf32, #tpu.memory_space<vmem>>, %arg16: memref<128x128xbf16, #tpu.memory_space<vmem>>, %arg17: memref<1x128xf32, #tpu.memory_space<vmem>>, %arg18: memref<96x128xf32, #tpu.memory_space<vmem>>) attributes {dimension_semantics = [], scalar_prefetch = 0 : i64, scratch_operands = 0 : i64, tpu.core_type = #tpu.core_type<tc>} {
    %c0 = arith.constant 0 : index
    %c0_0 = arith.constant 0 : index
    %0 = vector.load %arg0[%c0, %c0_0] : memref<96x16xf32, #tpu.memory_space<vmem>>, vector<96x16xf32>
    %1 = arith.truncf %0 : vector<96x16xf32> to vector<96x16xbf16>
    %c0_1 = arith.constant 0 : index
    %c0_2 = arith.constant 0 : index
    %2 = vector.load %arg1[%c0_1, %c0_2] : memref<16x128xbf16, #tpu.memory_space<vmem>>, vector<16x128xbf16>
    %cst = arith.constant dense<0.000000e+00> : vector<96x128xf32>
    %3 = tpu.matmul %1, %2, %cst {dimension_numbers = #tpu.dot_dimension_numbers<[1], [0], [0], [1], [0, 0, 1, 1], [], []>} : vector<96x16xbf16>, vector<16x128xbf16>, vector<96x128xf32> -> vector<96x128xf32>
    %c0_3 = arith.constant 0 : index
    %c0_4 = arith.constant 0 : index
    %4 = vector.load %arg2[%c0_3, %c0_4] : memref<1x128xf32, #tpu.memory_space<vmem>>, vector<1x128xf32>
    %5 = vector.broadcast %4 : vector<1x128xf32> to vector<96x128xf32>
    %6 = arith.addf %3, %5 : vector<96x128xf32>
    %7 = arith.truncf %6 : vector<96x128xf32> to vector<96x128xbf16>
    %c0_5 = arith.constant 0 : index
    %c0_6 = arith.constant 0 : index
    %c0_7 = arith.constant 0 : index
    %8 = vector.load %arg3[%c0_5, %c0_6, %c0_7] : memref<2x128x384xbf16, #tpu.memory_space<vmem>>, vector<1x128x384xbf16>
    %9 = vector.shape_cast %8 : vector<1x128x384xbf16> to vector<128x384xbf16>
    %cst_8 = arith.constant dense<0.000000e+00> : vector<96x384xf32>
    %10 = tpu.matmul %7, %9, %cst_8 {dimension_numbers = #tpu.dot_dimension_numbers<[1], [0], [0], [1], [0, 0, 1, 1], [], []>} : vector<96x128xbf16>, vector<128x384xbf16>, vector<96x384xf32> -> vector<96x384xf32>
    %11 = vector.extract_strided_slice %10 {offsets = [0, 0], sizes = [96, 128], strides = [1, 1]} : vector<96x384xf32> to vector<96x128xf32>
    %12 = arith.truncf %11 : vector<96x128xf32> to vector<96x128xbf16>
    %13 = vector.extract_strided_slice %10 {offsets = [0, 128], sizes = [96, 128], strides = [1, 1]} : vector<96x384xf32> to vector<96x128xf32>
    %14 = arith.truncf %13 : vector<96x128xf32> to vector<96x128xbf16>
    %15 = vector.extract_strided_slice %10 {offsets = [0, 256], sizes = [96, 128], strides = [1, 1]} : vector<96x384xf32> to vector<96x128xf32>
    %16 = arith.truncf %15 : vector<96x128xf32> to vector<96x128xbf16>
    %c0_9 = arith.constant 0 : index
    %c0_10 = arith.constant 0 : index
    %c0_11 = arith.constant 0 : index
    %17 = vector.load %arg4[%c0_9, %c0_10, %c0_11] : memref<2x128x64xbf16, #tpu.memory_space<vmem>>, vector<1x128x64xbf16>
    %18 = vector.shape_cast %17 : vector<1x128x64xbf16> to vector<128x64xbf16>
    %19 = vector.extract_strided_slice %18 {offsets = [0, 0], sizes = [96, 64], strides = [1, 1]} : vector<128x64xbf16> to vector<96x64xbf16>
    %c0_12 = arith.constant 0 : index
    %c0_13 = arith.constant 0 : index
    %c0_14 = arith.constant 0 : index
    %20 = vector.load %arg5[%c0_12, %c0_13, %c0_14] : memref<2x128x64xbf16, #tpu.memory_space<vmem>>, vector<1x128x64xbf16>
    %21 = vector.shape_cast %20 : vector<1x128x64xbf16> to vector<128x64xbf16>
    %22 = vector.extract_strided_slice %21 {offsets = [0, 0], sizes = [96, 64], strides = [1, 1]} : vector<128x64xbf16> to vector<96x64xbf16>
    %cst_15 = arith.constant dense<0.000000e+00> : vector<64x128xf32>
    %23 = tpu.matmul %19, %14, %cst_15 {dimension_numbers = #tpu.dot_dimension_numbers<[0], [0], [1], [1], [0, 1, 1, 1], [], []>} : vector<96x64xbf16>, vector<96x128xbf16>, vector<64x128xf32> -> vector<64x128xf32>
    %24 = arith.truncf %23 : vector<64x128xf32> to vector<64x128xbf16>
    %cst_16 = arith.constant dense<0.000000e+00> : vector<64x128xf32>
    %25 = tpu.matmul %22, %16, %cst_16 {dimension_numbers = #tpu.dot_dimension_numbers<[0], [0], [1], [1], [0, 1, 1, 1], [], []>} : vector<96x64xbf16>, vector<96x128xbf16>, vector<64x128xf32> -> vector<64x128xf32>
    %26 = arith.truncf %25 : vector<64x128xf32> to vector<64x128xbf16>
    %27 = vector.extract_strided_slice %12 {offsets = [0, 0], sizes = [96, 32], strides = [1, 1]} : vector<96x128xbf16> to vector<96x32xbf16>
    %28 = vector.extract_strided_slice %24 {offsets = [0, 0], sizes = [64, 32], strides = [1, 1]} : vector<64x128xbf16> to vector<64x32xbf16>
    %cst_17 = arith.constant dense<0.000000e+00> : vector<96x64xf32>
    %29 = tpu.matmul %27, %28, %cst_17 {dimension_numbers = #tpu.dot_dimension_numbers<[1], [1], [0], [0], [0, 0, 1, 0], [], []>} : vector<96x32xbf16>, vector<64x32xbf16>, vector<96x64xf32> -> vector<96x64xf32>
    %cst_18 = arith.constant dense<0xFF800000> : vector<96xf32>
    %30 = vector.multi_reduction <maximumf>, %29, %cst_18 [1] : vector<96x64xf32> to vector<96xf32>
    %31 = vector.shape_cast %30 : vector<96xf32> to vector<96x1xf32>
    %32 = vector.broadcast %31 : vector<96x1xf32> to vector<96x64xf32>
    %33 = arith.subf %29, %32 : vector<96x64xf32>
    %34 = math.exp %33 : vector<96x64xf32>
    %cst_19 = arith.constant dense<0.000000e+00> : vector<96xf32>
    %35 = vector.multi_reduction <add>, %34, %cst_19 [1] : vector<96x64xf32> to vector<96xf32>
    %36 = vector.shape_cast %35 : vector<96xf32> to vector<96x1xf32>
    %37 = tpu.reciprocal %36 {approx = true} : vector<96x1xf32> -> vector<96x1xf32>
    %38 = vector.broadcast %37 : vector<96x1xf32> to vector<96x64xf32>
    %39 = arith.mulf %34, %38 : vector<96x64xf32>
    %40 = arith.truncf %39 : vector<96x64xf32> to vector<96x64xbf16>
    %41 = vector.extract_strided_slice %26 {offsets = [0, 0], sizes = [64, 32], strides = [1, 1]} : vector<64x128xbf16> to vector<64x32xbf16>
    %cst_20 = arith.constant dense<0.000000e+00> : vector<96x32xf32>
    %42 = tpu.matmul %40, %41, %cst_20 {dimension_numbers = #tpu.dot_dimension_numbers<[1], [0], [0], [1], [0, 0, 1, 1], [], []>} : vector<96x64xbf16>, vector<64x32xbf16>, vector<96x32xf32> -> vector<96x32xf32>
    %43 = vector.extract_strided_slice %12 {offsets = [0, 32], sizes = [96, 32], strides = [1, 1]} : vector<96x128xbf16> to vector<96x32xbf16>
    %44 = vector.extract_strided_slice %24 {offsets = [0, 32], sizes = [64, 32], strides = [1, 1]} : vector<64x128xbf16> to vector<64x32xbf16>
    %cst_21 = arith.constant dense<0.000000e+00> : vector<96x64xf32>
    %45 = tpu.matmul %43, %44, %cst_21 {dimension_numbers = #tpu.dot_dimension_numbers<[1], [1], [0], [0], [0, 0, 1, 0], [], []>} : vector<96x32xbf16>, vector<64x32xbf16>, vector<96x64xf32> -> vector<96x64xf32>
    %cst_22 = arith.constant dense<0xFF800000> : vector<96xf32>
    %46 = vector.multi_reduction <maximumf>, %45, %cst_22 [1] : vector<96x64xf32> to vector<96xf32>
    %47 = vector.shape_cast %46 : vector<96xf32> to vector<96x1xf32>
    %48 = vector.broadcast %47 : vector<96x1xf32> to vector<96x64xf32>
    %49 = arith.subf %45, %48 : vector<96x64xf32>
    %50 = math.exp %49 : vector<96x64xf32>
    %cst_23 = arith.constant dense<0.000000e+00> : vector<96xf32>
    %51 = vector.multi_reduction <add>, %50, %cst_23 [1] : vector<96x64xf32> to vector<96xf32>
    %52 = vector.shape_cast %51 : vector<96xf32> to vector<96x1xf32>
    %53 = tpu.reciprocal %52 {approx = true} : vector<96x1xf32> -> vector<96x1xf32>
    %54 = vector.broadcast %53 : vector<96x1xf32> to vector<96x64xf32>
    %55 = arith.mulf %50, %54 : vector<96x64xf32>
    %56 = arith.truncf %55 : vector<96x64xf32> to vector<96x64xbf16>
    %57 = vector.extract_strided_slice %26 {offsets = [0, 32], sizes = [64, 32], strides = [1, 1]} : vector<64x128xbf16> to vector<64x32xbf16>
    %cst_24 = arith.constant dense<0.000000e+00> : vector<96x32xf32>
    %58 = tpu.matmul %56, %57, %cst_24 {dimension_numbers = #tpu.dot_dimension_numbers<[1], [0], [0], [1], [0, 0, 1, 1], [], []>} : vector<96x64xbf16>, vector<64x32xbf16>, vector<96x32xf32> -> vector<96x32xf32>
    %59 = vector.extract_strided_slice %12 {offsets = [0, 64], sizes = [96, 32], strides = [1, 1]} : vector<96x128xbf16> to vector<96x32xbf16>
    %60 = vector.extract_strided_slice %24 {offsets = [0, 64], sizes = [64, 32], strides = [1, 1]} : vector<64x128xbf16> to vector<64x32xbf16>
    %cst_25 = arith.constant dense<0.000000e+00> : vector<96x64xf32>
    %61 = tpu.matmul %59, %60, %cst_25 {dimension_numbers = #tpu.dot_dimension_numbers<[1], [1], [0], [0], [0, 0, 1, 0], [], []>} : vector<96x32xbf16>, vector<64x32xbf16>, vector<96x64xf32> -> vector<96x64xf32>
    %cst_26 = arith.constant dense<0xFF800000> : vector<96xf32>
    %62 = vector.multi_reduction <maximumf>, %61, %cst_26 [1] : vector<96x64xf32> to vector<96xf32>
    %63 = vector.shape_cast %62 : vector<96xf32> to vector<96x1xf32>
    %64 = vector.broadcast %63 : vector<96x1xf32> to vector<96x64xf32>
    %65 = arith.subf %61, %64 : vector<96x64xf32>
    %66 = math.exp %65 : vector<96x64xf32>
    %cst_27 = arith.constant dense<0.000000e+00> : vector<96xf32>
    %67 = vector.multi_reduction <add>, %66, %cst_27 [1] : vector<96x64xf32> to vector<96xf32>
    %68 = vector.shape_cast %67 : vector<96xf32> to vector<96x1xf32>
    %69 = tpu.reciprocal %68 {approx = true} : vector<96x1xf32> -> vector<96x1xf32>
    %70 = vector.broadcast %69 : vector<96x1xf32> to vector<96x64xf32>
    %71 = arith.mulf %66, %70 : vector<96x64xf32>
    %72 = arith.truncf %71 : vector<96x64xf32> to vector<96x64xbf16>
    %73 = vector.extract_strided_slice %26 {offsets = [0, 64], sizes = [64, 32], strides = [1, 1]} : vector<64x128xbf16> to vector<64x32xbf16>
    %cst_28 = arith.constant dense<0.000000e+00> : vector<96x32xf32>
    %74 = tpu.matmul %72, %73, %cst_28 {dimension_numbers = #tpu.dot_dimension_numbers<[1], [0], [0], [1], [0, 0, 1, 1], [], []>} : vector<96x64xbf16>, vector<64x32xbf16>, vector<96x32xf32> -> vector<96x32xf32>
    %75 = vector.extract_strided_slice %12 {offsets = [0, 96], sizes = [96, 32], strides = [1, 1]} : vector<96x128xbf16> to vector<96x32xbf16>
    %76 = vector.extract_strided_slice %24 {offsets = [0, 96], sizes = [64, 32], strides = [1, 1]} : vector<64x128xbf16> to vector<64x32xbf16>
    %cst_29 = arith.constant dense<0.000000e+00> : vector<96x64xf32>
    %77 = tpu.matmul %75, %76, %cst_29 {dimension_numbers = #tpu.dot_dimension_numbers<[1], [1], [0], [0], [0, 0, 1, 0], [], []>} : vector<96x32xbf16>, vector<64x32xbf16>, vector<96x64xf32> -> vector<96x64xf32>
    %cst_30 = arith.constant dense<0xFF800000> : vector<96xf32>
    %78 = vector.multi_reduction <maximumf>, %77, %cst_30 [1] : vector<96x64xf32> to vector<96xf32>
    %79 = vector.shape_cast %78 : vector<96xf32> to vector<96x1xf32>
    %80 = vector.broadcast %79 : vector<96x1xf32> to vector<96x64xf32>
    %81 = arith.subf %77, %80 : vector<96x64xf32>
    %82 = math.exp %81 : vector<96x64xf32>
    %cst_31 = arith.constant dense<0.000000e+00> : vector<96xf32>
    %83 = vector.multi_reduction <add>, %82, %cst_31 [1] : vector<96x64xf32> to vector<96xf32>
    %84 = vector.shape_cast %83 : vector<96xf32> to vector<96x1xf32>
    %85 = tpu.reciprocal %84 {approx = true} : vector<96x1xf32> -> vector<96x1xf32>
    %86 = vector.broadcast %85 : vector<96x1xf32> to vector<96x64xf32>
    %87 = arith.mulf %82, %86 : vector<96x64xf32>
    %88 = arith.truncf %87 : vector<96x64xf32> to vector<96x64xbf16>
    %89 = vector.extract_strided_slice %26 {offsets = [0, 96], sizes = [64, 32], strides = [1, 1]} : vector<64x128xbf16> to vector<64x32xbf16>
    %cst_32 = arith.constant dense<0.000000e+00> : vector<96x32xf32>
    %90 = tpu.matmul %88, %89, %cst_32 {dimension_numbers = #tpu.dot_dimension_numbers<[1], [0], [0], [1], [0, 0, 1, 1], [], []>} : vector<96x64xbf16>, vector<64x32xbf16>, vector<96x32xf32> -> vector<96x32xf32>
    %91 = tpu.concatenate %42, %58, %74, %90 in 1 : vector<96x32xf32>, vector<96x32xf32>, vector<96x32xf32>, vector<96x32xf32> -> vector<96x128xf32>
    %92 = arith.truncf %91 : vector<96x128xf32> to vector<96x128xbf16>
    %c0_33 = arith.constant 0 : index
    %c0_34 = arith.constant 0 : index
    %c0_35 = arith.constant 0 : index
    %93 = vector.load %arg6[%c0_33, %c0_34, %c0_35] : memref<2x128x128xbf16, #tpu.memory_space<vmem>>, vector<1x128x128xbf16>
    %94 = vector.shape_cast %93 : vector<1x128x128xbf16> to vector<128x128xbf16>
    %cst_36 = arith.constant dense<0.000000e+00> : vector<96x128xf32>
    %95 = tpu.matmul %92, %94, %cst_36 {dimension_numbers = #tpu.dot_dimension_numbers<[1], [0], [0], [1], [0, 0, 1, 1], [], []>} : vector<96x128xbf16>, vector<128x128xbf16>, vector<96x128xf32> -> vector<96x128xf32>
    %c0_37 = arith.constant 0 : index
    %c0_38 = arith.constant 0 : index
    %c0_39 = arith.constant 0 : index
    %96 = vector.load %arg7[%c0_37, %c0_38, %c0_39] : memref<2x1x128xf32, #tpu.memory_space<vmem>>, vector<1x1x128xf32>
    %97 = vector.shape_cast %96 : vector<1x1x128xf32> to vector<1x128xf32>
    %98 = vector.broadcast %97 : vector<1x128xf32> to vector<96x128xf32>
    %99 = arith.addf %95, %98 : vector<96x128xf32>
    %100 = arith.addf %6, %99 : vector<96x128xf32>
    %c0_40 = arith.constant 0 : index
    %c0_41 = arith.constant 0 : index
    %c0_42 = arith.constant 0 : index
    %101 = vector.load %arg8[%c0_40, %c0_41, %c0_42] : memref<2x1x128xf32, #tpu.memory_space<vmem>>, vector<1x1x128xf32>
    %102 = vector.shape_cast %101 : vector<1x1x128xf32> to vector<1x128xf32>
    %c0_43 = arith.constant 0 : index
    %c0_44 = arith.constant 0 : index
    %c0_45 = arith.constant 0 : index
    %103 = vector.load %arg9[%c0_43, %c0_44, %c0_45] : memref<2x1x128xf32, #tpu.memory_space<vmem>>, vector<1x1x128xf32>
    %104 = vector.shape_cast %103 : vector<1x1x128xf32> to vector<1x128xf32>
    %cst_46 = arith.constant dense<0.000000e+00> : vector<96xf32>
    %105 = vector.multi_reduction <add>, %100, %cst_46 [1] : vector<96x128xf32> to vector<96xf32>
    %106 = vector.shape_cast %105 : vector<96xf32> to vector<96x1xf32>
    %cst_47 = arith.constant 1.280000e+02 : f32
    %107 = vector.broadcast %cst_47 : f32 to vector<96x1xf32>
    %108 = arith.divf %106, %107 : vector<96x1xf32>
    %109 = vector.broadcast %108 : vector<96x1xf32> to vector<96x128xf32>
    %110 = arith.subf %100, %109 : vector<96x128xf32>
    %111 = arith.mulf %110, %110 : vector<96x128xf32>
    %cst_48 = arith.constant dense<0.000000e+00> : vector<96xf32>
    %112 = vector.multi_reduction <add>, %111, %cst_48 [1] : vector<96x128xf32> to vector<96xf32>
    %113 = vector.shape_cast %112 : vector<96xf32> to vector<96x1xf32>
    %cst_49 = arith.constant 1.280000e+02 : f32
    %114 = vector.broadcast %cst_49 : f32 to vector<96x1xf32>
    %115 = arith.divf %113, %114 : vector<96x1xf32>
    %116 = vector.broadcast %108 : vector<96x1xf32> to vector<96x128xf32>
    %117 = arith.subf %100, %116 : vector<96x128xf32>
    %cst_50 = arith.constant 9.99999974E-6 : f32
    %118 = vector.broadcast %cst_50 : f32 to vector<96x1xf32>
    %119 = arith.addf %115, %118 : vector<96x1xf32>
    %120 = math.rsqrt %119 : vector<96x1xf32>
    %121 = vector.broadcast %120 : vector<96x1xf32> to vector<96x128xf32>
    %122 = arith.mulf %117, %121 : vector<96x128xf32>
    %123 = vector.broadcast %102 : vector<1x128xf32> to vector<96x128xf32>
    %124 = arith.mulf %122, %123 : vector<96x128xf32>
    %125 = vector.broadcast %104 : vector<1x128xf32> to vector<96x128xf32>
    %126 = arith.addf %124, %125 : vector<96x128xf32>
    %127 = arith.truncf %126 : vector<96x128xf32> to vector<96x128xbf16>
    %c0_51 = arith.constant 0 : index
    %c0_52 = arith.constant 0 : index
    %c0_53 = arith.constant 0 : index
    %128 = vector.load %arg10[%c0_51, %c0_52, %c0_53] : memref<2x128x512xbf16, #tpu.memory_space<vmem>>, vector<1x128x512xbf16>
    %129 = vector.shape_cast %128 : vector<1x128x512xbf16> to vector<128x512xbf16>
    %cst_54 = arith.constant dense<0.000000e+00> : vector<96x512xf32>
    %130 = tpu.matmul %127, %129, %cst_54 {dimension_numbers = #tpu.dot_dimension_numbers<[1], [0], [0], [1], [0, 0, 1, 1], [], []>} : vector<96x128xbf16>, vector<128x512xbf16>, vector<96x512xf32> -> vector<96x512xf32>
    %c0_55 = arith.constant 0 : index
    %c0_56 = arith.constant 0 : index
    %c0_57 = arith.constant 0 : index
    %131 = vector.load %arg11[%c0_55, %c0_56, %c0_57] : memref<2x1x512xf32, #tpu.memory_space<vmem>>, vector<1x1x512xf32>
    %132 = vector.shape_cast %131 : vector<1x1x512xf32> to vector<1x512xf32>
    %133 = vector.broadcast %132 : vector<1x512xf32> to vector<96x512xf32>
    %134 = arith.addf %130, %133 : vector<96x512xf32>
    %cst_58 = arith.constant 0.000000e+00 : f32
    %135 = vector.broadcast %cst_58 : f32 to vector<96x512xf32>
    %136 = arith.maximumf %134, %135 : vector<96x512xf32>
    %137 = arith.truncf %136 : vector<96x512xf32> to vector<96x512xbf16>
    %c0_59 = arith.constant 0 : index
    %c0_60 = arith.constant 0 : index
    %c0_61 = arith.constant 0 : index
    %138 = vector.load %arg12[%c0_59, %c0_60, %c0_61] : memref<2x512x128xbf16, #tpu.memory_space<vmem>>, vector<1x512x128xbf16>
    %139 = vector.shape_cast %138 : vector<1x512x128xbf16> to vector<512x128xbf16>
    %cst_62 = arith.constant dense<0.000000e+00> : vector<96x128xf32>
    %140 = tpu.matmul %137, %139, %cst_62 {dimension_numbers = #tpu.dot_dimension_numbers<[1], [0], [0], [1], [0, 0, 1, 1], [], []>} : vector<96x512xbf16>, vector<512x128xbf16>, vector<96x128xf32> -> vector<96x128xf32>
    %c0_63 = arith.constant 0 : index
    %c0_64 = arith.constant 0 : index
    %c0_65 = arith.constant 0 : index
    %141 = vector.load %arg13[%c0_63, %c0_64, %c0_65] : memref<2x1x128xf32, #tpu.memory_space<vmem>>, vector<1x1x128xf32>
    %142 = vector.shape_cast %141 : vector<1x1x128xf32> to vector<1x128xf32>
    %143 = vector.broadcast %142 : vector<1x128xf32> to vector<96x128xf32>
    %144 = arith.addf %140, %143 : vector<96x128xf32>
    %145 = arith.addf %126, %144 : vector<96x128xf32>
    %c0_66 = arith.constant 0 : index
    %c0_67 = arith.constant 0 : index
    %c0_68 = arith.constant 0 : index
    %146 = vector.load %arg14[%c0_66, %c0_67, %c0_68] : memref<2x1x128xf32, #tpu.memory_space<vmem>>, vector<1x1x128xf32>
    %147 = vector.shape_cast %146 : vector<1x1x128xf32> to vector<1x128xf32>
    %c0_69 = arith.constant 0 : index
    %c0_70 = arith.constant 0 : index
    %c0_71 = arith.constant 0 : index
    %148 = vector.load %arg15[%c0_69, %c0_70, %c0_71] : memref<2x1x128xf32, #tpu.memory_space<vmem>>, vector<1x1x128xf32>
    %149 = vector.shape_cast %148 : vector<1x1x128xf32> to vector<1x128xf32>
    %cst_72 = arith.constant dense<0.000000e+00> : vector<96xf32>
    %150 = vector.multi_reduction <add>, %145, %cst_72 [1] : vector<96x128xf32> to vector<96xf32>
    %151 = vector.shape_cast %150 : vector<96xf32> to vector<96x1xf32>
    %cst_73 = arith.constant 1.280000e+02 : f32
    %152 = vector.broadcast %cst_73 : f32 to vector<96x1xf32>
    %153 = arith.divf %151, %152 : vector<96x1xf32>
    %154 = vector.broadcast %153 : vector<96x1xf32> to vector<96x128xf32>
    %155 = arith.subf %145, %154 : vector<96x128xf32>
    %156 = arith.mulf %155, %155 : vector<96x128xf32>
    %cst_74 = arith.constant dense<0.000000e+00> : vector<96xf32>
    %157 = vector.multi_reduction <add>, %156, %cst_74 [1] : vector<96x128xf32> to vector<96xf32>
    %158 = vector.shape_cast %157 : vector<96xf32> to vector<96x1xf32>
    %cst_75 = arith.constant 1.280000e+02 : f32
    %159 = vector.broadcast %cst_75 : f32 to vector<96x1xf32>
    %160 = arith.divf %158, %159 : vector<96x1xf32>
    %161 = vector.broadcast %153 : vector<96x1xf32> to vector<96x128xf32>
    %162 = arith.subf %145, %161 : vector<96x128xf32>
    %cst_76 = arith.constant 9.99999974E-6 : f32
    %163 = vector.broadcast %cst_76 : f32 to vector<96x1xf32>
    %164 = arith.addf %160, %163 : vector<96x1xf32>
    %165 = math.rsqrt %164 : vector<96x1xf32>
    %166 = vector.broadcast %165 : vector<96x1xf32> to vector<96x128xf32>
    %167 = arith.mulf %162, %166 : vector<96x128xf32>
    %168 = vector.broadcast %147 : vector<1x128xf32> to vector<96x128xf32>
    %169 = arith.mulf %167, %168 : vector<96x128xf32>
    %170 = vector.broadcast %149 : vector<1x128xf32> to vector<96x128xf32>
    %171 = arith.addf %169, %170 : vector<96x128xf32>
    %172 = arith.truncf %171 : vector<96x128xf32> to vector<96x128xbf16>
    %c1 = arith.constant 1 : index
    %c0_77 = arith.constant 0 : index
    %c0_78 = arith.constant 0 : index
    %173 = vector.load %arg3[%c1, %c0_77, %c0_78] : memref<2x128x384xbf16, #tpu.memory_space<vmem>>, vector<1x128x384xbf16>
    %174 = vector.shape_cast %173 : vector<1x128x384xbf16> to vector<128x384xbf16>
    %cst_79 = arith.constant dense<0.000000e+00> : vector<96x384xf32>
    %175 = tpu.matmul %172, %174, %cst_79 {dimension_numbers = #tpu.dot_dimension_numbers<[1], [0], [0], [1], [0, 0, 1, 1], [], []>} : vector<96x128xbf16>, vector<128x384xbf16>, vector<96x384xf32> -> vector<96x384xf32>
    %176 = vector.extract_strided_slice %175 {offsets = [0, 0], sizes = [96, 128], strides = [1, 1]} : vector<96x384xf32> to vector<96x128xf32>
    %177 = arith.truncf %176 : vector<96x128xf32> to vector<96x128xbf16>
    %178 = vector.extract_strided_slice %175 {offsets = [0, 128], sizes = [96, 128], strides = [1, 1]} : vector<96x384xf32> to vector<96x128xf32>
    %179 = arith.truncf %178 : vector<96x128xf32> to vector<96x128xbf16>
    %180 = vector.extract_strided_slice %175 {offsets = [0, 256], sizes = [96, 128], strides = [1, 1]} : vector<96x384xf32> to vector<96x128xf32>
    %181 = arith.truncf %180 : vector<96x128xf32> to vector<96x128xbf16>
    %c1_80 = arith.constant 1 : index
    %c0_81 = arith.constant 0 : index
    %c0_82 = arith.constant 0 : index
    %182 = vector.load %arg4[%c1_80, %c0_81, %c0_82] : memref<2x128x64xbf16, #tpu.memory_space<vmem>>, vector<1x128x64xbf16>
    %183 = vector.shape_cast %182 : vector<1x128x64xbf16> to vector<128x64xbf16>
    %184 = vector.extract_strided_slice %183 {offsets = [0, 0], sizes = [96, 64], strides = [1, 1]} : vector<128x64xbf16> to vector<96x64xbf16>
    %c1_83 = arith.constant 1 : index
    %c0_84 = arith.constant 0 : index
    %c0_85 = arith.constant 0 : index
    %185 = vector.load %arg5[%c1_83, %c0_84, %c0_85] : memref<2x128x64xbf16, #tpu.memory_space<vmem>>, vector<1x128x64xbf16>
    %186 = vector.shape_cast %185 : vector<1x128x64xbf16> to vector<128x64xbf16>
    %187 = vector.extract_strided_slice %186 {offsets = [0, 0], sizes = [96, 64], strides = [1, 1]} : vector<128x64xbf16> to vector<96x64xbf16>
    %cst_86 = arith.constant dense<0.000000e+00> : vector<64x128xf32>
    %188 = tpu.matmul %184, %179, %cst_86 {dimension_numbers = #tpu.dot_dimension_numbers<[0], [0], [1], [1], [0, 1, 1, 1], [], []>} : vector<96x64xbf16>, vector<96x128xbf16>, vector<64x128xf32> -> vector<64x128xf32>
    %189 = arith.truncf %188 : vector<64x128xf32> to vector<64x128xbf16>
    %cst_87 = arith.constant dense<0.000000e+00> : vector<64x128xf32>
    %190 = tpu.matmul %187, %181, %cst_87 {dimension_numbers = #tpu.dot_dimension_numbers<[0], [0], [1], [1], [0, 1, 1, 1], [], []>} : vector<96x64xbf16>, vector<96x128xbf16>, vector<64x128xf32> -> vector<64x128xf32>
    %191 = arith.truncf %190 : vector<64x128xf32> to vector<64x128xbf16>
    %192 = vector.extract_strided_slice %177 {offsets = [0, 0], sizes = [96, 32], strides = [1, 1]} : vector<96x128xbf16> to vector<96x32xbf16>
    %193 = vector.extract_strided_slice %189 {offsets = [0, 0], sizes = [64, 32], strides = [1, 1]} : vector<64x128xbf16> to vector<64x32xbf16>
    %cst_88 = arith.constant dense<0.000000e+00> : vector<96x64xf32>
    %194 = tpu.matmul %192, %193, %cst_88 {dimension_numbers = #tpu.dot_dimension_numbers<[1], [1], [0], [0], [0, 0, 1, 0], [], []>} : vector<96x32xbf16>, vector<64x32xbf16>, vector<96x64xf32> -> vector<96x64xf32>
    %cst_89 = arith.constant dense<0xFF800000> : vector<96xf32>
    %195 = vector.multi_reduction <maximumf>, %194, %cst_89 [1] : vector<96x64xf32> to vector<96xf32>
    %196 = vector.shape_cast %195 : vector<96xf32> to vector<96x1xf32>
    %197 = vector.broadcast %196 : vector<96x1xf32> to vector<96x64xf32>
    %198 = arith.subf %194, %197 : vector<96x64xf32>
    %199 = math.exp %198 : vector<96x64xf32>
    %cst_90 = arith.constant dense<0.000000e+00> : vector<96xf32>
    %200 = vector.multi_reduction <add>, %199, %cst_90 [1] : vector<96x64xf32> to vector<96xf32>
    %201 = vector.shape_cast %200 : vector<96xf32> to vector<96x1xf32>
    %202 = tpu.reciprocal %201 {approx = true} : vector<96x1xf32> -> vector<96x1xf32>
    %203 = vector.broadcast %202 : vector<96x1xf32> to vector<96x64xf32>
    %204 = arith.mulf %199, %203 : vector<96x64xf32>
    %205 = arith.truncf %204 : vector<96x64xf32> to vector<96x64xbf16>
    %206 = vector.extract_strided_slice %191 {offsets = [0, 0], sizes = [64, 32], strides = [1, 1]} : vector<64x128xbf16> to vector<64x32xbf16>
    %cst_91 = arith.constant dense<0.000000e+00> : vector<96x32xf32>
    %207 = tpu.matmul %205, %206, %cst_91 {dimension_numbers = #tpu.dot_dimension_numbers<[1], [0], [0], [1], [0, 0, 1, 1], [], []>} : vector<96x64xbf16>, vector<64x32xbf16>, vector<96x32xf32> -> vector<96x32xf32>
    %208 = vector.extract_strided_slice %177 {offsets = [0, 32], sizes = [96, 32], strides = [1, 1]} : vector<96x128xbf16> to vector<96x32xbf16>
    %209 = vector.extract_strided_slice %189 {offsets = [0, 32], sizes = [64, 32], strides = [1, 1]} : vector<64x128xbf16> to vector<64x32xbf16>
    %cst_92 = arith.constant dense<0.000000e+00> : vector<96x64xf32>
    %210 = tpu.matmul %208, %209, %cst_92 {dimension_numbers = #tpu.dot_dimension_numbers<[1], [1], [0], [0], [0, 0, 1, 0], [], []>} : vector<96x32xbf16>, vector<64x32xbf16>, vector<96x64xf32> -> vector<96x64xf32>
    %cst_93 = arith.constant dense<0xFF800000> : vector<96xf32>
    %211 = vector.multi_reduction <maximumf>, %210, %cst_93 [1] : vector<96x64xf32> to vector<96xf32>
    %212 = vector.shape_cast %211 : vector<96xf32> to vector<96x1xf32>
    %213 = vector.broadcast %212 : vector<96x1xf32> to vector<96x64xf32>
    %214 = arith.subf %210, %213 : vector<96x64xf32>
    %215 = math.exp %214 : vector<96x64xf32>
    %cst_94 = arith.constant dense<0.000000e+00> : vector<96xf32>
    %216 = vector.multi_reduction <add>, %215, %cst_94 [1] : vector<96x64xf32> to vector<96xf32>
    %217 = vector.shape_cast %216 : vector<96xf32> to vector<96x1xf32>
    %218 = tpu.reciprocal %217 {approx = true} : vector<96x1xf32> -> vector<96x1xf32>
    %219 = vector.broadcast %218 : vector<96x1xf32> to vector<96x64xf32>
    %220 = arith.mulf %215, %219 : vector<96x64xf32>
    %221 = arith.truncf %220 : vector<96x64xf32> to vector<96x64xbf16>
    %222 = vector.extract_strided_slice %191 {offsets = [0, 32], sizes = [64, 32], strides = [1, 1]} : vector<64x128xbf16> to vector<64x32xbf16>
    %cst_95 = arith.constant dense<0.000000e+00> : vector<96x32xf32>
    %223 = tpu.matmul %221, %222, %cst_95 {dimension_numbers = #tpu.dot_dimension_numbers<[1], [0], [0], [1], [0, 0, 1, 1], [], []>} : vector<96x64xbf16>, vector<64x32xbf16>, vector<96x32xf32> -> vector<96x32xf32>
    %224 = vector.extract_strided_slice %177 {offsets = [0, 64], sizes = [96, 32], strides = [1, 1]} : vector<96x128xbf16> to vector<96x32xbf16>
    %225 = vector.extract_strided_slice %189 {offsets = [0, 64], sizes = [64, 32], strides = [1, 1]} : vector<64x128xbf16> to vector<64x32xbf16>
    %cst_96 = arith.constant dense<0.000000e+00> : vector<96x64xf32>
    %226 = tpu.matmul %224, %225, %cst_96 {dimension_numbers = #tpu.dot_dimension_numbers<[1], [1], [0], [0], [0, 0, 1, 0], [], []>} : vector<96x32xbf16>, vector<64x32xbf16>, vector<96x64xf32> -> vector<96x64xf32>
    %cst_97 = arith.constant dense<0xFF800000> : vector<96xf32>
    %227 = vector.multi_reduction <maximumf>, %226, %cst_97 [1] : vector<96x64xf32> to vector<96xf32>
    %228 = vector.shape_cast %227 : vector<96xf32> to vector<96x1xf32>
    %229 = vector.broadcast %228 : vector<96x1xf32> to vector<96x64xf32>
    %230 = arith.subf %226, %229 : vector<96x64xf32>
    %231 = math.exp %230 : vector<96x64xf32>
    %cst_98 = arith.constant dense<0.000000e+00> : vector<96xf32>
    %232 = vector.multi_reduction <add>, %231, %cst_98 [1] : vector<96x64xf32> to vector<96xf32>
    %233 = vector.shape_cast %232 : vector<96xf32> to vector<96x1xf32>
    %234 = tpu.reciprocal %233 {approx = true} : vector<96x1xf32> -> vector<96x1xf32>
    %235 = vector.broadcast %234 : vector<96x1xf32> to vector<96x64xf32>
    %236 = arith.mulf %231, %235 : vector<96x64xf32>
    %237 = arith.truncf %236 : vector<96x64xf32> to vector<96x64xbf16>
    %238 = vector.extract_strided_slice %191 {offsets = [0, 64], sizes = [64, 32], strides = [1, 1]} : vector<64x128xbf16> to vector<64x32xbf16>
    %cst_99 = arith.constant dense<0.000000e+00> : vector<96x32xf32>
    %239 = tpu.matmul %237, %238, %cst_99 {dimension_numbers = #tpu.dot_dimension_numbers<[1], [0], [0], [1], [0, 0, 1, 1], [], []>} : vector<96x64xbf16>, vector<64x32xbf16>, vector<96x32xf32> -> vector<96x32xf32>
    %240 = vector.extract_strided_slice %177 {offsets = [0, 96], sizes = [96, 32], strides = [1, 1]} : vector<96x128xbf16> to vector<96x32xbf16>
    %241 = vector.extract_strided_slice %189 {offsets = [0, 96], sizes = [64, 32], strides = [1, 1]} : vector<64x128xbf16> to vector<64x32xbf16>
    %cst_100 = arith.constant dense<0.000000e+00> : vector<96x64xf32>
    %242 = tpu.matmul %240, %241, %cst_100 {dimension_numbers = #tpu.dot_dimension_numbers<[1], [1], [0], [0], [0, 0, 1, 0], [], []>} : vector<96x32xbf16>, vector<64x32xbf16>, vector<96x64xf32> -> vector<96x64xf32>
    %cst_101 = arith.constant dense<0xFF800000> : vector<96xf32>
    %243 = vector.multi_reduction <maximumf>, %242, %cst_101 [1] : vector<96x64xf32> to vector<96xf32>
    %244 = vector.shape_cast %243 : vector<96xf32> to vector<96x1xf32>
    %245 = vector.broadcast %244 : vector<96x1xf32> to vector<96x64xf32>
    %246 = arith.subf %242, %245 : vector<96x64xf32>
    %247 = math.exp %246 : vector<96x64xf32>
    %cst_102 = arith.constant dense<0.000000e+00> : vector<96xf32>
    %248 = vector.multi_reduction <add>, %247, %cst_102 [1] : vector<96x64xf32> to vector<96xf32>
    %249 = vector.shape_cast %248 : vector<96xf32> to vector<96x1xf32>
    %250 = tpu.reciprocal %249 {approx = true} : vector<96x1xf32> -> vector<96x1xf32>
    %251 = vector.broadcast %250 : vector<96x1xf32> to vector<96x64xf32>
    %252 = arith.mulf %247, %251 : vector<96x64xf32>
    %253 = arith.truncf %252 : vector<96x64xf32> to vector<96x64xbf16>
    %254 = vector.extract_strided_slice %191 {offsets = [0, 96], sizes = [64, 32], strides = [1, 1]} : vector<64x128xbf16> to vector<64x32xbf16>
    %cst_103 = arith.constant dense<0.000000e+00> : vector<96x32xf32>
    %255 = tpu.matmul %253, %254, %cst_103 {dimension_numbers = #tpu.dot_dimension_numbers<[1], [0], [0], [1], [0, 0, 1, 1], [], []>} : vector<96x64xbf16>, vector<64x32xbf16>, vector<96x32xf32> -> vector<96x32xf32>
    %256 = tpu.concatenate %207, %223, %239, %255 in 1 : vector<96x32xf32>, vector<96x32xf32>, vector<96x32xf32>, vector<96x32xf32> -> vector<96x128xf32>
    %257 = arith.truncf %256 : vector<96x128xf32> to vector<96x128xbf16>
    %c1_104 = arith.constant 1 : index
    %c0_105 = arith.constant 0 : index
    %c0_106 = arith.constant 0 : index
    %258 = vector.load %arg6[%c1_104, %c0_105, %c0_106] : memref<2x128x128xbf16, #tpu.memory_space<vmem>>, vector<1x128x128xbf16>
    %259 = vector.shape_cast %258 : vector<1x128x128xbf16> to vector<128x128xbf16>
    %cst_107 = arith.constant dense<0.000000e+00> : vector<96x128xf32>
    %260 = tpu.matmul %257, %259, %cst_107 {dimension_numbers = #tpu.dot_dimension_numbers<[1], [0], [0], [1], [0, 0, 1, 1], [], []>} : vector<96x128xbf16>, vector<128x128xbf16>, vector<96x128xf32> -> vector<96x128xf32>
    %c1_108 = arith.constant 1 : index
    %c0_109 = arith.constant 0 : index
    %c0_110 = arith.constant 0 : index
    %261 = vector.load %arg7[%c1_108, %c0_109, %c0_110] : memref<2x1x128xf32, #tpu.memory_space<vmem>>, vector<1x1x128xf32>
    %262 = vector.shape_cast %261 : vector<1x1x128xf32> to vector<1x128xf32>
    %263 = vector.broadcast %262 : vector<1x128xf32> to vector<96x128xf32>
    %264 = arith.addf %260, %263 : vector<96x128xf32>
    %265 = arith.addf %171, %264 : vector<96x128xf32>
    %c1_111 = arith.constant 1 : index
    %c0_112 = arith.constant 0 : index
    %c0_113 = arith.constant 0 : index
    %266 = vector.load %arg8[%c1_111, %c0_112, %c0_113] : memref<2x1x128xf32, #tpu.memory_space<vmem>>, vector<1x1x128xf32>
    %267 = vector.shape_cast %266 : vector<1x1x128xf32> to vector<1x128xf32>
    %c1_114 = arith.constant 1 : index
    %c0_115 = arith.constant 0 : index
    %c0_116 = arith.constant 0 : index
    %268 = vector.load %arg9[%c1_114, %c0_115, %c0_116] : memref<2x1x128xf32, #tpu.memory_space<vmem>>, vector<1x1x128xf32>
    %269 = vector.shape_cast %268 : vector<1x1x128xf32> to vector<1x128xf32>
    %cst_117 = arith.constant dense<0.000000e+00> : vector<96xf32>
    %270 = vector.multi_reduction <add>, %265, %cst_117 [1] : vector<96x128xf32> to vector<96xf32>
    %271 = vector.shape_cast %270 : vector<96xf32> to vector<96x1xf32>
    %cst_118 = arith.constant 1.280000e+02 : f32
    %272 = vector.broadcast %cst_118 : f32 to vector<96x1xf32>
    %273 = arith.divf %271, %272 : vector<96x1xf32>
    %274 = vector.broadcast %273 : vector<96x1xf32> to vector<96x128xf32>
    %275 = arith.subf %265, %274 : vector<96x128xf32>
    %276 = arith.mulf %275, %275 : vector<96x128xf32>
    %cst_119 = arith.constant dense<0.000000e+00> : vector<96xf32>
    %277 = vector.multi_reduction <add>, %276, %cst_119 [1] : vector<96x128xf32> to vector<96xf32>
    %278 = vector.shape_cast %277 : vector<96xf32> to vector<96x1xf32>
    %cst_120 = arith.constant 1.280000e+02 : f32
    %279 = vector.broadcast %cst_120 : f32 to vector<96x1xf32>
    %280 = arith.divf %278, %279 : vector<96x1xf32>
    %281 = vector.broadcast %273 : vector<96x1xf32> to vector<96x128xf32>
    %282 = arith.subf %265, %281 : vector<96x128xf32>
    %cst_121 = arith.constant 9.99999974E-6 : f32
    %283 = vector.broadcast %cst_121 : f32 to vector<96x1xf32>
    %284 = arith.addf %280, %283 : vector<96x1xf32>
    %285 = math.rsqrt %284 : vector<96x1xf32>
    %286 = vector.broadcast %285 : vector<96x1xf32> to vector<96x128xf32>
    %287 = arith.mulf %282, %286 : vector<96x128xf32>
    %288 = vector.broadcast %267 : vector<1x128xf32> to vector<96x128xf32>
    %289 = arith.mulf %287, %288 : vector<96x128xf32>
    %290 = vector.broadcast %269 : vector<1x128xf32> to vector<96x128xf32>
    %291 = arith.addf %289, %290 : vector<96x128xf32>
    %292 = arith.truncf %291 : vector<96x128xf32> to vector<96x128xbf16>
    %c1_122 = arith.constant 1 : index
    %c0_123 = arith.constant 0 : index
    %c0_124 = arith.constant 0 : index
    %293 = vector.load %arg10[%c1_122, %c0_123, %c0_124] : memref<2x128x512xbf16, #tpu.memory_space<vmem>>, vector<1x128x512xbf16>
    %294 = vector.shape_cast %293 : vector<1x128x512xbf16> to vector<128x512xbf16>
    %cst_125 = arith.constant dense<0.000000e+00> : vector<96x512xf32>
    %295 = tpu.matmul %292, %294, %cst_125 {dimension_numbers = #tpu.dot_dimension_numbers<[1], [0], [0], [1], [0, 0, 1, 1], [], []>} : vector<96x128xbf16>, vector<128x512xbf16>, vector<96x512xf32> -> vector<96x512xf32>
    %c1_126 = arith.constant 1 : index
    %c0_127 = arith.constant 0 : index
    %c0_128 = arith.constant 0 : index
    %296 = vector.load %arg11[%c1_126, %c0_127, %c0_128] : memref<2x1x512xf32, #tpu.memory_space<vmem>>, vector<1x1x512xf32>
    %297 = vector.shape_cast %296 : vector<1x1x512xf32> to vector<1x512xf32>
    %298 = vector.broadcast %297 : vector<1x512xf32> to vector<96x512xf32>
    %299 = arith.addf %295, %298 : vector<96x512xf32>
    %cst_129 = arith.constant 0.000000e+00 : f32
    %300 = vector.broadcast %cst_129 : f32 to vector<96x512xf32>
    %301 = arith.maximumf %299, %300 : vector<96x512xf32>
    %302 = arith.truncf %301 : vector<96x512xf32> to vector<96x512xbf16>
    %c1_130 = arith.constant 1 : index
    %c0_131 = arith.constant 0 : index
    %c0_132 = arith.constant 0 : index
    %303 = vector.load %arg12[%c1_130, %c0_131, %c0_132] : memref<2x512x128xbf16, #tpu.memory_space<vmem>>, vector<1x512x128xbf16>
    %304 = vector.shape_cast %303 : vector<1x512x128xbf16> to vector<512x128xbf16>
    %cst_133 = arith.constant dense<0.000000e+00> : vector<96x128xf32>
    %305 = tpu.matmul %302, %304, %cst_133 {dimension_numbers = #tpu.dot_dimension_numbers<[1], [0], [0], [1], [0, 0, 1, 1], [], []>} : vector<96x512xbf16>, vector<512x128xbf16>, vector<96x128xf32> -> vector<96x128xf32>
    %c1_134 = arith.constant 1 : index
    %c0_135 = arith.constant 0 : index
    %c0_136 = arith.constant 0 : index
    %306 = vector.load %arg13[%c1_134, %c0_135, %c0_136] : memref<2x1x128xf32, #tpu.memory_space<vmem>>, vector<1x1x128xf32>
    %307 = vector.shape_cast %306 : vector<1x1x128xf32> to vector<1x128xf32>
    %308 = vector.broadcast %307 : vector<1x128xf32> to vector<96x128xf32>
    %309 = arith.addf %305, %308 : vector<96x128xf32>
    %310 = arith.addf %291, %309 : vector<96x128xf32>
    %c1_137 = arith.constant 1 : index
    %c0_138 = arith.constant 0 : index
    %c0_139 = arith.constant 0 : index
    %311 = vector.load %arg14[%c1_137, %c0_138, %c0_139] : memref<2x1x128xf32, #tpu.memory_space<vmem>>, vector<1x1x128xf32>
    %312 = vector.shape_cast %311 : vector<1x1x128xf32> to vector<1x128xf32>
    %c1_140 = arith.constant 1 : index
    %c0_141 = arith.constant 0 : index
    %c0_142 = arith.constant 0 : index
    %313 = vector.load %arg15[%c1_140, %c0_141, %c0_142] : memref<2x1x128xf32, #tpu.memory_space<vmem>>, vector<1x1x128xf32>
    %314 = vector.shape_cast %313 : vector<1x1x128xf32> to vector<1x128xf32>
    %cst_143 = arith.constant dense<0.000000e+00> : vector<96xf32>
    %315 = vector.multi_reduction <add>, %310, %cst_143 [1] : vector<96x128xf32> to vector<96xf32>
    %316 = vector.shape_cast %315 : vector<96xf32> to vector<96x1xf32>
    %cst_144 = arith.constant 1.280000e+02 : f32
    %317 = vector.broadcast %cst_144 : f32 to vector<96x1xf32>
    %318 = arith.divf %316, %317 : vector<96x1xf32>
    %319 = vector.broadcast %318 : vector<96x1xf32> to vector<96x128xf32>
    %320 = arith.subf %310, %319 : vector<96x128xf32>
    %321 = arith.mulf %320, %320 : vector<96x128xf32>
    %cst_145 = arith.constant dense<0.000000e+00> : vector<96xf32>
    %322 = vector.multi_reduction <add>, %321, %cst_145 [1] : vector<96x128xf32> to vector<96xf32>
    %323 = vector.shape_cast %322 : vector<96xf32> to vector<96x1xf32>
    %cst_146 = arith.constant 1.280000e+02 : f32
    %324 = vector.broadcast %cst_146 : f32 to vector<96x1xf32>
    %325 = arith.divf %323, %324 : vector<96x1xf32>
    %326 = vector.broadcast %318 : vector<96x1xf32> to vector<96x128xf32>
    %327 = arith.subf %310, %326 : vector<96x128xf32>
    %cst_147 = arith.constant 9.99999974E-6 : f32
    %328 = vector.broadcast %cst_147 : f32 to vector<96x1xf32>
    %329 = arith.addf %325, %328 : vector<96x1xf32>
    %330 = math.rsqrt %329 : vector<96x1xf32>
    %331 = vector.broadcast %330 : vector<96x1xf32> to vector<96x128xf32>
    %332 = arith.mulf %327, %331 : vector<96x128xf32>
    %333 = vector.broadcast %312 : vector<1x128xf32> to vector<96x128xf32>
    %334 = arith.mulf %332, %333 : vector<96x128xf32>
    %335 = vector.broadcast %314 : vector<1x128xf32> to vector<96x128xf32>
    %336 = arith.addf %334, %335 : vector<96x128xf32>
    %337 = arith.truncf %336 : vector<96x128xf32> to vector<96x128xbf16>
    %c0_148 = arith.constant 0 : index
    %c0_149 = arith.constant 0 : index
    %338 = vector.load %arg16[%c0_148, %c0_149] : memref<128x128xbf16, #tpu.memory_space<vmem>>, vector<128x128xbf16>
    %cst_150 = arith.constant dense<0.000000e+00> : vector<96x128xf32>
    %339 = tpu.matmul %337, %338, %cst_150 {dimension_numbers = #tpu.dot_dimension_numbers<[1], [0], [0], [1], [0, 0, 1, 1], [], []>} : vector<96x128xbf16>, vector<128x128xbf16>, vector<96x128xf32> -> vector<96x128xf32>
    %c0_151 = arith.constant 0 : index
    %c0_152 = arith.constant 0 : index
    %340 = vector.load %arg17[%c0_151, %c0_152] : memref<1x128xf32, #tpu.memory_space<vmem>>, vector<1x128xf32>
    %341 = vector.broadcast %340 : vector<1x128xf32> to vector<96x128xf32>
    %342 = arith.addf %339, %341 : vector<96x128xf32>
    %343 = arith.negf %342 : vector<96x128xf32>
    %344 = math.exp %343 : vector<96x128xf32>
    %cst_153 = arith.constant 1.000000e+00 : f32
    %345 = vector.broadcast %cst_153 : f32 to vector<96x128xf32>
    %346 = arith.addf %345, %344 : vector<96x128xf32>
    %347 = arith.divf %345, %346 : vector<96x128xf32>
    %c0_154 = arith.constant 0 : index
    %c0_155 = arith.constant 0 : index
    %348 = vector.load %arg18[%c0_154, %c0_155] : memref<96x128xf32, #tpu.memory_space<vmem>>, vector<96x128xf32>
    tpu.vector_store %arg18[%c0_154, %c0_155], %347 {strides = array<i32>} : memref<96x128xf32, #tpu.memory_space<vmem>>, vector<96x128xf32>,
    return
  }
}

</mosaic_0001>

<llo_original>
// kernel: tpu_custom_call.1
$region0: #{tpu_custom_call.1}
  #allocation0 [shape = 'u32[]', space=smem, size = 0x4, offset = 0x4, fixed_abs, tag = 'smem constant byte address 0x4 - core index']
  #allocation1 [shape = 'u32[72,128]{1,0:T(1,128)}', space=vmem, size = 0x9000, scoped, tag = 'internal scratch']
  %s0 = inlined_call_operand.vmem [shape: f32[96,16], index: 0, kind: input, shape index: {}]
  %s1 = inlined_call_operand.vmem [shape: bf16[16,128], index: 1, kind: input, shape index: {}]
  %s2 = inlined_call_operand.vmem [shape: f32[1,128], index: 2, kind: input, shape index: {}]
  %s3 = inlined_call_operand.hbm [shape: bf16[2,128,384], index: 3, kind: input, shape index: {}]
  %s4 = inlined_call_operand.vmem [shape: bf16[2,128,64], index: 4, kind: input, shape index: {}]
  %s5 = inlined_call_operand.vmem [shape: bf16[2,128,64], index: 5, kind: input, shape index: {}]
  %s6 = inlined_call_operand.vmem [shape: bf16[2,128,128], index: 6, kind: input, shape index: {}]
  %s7 = inlined_call_operand.vmem [shape: f32[2,1,128], index: 7, kind: input, shape index: {}]
  %s8 = inlined_call_operand.vmem [shape: f32[2,1,128], index: 8, kind: input, shape index: {}]
  %s9 = inlined_call_operand.vmem [shape: f32[2,1,128], index: 9, kind: input, shape index: {}]
  %s10 = inlined_call_operand.hbm [shape: bf16[2,128,512], index: 10, kind: input, shape index: {}]
  %s11 = inlined_call_operand.vmem [shape: f32[2,1,512], index: 11, kind: input, shape index: {}]
  %s12 = inlined_call_operand.hbm [shape: bf16[2,512,128], index: 12, kind: input, shape index: {}]
  %s13 = inlined_call_operand.vmem [shape: f32[2,1,128], index: 13, kind: input, shape index: {}]
  %s14 = inlined_call_operand.vmem [shape: f32[2,1,128], index: 14, kind: input, shape index: {}]
  %s15 = inlined_call_operand.vmem [shape: f32[2,1,128], index: 15, kind: input, shape index: {}]
  %s16 = inlined_call_operand.vmem [shape: bf16[128,128], index: 16, kind: input, shape index: {}]
  %s17 = inlined_call_operand.vmem [shape: f32[1,128], index: 17, kind: input, shape index: {}]
  %s18 = inlined_call_operand.hbm [shape: f32[96,128], index: 18, kind: output, shape index: {}]
  %s19 = sld [smem:[#allocation0]]
  $region94: #{tpu_custom_call.1} parent=0
    _
  %s21 = ssub.s32 1, %s19
  %s22 = scalar_select 0, %s21, %s19
  $region1: #{tpu_custom_call.1} parent=0
    #allocation2 [shape = 'u8[196608]{0}', space=vmem, size = 0x30000, scoped, tag = 'input window, operand 3, single buffered']
    #allocation3 [shape = 's32[1]{0}', space=sflag, size = 0x4, scoped, tag = 'scoped memory for tpu_custom_call.1']
    #allocation4 [shape = 's32[1]{0}', space=sflag, size = 0x4, scoped, tag = 'scoped memory for tpu_custom_call.1']
    #allocation5 [shape = 'u8[262144]{0}', space=vmem, size = 0x40000, scoped, tag = 'input window, operand 10, single buffered']
    #allocation6 [shape = 's32[1]{0}', space=sflag, size = 0x4, scoped, tag = 'scoped memory for tpu_custom_call.1']
    #allocation7 [shape = 'u8[262144]{0}', space=vmem, size = 0x40000, scoped, tag = 'input window, operand 12, single buffered']
    #allocation8 [shape = 'u8[49152]{0}', space=vmem, size = 0xc000, scoped, tag = 'output window, operand 0, single buffered']
    %23 = vsyncpa [#allocation3], 0
    %24 = vsyncpa [#allocation6], 0
    %25 = vsyncpa [#allocation4], 0
    // Predicated region
    $region2: #{tpu_custom_call.1} parent=1 // pred_check
      _
    $region3: #{tpu_custom_call.1} parent=1 // pred_check_branch
      %27 = sbr.rel (0) target = $region5
    $region4: #{tpu_custom_call.1} parent=1 // pred_region
      _
    $region5: #{tpu_custom_call.1} parent=1 // pred_fallthru
      _
    // Predicated region
    $region6: #{tpu_custom_call.1} parent=1 // pred_check
      _
    $region7: #{tpu_custom_call.1} parent=1 // pred_check_branch
      %29 = sbr.rel (0) target = $region9
    $region8: #{tpu_custom_call.1} parent=1 // pred_region
      _
    $region9: #{tpu_custom_call.1} parent=1 // pred_fallthru
      _
    // Predicated region
    $region10: #{tpu_custom_call.1} parent=1 // pred_check
      _
    $region11: #{tpu_custom_call.1} parent=1 // pred_check_branch
      %31 = sbr.rel (0) target = $region13
    $region12: #{tpu_custom_call.1} parent=1 // pred_region
      _
    $region13: #{tpu_custom_call.1} parent=1 // pred_fallthru
      _
    // Predicated region
    $region14: #{tpu_custom_call.1} parent=1 // pred_check
      _
    $region15: #{tpu_custom_call.1} parent=1 // pred_check_branch
      %33 = sbr.rel (0) target = $region17
    $region16: #{tpu_custom_call.1} parent=1 // pred_region
      %35 = vsyncadd [#allocation3], 0
      %s36 = sshll.u32 %s3, 4
      %s37 = int_to_ptr.hbm [resolvable:$true] %s36
      %s38 = sshll.u32 [#allocation2], 4
      %s39 = int_to_ptr.vmem [resolvable:$true] %s38
      %44 = dma.hbm_to_vmem [thread:$0]  %s37, 6144, %s39, [#allocation3], 192, 192, 12
    $region17: #{tpu_custom_call.1} parent=1 // pred_fallthru
      _
    // Predicated region
    $region18: #{tpu_custom_call.1} parent=1 // pred_check
      _
    $region19: #{tpu_custom_call.1} parent=1 // pred_check_branch
      %46 = sbr.rel (0) target = $region21
    $region20: #{tpu_custom_call.1} parent=1 // pred_region
      _
    $region21: #{tpu_custom_call.1} parent=1 // pred_fallthru
      _
    // Predicated region
    $region22: #{tpu_custom_call.1} parent=1 // pred_check
      _
    $region23: #{tpu_custom_call.1} parent=1 // pred_check_branch
      %48 = sbr.rel (0) target = $region25
    $region24: #{tpu_custom_call.1} parent=1 // pred_region
      _
    $region25: #{tpu_custom_call.1} parent=1 // pred_fallthru
      _
    // Predicated region
    $region26: #{tpu_custom_call.1} parent=1 // pred_check
      _
    $region27: #{tpu_custom_call.1} parent=1 // pred_check_branch
      %50 = sbr.rel (0) target = $region29
    $region28: #{tpu_custom_call.1} parent=1 // pred_region
      _
    $region29: #{tpu_custom_call.1} parent=1 // pred_fallthru
      _
    // Predicated region
    $region30: #{tpu_custom_call.1} parent=1 // pred_check
      _
    $region31: #{tpu_custom_call.1} parent=1 // pred_check_branch
      %52 = sbr.rel (0) target = $region33
    $region32: #{tpu_custom_call.1} parent=1 // pred_region
      _
    $region33: #{tpu_custom_call.1} parent=1 // pred_fallthru
      _
    // Predicated region
    $region34: #{tpu_custom_call.1} parent=1 // pred_check
      _
    $region35: #{tpu_custom_call.1} parent=1 // pred_check_branch
      %54 = sbr.rel (0) target = $region37
    $region36: #{tpu_custom_call.1} parent=1 // pred_region
      _
    $region37: #{tpu_custom_call.1} parent=1 // pred_fallthru
      _
    // Predicated region
    $region38: #{tpu_custom_call.1} parent=1 // pred_check
      _
    $region39: #{tpu_custom_call.1} parent=1 // pred_check_branch
      %56 = sbr.rel (0) target = $region41
    $region40: #{tpu_custom_call.1} parent=1 // pred_region
      _
    $region41: #{tpu_custom_call.1} parent=1 // pred_fallthru
      _
    // Predicated region
    $region42: #{tpu_custom_call.1} parent=1 // pred_check
      _
    $region43: #{tpu_custom_call.1} parent=1 // pred_check_branch
      %58 = sbr.rel (0) target = $region45
    $region44: #{tpu_custom_call.1} parent=1 // pred_region
      %60 = vsyncadd [#allocation6], 0
      %s61 = sshll.u32 %s10, 4
      %s62 = int_to_ptr.hbm [resolvable:$true] %s61
      %s63 = sshll.u32 [#allocation5], 4
      %s64 = int_to_ptr.vmem [resolvable:$true] %s63
      %69 = dma.hbm_to_vmem [thread:$0]  %s62, 8192, %s64, [#allocation6], 256, 256, 16
    $region45: #{tpu_custom_call.1} parent=1 // pred_fallthru
      _
    // Predicated region
    $region46: #{tpu_custom_call.1} parent=1 // pred_check
      _
    $region47: #{tpu_custom_call.1} parent=1 // pred_check_branch
      %71 = sbr.rel (0) target = $region49
    $region48: #{tpu_custom_call.1} parent=1 // pred_region
      _
    $region49: #{tpu_custom_call.1} parent=1 // pred_fallthru
      _
    // Predicated region
    $region50: #{tpu_custom_call.1} parent=1 // pred_check
      _
    $region51: #{tpu_custom_call.1} parent=1 // pred_check_branch
      %73 = sbr.rel (0) target = $region53
    $region52: #{tpu_custom_call.1} parent=1 // pred_region
      %75 = vsyncadd [#allocation6], 0
      %s76 = sshll.u32 %s12, 4
      %s77 = int_to_ptr.hbm [resolvable:$true] %s76
      %s78 = sshll.u32 [#allocation7], 4
      %s79 = int_to_ptr.vmem [resolvable:$true] %s78
      %84 = dma.hbm_to_vmem [thread:$0]  %s77, 8192, %s79, [#allocation6], 64, 64, 4
    $region53: #{tpu_custom_call.1} parent=1 // pred_fallthru
      _
    // Predicated region
    $region54: #{tpu_custom_call.1} parent=1 // pred_check
      _
    $region55: #{tpu_custom_call.1} parent=1 // pred_check_branch
      %86 = sbr.rel (0) target = $region57
    $region56: #{tpu_custom_call.1} parent=1 // pred_region
      _
    $region57: #{tpu_custom_call.1} parent=1 // pred_fallthru
      _
    // Predicated region
    $region58: #{tpu_custom_call.1} parent=1 // pred_check
      _
    $region59: #{tpu_custom_call.1} parent=1 // pred_check_branch
      %88 = sbr.rel (0) target = $region61
    $region60: #{tpu_custom_call.1} parent=1 // pred_region
      _
    $region61: #{tpu_custom_call.1} parent=1 // pred_fallthru
      _
    // Predicated region
    $region62: #{tpu_custom_call.1} parent=1 // pred_check
      _
    $region63: #{tpu_custom_call.1} parent=1 // pred_check_branch
      %90 = sbr.rel (0) target = $region65
    $region64: #{tpu_custom_call.1} parent=1 // pred_region
      _
    $region65: #{tpu_custom_call.1} parent=1 // pred_fallthru
      _
    // Predicated region
    $region66: #{tpu_custom_call.1} parent=1 // pred_check
      _
    $region67: #{tpu_custom_call.1} parent=1 // pred_check_branch
      %92 = sbr.rel (0) target = $region69
    $region68: #{tpu_custom_call.1} parent=1 // pred_region
      _
    $region69: #{tpu_custom_call.1} parent=1 // pred_fallthru
      _
    // Predicated region
    $region70: #{tpu_custom_call.1} parent=1 // pred_check
      _
    $region71: #{tpu_custom_call.1} parent=1 // pred_check_branch
      %94 = sbr.rel (0) target = $region73
    $region72: #{tpu_custom_call.1} parent=1 // pred_region
      _
    $region73: #{tpu_custom_call.1} parent=1 // pred_fallthru
      _
    // Predicated region
    $region74: #{tpu_custom_call.1} parent=1 // pred_check
      _
    $region75: #{tpu_custom_call.1} parent=1 // pred_check_branch
      %96 = sbr.rel (0) target = $region77
    $region76: #{tpu_custom_call.1} parent=1 // pred_region
      %98 = dma.done [#allocation3], 6144
    $region77: #{tpu_custom_call.1} parent=1 // pred_fallthru
      _
    // Predicated region
    $region78: #{tpu_custom_call.1} parent=1 // pred_check
      _
    $region79: #{tpu_custom_call.1} parent=1 // pred_check_branch
      %100 = sbr.rel (0) target = $region81
    $region80: #{tpu_custom_call.1} parent=1 // pred_region
      %102 = dma.done [#allocation6], 8192
    $region81: #{tpu_custom_call.1} parent=1 // pred_fallthru
      _
    // Predicated region
    $region82: #{tpu_custom_call.1} parent=1 // pred_check
      _
    $region83: #{tpu_custom_call.1} parent=1 // pred_check_branch
      %104 = sbr.rel (0) target = $region85
    $region84: #{tpu_custom_call.1} parent=1 // pred_region
      %106 = dma.done [#allocation6], 8192
    $region85: #{tpu_custom_call.1} parent=1 // pred_fallthru
      _
    %v108 = vld [vmem:[%s0] sm:$0xff]
    %v109 = vld [vmem:[%s0 + $0x8] sm:$0xff]
    %v110 = vld [vmem:[%s0 + $0x10] sm:$0xff]
    %v111 = vld [vmem:[%s0 + $0x18] sm:$0xff]
    %v112 = vld [vmem:[%s0 + $0x20] sm:$0xff]
    %v113 = vld [vmem:[%s0 + $0x28] sm:$0xff]
    %v114 = vld [vmem:[%s0 + $0x30] sm:$0xff]
    %v115 = vld [vmem:[%s0 + $0x38] sm:$0xff]
    %v116 = vld [vmem:[%s0 + $0x40] sm:$0xff]
    %v117 = vld [vmem:[%s0 + $0x48] sm:$0xff]
    %v118 = vld [vmem:[%s0 + $0x50] sm:$0xff]
    %v119 = vld [vmem:[%s0 + $0x58] sm:$0xff]
    %v120 = vpack.c.bf16 %v109, %v108
    %v121 = vpack.c.bf16 %v111, %v110
    %v122 = vpack.c.bf16 %v113, %v112
    %v123 = vpack.c.bf16 %v115, %v114
    %v124 = vpack.c.bf16 %v117, %v116
    %v125 = vpack.c.bf16 %v119, %v118
    %v126 = vld [vmem:[%s1] sm:$0xf]
    %v127 = vld [vmem:[%s1 + $0x4] sm:$0xf]
    %v128 = vld [vmem:[%s2] sm:$0x1]
    %v130 = vperm.slane %v128, 0
    %v134 = vunpack.c.l.b16 %v126
    %v135 = vunpack.c.l.b16 %v127
    %v136 = vpack.c.b16 %v135, %v134
    %vm138 = vcmask 130048
    %v140 = vsel %vm138, %v120, 0
    %v143 = vsel %vm138, %v121, 0
    %v146 = vsel %vm138, %v122, 0
    %v149 = vsel %vm138, %v123, 0
    %v152 = vsel %vm138, %v124, 0
    %v155 = vsel %vm138, %v125, 0
    %157 = vmatpush.bf16.msra.mxu0 0
    %158 = vmatpush.bf16.msra.mxu0 0
    %159 = vmatpush.bf16.msra.mxu0 0
    %160 = vmatpush.bf16.msra.mxu0 0
    %161 = vmatpush.bf16.msra.mxu0 0
    %162 = vmatpush.bf16.msra.mxu0 0
    %163 = vmatpush.bf16.msra.mxu0 0
    %164 = vmatpush.bf16.msra.mxu0 %v136
    %165 = vmatmul.bf16.gmra.mxu0 %v140
    %v166 = vpop.f32.mrf.mxu0
    %v167 = vadd.f32 %v130, %v166
    %v168 = vpop.f32.mrf.mxu0
    %v169 = vadd.f32 %v130, %v168
    %170 = vmatmul.bf16.gmra.mxu0 %v143
    %v171 = vpop.f32.mrf.mxu0
    %v172 = vadd.f32 %v130, %v171
    %v173 = vpop.f32.mrf.mxu0
    %v174 = vadd.f32 %v130, %v173
    %175 = vmatmul.bf16.gmra.mxu0 %v146
    %v176 = vpop.f32.mrf.mxu0
    %v177 = vadd.f32 %v130, %v176
    %v178 = vpop.f32.mrf.mxu0
    %v179 = vadd.f32 %v130, %v178
    %180 = vmatmul.bf16.gmra.mxu0 %v149
    %v181 = vpop.f32.mrf.mxu0
    %v182 = vadd.f32 %v130, %v181
    %v183 = vpop.f32.mrf.mxu0
    %v184 = vadd.f32 %v130, %v183
    %185 = vmatmul.bf16.gmra.mxu0 %v152
    %v186 = vpop.f32.mrf.mxu0
    %v187 = vadd.f32 %v130, %v186
    %v188 = vpop.f32.mrf.mxu0
    %v189 = vadd.f32 %v130, %v188
    %190 = vmatmul.bf16.gmra.mxu0 %v155
    %v191 = vpop.f32.mrf.mxu0
    %v192 = vadd.f32 %v130, %v191
    %v193 = vpop.f32.mrf.mxu0
    %v194 = vadd.f32 %v130, %v193
    %195 = vdwg.mxu0
    %v196 = vpack.c.bf16 %v169, %v167
    %v197 = vpack.c.bf16 %v174, %v172
    %v198 = vpack.c.bf16 %v179, %v177
    %v199 = vpack.c.bf16 %v184, %v182
    %v200 = vpack.c.bf16 %v189, %v187
    %v201 = vpack.c.bf16 %v194, %v192
    %v202 = vld [vmem:[#allocation2] sm:$0xff]
    %v203 = vld [vmem:[#allocation2 + $0x8] sm:$0xf]
    %v204 = vld [vmem:[#allocation2 + $0xc] sm:$0xff]
    %v205 = vld [vmem:[#allocation2 + $0x14] sm:$0xf]
    %v206 = vld [vmem:[#allocation2 + $0x18] sm:$0xff]
    %v207 = vld [vmem:[#allocation2 + $0x20] sm:$0xf]
    %v208 = vld [vmem:[#allocation2 + $0x24] sm:$0xff]
    %v209 = vld [vmem:[#allocation2 + $0x2c] sm:$0xf]
    %v210 = vld [vmem:[#allocation2 + $0x30] sm:$0xff]
    %v211 = vld [vmem:[#allocation2 + $0x38] sm:$0xf]
    %v212 = vld [vmem:[#allocation2 + $0x3c] sm:$0xff]
    %v213 = vld [vmem:[#allocation2 + $0x44] sm:$0xf]
    %v214 = vld [vmem:[#allocation2 + $0x48] sm:$0xff]
    %v215 = vld [vmem:[#allocation2 + $0x50] sm:$0xf]
    %v216 = vld [vmem:[#allocation2 + $0x54] sm:$0xff]
    %v217 = vld [vmem:[#allocation2 + $0x5c] sm:$0xf]
    %v218 = vld [vmem:[#allocation2 + $0x60] sm:$0xff]
    %v219 = vld [vmem:[#allocation2 + $0x68] sm:$0xf]
    %v220 = vld [vmem:[#allocation2 + $0x6c] sm:$0xff]
    %v221 = vld [vmem:[#allocation2 + $0x74] sm:$0xf]
    %v222 = vld [vmem:[#allocation2 + $0x78] sm:$0xff]
    %v223 = vld [vmem:[#allocation2 + $0x80] sm:$0xf]
    %v224 = vld [vmem:[#allocation2 + $0x84] sm:$0xff]
    %v225 = vld [vmem:[#allocation2 + $0x8c] sm:$0xf]
    %v226 = vld [vmem:[#allocation2 + $0x90] sm:$0xff]
    %v227 = vld [vmem:[#allocation2 + $0x98] sm:$0xf]
    %v228 = vld [vmem:[#allocation2 + $0x9c] sm:$0xff]
    %v229 = vld [vmem:[#allocation2 + $0xa4] sm:$0xf]
    %v230 = vld [vmem:[#allocation2 + $0xa8] sm:$0xff]
    %v231 = vld [vmem:[#allocation2 + $0xb0] sm:$0xf]
    %v232 = vld [vmem:[#allocation2 + $0xb4] sm:$0xff]
    %v233 = vld [vmem:[#allocation2 + $0xbc] sm:$0xf]
    %v266 = vunpack.c.l.b16 %v202
    %v267 = vunpack.c.h.b16 %v202
    %v268 = vunpack.c.l.b16 %v203
    %v269 = vunpack.c.l.b16 %v204
    %v270 = vunpack.c.h.b16 %v204
    %v271 = vunpack.c.l.b16 %v205
    %v272 = vunpack.c.l.b16 %v206
    %v273 = vunpack.c.h.b16 %v206
    %v274 = vunpack.c.l.b16 %v207
    %v275 = vunpack.c.l.b16 %v208
    %v276 = vunpack.c.h.b16 %v208
    %v277 = vunpack.c.l.b16 %v209
    %v278 = vunpack.c.l.b16 %v210
    %v279 = vunpack.c.h.b16 %v210
    %v280 = vunpack.c.l.b16 %v211
    %v281 = vunpack.c.l.b16 %v212
    %v282 = vunpack.c.h.b16 %v212
    %v283 = vunpack.c.l.b16 %v213
    %v284 = vunpack.c.l.b16 %v214
    %v285 = vunpack.c.h.b16 %v214
    %v286 = vunpack.c.l.b16 %v215
    %v287 = vunpack.c.l.b16 %v216
    %v288 = vunpack.c.h.b16 %v216
    %v289 = vunpack.c.l.b16 %v217
    %v290 = vunpack.c.l.b16 %v218
    %v291 = vunpack.c.h.b16 %v218
    %v292 = vunpack.c.l.b16 %v219
    %v293 = vunpack.c.l.b16 %v220
    %v294 = vunpack.c.h.b16 %v220
    %v295 = vunpack.c.l.b16 %v221
    %v296 = vunpack.c.l.b16 %v222
    %v297 = vunpack.c.h.b16 %v222
    %v298 = vunpack.c.l.b16 %v223
    %v299 = vunpack.c.l.b16 %v224
    %v300 = vunpack.c.h.b16 %v224
    %v301 = vunpack.c.l.b16 %v225
    %v302 = vunpack.c.l.b16 %v226
    %v303 = vunpack.c.h.b16 %v226
    %v304 = vunpack.c.l.b16 %v227
    %v305 = vunpack.c.l.b16 %v228
    %v306 = vunpack.c.h.b16 %v228
    %v307 = vunpack.c.l.b16 %v229
    %v308 = vunpack.c.l.b16 %v230
    %v309 = vunpack.c.h.b16 %v230
    %v310 = vunpack.c.l.b16 %v231
    %v311 = vunpack.c.l.b16 %v232
    %v312 = vunpack.c.h.b16 %v232
    %v313 = vunpack.c.l.b16 %v233
    %v314 = vpack.c.b16 %v269, %v266
    %v315 = vpack.c.b16 %v270, %v267
    %v316 = vpack.c.b16 %v271, %v268
    %v317 = vpack.c.b16 %v275, %v272
    %v318 = vpack.c.b16 %v276, %v273
    %v319 = vpack.c.b16 %v277, %v274
    %v320 = vpack.c.b16 %v281, %v278
    %v321 = vpack.c.b16 %v282, %v279
    %v322 = vpack.c.b16 %v283, %v280
    %v323 = vpack.c.b16 %v287, %v284
    %v324 = vpack.c.b16 %v288, %v285
    %v325 = vpack.c.b16 %v289, %v286
    %v326 = vpack.c.b16 %v293, %v290
    %v327 = vpack.c.b16 %v294, %v291
    %v328 = vpack.c.b16 %v295, %v292
    %v329 = vpack.c.b16 %v299, %v296
    %v330 = vpack.c.b16 %v300, %v297
    %v331 = vpack.c.b16 %v301, %v298
    %v332 = vpack.c.b16 %v305, %v302
    %v333 = vpack.c.b16 %v306, %v303
    %v334 = vpack.c.b16 %v307, %v304
    %v335 = vpack.c.b16 %v311, %v308
    %v336 = vpack.c.b16 %v312, %v309
    %v337 = vpack.c.b16 %v313, %v310
    %362 = vmatpush.bf16.msra.mxu0 %v335
    %363 = vmatpush.bf16.msra.mxu0 %v332
    %364 = vmatpush.bf16.msra.mxu0 %v329
    %365 = vmatpush.bf16.msra.mxu0 %v326
    %366 = vmatpush.bf16.msra.mxu0 %v323
    %367 = vmatpush.bf16.msra.mxu0 %v320
    %368 = vmatpush.bf16.msra.mxu0 %v317
    %369 = vmatpush.bf16.msra.mxu0 %v314
    %370 = vmatmul.bf16.gmra.mxu0 %v196
    %v371 = vpop.f32.mrf.mxu0
    %v372 = vadd.f32 0.0, %v371
    %v373 = vpop.f32.mrf.mxu0
    %v374 = vadd.f32 0.0, %v373
    %375 = vmatmul.bf16.gmra.mxu0 %v197
    %v376 = vpop.f32.mrf.mxu0
    %v377 = vadd.f32 0.0, %v376
    %v378 = vpop.f32.mrf.mxu0
    %v379 = vadd.f32 0.0, %v378
    %380 = vmatmul.bf16.gmra.mxu0 %v198
    %v381 = vpop.f32.mrf.mxu0
    %v382 = vadd.f32 0.0, %v381
    %v383 = vpop.f32.mrf.mxu0
    %v384 = vadd.f32 0.0, %v383
    %385 = vmatmul.bf16.gmra.mxu0 %v199
    %v386 = vpop.f32.mrf.mxu0
    %v387 = vadd.f32 0.0, %v386
    %v388 = vpop.f32.mrf.mxu0
    %v389 = vadd.f32 0.0, %v388
    %390 = vmatmul.bf16.gmra.mxu0 %v200
    %v391 = vpop.f32.mrf.mxu0
    %v392 = vadd.f32 0.0, %v391
    %v393 = vpop.f32.mrf.mxu0
    %v394 = vadd.f32 0.0, %v393
    %395 = vmatmul.bf16.gmra.mxu0 %v201
    %v396 = vpop.f32.mrf.mxu0
    %v397 = vadd.f32 0.0, %v396
    %v398 = vpop.f32.mrf.mxu0
    %v399 = vadd.f32 0.0, %v398
    %400 = vdwg.mxu0
    %401 = vmatpush.bf16.msra.mxu0 %v336
    %402 = vmatpush.bf16.msra.mxu0 %v333
    %403 = vmatpush.bf16.msra.mxu0 %v330
    %404 = vmatpush.bf16.msra.mxu0 %v327
    %405 = vmatpush.bf16.msra.mxu0 %v324
    %406 = vmatpush.bf16.msra.mxu0 %v321
    %407 = vmatpush.bf16.msra.mxu0 %v318
    %408 = vmatpush.bf16.msra.mxu0 %v315
    %409 = vmatmul.bf16.gmra.mxu0 %v196
    %v410 = vpop.f32.mrf.mxu0
    %v411 = vadd.f32 0.0, %v410
    %v412 = vpop.f32.mrf.mxu0
    %v413 = vadd.f32 0.0, %v412
    %414 = vmatmul.bf16.gmra.mxu0 %v197
    %v415 = vpop.f32.mrf.mxu0
    %v416 = vadd.f32 0.0, %v415
    %v417 = vpop.f32.mrf.mxu0
    %v418 = vadd.f32 0.0, %v417
    %419 = vmatmul.bf16.gmra.mxu0 %v198
    %v420 = vpop.f32.mrf.mxu0
    %v421 = vadd.f32 0.0, %v420
    %v422 = vpop.f32.mrf.mxu0
    %v423 = vadd.f32 0.0, %v422
    %424 = vmatmul.bf16.gmra.mxu0 %v199
    %v425 = vpop.f32.mrf.mxu0
    %v426 = vadd.f32 0.0, %v425
    %v427 = vpop.f32.mrf.mxu0
    %v428 = vadd.f32 0.0, %v427
    %429 = vmatmul.bf16.gmra.mxu0 %v200
    %v430 = vpop.f32.mrf.mxu0
    %v431 = vadd.f32 0.0, %v430
    %v432 = vpop.f32.mrf.mxu0
    %v433 = vadd.f32 0.0, %v432
    %434 = vmatmul.bf16.gmra.mxu0 %v201
    %v435 = vpop.f32.mrf.mxu0
    %v436 = vadd.f32 0.0, %v435
    %v437 = vpop.f32.mrf.mxu0
    %v438 = vadd.f32 0.0, %v437
    %439 = vdwg.mxu0
    %440 = vmatpush.bf16.msra.mxu0 %v337
    %441 = vmatpush.bf16.msra.mxu0 %v334
    %442 = vmatpush.bf16.msra.mxu0 %v331
    %443 = vmatpush.bf16.msra.mxu0 %v328
    %444 = vmatpush.bf16.msra.mxu0 %v325
    %445 = vmatpush.bf16.msra.mxu0 %v322
    %446 = vmatpush.bf16.msra.mxu0 %v319
    %447 = vmatpush.bf16.msra.mxu0 %v316
    %448 = vmatmul.bf16.gmra.mxu0 %v196
    %v449 = vpop.f32.mrf.mxu0
    %v450 = vadd.f32 0.0, %v449
    %v451 = vpop.f32.mrf.mxu0
    %v452 = vadd.f32 0.0, %v451
    %453 = vmatmul.bf16.gmra.mxu0 %v197
    %v454 = vpop.f32.mrf.mxu0
    %v455 = vadd.f32 0.0, %v454
    %v456 = vpop.f32.mrf.mxu0
    %v457 = vadd.f32 0.0, %v456
    %458 = vmatmul.bf16.gmra.mxu0 %v198
    %v459 = vpop.f32.mrf.mxu0
    %v460 = vadd.f32 0.0, %v459
    %v461 = vpop.f32.mrf.mxu0
    %v462 = vadd.f32 0.0, %v461
    %463 = vmatmul.bf16.gmra.mxu0 %v199
    %v464 = vpop.f32.mrf.mxu0
    %v465 = vadd.f32 0.0, %v464
    %v466 = vpop.f32.mrf.mxu0
    %v467 = vadd.f32 0.0, %v466
    %468 = vmatmul.bf16.gmra.mxu0 %v200
    %v469 = vpop.f32.mrf.mxu0
    %v470 = vadd.f32 0.0, %v469
    %v471 = vpop.f32.mrf.mxu0
    %v472 = vadd.f32 0.0, %v471
    %473 = vmatmul.bf16.gmra.mxu0 %v201
    %v474 = vpop.f32.mrf.mxu0
    %v475 = vadd.f32 0.0, %v474
    %v476 = vpop.f32.mrf.mxu0
    %v477 = vadd.f32 0.0, %v476
    %478 = vdwg.mxu0
    %v479 = vpack.c.bf16 %v372, %v372
    %v480 = vpack.c.bf16 %v374, %v374
    %v481 = vpack.c.bf16 %v377, %v377
    %v482 = vpack.c.bf16 %v379, %v379
    %v483 = vpack.c.bf16 %v382, %v382
    %v484 = vpack.c.bf16 %v384, %v384
    %v485 = vpack.c.bf16 %v387, %v387
    %v486 = vpack.c.bf16 %v389, %v389
    %v487 = vpack.c.bf16 %v392, %v392
    %v488 = vpack.c.bf16 %v394, %v394
    %v489 = vpack.c.bf16 %v397, %v397
    %v490 = vpack.c.bf16 %v399, %v399
    %v491 = vpack.c.bf16 %v413, %v411
    %v492 = vpack.c.bf16 %v418, %v416
    %v493 = vpack.c.bf16 %v423, %v421
    %v494 = vpack.c.bf16 %v428, %v426
    %v495 = vpack.c.bf16 %v433, %v431
    %v496 = vpack.c.bf16 %v438, %v436
    %v497 = vpack.c.bf16 %v452, %v450
    %v498 = vpack.c.bf16 %v457, %v455
    %v499 = vpack.c.bf16 %v462, %v460
    %v500 = vpack.c.bf16 %v467, %v465
    %v501 = vpack.c.bf16 %v472, %v470
    %v502 = vpack.c.bf16 %v477, %v475
    %v503 = vld [vmem:[%s4] sm:$0xf]
    %v504 = vld [vmem:[%s4 + $0x4] sm:$0xf]
    %v505 = vld [vmem:[%s4 + $0x8] sm:$0xf]
    %v506 = vld [vmem:[%s4 + $0xc] sm:$0xf]
    %v507 = vld [vmem:[%s4 + $0x10] sm:$0xf]
    %v508 = vld [vmem:[%s4 + $0x14] sm:$0xf]
    %v509 = vld [vmem:[%s4 + $0x18] sm:$0xf]
    %v510 = vld [vmem:[%s4 + $0x1c] sm:$0xf]
    %v511 = vld [vmem:[%s4 + $0x20] sm:$0xf]
    %v512 = vld [vmem:[%s4 + $0x24] sm:$0xf]
    %v513 = vld [vmem:[%s4 + $0x28] sm:$0xf]
    %v514 = vld [vmem:[%s4 + $0x2c] sm:$0xf]
    %v515 = vld [vmem:[%s5] sm:$0xf]
    %v516 = vld [vmem:[%s5 + $0x4] sm:$0xf]
    %v517 = vld [vmem:[%s5 + $0x8] sm:$0xf]
    %v518 = vld [vmem:[%s5 + $0xc] sm:$0xf]
    %v519 = vld [vmem:[%s5 + $0x10] sm:$0xf]
    %v520 = vld [vmem:[%s5 + $0x14] sm:$0xf]
    %v521 = vld [vmem:[%s5 + $0x18] sm:$0xf]
    %v522 = vld [vmem:[%s5 + $0x1c] sm:$0xf]
    %v523 = vld [vmem:[%s5 + $0x20] sm:$0xf]
    %v524 = vld [vmem:[%s5 + $0x24] sm:$0xf]
    %v525 = vld [vmem:[%s5 + $0x28] sm:$0xf]
    %v526 = vld [vmem:[%s5 + $0x2c] sm:$0xf]
    %v539 = vunpack.c.l.b16 %v503
    %v540 = vunpack.c.l.b16 %v504
    %v541 = vunpack.c.l.b16 %v505
    %v542 = vunpack.c.l.b16 %v506
    %v543 = vunpack.c.l.b16 %v507
    %v544 = vunpack.c.l.b16 %v508
    %v545 = vunpack.c.l.b16 %v509
    %v546 = vunpack.c.l.b16 %v510
    %v547 = vunpack.c.l.b16 %v511
    %v548 = vunpack.c.l.b16 %v512
    %v549 = vunpack.c.l.b16 %v513
    %v550 = vunpack.c.l.b16 %v514
    %v551 = vpack.c.b16 %v540, %v539
    %v552 = vpack.c.b16 %v542, %v541
    %v553 = vpack.c.b16 %v544, %v543
    %v554 = vpack.c.b16 %v546, %v545
    %v555 = vpack.c.b16 %v548, %v547
    %v556 = vpack.c.b16 %v550, %v549
    %563 = vxpose.xlu0.c.b16.start [1/8] %v551, 128
    %564 = vxpose.xlu0.c.b16.cont [2/8] %v552, 128
    %565 = vxpose.xlu0.c.b16.cont [3/8] %v553, 128
    %566 = vxpose.xlu0.c.b16.cont [4/8] %v554, 128
    %567 = vxpose.xlu0.c.b16.cont [5/8] %v555, 128
    %568 = vxpose.xlu0.c.b16.cont [6/8] %v556, 128
    %569 = vxpose.xlu0.c.b16.cont [7/8] 0, 128
    %570 = vxpose.xlu0.c.b16.end [8/8] 0, 128
    %v571 = vpop.trf.xlu0
    %v572 = vpop.trf.xlu0
    %v573 = vpop.trf.xlu0
    %v574 = vpop.trf.xlu0
    %v575 = vpop.trf.xlu0
    %v576 = vpop.trf.xlu0
    %v577 = vpop.trf.xlu0
    %v578 = vpop.trf.xlu0
    %vm579 = vcmask 785408
    %v581 = vsel %vm579, %v571, 0
    %v584 = vsel %vm579, %v572, 0
    %v587 = vsel %vm579, %v573, 0
    %v590 = vsel %vm579, %v574, 0
    %592 = vmatpush.bf16.msra.mxu0 0
    %593 = vmatpush.bf16.msra.mxu0 0
    %594 = vmatpush.bf16.msra.mxu0 %v496
    %595 = vmatpush.bf16.msra.mxu0 %v495
    %596 = vmatpush.bf16.msra.mxu0 %v494
    %597 = vmatpush.bf16.msra.mxu0 %v493
    %598 = vmatpush.bf16.msra.mxu0 %v492
    %599 = vmatpush.bf16.msra.mxu0 %v491
    %600 = vmatmul.bf16.gmra.mxu0 %v581
    %v601 = vpop.f32.mrf.mxu0
    %v602 = vadd.f32 0.0, %v601
    %v603 = vpop.f32.mrf.mxu0
    %v604 = vadd.f32 0.0, %v603
    %605 = vmatmul.bf16.gmra.mxu0 %v584
    %v606 = vpop.f32.mrf.mxu0
    %v607 = vadd.f32 0.0, %v606
    %v608 = vpop.f32.mrf.mxu0
    %v609 = vadd.f32 0.0, %v608
    %610 = vmatmul.bf16.gmra.mxu0 %v587
    %v611 = vpop.f32.mrf.mxu0
    %v612 = vadd.f32 0.0, %v611
    %v613 = vpop.f32.mrf.mxu0
    %v614 = vadd.f32 0.0, %v613
    %615 = vmatmul.bf16.gmra.mxu0 %v590
    %v616 = vpop.f32.mrf.mxu0
    %v617 = vadd.f32 0.0, %v616
    %v618 = vpop.f32.mrf.mxu0
    %v619 = vadd.f32 0.0, %v618
    %620 = vdwg.mxu0
    %v621 = vpack.c.bf16 %v602, %v602
    %v622 = vpack.c.bf16 %v604, %v604
    %v623 = vpack.c.bf16 %v607, %v607
    %v624 = vpack.c.bf16 %v609, %v609
    %v625 = vpack.c.bf16 %v612, %v612
    %v626 = vpack.c.bf16 %v614, %v614
    %v627 = vpack.c.bf16 %v617, %v617
    %v628 = vpack.c.bf16 %v619, %v619
    %v641 = vunpack.c.l.b16 %v515
    %v642 = vunpack.c.l.b16 %v516
    %v643 = vunpack.c.l.b16 %v517
    %v644 = vunpack.c.l.b16 %v518
    %v645 = vunpack.c.l.b16 %v519
    %v646 = vunpack.c.l.b16 %v520
    %v647 = vunpack.c.l.b16 %v521
    %v648 = vunpack.c.l.b16 %v522
    %v649 = vunpack.c.l.b16 %v523
    %v650 = vunpack.c.l.b16 %v524
    %v651 = vunpack.c.l.b16 %v525
    %v652 = vunpack.c.l.b16 %v526
    %v653 = vpack.c.b16 %v642, %v641
    %v654 = vpack.c.b16 %v644, %v643
    %v655 = vpack.c.b16 %v646, %v645
    %v656 = vpack.c.b16 %v648, %v647
    %v657 = vpack.c.b16 %v650, %v649
    %v658 = vpack.c.b16 %v652, %v651
    %665 = vxpose.xlu0.c.b16.start [1/8] %v653, 128
    %666 = vxpose.xlu0.c.b16.cont [2/8] %v654, 128
    %667 = vxpose.xlu0.c.b16.cont [3/8] %v655, 128
    %668 = vxpose.xlu0.c.b16.cont [4/8] %v656, 128
    %669 = vxpose.xlu0.c.b16.cont [5/8] %v657, 128
    %670 = vxpose.xlu0.c.b16.cont [6/8] %v658, 128
    %671 = vxpose.xlu0.c.b16.cont [7/8] 0, 128
    %672 = vxpose.xlu0.c.b16.end [8/8] 0, 128
    %v673 = vpop.trf.xlu0
    %v674 = vpop.trf.xlu0
    %v675 = vpop.trf.xlu0
    %v676 = vpop.trf.xlu0
    %v677 = vpop.trf.xlu0
    %v678 = vpop.trf.xlu0
    %v679 = vpop.trf.xlu0
    %v680 = vpop.trf.xlu0
    %v682 = vsel %vm579, %v673, 0
    %v685 = vsel %vm579, %v674, 0
    %v688 = vsel %vm579, %v675, 0
    %v691 = vsel %vm579, %v676, 0
    %693 = vmatpush.bf16.msra.mxu0 0
    %694 = vmatpush.bf16.msra.mxu0 0
    %695 = vmatpush.bf16.msra.mxu0 %v502
    %696 = vmatpush.bf16.msra.mxu0 %v501
    %697 = vmatpush.bf16.msra.mxu0 %v500
    %698 = vmatpush.bf16.msra.mxu0 %v499
    %699 = vmatpush.bf16.msra.mxu0 %v498
    %700 = vmatpush.bf16.msra.mxu0 %v497
    %701 = vmatmul.bf16.gmra.mxu0 %v682
    %v702 = vpop.f32.mrf.mxu0
    %v703 = vadd.f32 0.0, %v702
    %v704 = vpop.f32.mrf.mxu0
    %v705 = vadd.f32 0.0, %v704
    %706 = vmatmul.bf16.gmra.mxu0 %v685
    %v707 = vpop.f32.mrf.mxu0
    %v708 = vadd.f32 0.0, %v707
    %v709 = vpop.f32.mrf.mxu0
    %v710 = vadd.f32 0.0, %v709
    %711 = vmatmul.bf16.gmra.mxu0 %v688
    %v712 = vpop.f32.mrf.mxu0
    %v713 = vadd.f32 0.0, %v712
    %v714 = vpop.f32.mrf.mxu0
    %v715 = vadd.f32 0.0, %v714
    %716 = vmatmul.bf16.gmra.mxu0 %v691
    %v717 = vpop.f32.mrf.mxu0
    %v718 = vadd.f32 0.0, %v717
    %v719 = vpop.f32.mrf.mxu0
    %v720 = vadd.f32 0.0, %v719
    %721 = vdwg.mxu0
    %v722 = vpack.c.bf16 %v703, %v703
    %v723 = vpack.c.bf16 %v705, %v705
    %v724 = vpack.c.bf16 %v708, %v708
    %v725 = vpack.c.bf16 %v710, %v710
    %v726 = vpack.c.bf16 %v713, %v713
    %v727 = vpack.c.bf16 %v715, %v715
    %v728 = vpack.c.bf16 %v718, %v718
    %v729 = vpack.c.bf16 %v720, %v720
    %v742 = vunpack.c.l.b16 %v479
    %v743 = vunpack.c.l.b16 %v480
    %v744 = vunpack.c.l.b16 %v481
    %v745 = vunpack.c.l.b16 %v482
    %v746 = vunpack.c.l.b16 %v483
    %v747 = vunpack.c.l.b16 %v484
    %v748 = vunpack.c.l.b16 %v485
    %v749 = vunpack.c.l.b16 %v486
    %v750 = vunpack.c.l.b16 %v487
    %v751 = vunpack.c.l.b16 %v488
    %v752 = vunpack.c.l.b16 %v489
    %v753 = vunpack.c.l.b16 %v490
    %v754 = vpack.c.b16 %v743, %v742
    %v755 = vpack.c.b16 %v745, %v744
    %v756 = vpack.c.b16 %v747, %v746
    %v757 = vpack.c.b16 %v749, %v748
    %v758 = vpack.c.b16 %v751, %v750
    %v759 = vpack.c.b16 %v753, %v752
    %v768 = vunpack.c.l.b16 %v621
    %v769 = vunpack.c.l.b16 %v622
    %v770 = vunpack.c.l.b16 %v623
    %v771 = vunpack.c.l.b16 %v624
    %v772 = vunpack.c.l.b16 %v625
    %v773 = vunpack.c.l.b16 %v626
    %v774 = vunpack.c.l.b16 %v627
    %v775 = vunpack.c.l.b16 %v628
    %v776 = vpack.c.b16 %v769, %v768
    %v777 = vpack.c.b16 %v771, %v770
    %v778 = vpack.c.b16 %v773, %v772
    %v779 = vpack.c.b16 %v775, %v774
    %vm780 = vcmask 261120
    %v782 = vsel %vm780, %v754, 0
    %v785 = vsel %vm780, %v755, 0
    %v788 = vsel %vm780, %v756, 0
    %v791 = vsel %vm780, %v757, 0
    %v794 = vsel %vm780, %v758, 0
    %v797 = vsel %vm780, %v759, 0
    %v800 = vsel %vm780, %v776, 0
    %v803 = vsel %vm780, %v777, 0
    %v806 = vsel %vm780, %v778, 0
    %v809 = vsel %vm780, %v779, 0
    %811 = vmatpush.bf16.xpose.msra.mxu0 0
    %812 = vmatpush.bf16.xpose.msra.mxu0 0
    %813 = vmatpush.bf16.xpose.msra.mxu0 0
    %814 = vmatpush.bf16.xpose.msra.mxu0 0
    %815 = vmatpush.bf16.xpose.msra.mxu0 %v809
    %816 = vmatpush.bf16.xpose.msra.mxu0 %v806
    %817 = vmatpush.bf16.xpose.msra.mxu0 %v803
    %818 = vmatpush.bf16.xpose.msra.mxu0 %v800
    %819 = vmatmul.bf16.gmra.mxu0 %v782
    %v820 = vpop.f32.mrf.mxu0
    %v821 = vadd.f32 0.0, %v820
    %v822 = vpop.f32.mrf.mxu0
    %v823 = vadd.f32 0.0, %v822
    %824 = vmatmul.bf16.gmra.mxu0 %v785
    %v825 = vpop.f32.mrf.mxu0
    %v826 = vadd.f32 0.0, %v825
    %v827 = vpop.f32.mrf.mxu0
    %v828 = vadd.f32 0.0, %v827
    %829 = vmatmul.bf16.gmra.mxu0 %v788
    %v830 = vpop.f32.mrf.mxu0
    %v831 = vadd.f32 0.0, %v830
    %v832 = vpop.f32.mrf.mxu0
    %v833 = vadd.f32 0.0, %v832
    %834 = vmatmul.bf16.gmra.mxu0 %v791
    %v835 = vpop.f32.mrf.mxu0
    %v836 = vadd.f32 0.0, %v835
    %v837 = vpop.f32.mrf.mxu0
    %v838 = vadd.f32 0.0, %v837
    %839 = vmatmul.bf16.gmra.mxu0 %v794
    %v840 = vpop.f32.mrf.mxu0
    %v841 = vadd.f32 0.0, %v840
    %v842 = vpop.f32.mrf.mxu0
    %v843 = vadd.f32 0.0, %v842
    %844 = vmatmul.bf16.gmra.mxu0 %v797
    %v845 = vpop.f32.mrf.mxu0
    %v846 = vadd.f32 0.0, %v845
    %v847 = vpop.f32.mrf.mxu0
    %v848 = vadd.f32 0.0, %v847
    %849 = vdwg.mxu0
    %vm850 = vcmask 523264
    %v851 = vsel %vm850, %v821, -inf
    %852 = vmax.xlane.f32.xlu0 %v851
    %v853 = vpop.xlane.xlu0 %852
    %v854 = vsel %vm850, %v823, -inf
    %855 = vmax.xlane.f32.xlu0 %v854
    %v856 = vpop.xlane.xlu0 %855
    %v857 = vsel %vm850, %v826, -inf
    %858 = vmax.xlane.f32.xlu0 %v857
    %v859 = vpop.xlane.xlu0 %858
    %v860 = vsel %vm850, %v828, -inf
    %861 = vmax.xlane.f32.xlu0 %v860
    %v862 = vpop.xlane.xlu0 %861
    %v863 = vsel %vm850, %v831, -inf
    %864 = vmax.xlane.f32.xlu0 %v863
    %v865 = vpop.xlane.xlu0 %864
    %v866 = vsel %vm850, %v833, -inf
    %867 = vmax.xlane.f32.xlu0 %v866
    %v868 = vpop.xlane.xlu0 %867
    %v869 = vsel %vm850, %v836, -inf
    %870 = vmax.xlane.f32.xlu0 %v869
    %v871 = vpop.xlane.xlu0 %870
    %v872 = vsel %vm850, %v838, -inf
    %873 = vmax.xlane.f32.xlu0 %v872
    %v874 = vpop.xlane.xlu0 %873
    %v875 = vsel %vm850, %v841, -inf
    %876 = vmax.xlane.f32.xlu0 %v875
    %v877 = vpop.xlane.xlu0 %876
    %v878 = vsel %vm850, %v843, -inf
    %879 = vmax.xlane.f32.xlu0 %v878
    %v880 = vpop.xlane.xlu0 %879
    %v881 = vsel %vm850, %v846, -inf
    %882 = vmax.xlane.f32.xlu0 %v881
    %v883 = vpop.xlane.xlu0 %882
    %v884 = vsel %vm850, %v848, -inf
    %885 = vmax.xlane.f32.xlu0 %v884
    %v886 = vpop.xlane.xlu0 %885
    %v887 = vsub.f32 %v821, %v853
    %v888 = vsub.f32 %v823, %v856
    %v889 = vsub.f32 %v826, %v859
    %v890 = vsub.f32 %v828, %v862
    %v891 = vsub.f32 %v831, %v865
    %v892 = vsub.f32 %v833, %v868
    %v893 = vsub.f32 %v836, %v871
    %v894 = vsub.f32 %v838, %v874
    %v895 = vsub.f32 %v841, %v877
    %v896 = vsub.f32 %v843, %v880
    %v897 = vsub.f32 %v846, %v883
    %v898 = vsub.f32 %v848, %v886
    %v899 = vmul.f32 %v887, 1.442695
    %v900 = vpow.pop %v899
    %v901 = vmul.f32 %v888, 1.442695
    %v902 = vpow.pop %v901
    %v903 = vmul.f32 %v889, 1.442695
    %v904 = vpow.pop %v903
    %v905 = vmul.f32 %v890, 1.442695
    %v906 = vpow.pop %v905
    %v907 = vmul.f32 %v891, 1.442695
    %v908 = vpow.pop %v907
    %v909 = vmul.f32 %v892, 1.442695
    %v910 = vpow.pop %v909
    %v911 = vmul.f32 %v893, 1.442695
    %v912 = vpow.pop %v911
    %v913 = vmul.f32 %v894, 1.442695
    %v914 = vpow.pop %v913
    %v915 = vmul.f32 %v895, 1.442695
    %v916 = vpow.pop %v915
    %v917 = vmul.f32 %v896, 1.442695
    %v918 = vpow.pop %v917
    %v919 = vmul.f32 %v897, 1.442695
    %v920 = vpow.pop %v919
    %v921 = vmul.f32 %v898, 1.442695
    %v922 = vpow.pop %v921
    %v923 = vsel %vm850, %v900, 0.0
    %924 = vadd.xlane.f32.xlu0 %v923
    %v925 = vpop.xlane.xlu0 %924
    %v926 = vsel %vm850, %v902, 0.0
    %927 = vadd.xlane.f32.xlu0 %v926
    %v928 = vpop.xlane.xlu0 %927
    %v929 = vsel %vm850, %v904, 0.0
    %930 = vadd.xlane.f32.xlu0 %v929
    %v931 = vpop.xlane.xlu0 %930
    %v932 = vsel %vm850, %v906, 0.0
    %933 = vadd.xlane.f32.xlu0 %v932
    %v934 = vpop.xlane.xlu0 %933
    %v935 = vsel %vm850, %v908, 0.0
    %936 = vadd.xlane.f32.xlu0 %v935
    %v937 = vpop.xlane.xlu0 %936
    %v938 = vsel %vm850, %v910, 0.0
    %939 = vadd.xlane.f32.xlu0 %v938
    %v940 = vpop.xlane.xlu0 %939
    %v941 = vsel %vm850, %v912, 0.0
    %942 = vadd.xlane.f32.xlu0 %v941
    %v943 = vpop.xlane.xlu0 %942
    %v944 = vsel %vm850, %v914, 0.0
    %945 = vadd.xlane.f32.xlu0 %v944
    %v946 = vpop.xlane.xlu0 %945
    %v947 = vsel %vm850, %v916, 0.0
    %948 = vadd.xlane.f32.xlu0 %v947
    %v949 = vpop.xlane.xlu0 %948
    %v950 = vsel %vm850, %v918, 0.0
    %951 = vadd.xlane.f32.xlu0 %v950
    %v952 = vpop.xlane.xlu0 %951
    %v953 = vsel %vm850, %v920, 0.0
    %954 = vadd.xlane.f32.xlu0 %v953
    %v955 = vpop.xlane.xlu0 %954
    %v956 = vsel %vm850, %v922, 0.0
    %957 = vadd.xlane.f32.xlu0 %v956
    %v958 = vpop.xlane.xlu0 %957
    %v959 = vrcp.pop %v925
    %v960 = vrcp.pop %v928
    %v961 = vrcp.pop %v931
    %v962 = vrcp.pop %v934
    %v963 = vrcp.pop %v937
    %v964 = vrcp.pop %v940
    %v965 = vrcp.pop %v943
    %v966 = vrcp.pop %v946
    %v967 = vrcp.pop %v949
    %v968 = vrcp.pop %v952
    %v969 = vrcp.pop %v955
    %v970 = vrcp.pop %v958
    %v971 = vmul.f32 %v900, %v959
    %v972 = vmul.f32 %v902, %v960
    %v973 = vmul.f32 %v904, %v961
    %v974 = vmul.f32 %v906, %v962
    %v975 = vmul.f32 %v908, %v963
    %v976 = vmul.f32 %v910, %v964
    %v977 = vmul.f32 %v912, %v965
    %v978 = vmul.f32 %v914, %v966
    %v979 = vmul.f32 %v916, %v967
    %v980 = vmul.f32 %v918, %v968
    %v981 = vmul.f32 %v920, %v969
    %v982 = vmul.f32 %v922, %v970
    %v983 = vpack.c.bf16 %v972, %v971
    %v984 = vpack.c.bf16 %v974, %v973
    %v985 = vpack.c.bf16 %v976, %v975
    %v986 = vpack.c.bf16 %v978, %v977
    %v987 = vpack.c.bf16 %v980, %v979
    %v988 = vpack.c.bf16 %v982, %v981
    %v997 = vunpack.c.l.b16 %v722
    %v998 = vunpack.c.l.b16 %v723
    %v999 = vunpack.c.l.b16 %v724
    %v1000 = vunpack.c.l.b16 %v725
    %v1001 = vunpack.c.l.b16 %v726
    %v1002 = vunpack.c.l.b16 %v727
    %v1003 = vunpack.c.l.b16 %v728
    %v1004 = vunpack.c.l.b16 %v729
    %v1005 = vpack.c.b16 %v998, %v997
    %v1006 = vpack.c.b16 %v1000, %v999
    %v1007 = vpack.c.b16 %v1002, %v1001
    %v1008 = vpack.c.b16 %v1004, %v1003
    %v1014 = vsel %vm850, %v983, 0
    %v1017 = vsel %vm850, %v984, 0
    %v1020 = vsel %vm850, %v985, 0
    %v1023 = vsel %vm850, %v986, 0
    %v1026 = vsel %vm850, %v987, 0
    %v1029 = vsel %vm850, %v988, 0
    %1031 = vmatpush.bf16.msra.mxu0 0
    %1032 = vmatpush.bf16.msra.mxu0 0
    %1033 = vmatpush.bf16.msra.mxu0 0
    %1034 = vmatpush.bf16.msra.mxu0 0
    %1035 = vmatpush.bf16.msra.mxu0 %v1008
    %1036 = vmatpush.bf16.msra.mxu0 %v1007
    %1037 = vmatpush.bf16.msra.mxu0 %v1006
    %1038 = vmatpush.bf16.msra.mxu0 %v1005
    %1039 = vmatmul.bf16.gmra.mxu0 %v1014
    %v1040 = vpop.f32.mrf.mxu0
    %v1041 = vadd.f32 0.0, %v1040
    %v1042 = vpop.f32.mrf.mxu0
    %v1043 = vadd.f32 0.0, %v1042
    %1044 = vmatmul.bf16.gmra.mxu0 %v1017
    %v1045 = vpop.f32.mrf.mxu0
    %v1046 = vadd.f32 0.0, %v1045
    %v1047 = vpop.f32.mrf.mxu0
    %v1048 = vadd.f32 0.0, %v1047
    %1049 = vmatmul.bf16.gmra.mxu0 %v1020
    %v1050 = vpop.f32.mrf.mxu0
    %v1051 = vadd.f32 0.0, %v1050
    %v1052 = vpop.f32.mrf.mxu0
    %v1053 = vadd.f32 0.0, %v1052
    %1054 = vmatmul.bf16.gmra.mxu0 %v1023
    %v1055 = vpop.f32.mrf.mxu0
    %v1056 = vadd.f32 0.0, %v1055
    %v1057 = vpop.f32.mrf.mxu0
    %v1058 = vadd.f32 0.0, %v1057
    %1059 = vmatmul.bf16.gmra.mxu0 %v1026
    %v1060 = vpop.f32.mrf.mxu0
    %v1061 = vadd.f32 0.0, %v1060
    %v1062 = vpop.f32.mrf.mxu0
    %v1063 = vadd.f32 0.0, %v1062
    %1064 = vmatmul.bf16.gmra.mxu0 %v1029
    %v1065 = vpop.f32.mrf.mxu0
    %v1066 = vadd.f32 0.0, %v1065
    %v1067 = vpop.f32.mrf.mxu0
    %v1068 = vadd.f32 0.0, %v1067
    %1069 = vdwg.mxu0
    %1070 = vrot.lane.b32.xlu0 %v754, 96
    %v1071 = vpop.permute.xlu0 %1070
    %1072 = vrot.lane.b32.xlu0 %v755, 96
    %v1073 = vpop.permute.xlu0 %1072
    %1074 = vrot.lane.b32.xlu0 %v756, 96
    %v1075 = vpop.permute.xlu0 %1074
    %1076 = vrot.lane.b32.xlu0 %v757, 96
    %v1077 = vpop.permute.xlu0 %1076
    %1078 = vrot.lane.b32.xlu0 %v758, 96
    %v1079 = vpop.permute.xlu0 %1078
    %1080 = vrot.lane.b32.xlu0 %v759, 96
    %v1081 = vpop.permute.xlu0 %1080
    %1082 = vrot.lane.b32.xlu0 %v776, 96
    %v1083 = vpop.permute.xlu0 %1082
    %1084 = vrot.lane.b32.xlu0 %v777, 96
    %v1085 = vpop.permute.xlu0 %1084
    %1086 = vrot.lane.b32.xlu0 %v778, 96
    %v1087 = vpop.permute.xlu0 %1086
    %1088 = vrot.lane.b32.xlu0 %v779, 96
    %v1089 = vpop.permute.xlu0 %1088
    %v1091 = vsel %vm780, %v1071, 0
    %v1094 = vsel %vm780, %v1073, 0
    %v1097 = vsel %vm780, %v1075, 0
    %v1100 = vsel %vm780, %v1077, 0
    %v1103 = vsel %vm780, %v1079, 0
    %v1106 = vsel %vm780, %v1081, 0
    %v1109 = vsel %vm780, %v1083, 0
    %v1112 = vsel %vm780, %v1085, 0
    %v1115 = vsel %vm780, %v1087, 0
    %v1118 = vsel %vm780, %v1089, 0
    %1120 = vmatpush.bf16.xpose.msra.mxu0 0
    %1121 = vmatpush.bf16.xpose.msra.mxu0 0
    %1122 = vmatpush.bf16.xpose.msra.mxu0 0
    %1123 = vmatpush.bf16.xpose.msra.mxu0 0
    %1124 = vmatpush.bf16.xpose.msra.mxu0 %v1118
    %1125 = vmatpush.bf16.xpose.msra.mxu0 %v1115
    %1126 = vmatpush.bf16.xpose.msra.mxu0 %v1112
    %1127 = vmatpush.bf16.xpose.msra.mxu0 %v1109
    %1128 = vmatmul.bf16.gmra.mxu0 %v1091
    %v1129 = vpop.f32.mrf.mxu0
    %v1130 = vadd.f32 0.0, %v1129
    %v1131 = vpop.f32.mrf.mxu0
    %v1132 = vadd.f32 0.0, %v1131
    %1133 = vmatmul.bf16.gmra.mxu0 %v1094
    %v1134 = vpop.f32.mrf.mxu0
    %v1135 = vadd.f32 0.0, %v1134
    %v1136 = vpop.f32.mrf.mxu0
    %v1137 = vadd.f32 0.0, %v1136
    %1138 = vmatmul.bf16.gmra.mxu0 %v1097
    %v1139 = vpop.f32.mrf.mxu0
    %v1140 = vadd.f32 0.0, %v1139
    %v1141 = vpop.f32.mrf.mxu0
    %v1142 = vadd.f32 0.0, %v1141
    %1143 = vmatmul.bf16.gmra.mxu0 %v1100
    %v1144 = vpop.f32.mrf.mxu0
    %v1145 = vadd.f32 0.0, %v1144
    %v1146 = vpop.f32.mrf.mxu0
    %v1147 = vadd.f32 0.0, %v1146
    %1148 = vmatmul.bf16.gmra.mxu0 %v1103
    %v1149 = vpop.f32.mrf.mxu0
    %v1150 = vadd.f32 0.0, %v1149
    %v1151 = vpop.f32.mrf.mxu0
    %v1152 = vadd.f32 0.0, %v1151
    %1153 = vmatmul.bf16.gmra.mxu0 %v1106
    %v1154 = vpop.f32.mrf.mxu0
    %v1155 = vadd.f32 0.0, %v1154
    %v1156 = vpop.f32.mrf.mxu0
    %v1157 = vadd.f32 0.0, %v1156
    %1158 = vdwg.mxu0
    %v1159 = vsel %vm850, %v1130, -inf
    %1160 = vmax.xlane.f32.xlu0 %v1159
    %v1161 = vpop.xlane.xlu0 %1160
    %v1162 = vsel %vm850, %v1132, -inf
    %1163 = vmax.xlane.f32.xlu0 %v1162
    %v1164 = vpop.xlane.xlu0 %1163
    %v1165 = vsel %vm850, %v1135, -inf
    %1166 = vmax.xlane.f32.xlu0 %v1165
    %v1167 = vpop.xlane.xlu0 %1166
    %v1168 = vsel %vm850, %v1137, -inf
    %1169 = vmax.xlane.f32.xlu0 %v1168
    %v1170 = vpop.xlane.xlu0 %1169
    %v1171 = vsel %vm850, %v1140, -inf
    %1172 = vmax.xlane.f32.xlu0 %v1171
    %v1173 = vpop.xlane.xlu0 %1172
    %v1174 = vsel %vm850, %v1142, -inf
    %1175 = vmax.xlane.f32.xlu0 %v1174
    %v1176 = vpop.xlane.xlu0 %1175
    %v1177 = vsel %vm850, %v1145, -inf
    %1178 = vmax.xlane.f32.xlu0 %v1177
    %v1179 = vpop.xlane.xlu0 %1178
    %v1180 = vsel %vm850, %v1147, -inf
    %1181 = vmax.xlane.f32.xlu0 %v1180
    %v1182 = vpop.xlane.xlu0 %1181
    %v1183 = vsel %vm850, %v1150, -inf
    %1184 = vmax.xlane.f32.xlu0 %v1183
    %v1185 = vpop.xlane.xlu0 %1184
    %v1186 = vsel %vm850, %v1152, -inf
    %1187 = vmax.xlane.f32.xlu0 %v1186
    %v1188 = vpop.xlane.xlu0 %1187
    %v1189 = vsel %vm850, %v1155, -inf
    %1190 = vmax.xlane.f32.xlu0 %v1189
    %v1191 = vpop.xlane.xlu0 %1190
    %v1192 = vsel %vm850, %v1157, -inf
    %1193 = vmax.xlane.f32.xlu0 %v1192
    %v1194 = vpop.xlane.xlu0 %1193
    %v1195 = vsub.f32 %v1130, %v1161
    %v1196 = vsub.f32 %v1132, %v1164
    %v1197 = vsub.f32 %v1135, %v1167
    %v1198 = vsub.f32 %v1137, %v1170
    %v1199 = vsub.f32 %v1140, %v1173
    %v1200 = vsub.f32 %v1142, %v1176
    %v1201 = vsub.f32 %v1145, %v1179
    %v1202 = vsub.f32 %v1147, %v1182
    %v1203 = vsub.f32 %v1150, %v1185
    %v1204 = vsub.f32 %v1152, %v1188
    %v1205 = vsub.f32 %v1155, %v1191
    %v1206 = vsub.f32 %v1157, %v1194
    %v1207 = vmul.f32 %v1195, 1.442695
    %v1208 = vpow.pop %v1207
    %v1209 = vmul.f32 %v1196, 1.442695
    %v1210 = vpow.pop %v1209
    %v1211 = vmul.f32 %v1197, 1.442695
    %v1212 = vpow.pop %v1211
    %v1213 = vmul.f32 %v1198, 1.442695
    %v1214 = vpow.pop %v1213
    %v1215 = vmul.f32 %v1199, 1.442695
    %v1216 = vpow.pop %v1215
    %v1217 = vmul.f32 %v1200, 1.442695
    %v1218 = vpow.pop %v1217
    %v1219 = vmul.f32 %v1201, 1.442695
    %v1220 = vpow.pop %v1219
    %v1221 = vmul.f32 %v1202, 1.442695
    %v1222 = vpow.pop %v1221
    %v1223 = vmul.f32 %v1203, 1.442695
    %v1224 = vpow.pop %v1223
    %v1225 = vmul.f32 %v1204, 1.442695
    %v1226 = vpow.pop %v1225
    %v1227 = vmul.f32 %v1205, 1.442695
    %v1228 = vpow.pop %v1227
    %v1229 = vmul.f32 %v1206, 1.442695
    %v1230 = vpow.pop %v1229
    %v1231 = vsel %vm850, %v1208, 0.0
    %1232 = vadd.xlane.f32.xlu0 %v1231
    %v1233 = vpop.xlane.xlu0 %1232
    %v1234 = vsel %vm850, %v1210, 0.0
    %1235 = vadd.xlane.f32.xlu0 %v1234
    %v1236 = vpop.xlane.xlu0 %1235
    %v1237 = vsel %vm850, %v1212, 0.0
    %1238 = vadd.xlane.f32.xlu0 %v1237
    %v1239 = vpop.xlane.xlu0 %1238
    %v1240 = vsel %vm850, %v1214, 0.0
    %1241 = vadd.xlane.f32.xlu0 %v1240
    %v1242 = vpop.xlane.xlu0 %1241
    %v1243 = vsel %vm850, %v1216, 0.0
    %1244 = vadd.xlane.f32.xlu0 %v1243
    %v1245 = vpop.xlane.xlu0 %1244
    %v1246 = vsel %vm850, %v1218, 0.0
    %1247 = vadd.xlane.f32.xlu0 %v1246
    %v1248 = vpop.xlane.xlu0 %1247
    %v1249 = vsel %vm850, %v1220, 0.0
    %1250 = vadd.xlane.f32.xlu0 %v1249
    %v1251 = vpop.xlane.xlu0 %1250
    %v1252 = vsel %vm850, %v1222, 0.0
    %1253 = vadd.xlane.f32.xlu0 %v1252
    %v1254 = vpop.xlane.xlu0 %1253
    %v1255 = vsel %vm850, %v1224, 0.0
    %1256 = vadd.xlane.f32.xlu0 %v1255
    %v1257 = vpop.xlane.xlu0 %1256
    %v1258 = vsel %vm850, %v1226, 0.0
    %1259 = vadd.xlane.f32.xlu0 %v1258
    %v1260 = vpop.xlane.xlu0 %1259
    %v1261 = vsel %vm850, %v1228, 0.0
    %1262 = vadd.xlane.f32.xlu0 %v1261
    %v1263 = vpop.xlane.xlu0 %1262
    %v1264 = vsel %vm850, %v1230, 0.0
    %1265 = vadd.xlane.f32.xlu0 %v1264
    %v1266 = vpop.xlane.xlu0 %1265
    %v1267 = vrcp.pop %v1233
    %v1268 = vrcp.pop %v1236
    %v1269 = vrcp.pop %v1239
    %v1270 = vrcp.pop %v1242
    %v1271 = vrcp.pop %v1245
    %v1272 = vrcp.pop %v1248
    %v1273 = vrcp.pop %v1251
    %v1274 = vrcp.pop %v1254
    %v1275 = vrcp.pop %v1257
    %v1276 = vrcp.pop %v1260
    %v1277 = vrcp.pop %v1263
    %v1278 = vrcp.pop %v1266
    %v1279 = vmul.f32 %v1208, %v1267
    %v1280 = vmul.f32 %v1210, %v1268
    %v1281 = vmul.f32 %v1212, %v1269
    %v1282 = vmul.f32 %v1214, %v1270
    %v1283 = vmul.f32 %v1216, %v1271
    %v1284 = vmul.f32 %v1218, %v1272
    %v1285 = vmul.f32 %v1220, %v1273
    %v1286 = vmul.f32 %v1222, %v1274
    %v1287 = vmul.f32 %v1224, %v1275
    %v1288 = vmul.f32 %v1226, %v1276
    %v1289 = vmul.f32 %v1228, %v1277
    %v1290 = vmul.f32 %v1230, %v1278
    %v1291 = vpack.c.bf16 %v1280, %v1279
    %v1292 = vpack.c.bf16 %v1282, %v1281
    %v1293 = vpack.c.bf16 %v1284, %v1283
    %v1294 = vpack.c.bf16 %v1286, %v1285
    %v1295 = vpack.c.bf16 %v1288, %v1287
    %v1296 = vpack.c.bf16 %v1290, %v1289
    %1297 = vrot.lane.b32.xlu0 %v1005, 96
    %v1298 = vpop.permute.xlu0 %1297
    %1299 = vrot.lane.b32.xlu0 %v1006, 96
    %v1300 = vpop.permute.xlu0 %1299
    %1301 = vrot.lane.b32.xlu0 %v1007, 96
    %v1302 = vpop.permute.xlu0 %1301
    %1303 = vrot.lane.b32.xlu0 %v1008, 96
    %v1304 = vpop.permute.xlu0 %1303
    %v1310 = vsel %vm850, %v1291, 0
    %v1313 = vsel %vm850, %v1292, 0
    %v1316 = vsel %vm850, %v1293, 0
    %v1319 = vsel %vm850, %v1294, 0
    %v1322 = vsel %vm850, %v1295, 0
    %v1325 = vsel %vm850, %v1296, 0
    %1327 = vmatpush.bf16.msra.mxu0 0
    %1328 = vmatpush.bf16.msra.mxu0 0
    %1329 = vmatpush.bf16.msra.mxu0 0
    %1330 = vmatpush.bf16.msra.mxu0 0
    %1331 = vmatpush.bf16.msra.mxu0 %v1304
    %1332 = vmatpush.bf16.msra.mxu0 %v1302
    %1333 = vmatpush.bf16.msra.mxu0 %v1300
    %1334 = vmatpush.bf16.msra.mxu0 %v1298
    %1335 = vmatmul.bf16.gmra.mxu0 %v1310
    %v1336 = vpop.f32.mrf.mxu0
    %v1337 = vadd.f32 0.0, %v1336
    %v1338 = vpop.f32.mrf.mxu0
    %v1339 = vadd.f32 0.0, %v1338
    %1340 = vmatmul.bf16.gmra.mxu0 %v1313
    %v1341 = vpop.f32.mrf.mxu0
    %v1342 = vadd.f32 0.0, %v1341
    %v1343 = vpop.f32.mrf.mxu0
    %v1344 = vadd.f32 0.0, %v1343
    %1345 = vmatmul.bf16.gmra.mxu0 %v1316
    %v1346 = vpop.f32.mrf.mxu0
    %v1347 = vadd.f32 0.0, %v1346
    %v1348 = vpop.f32.mrf.mxu0
    %v1349 = vadd.f32 0.0, %v1348
    %1350 = vmatmul.bf16.gmra.mxu0 %v1319
    %v1351 = vpop.f32.mrf.mxu0
    %v1352 = vadd.f32 0.0, %v1351
    %v1353 = vpop.f32.mrf.mxu0
    %v1354 = vadd.f32 0.0, %v1353
    %1355 = vmatmul.bf16.gmra.mxu0 %v1322
    %v1356 = vpop.f32.mrf.mxu0
    %v1357 = vadd.f32 0.0, %v1356
    %v1358 = vpop.f32.mrf.mxu0
    %v1359 = vadd.f32 0.0, %v1358
    %1360 = vmatmul.bf16.gmra.mxu0 %v1325
    %v1361 = vpop.f32.mrf.mxu0
    %v1362 = vadd.f32 0.0, %v1361
    %v1363 = vpop.f32.mrf.mxu0
    %v1364 = vadd.f32 0.0, %v1363
    %1365 = vdwg.mxu0
    %1366 = vrot.lane.b32.xlu0 %v754, 64
    %v1367 = vpop.permute.xlu0 %1366
    %1368 = vrot.lane.b32.xlu0 %v755, 64
    %v1369 = vpop.permute.xlu0 %1368
    %1370 = vrot.lane.b32.xlu0 %v756, 64
    %v1371 = vpop.permute.xlu0 %1370
    %1372 = vrot.lane.b32.xlu0 %v757, 64
    %v1373 = vpop.permute.xlu0 %1372
    %1374 = vrot.lane.b32.xlu0 %v758, 64
    %v1375 = vpop.permute.xlu0 %1374
    %1376 = vrot.lane.b32.xlu0 %v759, 64
    %v1377 = vpop.permute.xlu0 %1376
    %1378 = vrot.lane.b32.xlu0 %v776, 64
    %v1379 = vpop.permute.xlu0 %1378
    %1380 = vrot.lane.b32.xlu0 %v777, 64
    %v1381 = vpop.permute.xlu0 %1380
    %1382 = vrot.lane.b32.xlu0 %v778, 64
    %v1383 = vpop.permute.xlu0 %1382
    %1384 = vrot.lane.b32.xlu0 %v779, 64
    %v1385 = vpop.permute.xlu0 %1384
    %v1387 = vsel %vm780, %v1367, 0
    %v1390 = vsel %vm780, %v1369, 0
    %v1393 = vsel %vm780, %v1371, 0
    %v1396 = vsel %vm780, %v1373, 0
    %v1399 = vsel %vm780, %v1375, 0
    %v1402 = vsel %vm780, %v1377, 0
    %v1405 = vsel %vm780, %v1379, 0
    %v1408 = vsel %vm780, %v1381, 0
    %v1411 = vsel %vm780, %v1383, 0
    %v1414 = vsel %vm780, %v1385, 0
    %1416 = vmatpush.bf16.xpose.msra.mxu0 0
    %1417 = vmatpush.bf16.xpose.msra.mxu0 0
    %1418 = vmatpush.bf16.xpose.msra.mxu0 0
    %1419 = vmatpush.bf16.xpose.msra.mxu0 0
    %1420 = vmatpush.bf16.xpose.msra.mxu0 %v1414
    %1421 = vmatpush.bf16.xpose.msra.mxu0 %v1411
    %1422 = vmatpush.bf16.xpose.msra.mxu0 %v1408
    %1423 = vmatpush.bf16.xpose.msra.mxu0 %v1405
    %1424 = vmatmul.bf16.gmra.mxu0 %v1387
    %v1425 = vpop.f32.mrf.mxu0
    %v1426 = vadd.f32 0.0, %v1425
    %v1427 = vpop.f32.mrf.mxu0
    %v1428 = vadd.f32 0.0, %v1427
    %1429 = vmatmul.bf16.gmra.mxu0 %v1390
    %v1430 = vpop.f32.mrf.mxu0
    %v1431 = vadd.f32 0.0, %v1430
    %v1432 = vpop.f32.mrf.mxu0
    %v1433 = vadd.f32 0.0, %v1432
    %1434 = vmatmul.bf16.gmra.mxu0 %v1393
    %v1435 = vpop.f32.mrf.mxu0
    %v1436 = vadd.f32 0.0, %v1435
    %v1437 = vpop.f32.mrf.mxu0
    %v1438 = vadd.f32 0.0, %v1437
    %1439 = vmatmul.bf16.gmra.mxu0 %v1396
    %v1440 = vpop.f32.mrf.mxu0
    %v1441 = vadd.f32 0.0, %v1440
    %v1442 = vpop.f32.mrf.mxu0
    %v1443 = vadd.f32 0.0, %v1442
    %1444 = vmatmul.bf16.gmra.mxu0 %v1399
    %v1445 = vpop.f32.mrf.mxu0
    %v1446 = vadd.f32 0.0, %v1445
    %v1447 = vpop.f32.mrf.mxu0
    %v1448 = vadd.f32 0.0, %v1447
    %1449 = vmatmul.bf16.gmra.mxu0 %v1402
    %v1450 = vpop.f32.mrf.mxu0
    %v1451 = vadd.f32 0.0, %v1450
    %v1452 = vpop.f32.mrf.mxu0
    %v1453 = vadd.f32 0.0, %v1452
    %1454 = vdwg.mxu0
    %v1455 = vsel %vm850, %v1426, -inf
    %1456 = vmax.xlane.f32.xlu0 %v1455
    %v1457 = vpop.xlane.xlu0 %1456
    %v1458 = vsel %vm850, %v1428, -inf
    %1459 = vmax.xlane.f32.xlu0 %v1458
    %v1460 = vpop.xlane.xlu0 %1459
    %v1461 = vsel %vm850, %v1431, -inf
    %1462 = vmax.xlane.f32.xlu0 %v1461
    %v1463 = vpop.xlane.xlu0 %1462
    %v1464 = vsel %vm850, %v1433, -inf
    %1465 = vmax.xlane.f32.xlu0 %v1464
    %v1466 = vpop.xlane.xlu0 %1465
    %v1467 = vsel %vm850, %v1436, -inf
    %1468 = vmax.xlane.f32.xlu0 %v1467
    %v1469 = vpop.xlane.xlu0 %1468
    %v1470 = vsel %vm850, %v1438, -inf
    %1471 = vmax.xlane.f32.xlu0 %v1470
    %v1472 = vpop.xlane.xlu0 %1471
    %v1473 = vsel %vm850, %v1441, -inf
    %1474 = vmax.xlane.f32.xlu0 %v1473
    %v1475 = vpop.xlane.xlu0 %1474
    %v1476 = vsel %vm850, %v1443, -inf
    %1477 = vmax.xlane.f32.xlu0 %v1476
    %v1478 = vpop.xlane.xlu0 %1477
    %v1479 = vsel %vm850, %v1446, -inf
    %1480 = vmax.xlane.f32.xlu0 %v1479
    %v1481 = vpop.xlane.xlu0 %1480
    %v1482 = vsel %vm850, %v1448, -inf
    %1483 = vmax.xlane.f32.xlu0 %v1482
    %v1484 = vpop.xlane.xlu0 %1483
    %v1485 = vsel %vm850, %v1451, -inf
    %1486 = vmax.xlane.f32.xlu0 %v1485
    %v1487 = vpop.xlane.xlu0 %1486
    %v1488 = vsel %vm850, %v1453, -inf
    %1489 = vmax.xlane.f32.xlu0 %v1488
    %v1490 = vpop.xlane.xlu0 %1489
    %v1491 = vsub.f32 %v1426, %v1457
    %v1492 = vsub.f32 %v1428, %v1460
    %v1493 = vsub.f32 %v1431, %v1463
    %v1494 = vsub.f32 %v1433, %v1466
    %v1495 = vsub.f32 %v1436, %v1469
    %v1496 = vsub.f32 %v1438, %v1472
    %v1497 = vsub.f32 %v1441, %v1475
    %v1498 = vsub.f32 %v1443, %v1478
    %v1499 = vsub.f32 %v1446, %v1481
    %v1500 = vsub.f32 %v1448, %v1484
    %v1501 = vsub.f32 %v1451, %v1487
    %v1502 = vsub.f32 %v1453, %v1490
    %v1503 = vmul.f32 %v1491, 1.442695
    %v1504 = vpow.pop %v1503
    %v1505 = vmul.f32 %v1492, 1.442695
    %v1506 = vpow.pop %v1505
    %v1507 = vmul.f32 %v1493, 1.442695
    %v1508 = vpow.pop %v1507
    %v1509 = vmul.f32 %v1494, 1.442695
    %v1510 = vpow.pop %v1509
    %v1511 = vmul.f32 %v1495, 1.442695
    %v1512 = vpow.pop %v1511
    %v1513 = vmul.f32 %v1496, 1.442695
    %v1514 = vpow.pop %v1513
    %v1515 = vmul.f32 %v1497, 1.442695
    %v1516 = vpow.pop %v1515
    %v1517 = vmul.f32 %v1498, 1.442695
    %v1518 = vpow.pop %v1517
    %v1519 = vmul.f32 %v1499, 1.442695
    %v1520 = vpow.pop %v1519
    %v1521 = vmul.f32 %v1500, 1.442695
    %v1522 = vpow.pop %v1521
    %v1523 = vmul.f32 %v1501, 1.442695
    %v1524 = vpow.pop %v1523
    %v1525 = vmul.f32 %v1502, 1.442695
    %v1526 = vpow.pop %v1525
    %v1527 = vsel %vm850, %v1504, 0.0
    %1528 = vadd.xlane.f32.xlu0 %v1527
    %v1529 = vpop.xlane.xlu0 %1528
    %v1530 = vsel %vm850, %v1506, 0.0
    %1531 = vadd.xlane.f32.xlu0 %v1530
    %v1532 = vpop.xlane.xlu0 %1531
    %v1533 = vsel %vm850, %v1508, 0.0
    %1534 = vadd.xlane.f32.xlu0 %v1533
    %v1535 = vpop.xlane.xlu0 %1534
    %v1536 = vsel %vm850, %v1510, 0.0
    %1537 = vadd.xlane.f32.xlu0 %v1536
    %v1538 = vpop.xlane.xlu0 %1537
    %v1539 = vsel %vm850, %v1512, 0.0
    %1540 = vadd.xlane.f32.xlu0 %v1539
    %v1541 = vpop.xlane.xlu0 %1540
    %v1542 = vsel %vm850, %v1514, 0.0
    %1543 = vadd.xlane.f32.xlu0 %v1542
    %v1544 = vpop.xlane.xlu0 %1543
    %v1545 = vsel %vm850, %v1516, 0.0
    %1546 = vadd.xlane.f32.xlu0 %v1545
    %v1547 = vpop.xlane.xlu0 %1546
    %v1548 = vsel %vm850, %v1518, 0.0
    %1549 = vadd.xlane.f32.xlu0 %v1548
    %v1550 = vpop.xlane.xlu0 %1549
    %v1551 = vsel %vm850, %v1520, 0.0
    %1552 = vadd.xlane.f32.xlu0 %v1551
    %v1553 = vpop.xlane.xlu0 %1552
    %v1554 = vsel %vm850, %v1522, 0.0
    %1555 = vadd.xlane.f32.xlu0 %v1554
    %v1556 = vpop.xlane.xlu0 %1555
    %v1557 = vsel %vm850, %v1524, 0.0
    %1558 = vadd.xlane.f32.xlu0 %v1557
    %v1559 = vpop.xlane.xlu0 %1558
    %v1560 = vsel %vm850, %v1526, 0.0
    %1561 = vadd.xlane.f32.xlu0 %v1560
    %v1562 = vpop.xlane.xlu0 %1561
    %v1563 = vrcp.pop %v1529
    %v1564 = vrcp.pop %v1532
    %v1565 = vrcp.pop %v1535
    %v1566 = vrcp.pop %v1538
    %v1567 = vrcp.pop %v1541
    %v1568 = vrcp.pop %v1544
    %v1569 = vrcp.pop %v1547
    %v1570 = vrcp.pop %v1550
    %v1571 = vrcp.pop %v1553
    %v1572 = vrcp.pop %v1556
    %v1573 = vrcp.pop %v1559
    %v1574 = vrcp.pop %v1562
    %v1575 = vmul.f32 %v1504, %v1563
    %v1576 = vmul.f32 %v1506, %v1564
    %v1577 = vmul.f32 %v1508, %v1565
    %v1578 = vmul.f32 %v1510, %v1566
    %v1579 = vmul.f32 %v1512, %v1567
    %v1580 = vmul.f32 %v1514, %v1568
    %v1581 = vmul.f32 %v1516, %v1569
    %v1582 = vmul.f32 %v1518, %v1570
    %v1583 = vmul.f32 %v1520, %v1571
    %v1584 = vmul.f32 %v1522, %v1572
    %v1585 = vmul.f32 %v1524, %v1573
    %v1586 = vmul.f32 %v1526, %v1574
    %v1587 = vpack.c.bf16 %v1576, %v1575
    %v1588 = vpack.c.bf16 %v1578, %v1577
    %v1589 = vpack.c.bf16 %v1580, %v1579
    %v1590 = vpack.c.bf16 %v1582, %v1581
    %v1591 = vpack.c.bf16 %v1584, %v1583
    %v1592 = vpack.c.bf16 %v1586, %v1585
    %1593 = vrot.lane.b32.xlu0 %v1005, 64
    %v1594 = vpop.permute.xlu0 %1593
    %1595 = vrot.lane.b32.xlu0 %v1006, 64
    %v1596 = vpop.permute.xlu0 %1595
    %1597 = vrot.lane.b32.xlu0 %v1007, 64
    %v1598 = vpop.permute.xlu0 %1597
    %1599 = vrot.lane.b32.xlu0 %v1008, 64
    %v1600 = vpop.permute.xlu0 %1599
    %v1606 = vsel %vm850, %v1587, 0
    %v1609 = vsel %vm850, %v1588, 0
    %v1612 = vsel %vm850, %v1589, 0
    %v1615 = vsel %vm850, %v1590, 0
    %v1618 = vsel %vm850, %v1591, 0
    %v1621 = vsel %vm850, %v1592, 0
    %1623 = vmatpush.bf16.msra.mxu0 0
    %1624 = vmatpush.bf16.msra.mxu0 0
    %1625 = vmatpush.bf16.msra.mxu0 0
    %1626 = vmatpush.bf16.msra.mxu0 0
    %1627 = vmatpush.bf16.msra.mxu0 %v1600
    %1628 = vmatpush.bf16.msra.mxu0 %v1598
    %1629 = vmatpush.bf16.msra.mxu0 %v1596
    %1630 = vmatpush.bf16.msra.mxu0 %v1594
    %1631 = vmatmul.bf16.gmra.mxu0 %v1606
    %v1632 = vpop.f32.mrf.mxu0
    %v1633 = vadd.f32 0.0, %v1632
    %v1634 = vpop.f32.mrf.mxu0
    %v1635 = vadd.f32 0.0, %v1634
    %1636 = vmatmul.bf16.gmra.mxu0 %v1609
    %v1637 = vpop.f32.mrf.mxu0
    %v1638 = vadd.f32 0.0, %v1637
    %v1639 = vpop.f32.mrf.mxu0
    %v1640 = vadd.f32 0.0, %v1639
    %1641 = vmatmul.bf16.gmra.mxu0 %v1612
    %v1642 = vpop.f32.mrf.mxu0
    %v1643 = vadd.f32 0.0, %v1642
    %v1644 = vpop.f32.mrf.mxu0
    %v1645 = vadd.f32 0.0, %v1644
    %1646 = vmatmul.bf16.gmra.mxu0 %v1615
    %v1647 = vpop.f32.mrf.mxu0
    %v1648 = vadd.f32 0.0, %v1647
    %v1649 = vpop.f32.mrf.mxu0
    %v1650 = vadd.f32 0.0, %v1649
    %1651 = vmatmul.bf16.gmra.mxu0 %v1618
    %v1652 = vpop.f32.mrf.mxu0
    %v1653 = vadd.f32 0.0, %v1652
    %v1654 = vpop.f32.mrf.mxu0
    %v1655 = vadd.f32 0.0, %v1654
    %1656 = vmatmul.bf16.gmra.mxu0 %v1621
    %v1657 = vpop.f32.mrf.mxu0
    %v1658 = vadd.f32 0.0, %v1657
    %v1659 = vpop.f32.mrf.mxu0
    %v1660 = vadd.f32 0.0, %v1659
    %1661 = vdwg.mxu0
    %1662 = vrot.lane.b32.xlu0 %v754, 32
    %v1663 = vpop.permute.xlu0 %1662
    %1664 = vrot.lane.b32.xlu0 %v755, 32
    %v1665 = vpop.permute.xlu0 %1664
    %1666 = vrot.lane.b32.xlu0 %v756, 32
    %v1667 = vpop.permute.xlu0 %1666
    %1668 = vrot.lane.b32.xlu0 %v757, 32
    %v1669 = vpop.permute.xlu0 %1668
    %1670 = vrot.lane.b32.xlu0 %v758, 32
    %v1671 = vpop.permute.xlu0 %1670
    %1672 = vrot.lane.b32.xlu0 %v759, 32
    %v1673 = vpop.permute.xlu0 %1672
    %1674 = vrot.lane.b32.xlu0 %v776, 32
    %v1675 = vpop.permute.xlu0 %1674
    %1676 = vrot.lane.b32.xlu0 %v777, 32
    %v1677 = vpop.permute.xlu0 %1676
    %1678 = vrot.lane.b32.xlu0 %v778, 32
    %v1679 = vpop.permute.xlu0 %1678
    %1680 = vrot.lane.b32.xlu0 %v779, 32
    %v1681 = vpop.permute.xlu0 %1680
    %v1683 = vsel %vm780, %v1663, 0
    %v1686 = vsel %vm780, %v1665, 0
    %v1689 = vsel %vm780, %v1667, 0
    %v1692 = vsel %vm780, %v1669, 0
    %v1695 = vsel %vm780, %v1671, 0
    %v1698 = vsel %vm780, %v1673, 0
    %v1701 = vsel %vm780, %v1675, 0
    %v1704 = vsel %vm780, %v1677, 0
    %v1707 = vsel %vm780, %v1679, 0
    %v1710 = vsel %vm780, %v1681, 0
    %1712 = vmatpush.bf16.xpose.msra.mxu0 0
    %1713 = vmatpush.bf16.xpose.msra.mxu0 0
    %1714 = vmatpush.bf16.xpose.msra.mxu0 0
    %1715 = vmatpush.bf16.xpose.msra.mxu0 0
    %1716 = vmatpush.bf16.xpose.msra.mxu0 %v1710
    %1717 = vmatpush.bf16.xpose.msra.mxu0 %v1707
    %1718 = vmatpush.bf16.xpose.msra.mxu0 %v1704
    %1719 = vmatpush.bf16.xpose.msra.mxu0 %v1701
    %1720 = vmatmul.bf16.gmra.mxu0 %v1683
    %v1721 = vpop.f32.mrf.mxu0
    %v1722 = vadd.f32 0.0, %v1721
    %v1723 = vpop.f32.mrf.mxu0
    %v1724 = vadd.f32 0.0, %v1723
    %1725 = vmatmul.bf16.gmra.mxu0 %v1686
    %v1726 = vpop.f32.mrf.mxu0
    %v1727 = vadd.f32 0.0, %v1726
    %v1728 = vpop.f32.mrf.mxu0
    %v1729 = vadd.f32 0.0, %v1728
    %1730 = vmatmul.bf16.gmra.mxu0 %v1689
    %v1731 = vpop.f32.mrf.mxu0
    %v1732 = vadd.f32 0.0, %v1731
    %v1733 = vpop.f32.mrf.mxu0
    %v1734 = vadd.f32 0.0, %v1733
    %1735 = vmatmul.bf16.gmra.mxu0 %v1692
    %v1736 = vpop.f32.mrf.mxu0
    %v1737 = vadd.f32 0.0, %v1736
    %v1738 = vpop.f32.mrf.mxu0
    %v1739 = vadd.f32 0.0, %v1738
    %1740 = vmatmul.bf16.gmra.mxu0 %v1695
    %v1741 = vpop.f32.mrf.mxu0
    %v1742 = vadd.f32 0.0, %v1741
    %v1743 = vpop.f32.mrf.mxu0
    %v1744 = vadd.f32 0.0, %v1743
    %1745 = vmatmul.bf16.gmra.mxu0 %v1698
    %v1746 = vpop.f32.mrf.mxu0
    %v1747 = vadd.f32 0.0, %v1746
    %v1748 = vpop.f32.mrf.mxu0
    %v1749 = vadd.f32 0.0, %v1748
    %1750 = vdwg.mxu0
    %v1751 = vsel %vm850, %v1722, -inf
    %1752 = vmax.xlane.f32.xlu0 %v1751
    %v1753 = vpop.xlane.xlu0 %1752
    %v1754 = vsel %vm850, %v1724, -inf
    %1755 = vmax.xlane.f32.xlu0 %v1754
    %v1756 = vpop.xlane.xlu0 %1755
    %v1757 = vsel %vm850, %v1727, -inf
    %1758 = vmax.xlane.f32.xlu0 %v1757
    %v1759 = vpop.xlane.xlu0 %1758
    %v1760 = vsel %vm850, %v1729, -inf
    %1761 = vmax.xlane.f32.xlu0 %v1760
    %v1762 = vpop.xlane.xlu0 %1761
    %v1763 = vsel %vm850, %v1732, -inf
    %1764 = vmax.xlane.f32.xlu0 %v1763
    %v1765 = vpop.xlane.xlu0 %1764
    %v1766 = vsel %vm850, %v1734, -inf
    %1767 = vmax.xlane.f32.xlu0 %v1766
    %v1768 = vpop.xlane.xlu0 %1767
    %v1769 = vsel %vm850, %v1737, -inf
    %1770 = vmax.xlane.f32.xlu0 %v1769
    %v1771 = vpop.xlane.xlu0 %1770
    %v1772 = vsel %vm850, %v1739, -inf
    %1773 = vmax.xlane.f32.xlu0 %v1772
    %v1774 = vpop.xlane.xlu0 %1773
    %v1775 = vsel %vm850, %v1742, -inf
    %1776 = vmax.xlane.f32.xlu0 %v1775
    %v1777 = vpop.xlane.xlu0 %1776
    %v1778 = vsel %vm850, %v1744, -inf
    %1779 = vmax.xlane.f32.xlu0 %v1778
    %v1780 = vpop.xlane.xlu0 %1779
    %v1781 = vsel %vm850, %v1747, -inf
    %1782 = vmax.xlane.f32.xlu0 %v1781
    %v1783 = vpop.xlane.xlu0 %1782
    %v1784 = vsel %vm850, %v1749, -inf
    %1785 = vmax.xlane.f32.xlu0 %v1784
    %v1786 = vpop.xlane.xlu0 %1785
    %v1787 = vsub.f32 %v1722, %v1753
    %v1788 = vsub.f32 %v1724, %v1756
    %v1789 = vsub.f32 %v1727, %v1759
    %v1790 = vsub.f32 %v1729, %v1762
    %v1791 = vsub.f32 %v1732, %v1765
    %v1792 = vsub.f32 %v1734, %v1768
    %v1793 = vsub.f32 %v1737, %v1771
    %v1794 = vsub.f32 %v1739, %v1774
    %v1795 = vsub.f32 %v1742, %v1777
    %v1796 = vsub.f32 %v1744, %v1780
    %v1797 = vsub.f32 %v1747, %v1783
    %v1798 = vsub.f32 %v1749, %v1786
    %v1799 = vmul.f32 %v1787, 1.442695
    %v1800 = vpow.pop %v1799
    %v1801 = vmul.f32 %v1788, 1.442695
    %v1802 = vpow.pop %v1801
    %v1803 = vmul.f32 %v1789, 1.442695
    %v1804 = vpow.pop %v1803
    %v1805 = vmul.f32 %v1790, 1.442695
    %v1806 = vpow.pop %v1805
    %v1807 = vmul.f32 %v1791, 1.442695
    %v1808 = vpow.pop %v1807
    %v1809 = vmul.f32 %v1792, 1.442695
    %v1810 = vpow.pop %v1809
    %v1811 = vmul.f32 %v1793, 1.442695
    %v1812 = vpow.pop %v1811
    %v1813 = vmul.f32 %v1794, 1.442695
    %v1814 = vpow.pop %v1813
    %v1815 = vmul.f32 %v1795, 1.442695
    %v1816 = vpow.pop %v1815
    %v1817 = vmul.f32 %v1796, 1.442695
    %v1818 = vpow.pop %v1817
    %v1819 = vmul.f32 %v1797, 1.442695
    %v1820 = vpow.pop %v1819
    %v1821 = vmul.f32 %v1798, 1.442695
    %v1822 = vpow.pop %v1821
    %v1823 = vsel %vm850, %v1800, 0.0
    %1824 = vadd.xlane.f32.xlu0 %v1823
    %v1825 = vpop.xlane.xlu0 %1824
    %v1826 = vsel %vm850, %v1802, 0.0
    %1827 = vadd.xlane.f32.xlu0 %v1826
    %v1828 = vpop.xlane.xlu0 %1827
    %v1829 = vsel %vm850, %v1804, 0.0
    %1830 = vadd.xlane.f32.xlu0 %v1829
    %v1831 = vpop.xlane.xlu0 %1830
    %v1832 = vsel %vm850, %v1806, 0.0
    %1833 = vadd.xlane.f32.xlu0 %v1832
    %v1834 = vpop.xlane.xlu0 %1833
    %v1835 = vsel %vm850, %v1808, 0.0
    %1836 = vadd.xlane.f32.xlu0 %v1835
    %v1837 = vpop.xlane.xlu0 %1836
    %v1838 = vsel %vm850, %v1810, 0.0
    %1839 = vadd.xlane.f32.xlu0 %v1838
    %v1840 = vpop.xlane.xlu0 %1839
    %v1841 = vsel %vm850, %v1812, 0.0
    %1842 = vadd.xlane.f32.xlu0 %v1841
    %v1843 = vpop.xlane.xlu0 %1842
    %v1844 = vsel %vm850, %v1814, 0.0
    %1845 = vadd.xlane.f32.xlu0 %v1844
    %v1846 = vpop.xlane.xlu0 %1845
    %v1847 = vsel %vm850, %v1816, 0.0
    %1848 = vadd.xlane.f32.xlu0 %v1847
    %v1849 = vpop.xlane.xlu0 %1848
    %v1850 = vsel %vm850, %v1818, 0.0
    %1851 = vadd.xlane.f32.xlu0 %v1850
    %v1852 = vpop.xlane.xlu0 %1851
    %v1853 = vsel %vm850, %v1820, 0.0
    %1854 = vadd.xlane.f32.xlu0 %v1853
    %v1855 = vpop.xlane.xlu0 %1854
    %v1856 = vsel %vm850, %v1822, 0.0
    %1857 = vadd.xlane.f32.xlu0 %v1856
    %v1858 = vpop.xlane.xlu0 %1857
    %v1859 = vrcp.pop %v1825
    %v1860 = vrcp.pop %v1828
    %v1861 = vrcp.pop %v1831
    %v1862 = vrcp.pop %v1834
    %v1863 = vrcp.pop %v1837
    %v1864 = vrcp.pop %v1840
    %v1865 = vrcp.pop %v1843
    %v1866 = vrcp.pop %v1846
    %v1867 = vrcp.pop %v1849
    %v1868 = vrcp.pop %v1852
    %v1869 = vrcp.pop %v1855
    %v1870 = vrcp.pop %v1858
    %v1871 = vmul.f32 %v1800, %v1859
    %v1872 = vmul.f32 %v1802, %v1860
    %v1873 = vmul.f32 %v1804, %v1861
    %v1874 = vmul.f32 %v1806, %v1862
    %v1875 = vmul.f32 %v1808, %v1863
    %v1876 = vmul.f32 %v1810, %v1864
    %v1877 = vmul.f32 %v1812, %v1865
    %v1878 = vmul.f32 %v1814, %v1866
    %v1879 = vmul.f32 %v1816, %v1867
    %v1880 = vmul.f32 %v1818, %v1868
    %v1881 = vmul.f32 %v1820, %v1869
    %v1882 = vmul.f32 %v1822, %v1870
    %v1883 = vpack.c.bf16 %v1872, %v1871
    %v1884 = vpack.c.bf16 %v1874, %v1873
    %v1885 = vpack.c.bf16 %v1876, %v1875
    %v1886 = vpack.c.bf16 %v1878, %v1877
    %v1887 = vpack.c.bf16 %v1880, %v1879
    %v1888 = vpack.c.bf16 %v1882, %v1881
    %1889 = vrot.lane.b32.xlu0 %v1005, 32
    %v1890 = vpop.permute.xlu0 %1889
    %1891 = vrot.lane.b32.xlu0 %v1006, 32
    %v1892 = vpop.permute.xlu0 %1891
    %1893 = vrot.lane.b32.xlu0 %v1007, 32
    %v1894 = vpop.permute.xlu0 %1893
    %1895 = vrot.lane.b32.xlu0 %v1008, 32
    %v1896 = vpop.permute.xlu0 %1895
    %v1902 = vsel %vm850, %v1883, 0
    %v1905 = vsel %vm850, %v1884, 0
    %v1908 = vsel %vm850, %v1885, 0
    %v1911 = vsel %vm850, %v1886, 0
    %v1914 = vsel %vm850, %v1887, 0
    %v1917 = vsel %vm850, %v1888, 0
    %1919 = vmatpush.bf16.msra.mxu0 0
    %1920 = vmatpush.bf16.msra.mxu0 0
    %1921 = vmatpush.bf16.msra.mxu0 0
    %1922 = vmatpush.bf16.msra.mxu0 0
    %1923 = vmatpush.bf16.msra.mxu0 %v1896
    %1924 = vmatpush.bf16.msra.mxu0 %v1894
    %1925 = vmatpush.bf16.msra.mxu0 %v1892
    %1926 = vmatpush.bf16.msra.mxu0 %v1890
    %1927 = vmatmul.bf16.gmra.mxu0 %v1902
    %v1928 = vpop.f32.mrf.mxu0
    %v1929 = vadd.f32 0.0, %v1928
    %v1930 = vpop.f32.mrf.mxu0
    %v1931 = vadd.f32 0.0, %v1930
    %1932 = vmatmul.bf16.gmra.mxu0 %v1905
    %v1933 = vpop.f32.mrf.mxu0
    %v1934 = vadd.f32 0.0, %v1933
    %v1935 = vpop.f32.mrf.mxu0
    %v1936 = vadd.f32 0.0, %v1935
    %1937 = vmatmul.bf16.gmra.mxu0 %v1908
    %v1938 = vpop.f32.mrf.mxu0
    %v1939 = vadd.f32 0.0, %v1938
    %v1940 = vpop.f32.mrf.mxu0
    %v1941 = vadd.f32 0.0, %v1940
    %1942 = vmatmul.bf16.gmra.mxu0 %v1911
    %v1943 = vpop.f32.mrf.mxu0
    %v1944 = vadd.f32 0.0, %v1943
    %v1945 = vpop.f32.mrf.mxu0
    %v1946 = vadd.f32 0.0, %v1945
    %1947 = vmatmul.bf16.gmra.mxu0 %v1914
    %v1948 = vpop.f32.mrf.mxu0
    %v1949 = vadd.f32 0.0, %v1948
    %v1950 = vpop.f32.mrf.mxu0
    %v1951 = vadd.f32 0.0, %v1950
    %1952 = vmatmul.bf16.gmra.mxu0 %v1917
    %v1953 = vpop.f32.mrf.mxu0
    %v1954 = vadd.f32 0.0, %v1953
    %v1955 = vpop.f32.mrf.mxu0
    %v1956 = vadd.f32 0.0, %v1955
    %1957 = vdwg.mxu0
    %1970 = vrot.lane.b32.xlu0 %v1337, 32
    %v1971 = vpop.permute.xlu0 %1970
    %1972 = vrot.lane.b32.xlu0 %v1339, 32
    %v1973 = vpop.permute.xlu0 %1972
    %1974 = vrot.lane.b32.xlu0 %v1342, 32
    %v1975 = vpop.permute.xlu0 %1974
    %1976 = vrot.lane.b32.xlu0 %v1344, 32
    %v1977 = vpop.permute.xlu0 %1976
    %1978 = vrot.lane.b32.xlu0 %v1347, 32
    %v1979 = vpop.permute.xlu0 %1978
    %1980 = vrot.lane.b32.xlu0 %v1349, 32
    %v1981 = vpop.permute.xlu0 %1980
    %1982 = vrot.lane.b32.xlu0 %v1352, 32
    %v1983 = vpop.permute.xlu0 %1982
    %1984 = vrot.lane.b32.xlu0 %v1354, 32
    %v1985 = vpop.permute.xlu0 %1984
    %1986 = vrot.lane.b32.xlu0 %v1357, 32
    %v1987 = vpop.permute.xlu0 %1986
    %1988 = vrot.lane.b32.xlu0 %v1359, 32
    %v1989 = vpop.permute.xlu0 %1988
    %1990 = vrot.lane.b32.xlu0 %v1362, 32
    %v1991 = vpop.permute.xlu0 %1990
    %1992 = vrot.lane.b32.xlu0 %v1364, 32
    %v1993 = vpop.permute.xlu0 %1992
    %2018 = vrot.lane.b32.xlu0 %v1633, 64
    %v2019 = vpop.permute.xlu0 %2018
    %2020 = vrot.lane.b32.xlu0 %v1635, 64
    %v2021 = vpop.permute.xlu0 %2020
    %2022 = vrot.lane.b32.xlu0 %v1638, 64
    %v2023 = vpop.permute.xlu0 %2022
    %2024 = vrot.lane.b32.xlu0 %v1640, 64
    %v2025 = vpop.permute.xlu0 %2024
    %2026 = vrot.lane.b32.xlu0 %v1643, 64
    %v2027 = vpop.permute.xlu0 %2026
    %2028 = vrot.lane.b32.xlu0 %v1645, 64
    %v2029 = vpop.permute.xlu0 %2028
    %2030 = vrot.lane.b32.xlu0 %v1648, 64
    %v2031 = vpop.permute.xlu0 %2030
    %2032 = vrot.lane.b32.xlu0 %v1650, 64
    %v2033 = vpop.permute.xlu0 %2032
    %2034 = vrot.lane.b32.xlu0 %v1653, 64
    %v2035 = vpop.permute.xlu0 %2034
    %2036 = vrot.lane.b32.xlu0 %v1655, 64
    %v2037 = vpop.permute.xlu0 %2036
    %2038 = vrot.lane.b32.xlu0 %v1658, 64
    %v2039 = vpop.permute.xlu0 %2038
    %2040 = vrot.lane.b32.xlu0 %v1660, 64
    %v2041 = vpop.permute.xlu0 %2040
    %2066 = vrot.lane.b32.xlu0 %v1929, 96
    %v2067 = vpop.permute.xlu0 %2066
    %2068 = vrot.lane.b32.xlu0 %v1931, 96
    %v2069 = vpop.permute.xlu0 %2068
    %2070 = vrot.lane.b32.xlu0 %v1934, 96
    %v2071 = vpop.permute.xlu0 %2070
    %2072 = vrot.lane.b32.xlu0 %v1936, 96
    %v2073 = vpop.permute.xlu0 %2072
    %2074 = vrot.lane.b32.xlu0 %v1939, 96
    %v2075 = vpop.permute.xlu0 %2074
    %2076 = vrot.lane.b32.xlu0 %v1941, 96
    %v2077 = vpop.permute.xlu0 %2076
    %2078 = vrot.lane.b32.xlu0 %v1944, 96
    %v2079 = vpop.permute.xlu0 %2078
    %2080 = vrot.lane.b32.xlu0 %v1946, 96
    %v2081 = vpop.permute.xlu0 %2080
    %2082 = vrot.lane.b32.xlu0 %v1949, 96
    %v2083 = vpop.permute.xlu0 %2082
    %2084 = vrot.lane.b32.xlu0 %v1951, 96
    %v2085 = vpop.permute.xlu0 %2084
    %2086 = vrot.lane.b32.xlu0 %v1954, 96
    %v2087 = vpop.permute.xlu0 %2086
    %2088 = vrot.lane.b32.xlu0 %v1956, 96
    %v2089 = vpop.permute.xlu0 %2088
    %v2102 = vsel %vm780, %v1041, %v1971
    %v2103 = vsel %vm780, %v1043, %v1973
    %v2104 = vsel %vm780, %v1046, %v1975
    %v2105 = vsel %vm780, %v1048, %v1977
    %v2106 = vsel %vm780, %v1051, %v1979
    %v2107 = vsel %vm780, %v1053, %v1981
    %v2108 = vsel %vm780, %v1056, %v1983
    %v2109 = vsel %vm780, %v1058, %v1985
    %v2110 = vsel %vm780, %v1061, %v1987
    %v2111 = vsel %vm780, %v1063, %v1989
    %v2112 = vsel %vm780, %v1066, %v1991
    %v2113 = vsel %vm780, %v1068, %v1993
    %v2114 = vsel %vm850, %v2102, %v2019
    %v2115 = vsel %vm850, %v2103, %v2021
    %v2116 = vsel %vm850, %v2104, %v2023
    %v2117 = vsel %vm850, %v2105, %v2025
    %v2118 = vsel %vm850, %v2106, %v2027
    %v2119 = vsel %vm850, %v2107, %v2029
    %v2120 = vsel %vm850, %v2108, %v2031
    %v2121 = vsel %vm850, %v2109, %v2033
    %v2122 = vsel %vm850, %v2110, %v2035
    %v2123 = vsel %vm850, %v2111, %v2037
    %v2124 = vsel %vm850, %v2112, %v2039
    %v2125 = vsel %vm850, %v2113, %v2041
    %v2126 = vsel %vm579, %v2114, %v2067
    %v2127 = vsel %vm579, %v2115, %v2069
    %v2128 = vsel %vm579, %v2116, %v2071
    %v2129 = vsel %vm579, %v2117, %v2073
    %v2130 = vsel %vm579, %v2118, %v2075
    %v2131 = vsel %vm579, %v2119, %v2077
    %v2132 = vsel %vm579, %v2120, %v2079
    %v2133 = vsel %vm579, %v2121, %v2081
    %v2134 = vsel %vm579, %v2122, %v2083
    %v2135 = vsel %vm579, %v2123, %v2085
    %v2136 = vsel %vm579, %v2124, %v2087
    %v2137 = vsel %vm579, %v2125, %v2089
    %v2138 = vpack.c.bf16 %v2127, %v2126
    %v2139 = vpack.c.bf16 %v2129, %v2128
    %v2140 = vpack.c.bf16 %v2131, %v2130
    %v2141 = vpack.c.bf16 %v2133, %v2132
    %v2142 = vpack.c.bf16 %v2135, %v2134
    %v2143 = vpack.c.bf16 %v2137, %v2136
    %v2144 = vld [vmem:[%s6] sm:$0xf]
    %v2145 = vld [vmem:[%s6 + $0x4] sm:$0xf]
    %v2146 = vld [vmem:[%s6 + $0x8] sm:$0xf]
    %v2147 = vld [vmem:[%s6 + $0xc] sm:$0xf]
    %v2148 = vld [vmem:[%s6 + $0x10] sm:$0xf]
    %v2149 = vld [vmem:[%s6 + $0x14] sm:$0xf]
    %v2150 = vld [vmem:[%s6 + $0x18] sm:$0xf]
    %v2151 = vld [vmem:[%s6 + $0x1c] sm:$0xf]
    %v2152 = vld [vmem:[%s6 + $0x20] sm:$0xf]
    %v2153 = vld [vmem:[%s6 + $0x24] sm:$0xf]
    %v2154 = vld [vmem:[%s6 + $0x28] sm:$0xf]
    %v2155 = vld [vmem:[%s6 + $0x2c] sm:$0xf]
    %v2156 = vld [vmem:[%s6 + $0x30] sm:$0xf]
    %v2157 = vld [vmem:[%s6 + $0x34] sm:$0xf]
    %v2158 = vld [vmem:[%s6 + $0x38] sm:$0xf]
    %v2159 = vld [vmem:[%s6 + $0x3c] sm:$0xf]
    %v2160 = vld [vmem:[%s7] sm:$0x1]
    %v2162 = vperm.slane %v2160, 0
    %v2180 = vunpack.c.l.b16 %v2144
    %v2181 = vunpack.c.l.b16 %v2145
    %v2182 = vunpack.c.l.b16 %v2146
    %v2183 = vunpack.c.l.b16 %v2147
    %v2184 = vunpack.c.l.b16 %v2148
    %v2185 = vunpack.c.l.b16 %v2149
    %v2186 = vunpack.c.l.b16 %v2150
    %v2187 = vunpack.c.l.b16 %v2151
    %v2188 = vunpack.c.l.b16 %v2152
    %v2189 = vunpack.c.l.b16 %v2153
    %v2190 = vunpack.c.l.b16 %v2154
    %v2191 = vunpack.c.l.b16 %v2155
    %v2192 = vunpack.c.l.b16 %v2156
    %v2193 = vunpack.c.l.b16 %v2157
    %v2194 = vunpack.c.l.b16 %v2158
    %v2195 = vunpack.c.l.b16 %v2159
    %v2196 = vpack.c.b16 %v2181, %v2180
    %v2197 = vpack.c.b16 %v2183, %v2182
    %v2198 = vpack.c.b16 %v2185, %v2184
    %v2199 = vpack.c.b16 %v2187, %v2186
    %v2200 = vpack.c.b16 %v2189, %v2188
    %v2201 = vpack.c.b16 %v2191, %v2190
    %v2202 = vpack.c.b16 %v2193, %v2192
    %v2203 = vpack.c.b16 %v2195, %v2194
    %2212 = vmatpush.bf16.msra.mxu0 %v2203
    %2213 = vmatpush.bf16.msra.mxu0 %v2202
    %2214 = vmatpush.bf16.msra.mxu0 %v2201
    %2215 = vmatpush.bf16.msra.mxu0 %v2200
    %2216 = vmatpush.bf16.msra.mxu0 %v2199
    %2217 = vmatpush.bf16.msra.mxu0 %v2198
    %2218 = vmatpush.bf16.msra.mxu0 %v2197
    %2219 = vmatpush.bf16.msra.mxu0 %v2196
    %2220 = vmatmul.bf16.gmra.mxu0 %v2138
    %v2221 = vpop.f32.mrf.mxu0
    %v2222 = vadd.f32 %v2162, %v2221
    %v2223 = vpop.f32.mrf.mxu0
    %v2224 = vadd.f32 %v2162, %v2223
    %2225 = vmatmul.bf16.gmra.mxu0 %v2139
    %v2226 = vpop.f32.mrf.mxu0
    %v2227 = vadd.f32 %v2162, %v2226
    %v2228 = vpop.f32.mrf.mxu0
    %v2229 = vadd.f32 %v2162, %v2228
    %2230 = vmatmul.bf16.gmra.mxu0 %v2140
    %v2231 = vpop.f32.mrf.mxu0
    %v2232 = vadd.f32 %v2162, %v2231
    %v2233 = vpop.f32.mrf.mxu0
    %v2234 = vadd.f32 %v2162, %v2233
    %2235 = vmatmul.bf16.gmra.mxu0 %v2141
    %v2236 = vpop.f32.mrf.mxu0
    %v2237 = vadd.f32 %v2162, %v2236
    %v2238 = vpop.f32.mrf.mxu0
    %v2239 = vadd.f32 %v2162, %v2238
    %2240 = vmatmul.bf16.gmra.mxu0 %v2142
    %v2241 = vpop.f32.mrf.mxu0
    %v2242 = vadd.f32 %v2162, %v2241
    %v2243 = vpop.f32.mrf.mxu0
    %v2244 = vadd.f32 %v2162, %v2243
    %2245 = vmatmul.bf16.gmra.mxu0 %v2143
    %v2246 = vpop.f32.mrf.mxu0
    %v2247 = vadd.f32 %v2162, %v2246
    %v2248 = vpop.f32.mrf.mxu0
    %v2249 = vadd.f32 %v2162, %v2248
    %2250 = vdwg.mxu0
    %v2251 = vadd.f32 %v167, %v2222
    %v2252 = vadd.f32 %v169, %v2224
    %v2253 = vadd.f32 %v172, %v2227
    %v2254 = vadd.f32 %v174, %v2229
    %v2255 = vadd.f32 %v177, %v2232
    %v2256 = vadd.f32 %v179, %v2234
    %v2257 = vadd.f32 %v182, %v2237
    %v2258 = vadd.f32 %v184, %v2239
    %v2259 = vadd.f32 %v187, %v2242
    %v2260 = vadd.f32 %v189, %v2244
    %v2261 = vadd.f32 %v192, %v2247
    %v2262 = vadd.f32 %v194, %v2249
    %v2263 = vld [vmem:[%s8] sm:$0x1]
    %v2264 = vld [vmem:[%s9] sm:$0x1]
    %2265 = vadd.xlane.f32.xlu0 %v2251
    %v2266 = vpop.xlane.xlu0 %2265
    %2267 = vadd.xlane.f32.xlu0 %v2252
    %v2268 = vpop.xlane.xlu0 %2267
    %2269 = vadd.xlane.f32.xlu0 %v2253
    %v2270 = vpop.xlane.xlu0 %2269
    %2271 = vadd.xlane.f32.xlu0 %v2254
    %v2272 = vpop.xlane.xlu0 %2271
    %2273 = vadd.xlane.f32.xlu0 %v2255
    %v2274 = vpop.xlane.xlu0 %2273
    %2275 = vadd.xlane.f32.xlu0 %v2256
    %v2276 = vpop.xlane.xlu0 %2275
    %2277 = vadd.xlane.f32.xlu0 %v2257
    %v2278 = vpop.xlane.xlu0 %2277
    %2279 = vadd.xlane.f32.xlu0 %v2258
    %v2280 = vpop.xlane.xlu0 %2279
    %2281 = vadd.xlane.f32.xlu0 %v2259
    %v2282 = vpop.xlane.xlu0 %2281
    %2283 = vadd.xlane.f32.xlu0 %v2260
    %v2284 = vpop.xlane.xlu0 %2283
    %2285 = vadd.xlane.f32.xlu0 %v2261
    %v2286 = vpop.xlane.xlu0 %2285
    %2287 = vadd.xlane.f32.xlu0 %v2262
    %v2288 = vpop.xlane.xlu0 %2287
    %v2289 = vrcp.pop 128.0
    %v2290 = vmul.f32 128.0, %v2289
    %v2291 = vsub.f32 1.0, %v2290
    %v2292 = vmul.f32 %v2289, %v2291
    %v2293 = vadd.f32 %v2289, %v2292
    %vm2294 = vweird.f32 %v2289
    %v2295 = vsel %vm2294, %v2289, %v2293
    %v2296 = vmul.f32 %v2266, %v2295
    %v2297 = vmul.f32 %v2268, %v2295
    %v2298 = vmul.f32 %v2270, %v2295
    %v2299 = vmul.f32 %v2272, %v2295
    %v2300 = vmul.f32 %v2274, %v2295
    %v2301 = vmul.f32 %v2276, %v2295
    %v2302 = vmul.f32 %v2278, %v2295
    %v2303 = vmul.f32 %v2280, %v2295
    %v2304 = vmul.f32 %v2282, %v2295
    %v2305 = vmul.f32 %v2284, %v2295
    %v2306 = vmul.f32 %v2286, %v2295
    %v2307 = vmul.f32 %v2288, %v2295
    %v2308 = vsub.f32 %v2251, %v2296
    %v2309 = vsub.f32 %v2252, %v2297
    %v2310 = vsub.f32 %v2253, %v2298
    %v2311 = vsub.f32 %v2254, %v2299
    %v2312 = vsub.f32 %v2255, %v2300
    %v2313 = vsub.f32 %v2256, %v2301
    %v2314 = vsub.f32 %v2257, %v2302
    %v2315 = vsub.f32 %v2258, %v2303
    %v2316 = vsub.f32 %v2259, %v2304
    %v2317 = vsub.f32 %v2260, %v2305
    %v2318 = vsub.f32 %v2261, %v2306
    %v2319 = vsub.f32 %v2262, %v2307
    %v2320 = vmul.f32 %v2308, %v2308
    %v2321 = vmul.f32 %v2309, %v2309
    %v2322 = vmul.f32 %v2310, %v2310
    %v2323 = vmul.f32 %v2311, %v2311
    %v2324 = vmul.f32 %v2312, %v2312
    %v2325 = vmul.f32 %v2313, %v2313
    %v2326 = vmul.f32 %v2314, %v2314
    %v2327 = vmul.f32 %v2315, %v2315
    %v2328 = vmul.f32 %v2316, %v2316
    %v2329 = vmul.f32 %v2317, %v2317
    %v2330 = vmul.f32 %v2318, %v2318
    %v2331 = vmul.f32 %v2319, %v2319
    %2332 = vadd.xlane.f32.xlu0 %v2320
    %v2333 = vpop.xlane.xlu0 %2332
    %2334 = vadd.xlane.f32.xlu0 %v2321
    %v2335 = vpop.xlane.xlu0 %2334
    %2336 = vadd.xlane.f32.xlu0 %v2322
    %v2337 = vpop.xlane.xlu0 %2336
    %2338 = vadd.xlane.f32.xlu0 %v2323
    %v2339 = vpop.xlane.xlu0 %2338
    %2340 = vadd.xlane.f32.xlu0 %v2324
    %v2341 = vpop.xlane.xlu0 %2340
    %2342 = vadd.xlane.f32.xlu0 %v2325
    %v2343 = vpop.xlane.xlu0 %2342
    %2344 = vadd.xlane.f32.xlu0 %v2326
    %v2345 = vpop.xlane.xlu0 %2344
    %2346 = vadd.xlane.f32.xlu0 %v2327
    %v2347 = vpop.xlane.xlu0 %2346
    %2348 = vadd.xlane.f32.xlu0 %v2328
    %v2349 = vpop.xlane.xlu0 %2348
    %2350 = vadd.xlane.f32.xlu0 %v2329
    %v2351 = vpop.xlane.xlu0 %2350
    %2352 = vadd.xlane.f32.xlu0 %v2330
    %v2353 = vpop.xlane.xlu0 %2352
    %2354 = vadd.xlane.f32.xlu0 %v2331
    %v2355 = vpop.xlane.xlu0 %2354
    %v2356 = vmul.f32 %v2333, %v2295
    %v2357 = vmul.f32 %v2335, %v2295
    %v2358 = vmul.f32 %v2337, %v2295
    %v2359 = vmul.f32 %v2339, %v2295
    %v2360 = vmul.f32 %v2341, %v2295
    %v2361 = vmul.f32 %v2343, %v2295
    %v2362 = vmul.f32 %v2345, %v2295
    %v2363 = vmul.f32 %v2347, %v2295
    %v2364 = vmul.f32 %v2349, %v2295
    %v2365 = vmul.f32 %v2351, %v2295
    %v2366 = vmul.f32 %v2353, %v2295
    %v2367 = vmul.f32 %v2355, %v2295
    %v2368 = vadd.f32 %v2356, 1e-05
    %v2369 = vadd.f32 %v2357, 1e-05
    %v2370 = vadd.f32 %v2358, 1e-05
    %v2371 = vadd.f32 %v2359, 1e-05
    %v2372 = vadd.f32 %v2360, 1e-05
    %v2373 = vadd.f32 %v2361, 1e-05
    %v2374 = vadd.f32 %v2362, 1e-05
    %v2375 = vadd.f32 %v2363, 1e-05
    %v2376 = vadd.f32 %v2364, 1e-05
    %v2377 = vadd.f32 %v2365, 1e-05
    %v2378 = vadd.f32 %v2366, 1e-05
    %v2379 = vadd.f32 %v2367, 1e-05
    %v2380 = vrsqrt.pop %v2368
    %v2381 = vmul.f32 %v2380, %v2368
    %v2382 = vmul.f32 %v2381, %v2380
    %v2383 = vmul.f32 0.5, %v2382
    %v2384 = vsub.f32 1.5, %v2383
    %v2385 = vmul.f32 %v2380, %v2384
    %vm2386 = vweird.f32 %v2368
    %vm2387 = vweird.f32 %v2380
    %vm2388 = vmor %vm2386, %vm2387
    %v2389 = vsel %vm2388, %v2380, %v2385
    %v2390 = vrsqrt.pop %v2369
    %v2391 = vmul.f32 %v2390, %v2369
    %v2392 = vmul.f32 %v2391, %v2390
    %v2393 = vmul.f32 0.5, %v2392
    %v2394 = vsub.f32 1.5, %v2393
    %v2395 = vmul.f32 %v2390, %v2394
    %vm2396 = vweird.f32 %v2369
    %vm2397 = vweird.f32 %v2390
    %vm2398 = vmor %vm2396, %vm2397
    %v2399 = vsel %vm2398, %v2390, %v2395
    %v2400 = vrsqrt.pop %v2370
    %v2401 = vmul.f32 %v2400, %v2370
    %v2402 = vmul.f32 %v2401, %v2400
    %v2403 = vmul.f32 0.5, %v2402
    %v2404 = vsub.f32 1.5, %v2403
    %v2405 = vmul.f32 %v2400, %v2404
    %vm2406 = vweird.f32 %v2370
    %vm2407 = vweird.f32 %v2400
    %vm2408 = vmor %vm2406, %vm2407
    %v2409 = vsel %vm2408, %v2400, %v2405
    %v2410 = vrsqrt.pop %v2371
    %v2411 = vmul.f32 %v2410, %v2371
    %v2412 = vmul.f32 %v2411, %v2410
    %v2413 = vmul.f32 0.5, %v2412
    %v2414 = vsub.f32 1.5, %v2413
    %v2415 = vmul.f32 %v2410, %v2414
    %vm2416 = vweird.f32 %v2371
    %vm2417 = vweird.f32 %v2410
    %vm2418 = vmor %vm2416, %vm2417
    %v2419 = vsel %vm2418, %v2410, %v2415
    %v2420 = vrsqrt.pop %v2372
    %v2421 = vmul.f32 %v2420, %v2372
    %v2422 = vmul.f32 %v2421, %v2420
    %v2423 = vmul.f32 0.5, %v2422
    %v2424 = vsub.f32 1.5, %v2423
    %v2425 = vmul.f32 %v2420, %v2424
    %vm2426 = vweird.f32 %v2372
    %vm2427 = vweird.f32 %v2420
    %vm2428 = vmor %vm2426, %vm2427
    %v2429 = vsel %vm2428, %v2420, %v2425
    %v2430 = vrsqrt.pop %v2373
    %v2431 = vmul.f32 %v2430, %v2373
    %v2432 = vmul.f32 %v2431, %v2430
    %v2433 = vmul.f32 0.5, %v2432
    %v2434 = vsub.f32 1.5, %v2433
    %v2435 = vmul.f32 %v2430, %v2434
    %vm2436 = vweird.f32 %v2373
    %vm2437 = vweird.f32 %v2430
    %vm2438 = vmor %vm2436, %vm2437
    %v2439 = vsel %vm2438, %v2430, %v2435
    %v2440 = vrsqrt.pop %v2374
    %v2441 = vmul.f32 %v2440, %v2374
    %v2442 = vmul.f32 %v2441, %v2440
    %v2443 = vmul.f32 0.5, %v2442
    %v2444 = vsub.f32 1.5, %v2443
    %v2445 = vmul.f32 %v2440, %v2444
    %vm2446 = vweird.f32 %v2374
    %vm2447 = vweird.f32 %v2440
    %vm2448 = vmor %vm2446, %vm2447
    %v2449 = vsel %vm2448, %v2440, %v2445
    %v2450 = vrsqrt.pop %v2375
    %v2451 = vmul.f32 %v2450, %v2375
    %v2452 = vmul.f32 %v2451, %v2450
    %v2453 = vmul.f32 0.5, %v2452
    %v2454 = vsub.f32 1.5, %v2453
    %v2455 = vmul.f32 %v2450, %v2454
    %vm2456 = vweird.f32 %v2375
    %vm2457 = vweird.f32 %v2450
    %vm2458 = vmor %vm2456, %vm2457
    %v2459 = vsel %vm2458, %v2450, %v2455
    %v2460 = vrsqrt.pop %v2376
    %v2461 = vmul.f32 %v2460, %v2376
    %v2462 = vmul.f32 %v2461, %v2460
    %v2463 = vmul.f32 0.5, %v2462
    %v2464 = vsub.f32 1.5, %v2463
    %v2465 = vmul.f32 %v2460, %v2464
    %vm2466 = vweird.f32 %v2376
    %vm2467 = vweird.f32 %v2460
    %vm2468 = vmor %vm2466, %vm2467
    %v2469 = vsel %vm2468, %v2460, %v2465
    %v2470 = vrsqrt.pop %v2377
    %v2471 = vmul.f32 %v2470, %v2377
    %v2472 = vmul.f32 %v2471, %v2470
    %v2473 = vmul.f32 0.5, %v2472
    %v2474 = vsub.f32 1.5, %v2473
    %v2475 = vmul.f32 %v2470, %v2474
    %vm2476 = vweird.f32 %v2377
    %vm2477 = vweird.f32 %v2470
    %vm2478 = vmor %vm2476, %vm2477
    %v2479 = vsel %vm2478, %v2470, %v2475
    %v2480 = vrsqrt.pop %v2378
    %v2481 = vmul.f32 %v2480, %v2378
    %v2482 = vmul.f32 %v2481, %v2480
    %v2483 = vmul.f32 0.5, %v2482
    %v2484 = vsub.f32 1.5, %v2483
    %v2485 = vmul.f32 %v2480, %v2484
    %vm2486 = vweird.f32 %v2378
    %vm2487 = vweird.f32 %v2480
    %vm2488 = vmor %vm2486, %vm2487
    %v2489 = vsel %vm2488, %v2480, %v2485
    %v2490 = vrsqrt.pop %v2379
    %v2491 = vmul.f32 %v2490, %v2379
    %v2492 = vmul.f32 %v2491, %v2490
    %v2493 = vmul.f32 0.5, %v2492
    %v2494 = vsub.f32 1.5, %v2493
    %v2495 = vmul.f32 %v2490, %v2494
    %vm2496 = vweird.f32 %v2379
    %vm2497 = vweird.f32 %v2490
    %vm2498 = vmor %vm2496, %vm2497
    %v2499 = vsel %vm2498, %v2490, %v2495
    %v2500 = vmul.f32 %v2308, %v2389
    %v2501 = vmul.f32 %v2309, %v2399
    %v2502 = vmul.f32 %v2310, %v2409
    %v2503 = vmul.f32 %v2311, %v2419
    %v2504 = vmul.f32 %v2312, %v2429
    %v2505 = vmul.f32 %v2313, %v2439
    %v2506 = vmul.f32 %v2314, %v2449
    %v2507 = vmul.f32 %v2315, %v2459
    %v2508 = vmul.f32 %v2316, %v2469
    %v2509 = vmul.f32 %v2317, %v2479
    %v2510 = vmul.f32 %v2318, %v2489
    %v2511 = vmul.f32 %v2319, %v2499
    %v2513 = vperm.slane %v2263, 0
    %v2515 = vmul.f32 %v2500, %v2513
    %v2516 = vmul.f32 %v2501, %v2513
    %v2517 = vmul.f32 %v2502, %v2513
    %v2518 = vmul.f32 %v2503, %v2513
    %v2519 = vmul.f32 %v2504, %v2513
    %v2520 = vmul.f32 %v2505, %v2513
    %v2521 = vmul.f32 %v2506, %v2513
    %v2522 = vmul.f32 %v2507, %v2513
    %v2523 = vmul.f32 %v2508, %v2513
    %v2524 = vmul.f32 %v2509, %v2513
    %v2525 = vmul.f32 %v2510, %v2513
    %v2526 = vmul.f32 %v2511, %v2513
    %v2528 = vperm.slane %v2264, 0
    %v2530 = vadd.f32 %v2515, %v2528
    %v2531 = vadd.f32 %v2516, %v2528
    %v2532 = vadd.f32 %v2517, %v2528
    %v2533 = vadd.f32 %v2518, %v2528
    %v2534 = vadd.f32 %v2519, %v2528
    %v2535 = vadd.f32 %v2520, %v2528
    %v2536 = vadd.f32 %v2521, %v2528
    %v2537 = vadd.f32 %v2522, %v2528
    %v2538 = vadd.f32 %v2523, %v2528
    %v2539 = vadd.f32 %v2524, %v2528
    %v2540 = vadd.f32 %v2525, %v2528
    %v2541 = vadd.f32 %v2526, %v2528
    %v2542 = vpack.c.bf16 %v2531, %v2530
    %v2543 = vpack.c.bf16 %v2533, %v2532
    %v2544 = vpack.c.bf16 %v2535, %v2534
    %v2545 = vpack.c.bf16 %v2537, %v2536
    %v2546 = vpack.c.bf16 %v2539, %v2538
    %v2547 = vpack.c.bf16 %v2541, %v2540
    %v2548 = vld [vmem:[#allocation5] sm:$0xff]
    %v2549 = vld [vmem:[#allocation5 + $0x8] sm:$0xff]
    %v2550 = vld [vmem:[#allocation5 + $0x10] sm:$0xff]
    %v2551 = vld [vmem:[#allocation5 + $0x18] sm:$0xff]
    %v2552 = vld [vmem:[#allocation5 + $0x20] sm:$0xff]
    %v2553 = vld [vmem:[#allocation5 + $0x28] sm:$0xff]
    %v2554 = vld [vmem:[#allocation5 + $0x30] sm:$0xff]
    %v2555 = vld [vmem:[#allocation5 + $0x38] sm:$0xff]
    %v2556 = vld [vmem:[#allocation5 + $0x40] sm:$0xff]
    %v2557 = vld [vmem:[#allocation5 + $0x48] sm:$0xff]
    %v2558 = vld [vmem:[#allocation5 + $0x50] sm:$0xff]
    %v2559 = vld [vmem:[#allocation5 + $0x58] sm:$0xff]
    %v2560 = vld [vmem:[#allocation5 + $0x60] sm:$0xff]
    %v2561 = vld [vmem:[#allocation5 + $0x68] sm:$0xff]
    %v2562 = vld [vmem:[#allocation5 + $0x70] sm:$0xff]
    %v2563 = vld [vmem:[#allocation5 + $0x78] sm:$0xff]
    %v2564 = vld [vmem:[#allocation5 + $0x80] sm:$0xff]
    %v2565 = vld [vmem:[#allocation5 + $0x88] sm:$0xff]
    %v2566 = vld [vmem:[#allocation5 + $0x90] sm:$0xff]
    %v2567 = vld [vmem:[#allocation5 + $0x98] sm:$0xff]
    %v2568 = vld [vmem:[#allocation5 + $0xa0] sm:$0xff]
    %v2569 = vld [vmem:[#allocation5 + $0xa8] sm:$0xff]
    %v2570 = vld [vmem:[#allocation5 + $0xb0] sm:$0xff]
    %v2571 = vld [vmem:[#allocation5 + $0xb8] sm:$0xff]
    %v2572 = vld [vmem:[#allocation5 + $0xc0] sm:$0xff]
    %v2573 = vld [vmem:[#allocation5 + $0xc8] sm:$0xff]
    %v2574 = vld [vmem:[#allocation5 + $0xd0] sm:$0xff]
    %v2575 = vld [vmem:[#allocation5 + $0xd8] sm:$0xff]
    %v2576 = vld [vmem:[#allocation5 + $0xe0] sm:$0xff]
    %v2577 = vld [vmem:[#allocation5 + $0xe8] sm:$0xff]
    %v2578 = vld [vmem:[#allocation5 + $0xf0] sm:$0xff]
    %v2579 = vld [vmem:[#allocation5 + $0xf8] sm:$0xff]
    %v2580 = vld [vmem:[%s11] sm:$0xf]
    %v2582 = vperm.slane %v2580, 0
    %v2583 = vperm.slane %v2580, 1
    %v2584 = vperm.slane %v2580, 2
    %v2585 = vperm.slane %v2580, 3
    %v2622 = vunpack.c.l.b16 %v2548
    %v2623 = vunpack.c.h.b16 %v2548
    %v2624 = vunpack.c.l.b16 %v2549
    %v2625 = vunpack.c.h.b16 %v2549
    %v2626 = vunpack.c.l.b16 %v2550
    %v2627 = vunpack.c.h.b16 %v2550
    %v2628 = vunpack.c.l.b16 %v2551
    %v2629 = vunpack.c.h.b16 %v2551
    %v2630 = vunpack.c.l.b16 %v2552
    %v2631 = vunpack.c.h.b16 %v2552
    %v2632 = vunpack.c.l.b16 %v2553
    %v2633 = vunpack.c.h.b16 %v2553
    %v2634 = vunpack.c.l.b16 %v2554
    %v2635 = vunpack.c.h.b16 %v2554
    %v2636 = vunpack.c.l.b16 %v2555
    %v2637 = vunpack.c.h.b16 %v2555
    %v2638 = vunpack.c.l.b16 %v2556
    %v2639 = vunpack.c.h.b16 %v2556
    %v2640 = vunpack.c.l.b16 %v2557
    %v2641 = vunpack.c.h.b16 %v2557
    %v2642 = vunpack.c.l.b16 %v2558
    %v2643 = vunpack.c.h.b16 %v2558
    %v2644 = vunpack.c.l.b16 %v2559
    %v2645 = vunpack.c.h.b16 %v2559
    %v2646 = vunpack.c.l.b16 %v2560
    %v2647 = vunpack.c.h.b16 %v2560
    %v2648 = vunpack.c.l.b16 %v2561
    %v2649 = vunpack.c.h.b16 %v2561
    %v2650 = vunpack.c.l.b16 %v2562
    %v2651 = vunpack.c.h.b16 %v2562
    %v2652 = vunpack.c.l.b16 %v2563
    %v2653 = vunpack.c.h.b16 %v2563
    %v2654 = vunpack.c.l.b16 %v2564
    %v2655 = vunpack.c.h.b16 %v2564
    %v2656 = vunpack.c.l.b16 %v2565
    %v2657 = vunpack.c.h.b16 %v2565
    %v2658 = vunpack.c.l.b16 %v2566
    %v2659 = vunpack.c.h.b16 %v2566
    %v2660 = vunpack.c.l.b16 %v2567
    %v2661 = vunpack.c.h.b16 %v2567
    %v2662 = vunpack.c.l.b16 %v2568
    %v2663 = vunpack.c.h.b16 %v2568
    %v2664 = vunpack.c.l.b16 %v2569
    %v2665 = vunpack.c.h.b16 %v2569
    %v2666 = vunpack.c.l.b16 %v2570
    %v2667 = vunpack.c.h.b16 %v2570
    %v2668 = vunpack.c.l.b16 %v2571
    %v2669 = vunpack.c.h.b16 %v2571
    %v2670 = vunpack.c.l.b16 %v2572
    %v2671 = vunpack.c.h.b16 %v2572
    %v2672 = vunpack.c.l.b16 %v2573
    %v2673 = vunpack.c.h.b16 %v2573
    %v2674 = vunpack.c.l.b16 %v2574
    %v2675 = vunpack.c.h.b16 %v2574
    %v2676 = vunpack.c.l.b16 %v2575
    %v2677 = vunpack.c.h.b16 %v2575
    %v2678 = vunpack.c.l.b16 %v2576
    %v2679 = vunpack.c.h.b16 %v2576
    %v2680 = vunpack.c.l.b16 %v2577
    %v2681 = vunpack.c.h.b16 %v2577
    %v2682 = vunpack.c.l.b16 %v2578
    %v2683 = vunpack.c.h.b16 %v2578
    %v2684 = vunpack.c.l.b16 %v2579
    %v2685 = vunpack.c.h.b16 %v2579
    %v2686 = vpack.c.b16 %v2626, %v2622
    %v2687 = vpack.c.b16 %v2627, %v2623
    %v2688 = vpack.c.b16 %v2628, %v2624
    %v2689 = vpack.c.b16 %v2629, %v2625
    %v2690 = vpack.c.b16 %v2634, %v2630
    %v2691 = vpack.c.b16 %v2635, %v2631
    %v2692 = vpack.c.b16 %v2636, %v2632
    %v2693 = vpack.c.b16 %v2637, %v2633
    %v2694 = vpack.c.b16 %v2642, %v2638
    %v2695 = vpack.c.b16 %v2643, %v2639
    %v2696 = vpack.c.b16 %v2644, %v2640
    %v2697 = vpack.c.b16 %v2645, %v2641
    %v2698 = vpack.c.b16 %v2650, %v2646
    %v2699 = vpack.c.b16 %v2651, %v2647
    %v2700 = vpack.c.b16 %v2652, %v2648
    %v2701 = vpack.c.b16 %v2653, %v2649
    %v2702 = vpack.c.b16 %v2658, %v2654
    %v2703 = vpack.c.b16 %v2659, %v2655
    %v2704 = vpack.c.b16 %v2660, %v2656
    %v2705 = vpack.c.b16 %v2661, %v2657
    %v2706 = vpack.c.b16 %v2666, %v2662
    %v2707 = vpack.c.b16 %v2667, %v2663
    %v2708 = vpack.c.b16 %v2668, %v2664
    %v2709 = vpack.c.b16 %v2669, %v2665
    %v2710 = vpack.c.b16 %v2674, %v2670
    %v2711 = vpack.c.b16 %v2675, %v2671
    %v2712 = vpack.c.b16 %v2676, %v2672
    %v2713 = vpack.c.b16 %v2677, %v2673
    %v2714 = vpack.c.b16 %v2682, %v2678
    %v2715 = vpack.c.b16 %v2683, %v2679
    %v2716 = vpack.c.b16 %v2684, %v2680
    %v2717 = vpack.c.b16 %v2685, %v2681
    %2750 = vmatpush.bf16.msra.mxu0 %v2714
    %2751 = vmatpush.bf16.msra.mxu0 %v2710
    %2752 = vmatpush.bf16.msra.mxu0 %v2706
    %2753 = vmatpush.bf16.msra.mxu0 %v2702
    %2754 = vmatpush.bf16.msra.mxu0 %v2698
    %2755 = vmatpush.bf16.msra.mxu0 %v2694
    %2756 = vmatpush.bf16.msra.mxu0 %v2690
    %2757 = vmatpush.bf16.msra.mxu0 %v2686
    %2758 = vmatmul.bf16.gmra.mxu0 %v2542
    %v2759 = vpop.f32.mrf.mxu0
    %v2760 = vadd.f32 %v2582, %v2759
    %v2761 = vpop.f32.mrf.mxu0
    %v2762 = vadd.f32 %v2582, %v2761
    %2763 = vmatmul.bf16.gmra.mxu0 %v2543
    %v2764 = vpop.f32.mrf.mxu0
    %v2765 = vadd.f32 %v2582, %v2764
    %v2766 = vpop.f32.mrf.mxu0
    %v2767 = vadd.f32 %v2582, %v2766
    %2768 = vmatmul.bf16.gmra.mxu0 %v2544
    %v2769 = vpop.f32.mrf.mxu0
    %v2770 = vadd.f32 %v2582, %v2769
    %v2771 = vpop.f32.mrf.mxu0
    %v2772 = vadd.f32 %v2582, %v2771
    %2773 = vmatmul.bf16.gmra.mxu0 %v2545
    %v2774 = vpop.f32.mrf.mxu0
    %v2775 = vadd.f32 %v2582, %v2774
    %v2776 = vpop.f32.mrf.mxu0
    %v2777 = vadd.f32 %v2582, %v2776
    %2778 = vmatmul.bf16.gmra.mxu0 %v2546
    %v2779 = vpop.f32.mrf.mxu0
    %v2780 = vadd.f32 %v2582, %v2779
    %v2781 = vpop.f32.mrf.mxu0
    %v2782 = vadd.f32 %v2582, %v2781
    %2783 = vmatmul.bf16.gmra.mxu0 %v2547
    %v2784 = vpop.f32.mrf.mxu0
    %v2785 = vadd.f32 %v2582, %v2784
    %v2786 = vpop.f32.mrf.mxu0
    %v2787 = vadd.f32 %v2582, %v2786
    %2788 = vdwg.mxu0
    %2789 = vmatpush.bf16.msra.mxu0 %v2715
    %2790 = vmatpush.bf16.msra.mxu0 %v2711
    %2791 = vmatpush.bf16.msra.mxu0 %v2707
    %2792 = vmatpush.bf16.msra.mxu0 %v2703
    %2793 = vmatpush.bf16.msra.mxu0 %v2699
    %2794 = vmatpush.bf16.msra.mxu0 %v2695
    %2795 = vmatpush.bf16.msra.mxu0 %v2691
    %2796 = vmatpush.bf16.msra.mxu0 %v2687
    %2797 = vmatmul.bf16.gmra.mxu0 %v2542
    %v2798 = vpop.f32.mrf.mxu0
    %v2799 = vadd.f32 %v2583, %v2798
    %v2800 = vpop.f32.mrf.mxu0
    %v2801 = vadd.f32 %v2583, %v2800
    %2802 = vmatmul.bf16.gmra.mxu0 %v2543
    %v2803 = vpop.f32.mrf.mxu0
    %v2804 = vadd.f32 %v2583, %v2803
    %v2805 = vpop.f32.mrf.mxu0
    %v2806 = vadd.f32 %v2583, %v2805
    %2807 = vmatmul.bf16.gmra.mxu0 %v2544
    %v2808 = vpop.f32.mrf.mxu0
    %v2809 = vadd.f32 %v2583, %v2808
    %v2810 = vpop.f32.mrf.mxu0
    %v2811 = vadd.f32 %v2583, %v2810
    %2812 = vmatmul.bf16.gmra.mxu0 %v2545
    %v2813 = vpop.f32.mrf.mxu0
    %v2814 = vadd.f32 %v2583, %v2813
    %v2815 = vpop.f32.mrf.mxu0
    %v2816 = vadd.f32 %v2583, %v2815
    %2817 = vmatmul.bf16.gmra.mxu0 %v2546
    %v2818 = vpop.f32.mrf.mxu0
    %v2819 = vadd.f32 %v2583, %v2818
    %v2820 = vpop.f32.mrf.mxu0
    %v2821 = vadd.f32 %v2583, %v2820
    %2822 = vmatmul.bf16.gmra.mxu0 %v2547
    %v2823 = vpop.f32.mrf.mxu0
    %v2824 = vadd.f32 %v2583, %v2823
    %v2825 = vpop.f32.mrf.mxu0
    %v2826 = vadd.f32 %v2583, %v2825
    %2827 = vdwg.mxu0
    %2828 = vmatpush.bf16.msra.mxu0 %v2716
    %2829 = vmatpush.bf16.msra.mxu0 %v2712
    %2830 = vmatpush.bf16.msra.mxu0 %v2708
    %2831 = vmatpush.bf16.msra.mxu0 %v2704
    %2832 = vmatpush.bf16.msra.mxu0 %v2700
    %2833 = vmatpush.bf16.msra.mxu0 %v2696
    %2834 = vmatpush.bf16.msra.mxu0 %v2692
    %2835 = vmatpush.bf16.msra.mxu0 %v2688
    %2836 = vmatmul.bf16.gmra.mxu0 %v2542
    %v2837 = vpop.f32.mrf.mxu0
    %v2838 = vadd.f32 %v2584, %v2837
    %v2839 = vpop.f32.mrf.mxu0
    %v2840 = vadd.f32 %v2584, %v2839
    %2841 = vmatmul.bf16.gmra.mxu0 %v2543
    %v2842 = vpop.f32.mrf.mxu0
    %v2843 = vadd.f32 %v2584, %v2842
    %v2844 = vpop.f32.mrf.mxu0
    %v2845 = vadd.f32 %v2584, %v2844
    %2846 = vmatmul.bf16.gmra.mxu0 %v2544
    %v2847 = vpop.f32.mrf.mxu0
    %v2848 = vadd.f32 %v2584, %v2847
    %v2849 = vpop.f32.mrf.mxu0
    %v2850 = vadd.f32 %v2584, %v2849
    %2851 = vmatmul.bf16.gmra.mxu0 %v2545
    %v2852 = vpop.f32.mrf.mxu0
    %v2853 = vadd.f32 %v2584, %v2852
    %v2854 = vpop.f32.mrf.mxu0
    %v2855 = vadd.f32 %v2584, %v2854
    %2856 = vmatmul.bf16.gmra.mxu0 %v2546
    %v2857 = vpop.f32.mrf.mxu0
    %v2858 = vadd.f32 %v2584, %v2857
    %v2859 = vpop.f32.mrf.mxu0
    %v2860 = vadd.f32 %v2584, %v2859
    %2861 = vmatmul.bf16.gmra.mxu0 %v2547
    %v2862 = vpop.f32.mrf.mxu0
    %v2863 = vadd.f32 %v2584, %v2862
    %v2864 = vpop.f32.mrf.mxu0
    %v2865 = vadd.f32 %v2584, %v2864
    %2866 = vdwg.mxu0
    %2867 = vmatpush.bf16.msra.mxu0 %v2717
    %2868 = vmatpush.bf16.msra.mxu0 %v2713
    %2869 = vmatpush.bf16.msra.mxu0 %v2709
    %2870 = vmatpush.bf16.msra.mxu0 %v2705
    %2871 = vmatpush.bf16.msra.mxu0 %v2701
    %2872 = vmatpush.bf16.msra.mxu0 %v2697
    %2873 = vmatpush.bf16.msra.mxu0 %v2693
    %2874 = vmatpush.bf16.msra.mxu0 %v2689
    %2875 = vmatmul.bf16.gmra.mxu0 %v2542
    %v2876 = vpop.f32.mrf.mxu0
    %v2877 = vadd.f32 %v2585, %v2876
    %v2878 = vpop.f32.mrf.mxu0
    %v2879 = vadd.f32 %v2585, %v2878
    %2880 = vmatmul.bf16.gmra.mxu0 %v2543
    %v2881 = vpop.f32.mrf.mxu0
    %v2882 = vadd.f32 %v2585, %v2881
    %v2883 = vpop.f32.mrf.mxu0
    %v2884 = vadd.f32 %v2585, %v2883
    %2885 = vmatmul.bf16.gmra.mxu0 %v2544
    %v2886 = vpop.f32.mrf.mxu0
    %v2887 = vadd.f32 %v2585, %v2886
    %v2888 = vpop.f32.mrf.mxu0
    %v2889 = vadd.f32 %v2585, %v2888
    %2890 = vmatmul.bf16.gmra.mxu0 %v2545
    %v2891 = vpop.f32.mrf.mxu0
    %v2892 = vadd.f32 %v2585, %v2891
    %v2893 = vpop.f32.mrf.mxu0
    %v2894 = vadd.f32 %v2585, %v2893
    %2895 = vmatmul.bf16.gmra.mxu0 %v2546
    %v2896 = vpop.f32.mrf.mxu0
    %v2897 = vadd.f32 %v2585, %v2896
    %v2898 = vpop.f32.mrf.mxu0
    %v2899 = vadd.f32 %v2585, %v2898
    %2900 = vmatmul.bf16.gmra.mxu0 %v2547
    %v2901 = vpop.f32.mrf.mxu0
    %v2902 = vadd.f32 %v2585, %v2901
    %v2903 = vpop.f32.mrf.mxu0
    %v2904 = vadd.f32 %v2585, %v2903
    %2905 = vdwg.mxu0
    %v2906 = vmax.f32 %v2760, 0.0
    %v2907 = vmax.f32 %v2799, 0.0
    %v2908 = vmax.f32 %v2838, 0.0
    %v2909 = vmax.f32 %v2877, 0.0
    %v2910 = vmax.f32 %v2762, 0.0
    %v2911 = vmax.f32 %v2801, 0.0
    %v2912 = vmax.f32 %v2840, 0.0
    %v2913 = vmax.f32 %v2879, 0.0
    %v2914 = vmax.f32 %v2765, 0.0
    %v2915 = vmax.f32 %v2804, 0.0
    %v2916 = vmax.f32 %v2843, 0.0
    %v2917 = vmax.f32 %v2882, 0.0
    %v2918 = vmax.f32 %v2767, 0.0
    %v2919 = vmax.f32 %v2806, 0.0
    %v2920 = vmax.f32 %v2845, 0.0
    %v2921 = vmax.f32 %v2884, 0.0
    %v2922 = vmax.f32 %v2770, 0.0
    %v2923 = vmax.f32 %v2809, 0.0
    %v2924 = vmax.f32 %v2848, 0.0
    %v2925 = vmax.f32 %v2887, 0.0
    %v2926 = vmax.f32 %v2772, 0.0
    %v2927 = vmax.f32 %v2811, 0.0
    %v2928 = vmax.f32 %v2850, 0.0
    %v2929 = vmax.f32 %v2889, 0.0
    %v2930 = vmax.f32 %v2775, 0.0
    %v2931 = vmax.f32 %v2814, 0.0
    %v2932 = vmax.f32 %v2853, 0.0
    %v2933 = vmax.f32 %v2892, 0.0
    %v2934 = vmax.f32 %v2777, 0.0
    %v2935 = vmax.f32 %v2816, 0.0
    %v2936 = vmax.f32 %v2855, 0.0
    %v2937 = vmax.f32 %v2894, 0.0
    %v2938 = vmax.f32 %v2780, 0.0
    %v2939 = vmax.f32 %v2819, 0.0
    %v2940 = vmax.f32 %v2858, 0.0
    %v2941 = vmax.f32 %v2897, 0.0
    %v2942 = vmax.f32 %v2782, 0.0
    %v2943 = vmax.f32 %v2821, 0.0
    %v2944 = vmax.f32 %v2860, 0.0
    %v2945 = vmax.f32 %v2899, 0.0
    %v2946 = vmax.f32 %v2785, 0.0
    %v2947 = vmax.f32 %v2824, 0.0
    %v2948 = vmax.f32 %v2863, 0.0
    %v2949 = vmax.f32 %v2902, 0.0
    %v2950 = vmax.f32 %v2787, 0.0
    %v2951 = vmax.f32 %v2826, 0.0
    %v2952 = vmax.f32 %v2865, 0.0
    %v2953 = vmax.f32 %v2904, 0.0
    %v2954 = vpack.c.bf16 %v2910, %v2906
    %v2955 = vpack.c.bf16 %v2911, %v2907
    %v2956 = vpack.c.bf16 %v2912, %v2908
    %v2957 = vpack.c.bf16 %v2913, %v2909
    %v2958 = vpack.c.bf16 %v2918, %v2914
    %v2959 = vpack.c.bf16 %v2919, %v2915
    %v2960 = vpack.c.bf16 %v2920, %v2916
    %v2961 = vpack.c.bf16 %v2921, %v2917
    %v2962 = vpack.c.bf16 %v2926, %v2922
    %v2963 = vpack.c.bf16 %v2927, %v2923
    %v2964 = vpack.c.bf16 %v2928, %v2924
    %v2965 = vpack.c.bf16 %v2929, %v2925
    %v2966 = vpack.c.bf16 %v2934, %v2930
    %v2967 = vpack.c.bf16 %v2935, %v2931
    %v2968 = vpack.c.bf16 %v2936, %v2932
    %v2969 = vpack.c.bf16 %v2937, %v2933
    %v2970 = vpack.c.bf16 %v2942, %v2938
    %v2971 = vpack.c.bf16 %v2943, %v2939
    %v2972 = vpack.c.bf16 %v2944, %v2940
    %v2973 = vpack.c.bf16 %v2945, %v2941
    %v2974 = vpack.c.bf16 %v2950, %v2946
    %v2975 = vpack.c.bf16 %v2951, %v2947
    %v2976 = vpack.c.bf16 %v2952, %v2948
    %v2977 = vpack.c.bf16 %v2953, %v2949
    %v2978 = vld [vmem:[#allocation7] sm:$0xf]
    %v2979 = vld [vmem:[#allocation7 + $0x4] sm:$0xf]
    %v2980 = vld [vmem:[#allocation7 + $0x8] sm:$0xf]
    %v2981 = vld [vmem:[#allocation7 + $0xc] sm:$0xf]
    %v2982 = vld [vmem:[#allocation7 + $0x10] sm:$0xf]
    %v2983 = vld [vmem:[#allocation7 + $0x14] sm:$0xf]
    %v2984 = vld [vmem:[#allocation7 + $0x18] sm:$0xf]
    %v2985 = vld [vmem:[#allocation7 + $0x1c] sm:$0xf]
    %v2986 = vld [vmem:[#allocation7 + $0x20] sm:$0xf]
    %v2987 = vld [vmem:[#allocation7 + $0x24] sm:$0xf]
    %v2988 = vld [vmem:[#allocation7 + $0x28] sm:$0xf]
    %v2989 = vld [vmem:[#allocation7 + $0x2c] sm:$0xf]
    %v2990 = vld [vmem:[#allocation7 + $0x30] sm:$0xf]
    %v2991 = vld [vmem:[#allocation7 + $0x34] sm:$0xf]
    %v2992 = vld [vmem:[#allocation7 + $0x38] sm:$0xf]
    %v2993 = vld [vmem:[#allocation7 + $0x3c] sm:$0xf]
    %v2994 = vld [vmem:[#allocation7 + $0x40] sm:$0xf]
    %v2995 = vld [vmem:[#allocation7 + $0x44] sm:$0xf]
    %v2996 = vld [vmem:[#allocation7 + $0x48] sm:$0xf]
    %v2997 = vld [vmem:[#allocation7 + $0x4c] sm:$0xf]
    %v2998 = vld [vmem:[#allocation7 + $0x50] sm:$0xf]
    %v2999 = vld [vmem:[#allocation7 + $0x54] sm:$0xf]
    %v3000 = vld [vmem:[#allocation7 + $0x58] sm:$0xf]
    %v3001 = vld [vmem:[#allocation7 + $0x5c] sm:$0xf]
    %v3002 = vld [vmem:[#allocation7 + $0x60] sm:$0xf]
    %v3003 = vld [vmem:[#allocation7 + $0x64] sm:$0xf]
    %v3004 = vld [vmem:[#allocation7 + $0x68] sm:$0xf]
    %v3005 = vld [vmem:[#allocation7 + $0x6c] sm:$0xf]
    %v3006 = vld [vmem:[#allocation7 + $0x70] sm:$0xf]
    %v3007 = vld [vmem:[#allocation7 + $0x74] sm:$0xf]
    %v3008 = vld [vmem:[#allocation7 + $0x78] sm:$0xf]
    %v3009 = vld [vmem:[#allocation7 + $0x7c] sm:$0xf]
    %v3010 = vld [vmem:[#allocation7 + $0x80] sm:$0xf]
    %v3011 = vld [vmem:[#allocation7 + $0x84] sm:$0xf]
    %v3012 = vld [vmem:[#allocation7 + $0x88] sm:$0xf]
    %v3013 = vld [vmem:[#allocation7 + $0x8c] sm:$0xf]
    %v3014 = vld [vmem:[#allocation7 + $0x90] sm:$0xf]
    %v3015 = vld [vmem:[#allocation7 + $0x94] sm:$0xf]
    %v3016 = vld [vmem:[#allocation7 + $0x98] sm:$0xf]
    %v3017 = vld [vmem:[#allocation7 + $0x9c] sm:$0xf]
    %v3018 = vld [vmem:[#allocation7 + $0xa0] sm:$0xf]
    %v3019 = vld [vmem:[#allocation7 + $0xa4] sm:$0xf]
    %v3020 = vld [vmem:[#allocation7 + $0xa8] sm:$0xf]
    %v3021 = vld [vmem:[#allocation7 + $0xac] sm:$0xf]
    %v3022 = vld [vmem:[#allocation7 + $0xb0] sm:$0xf]
    %v3023 = vld [vmem:[#allocation7 + $0xb4] sm:$0xf]
    %v3024 = vld [vmem:[#allocation7 + $0xb8] sm:$0xf]
    %v3025 = vld [vmem:[#allocation7 + $0xbc] sm:$0xf]
    %v3026 = vld [vmem:[#allocation7 + $0xc0] sm:$0xf]
    %v3027 = vld [vmem:[#allocation7 + $0xc4] sm:$0xf]
    %v3028 = vld [vmem:[#allocation7 + $0xc8] sm:$0xf]
    %v3029 = vld [vmem:[#allocation7 + $0xcc] sm:$0xf]
    %v3030 = vld [vmem:[#allocation7 + $0xd0] sm:$0xf]
    %v3031 = vld [vmem:[#allocation7 + $0xd4] sm:$0xf]
    %v3032 = vld [vmem:[#allocation7 + $0xd8] sm:$0xf]
    %v3033 = vld [vmem:[#allocation7 + $0xdc] sm:$0xf]
    %v3034 = vld [vmem:[#allocation7 + $0xe0] sm:$0xf]
    %v3035 = vld [vmem:[#allocation7 + $0xe4] sm:$0xf]
    %v3036 = vld [vmem:[#allocation7 + $0xe8] sm:$0xf]
    %v3037 = vld [vmem:[#allocation7 + $0xec] sm:$0xf]
    %v3038 = vld [vmem:[#allocation7 + $0xf0] sm:$0xf]
    %v3039 = vld [vmem:[#allocation7 + $0xf4] sm:$0xf]
    %v3040 = vld [vmem:[#allocation7 + $0xf8] sm:$0xf]
    %v3041 = vld [vmem:[#allocation7 + $0xfc] sm:$0xf]
    %v3042 = vld [vmem:[%s13] sm:$0x1]
    %v3044 = vperm.slane %v3042, 0
    %v3110 = vunpack.c.l.b16 %v2978
    %v3111 = vunpack.c.l.b16 %v2979
    %v3112 = vunpack.c.l.b16 %v2980
    %v3113 = vunpack.c.l.b16 %v2981
    %v3114 = vunpack.c.l.b16 %v2982
    %v3115 = vunpack.c.l.b16 %v2983
    %v3116 = vunpack.c.l.b16 %v2984
    %v3117 = vunpack.c.l.b16 %v2985
    %v3118 = vunpack.c.l.b16 %v2986
    %v3119 = vunpack.c.l.b16 %v2987
    %v3120 = vunpack.c.l.b16 %v2988
    %v3121 = vunpack.c.l.b16 %v2989
    %v3122 = vunpack.c.l.b16 %v2990
    %v3123 = vunpack.c.l.b16 %v2991
    %v3124 = vunpack.c.l.b16 %v2992
    %v3125 = vunpack.c.l.b16 %v2993
    %v3126 = vunpack.c.l.b16 %v2994
    %v3127 = vunpack.c.l.b16 %v2995
    %v3128 = vunpack.c.l.b16 %v2996
    %v3129 = vunpack.c.l.b16 %v2997
    %v3130 = vunpack.c.l.b16 %v2998
    %v3131 = vunpack.c.l.b16 %v2999
    %v3132 = vunpack.c.l.b16 %v3000
    %v3133 = vunpack.c.l.b16 %v3001
    %v3134 = vunpack.c.l.b16 %v3002
    %v3135 = vunpack.c.l.b16 %v3003
    %v3136 = vunpack.c.l.b16 %v3004
    %v3137 = vunpack.c.l.b16 %v3005
    %v3138 = vunpack.c.l.b16 %v3006
    %v3139 = vunpack.c.l.b16 %v3007
    %v3140 = vunpack.c.l.b16 %v3008
    %v3141 = vunpack.c.l.b16 %v3009
    %v3142 = vunpack.c.l.b16 %v3010
    %v3143 = vunpack.c.l.b16 %v3011
    %v3144 = vunpack.c.l.b16 %v3012
    %v3145 = vunpack.c.l.b16 %v3013
    %v3146 = vunpack.c.l.b16 %v3014
    %v3147 = vunpack.c.l.b16 %v3015
    %v3148 = vunpack.c.l.b16 %v3016
    %v3149 = vunpack.c.l.b16 %v3017
    %v3150 = vunpack.c.l.b16 %v3018
    %v3151 = vunpack.c.l.b16 %v3019
    %v3152 = vunpack.c.l.b16 %v3020
    %v3153 = vunpack.c.l.b16 %v3021
    %v3154 = vunpack.c.l.b16 %v3022
    %v3155 = vunpack.c.l.b16 %v3023
    %v3156 = vunpack.c.l.b16 %v3024
    %v3157 = vunpack.c.l.b16 %v3025
    %v3158 = vunpack.c.l.b16 %v3026
    %v3159 = vunpack.c.l.b16 %v3027
    %v3160 = vunpack.c.l.b16 %v3028
    %v3161 = vunpack.c.l.b16 %v3029
    %v3162 = vunpack.c.l.b16 %v3030
    %v3163 = vunpack.c.l.b16 %v3031
    %v3164 = vunpack.c.l.b16 %v3032
    %v3165 = vunpack.c.l.b16 %v3033
    %v3166 = vunpack.c.l.b16 %v3034
    %v3167 = vunpack.c.l.b16 %v3035
    %v3168 = vunpack.c.l.b16 %v3036
    %v3169 = vunpack.c.l.b16 %v3037
    %v3170 = vunpack.c.l.b16 %v3038
    %v3171 = vunpack.c.l.b16 %v3039
    %v3172 = vunpack.c.l.b16 %v3040
    %v3173 = vunpack.c.l.b16 %v3041
    %v3174 = vpack.c.b16 %v3111, %v3110
    %v3175 = vpack.c.b16 %v3113, %v3112
    %v3176 = vpack.c.b16 %v3115, %v3114
    %v3177 = vpack.c.b16 %v3117, %v3116
    %v3178 = vpack.c.b16 %v3119, %v3118
    %v3179 = vpack.c.b16 %v3121, %v3120
    %v3180 = vpack.c.b16 %v3123, %v3122
    %v3181 = vpack.c.b16 %v3125, %v3124
    %v3182 = vpack.c.b16 %v3127, %v3126
    %v3183 = vpack.c.b16 %v3129, %v3128
    %v3184 = vpack.c.b16 %v3131, %v3130
    %v3185 = vpack.c.b16 %v3133, %v3132
    %v3186 = vpack.c.b16 %v3135, %v3134
    %v3187 = vpack.c.b16 %v3137, %v3136
    %v3188 = vpack.c.b16 %v3139, %v3138
    %v3189 = vpack.c.b16 %v3141, %v3140
    %v3190 = vpack.c.b16 %v3143, %v3142
    %v3191 = vpack.c.b16 %v3145, %v3144
    %v3192 = vpack.c.b16 %v3147, %v3146
    %v3193 = vpack.c.b16 %v3149, %v3148
    %v3194 = vpack.c.b16 %v3151, %v3150
    %v3195 = vpack.c.b16 %v3153, %v3152
    %v3196 = vpack.c.b16 %v3155, %v3154
    %v3197 = vpack.c.b16 %v3157, %v3156
    %v3198 = vpack.c.b16 %v3159, %v3158
    %v3199 = vpack.c.b16 %v3161, %v3160
    %v3200 = vpack.c.b16 %v3163, %v3162
    %v3201 = vpack.c.b16 %v3165, %v3164
    %v3202 = vpack.c.b16 %v3167, %v3166
    %v3203 = vpack.c.b16 %v3169, %v3168
    %v3204 = vpack.c.b16 %v3171, %v3170
    %v3205 = vpack.c.b16 %v3173, %v3172
    %3238 = vmatpush.bf16.msra.mxu0 %v3181
    %3239 = vmatpush.bf16.msra.mxu0 %v3180
    %3240 = vmatpush.bf16.msra.mxu0 %v3179
    %3241 = vmatpush.bf16.msra.mxu0 %v3178
    %3242 = vmatpush.bf16.msra.mxu0 %v3177
    %3243 = vmatpush.bf16.msra.mxu0 %v3176
    %3244 = vmatpush.bf16.msra.mxu0 %v3175
    %3245 = vmatpush.bf16.msra.mxu0 %v3174
    %3246 = vmatmul.bf16.gmra.mxu0 %v2954
    %v3247 = vpop.f32.mrf.mxu0
    %v3248 = vadd.f32 %v3044, %v3247
    %v3249 = vpop.f32.mrf.mxu0
    %v3250 = vadd.f32 %v3044, %v3249
    %3251 = vmatmul.bf16.gmra.mxu0 %v2958
    %v3252 = vpop.f32.mrf.mxu0
    %v3253 = vadd.f32 %v3044, %v3252
    %v3254 = vpop.f32.mrf.mxu0
    %v3255 = vadd.f32 %v3044, %v3254
    %3256 = vmatmul.bf16.gmra.mxu0 %v2962
    %v3257 = vpop.f32.mrf.mxu0
    %v3258 = vadd.f32 %v3044, %v3257
    %v3259 = vpop.f32.mrf.mxu0
    %v3260 = vadd.f32 %v3044, %v3259
    %3261 = vmatmul.bf16.gmra.mxu0 %v2966
    %v3262 = vpop.f32.mrf.mxu0
    %v3263 = vadd.f32 %v3044, %v3262
    %v3264 = vpop.f32.mrf.mxu0
    %v3265 = vadd.f32 %v3044, %v3264
    %3266 = vmatmul.bf16.gmra.mxu0 %v2970
    %v3267 = vpop.f32.mrf.mxu0
    %v3268 = vadd.f32 %v3044, %v3267
    %v3269 = vpop.f32.mrf.mxu0
    %v3270 = vadd.f32 %v3044, %v3269
    %3271 = vmatmul.bf16.gmra.mxu0 %v2974
    %v3272 = vpop.f32.mrf.mxu0
    %v3273 = vadd.f32 %v3044, %v3272
    %v3274 = vpop.f32.mrf.mxu0
    %v3275 = vadd.f32 %v3044, %v3274
    %3276 = vdwg.mxu0
    %3277 = vmatpush.bf16.msra.mxu0 %v3189
    %3278 = vmatpush.bf16.msra.mxu0 %v3188
    %3279 = vmatpush.bf16.msra.mxu0 %v3187
    %3280 = vmatpush.bf16.msra.mxu0 %v3186
    %3281 = vmatpush.bf16.msra.mxu0 %v3185
    %3282 = vmatpush.bf16.msra.mxu0 %v3184
    %3283 = vmatpush.bf16.msra.mxu0 %v3183
    %3284 = vmatpush.bf16.msra.mxu0 %v3182
    %3285 = vmatmul.bf16.gmra.mxu0 %v2955
    %v3286 = vpop.f32.mrf.mxu0
    %v3287 = vadd.f32 %v3248, %v3286
    %v3288 = vpop.f32.mrf.mxu0
    %v3289 = vadd.f32 %v3250, %v3288
    %3290 = vmatmul.bf16.gmra.mxu0 %v2959
    %v3291 = vpop.f32.mrf.mxu0
    %v3292 = vadd.f32 %v3253, %v3291
    %v3293 = vpop.f32.mrf.mxu0
    %v3294 = vadd.f32 %v3255, %v3293
    %3295 = vmatmul.bf16.gmra.mxu0 %v2963
    %v3296 = vpop.f32.mrf.mxu0
    %v3297 = vadd.f32 %v3258, %v3296
    %v3298 = vpop.f32.mrf.mxu0
    %v3299 = vadd.f32 %v3260, %v3298
    %3300 = vmatmul.bf16.gmra.mxu0 %v2967
    %v3301 = vpop.f32.mrf.mxu0
    %v3302 = vadd.f32 %v3263, %v3301
    %v3303 = vpop.f32.mrf.mxu0
    %v3304 = vadd.f32 %v3265, %v3303
    %3305 = vmatmul.bf16.gmra.mxu0 %v2971
    %v3306 = vpop.f32.mrf.mxu0
    %v3307 = vadd.f32 %v3268, %v3306
    %v3308 = vpop.f32.mrf.mxu0
    %v3309 = vadd.f32 %v3270, %v3308
    %3310 = vmatmul.bf16.gmra.mxu0 %v2975
    %v3311 = vpop.f32.mrf.mxu0
    %v3312 = vadd.f32 %v3273, %v3311
    %v3313 = vpop.f32.mrf.mxu0
    %v3314 = vadd.f32 %v3275, %v3313
    %3315 = vdwg.mxu0
    %3316 = vmatpush.bf16.msra.mxu0 %v3197
    %3317 = vmatpush.bf16.msra.mxu0 %v3196
    %3318 = vmatpush.bf16.msra.mxu0 %v3195
    %3319 = vmatpush.bf16.msra.mxu0 %v3194
    %3320 = vmatpush.bf16.msra.mxu0 %v3193
    %3321 = vmatpush.bf16.msra.mxu0 %v3192
    %3322 = vmatpush.bf16.msra.mxu0 %v3191
    %3323 = vmatpush.bf16.msra.mxu0 %v3190
    %3324 = vmatmul.bf16.gmra.mxu0 %v2956
    %v3325 = vpop.f32.mrf.mxu0
    %v3326 = vadd.f32 %v3287, %v3325
    %v3327 = vpop.f32.mrf.mxu0
    %v3328 = vadd.f32 %v3289, %v3327
    %3329 = vmatmul.bf16.gmra.mxu0 %v2960
    %v3330 = vpop.f32.mrf.mxu0
    %v3331 = vadd.f32 %v3292, %v3330
    %v3332 = vpop.f32.mrf.mxu0
    %v3333 = vadd.f32 %v3294, %v3332
    %3334 = vmatmul.bf16.gmra.mxu0 %v2964
    %v3335 = vpop.f32.mrf.mxu0
    %v3336 = vadd.f32 %v3297, %v3335
    %v3337 = vpop.f32.mrf.mxu0
    %v3338 = vadd.f32 %v3299, %v3337
    %3339 = vmatmul.bf16.gmra.mxu0 %v2968
    %v3340 = vpop.f32.mrf.mxu0
    %v3341 = vadd.f32 %v3302, %v3340
    %v3342 = vpop.f32.mrf.mxu0
    %v3343 = vadd.f32 %v3304, %v3342
    %3344 = vmatmul.bf16.gmra.mxu0 %v2972
    %v3345 = vpop.f32.mrf.mxu0
    %v3346 = vadd.f32 %v3307, %v3345
    %v3347 = vpop.f32.mrf.mxu0
    %v3348 = vadd.f32 %v3309, %v3347
    %3349 = vmatmul.bf16.gmra.mxu0 %v2976
    %v3350 = vpop.f32.mrf.mxu0
    %v3351 = vadd.f32 %v3312, %v3350
    %v3352 = vpop.f32.mrf.mxu0
    %v3353 = vadd.f32 %v3314, %v3352
    %3354 = vdwg.mxu0
    %3355 = vmatpush.bf16.msra.mxu0 %v3205
    %3356 = vmatpush.bf16.msra.mxu0 %v3204
    %3357 = vmatpush.bf16.msra.mxu0 %v3203
    %3358 = vmatpush.bf16.msra.mxu0 %v3202
    %3359 = vmatpush.bf16.msra.mxu0 %v3201
    %3360 = vmatpush.bf16.msra.mxu0 %v3200
    %3361 = vmatpush.bf16.msra.mxu0 %v3199
    %3362 = vmatpush.bf16.msra.mxu0 %v3198
    %3363 = vmatmul.bf16.gmra.mxu0 %v2957
    %v3364 = vpop.f32.mrf.mxu0
    %v3365 = vadd.f32 %v3326, %v3364
    %v3366 = vpop.f32.mrf.mxu0
    %v3367 = vadd.f32 %v3328, %v3366
    %3368 = vmatmul.bf16.gmra.mxu0 %v2961
    %v3369 = vpop.f32.mrf.mxu0
    %v3370 = vadd.f32 %v3331, %v3369
    %v3371 = vpop.f32.mrf.mxu0
    %v3372 = vadd.f32 %v3333, %v3371
    %3373 = vmatmul.bf16.gmra.mxu0 %v2965
    %v3374 = vpop.f32.mrf.mxu0
    %v3375 = vadd.f32 %v3336, %v3374
    %v3376 = vpop.f32.mrf.mxu0
    %v3377 = vadd.f32 %v3338, %v3376
    %3378 = vmatmul.bf16.gmra.mxu0 %v2969
    %v3379 = vpop.f32.mrf.mxu0
    %v3380 = vadd.f32 %v3341, %v3379
    %v3381 = vpop.f32.mrf.mxu0
    %v3382 = vadd.f32 %v3343, %v3381
    %3383 = vmatmul.bf16.gmra.mxu0 %v2973
    %v3384 = vpop.f32.mrf.mxu0
    %v3385 = vadd.f32 %v3346, %v3384
    %v3386 = vpop.f32.mrf.mxu0
    %v3387 = vadd.f32 %v3348, %v3386
    %3388 = vmatmul.bf16.gmra.mxu0 %v2977
    %v3389 = vpop.f32.mrf.mxu0
    %v3390 = vadd.f32 %v3351, %v3389
    %v3391 = vpop.f32.mrf.mxu0
    %v3392 = vadd.f32 %v3353, %v3391
    %3393 = vdwg.mxu0
    %v3394 = vadd.f32 %v2530, %v3365
    %v3395 = vadd.f32 %v2531, %v3367
    %v3396 = vadd.f32 %v2532, %v3370
    %v3397 = vadd.f32 %v2533, %v3372
    %v3398 = vadd.f32 %v2534, %v3375
    %v3399 = vadd.f32 %v2535, %v3377
    %v3400 = vadd.f32 %v2536, %v3380
    %v3401 = vadd.f32 %v2537, %v3382
    %v3402 = vadd.f32 %v2538, %v3385
    %v3403 = vadd.f32 %v2539, %v3387
    %v3404 = vadd.f32 %v2540, %v3390
    %v3405 = vadd.f32 %v2541, %v3392
    %v3406 = vld [vmem:[%s14] sm:$0x1]
    %v3407 = vld [vmem:[%s15] sm:$0x1]
    %3408 = vadd.xlane.f32.xlu0 %v3394
    %v3409 = vpop.xlane.xlu0 %3408
    %3410 = vadd.xlane.f32.xlu0 %v3395
    %v3411 = vpop.xlane.xlu0 %3410
    %3412 = vadd.xlane.f32.xlu0 %v3396
    %v3413 = vpop.xlane.xlu0 %3412
    %3414 = vadd.xlane.f32.xlu0 %v3397
    %v3415 = vpop.xlane.xlu0 %3414
    %3416 = vadd.xlane.f32.xlu0 %v3398
    %v3417 = vpop.xlane.xlu0 %3416
    %3418 = vadd.xlane.f32.xlu0 %v3399
    %v3419 = vpop.xlane.xlu0 %3418
    %3420 = vadd.xlane.f32.xlu0 %v3400
    %v3421 = vpop.xlane.xlu0 %3420
    %3422 = vadd.xlane.f32.xlu0 %v3401
    %v3423 = vpop.xlane.xlu0 %3422
    %3424 = vadd.xlane.f32.xlu0 %v3402
    %v3425 = vpop.xlane.xlu0 %3424
    %3426 = vadd.xlane.f32.xlu0 %v3403
    %v3427 = vpop.xlane.xlu0 %3426
    %3428 = vadd.xlane.f32.xlu0 %v3404
    %v3429 = vpop.xlane.xlu0 %3428
    %3430 = vadd.xlane.f32.xlu0 %v3405
    %v3431 = vpop.xlane.xlu0 %3430
    %v3432 = vmul.f32 %v3409, %v2295
    %v3433 = vmul.f32 %v3411, %v2295
    %v3434 = vmul.f32 %v3413, %v2295
    %v3435 = vmul.f32 %v3415, %v2295
    %v3436 = vmul.f32 %v3417, %v2295
    %v3437 = vmul.f32 %v3419, %v2295
    %v3438 = vmul.f32 %v3421, %v2295
    %v3439 = vmul.f32 %v3423, %v2295
    %v3440 = vmul.f32 %v3425, %v2295
    %v3441 = vmul.f32 %v3427, %v2295
    %v3442 = vmul.f32 %v3429, %v2295
    %v3443 = vmul.f32 %v3431, %v2295
    %v3444 = vsub.f32 %v3394, %v3432
    %v3445 = vsub.f32 %v3395, %v3433
    %v3446 = vsub.f32 %v3396, %v3434
    %v3447 = vsub.f32 %v3397, %v3435
    %v3448 = vsub.f32 %v3398, %v3436
    %v3449 = vsub.f32 %v3399, %v3437
    %v3450 = vsub.f32 %v3400, %v3438
    %v3451 = vsub.f32 %v3401, %v3439
    %v3452 = vsub.f32 %v3402, %v3440
    %v3453 = vsub.f32 %v3403, %v3441
    %v3454 = vsub.f32 %v3404, %v3442
    %v3455 = vsub.f32 %v3405, %v3443
    %v3456 = vmul.f32 %v3444, %v3444
    %v3457 = vmul.f32 %v3445, %v3445
    %v3458 = vmul.f32 %v3446, %v3446
    %v3459 = vmul.f32 %v3447, %v3447
    %v3460 = vmul.f32 %v3448, %v3448
    %v3461 = vmul.f32 %v3449, %v3449
    %v3462 = vmul.f32 %v3450, %v3450
    %v3463 = vmul.f32 %v3451, %v3451
    %v3464 = vmul.f32 %v3452, %v3452
    %v3465 = vmul.f32 %v3453, %v3453
    %v3466 = vmul.f32 %v3454, %v3454
    %v3467 = vmul.f32 %v3455, %v3455
    %3468 = vadd.xlane.f32.xlu0 %v3456
    %v3469 = vpop.xlane.xlu0 %3468
    %3470 = vadd.xlane.f32.xlu0 %v3457
    %v3471 = vpop.xlane.xlu0 %3470
    %3472 = vadd.xlane.f32.xlu0 %v3458
    %v3473 = vpop.xlane.xlu0 %3472
    %3474 = vadd.xlane.f32.xlu0 %v3459
    %v3475 = vpop.xlane.xlu0 %3474
    %3476 = vadd.xlane.f32.xlu0 %v3460
    %v3477 = vpop.xlane.xlu0 %3476
    %3478 = vadd.xlane.f32.xlu0 %v3461
    %v3479 = vpop.xlane.xlu0 %3478
    %3480 = vadd.xlane.f32.xlu0 %v3462
    %v3481 = vpop.xlane.xlu0 %3480
    %3482 = vadd.xlane.f32.xlu0 %v3463
    %v3483 = vpop.xlane.xlu0 %3482
    %3484 = vadd.xlane.f32.xlu0 %v3464
    %v3485 = vpop.xlane.xlu0 %3484
    %3486 = vadd.xlane.f32.xlu0 %v3465
    %v3487 = vpop.xlane.xlu0 %3486
    %3488 = vadd.xlane.f32.xlu0 %v3466
    %v3489 = vpop.xlane.xlu0 %3488
    %3490 = vadd.xlane.f32.xlu0 %v3467
    %v3491 = vpop.xlane.xlu0 %3490
    %v3492 = vmul.f32 %v3469, %v2295
    %v3493 = vmul.f32 %v3471, %v2295
    %v3494 = vmul.f32 %v3473, %v2295
    %v3495 = vmul.f32 %v3475, %v2295
    %v3496 = vmul.f32 %v3477, %v2295
    %v3497 = vmul.f32 %v3479, %v2295
    %v3498 = vmul.f32 %v3481, %v2295
    %v3499 = vmul.f32 %v3483, %v2295
    %v3500 = vmul.f32 %v3485, %v2295
    %v3501 = vmul.f32 %v3487, %v2295
    %v3502 = vmul.f32 %v3489, %v2295
    %v3503 = vmul.f32 %v3491, %v2295
    %v3504 = vadd.f32 %v3492, 1e-05
    %v3505 = vadd.f32 %v3493, 1e-05
    %v3506 = vadd.f32 %v3494, 1e-05
    %v3507 = vadd.f32 %v3495, 1e-05
    %v3508 = vadd.f32 %v3496, 1e-05
    %v3509 = vadd.f32 %v3497, 1e-05
    %v3510 = vadd.f32 %v3498, 1e-05
    %v3511 = vadd.f32 %v3499, 1e-05
    %v3512 = vadd.f32 %v3500, 1e-05
    %v3513 = vadd.f32 %v3501, 1e-05
    %v3514 = vadd.f32 %v3502, 1e-05
    %v3515 = vadd.f32 %v3503, 1e-05
    %v3516 = vrsqrt.pop %v3504
    %v3517 = vmul.f32 %v3516, %v3504
    %v3518 = vmul.f32 %v3517, %v3516
    %v3519 = vmul.f32 0.5, %v3518
    %v3520 = vsub.f32 1.5, %v3519
    %v3521 = vmul.f32 %v3516, %v3520
    %vm3522 = vweird.f32 %v3504
    %vm3523 = vweird.f32 %v3516
    %vm3524 = vmor %vm3522, %vm3523
    %v3525 = vsel %vm3524, %v3516, %v3521
    %v3526 = vrsqrt.pop %v3505
    %v3527 = vmul.f32 %v3526, %v3505
    %v3528 = vmul.f32 %v3527, %v3526
    %v3529 = vmul.f32 0.5, %v3528
    %v3530 = vsub.f32 1.5, %v3529
    %v3531 = vmul.f32 %v3526, %v3530
    %vm3532 = vweird.f32 %v3505
    %vm3533 = vweird.f32 %v3526
    %vm3534 = vmor %vm3532, %vm3533
    %v3535 = vsel %vm3534, %v3526, %v3531
    %v3536 = vrsqrt.pop %v3506
    %v3537 = vmul.f32 %v3536, %v3506
    %v3538 = vmul.f32 %v3537, %v3536
    %v3539 = vmul.f32 0.5, %v3538
    %v3540 = vsub.f32 1.5, %v3539
    %v3541 = vmul.f32 %v3536, %v3540
    %vm3542 = vweird.f32 %v3506
    %vm3543 = vweird.f32 %v3536
    %vm3544 = vmor %vm3542, %vm3543
    %v3545 = vsel %vm3544, %v3536, %v3541
    %v3546 = vrsqrt.pop %v3507
    %v3547 = vmul.f32 %v3546, %v3507
    %v3548 = vmul.f32 %v3547, %v3546
    %v3549 = vmul.f32 0.5, %v3548
    %v3550 = vsub.f32 1.5, %v3549
    %v3551 = vmul.f32 %v3546, %v3550
    %vm3552 = vweird.f32 %v3507
    %vm3553 = vweird.f32 %v3546
    %vm3554 = vmor %vm3552, %vm3553
    %v3555 = vsel %vm3554, %v3546, %v3551
    %v3556 = vrsqrt.pop %v3508
    %v3557 = vmul.f32 %v3556, %v3508
    %v3558 = vmul.f32 %v3557, %v3556
    %v3559 = vmul.f32 0.5, %v3558
    %v3560 = vsub.f32 1.5, %v3559
    %v3561 = vmul.f32 %v3556, %v3560
    %vm3562 = vweird.f32 %v3508
    %vm3563 = vweird.f32 %v3556
    %vm3564 = vmor %vm3562, %vm3563
    %v3565 = vsel %vm3564, %v3556, %v3561
    %v3566 = vrsqrt.pop %v3509
    %v3567 = vmul.f32 %v3566, %v3509
    %v3568 = vmul.f32 %v3567, %v3566
    %v3569 = vmul.f32 0.5, %v3568
    %v3570 = vsub.f32 1.5, %v3569
    %v3571 = vmul.f32 %v3566, %v3570
    %vm3572 = vweird.f32 %v3509
    %vm3573 = vweird.f32 %v3566
    %vm3574 = vmor %vm3572, %vm3573
    %v3575 = vsel %vm3574, %v3566, %v3571
    %v3576 = vrsqrt.pop %v3510
    %v3577 = vmul.f32 %v3576, %v3510
    %v3578 = vmul.f32 %v3577, %v3576
    %v3579 = vmul.f32 0.5, %v3578
    %v3580 = vsub.f32 1.5, %v3579
    %v3581 = vmul.f32 %v3576, %v3580
    %vm3582 = vweird.f32 %v3510
    %vm3583 = vweird.f32 %v3576
    %vm3584 = vmor %vm3582, %vm3583
    %v3585 = vsel %vm3584, %v3576, %v3581
    %v3586 = vrsqrt.pop %v3511
    %v3587 = vmul.f32 %v3586, %v3511
    %v3588 = vmul.f32 %v3587, %v3586
    %v3589 = vmul.f32 0.5, %v3588
    %v3590 = vsub.f32 1.5, %v3589
    %v3591 = vmul.f32 %v3586, %v3590
    %vm3592 = vweird.f32 %v3511
    %vm3593 = vweird.f32 %v3586
    %vm3594 = vmor %vm3592, %vm3593
    %v3595 = vsel %vm3594, %v3586, %v3591
    %v3596 = vrsqrt.pop %v3512
    %v3597 = vmul.f32 %v3596, %v3512
    %v3598 = vmul.f32 %v3597, %v3596
    %v3599 = vmul.f32 0.5, %v3598
    %v3600 = vsub.f32 1.5, %v3599
    %v3601 = vmul.f32 %v3596, %v3600
    %vm3602 = vweird.f32 %v3512
    %vm3603 = vweird.f32 %v3596
    %vm3604 = vmor %vm3602, %vm3603
    %v3605 = vsel %vm3604, %v3596, %v3601
    %v3606 = vrsqrt.pop %v3513
    %v3607 = vmul.f32 %v3606, %v3513
    %v3608 = vmul.f32 %v3607, %v3606
    %v3609 = vmul.f32 0.5, %v3608
    %v3610 = vsub.f32 1.5, %v3609
    %v3611 = vmul.f32 %v3606, %v3610
    %vm3612 = vweird.f32 %v3513
    %vm3613 = vweird.f32 %v3606
    %vm3614 = vmor %vm3612, %vm3613
    %v3615 = vsel %vm3614, %v3606, %v3611
    %v3616 = vrsqrt.pop %v3514
    %v3617 = vmul.f32 %v3616, %v3514
    %v3618 = vmul.f32 %v3617, %v3616
    %v3619 = vmul.f32 0.5, %v3618
    %v3620 = vsub.f32 1.5, %v3619
    %v3621 = vmul.f32 %v3616, %v3620
    %vm3622 = vweird.f32 %v3514
    %vm3623 = vweird.f32 %v3616
    %vm3624 = vmor %vm3622, %vm3623
    %v3625 = vsel %vm3624, %v3616, %v3621
    %v3626 = vrsqrt.pop %v3515
    %v3627 = vmul.f32 %v3626, %v3515
    %v3628 = vmul.f32 %v3627, %v3626
    %v3629 = vmul.f32 0.5, %v3628
    %v3630 = vsub.f32 1.5, %v3629
    %v3631 = vmul.f32 %v3626, %v3630
    %vm3632 = vweird.f32 %v3515
    %vm3633 = vweird.f32 %v3626
    %vm3634 = vmor %vm3632, %vm3633
    %v3635 = vsel %vm3634, %v3626, %v3631
    %v3636 = vmul.f32 %v3444, %v3525
    %v3637 = vmul.f32 %v3445, %v3535
    %v3638 = vmul.f32 %v3446, %v3545
    %v3639 = vmul.f32 %v3447, %v3555
    %v3640 = vmul.f32 %v3448, %v3565
    %v3641 = vmul.f32 %v3449, %v3575
    %v3642 = vmul.f32 %v3450, %v3585
    %v3643 = vmul.f32 %v3451, %v3595
    %v3644 = vmul.f32 %v3452, %v3605
    %v3645 = vmul.f32 %v3453, %v3615
    %v3646 = vmul.f32 %v3454, %v3625
    %v3647 = vmul.f32 %v3455, %v3635
    %v3649 = vperm.slane %v3406, 0
    %v3651 = vmul.f32 %v3636, %v3649
    %v3652 = vmul.f32 %v3637, %v3649
    %v3653 = vmul.f32 %v3638, %v3649
    %v3654 = vmul.f32 %v3639, %v3649
    %v3655 = vmul.f32 %v3640, %v3649
    %v3656 = vmul.f32 %v3641, %v3649
    %v3657 = vmul.f32 %v3642, %v3649
    %v3658 = vmul.f32 %v3643, %v3649
    %v3659 = vmul.f32 %v3644, %v3649
    %v3660 = vmul.f32 %v3645, %v3649
    %v3661 = vmul.f32 %v3646, %v3649
    %v3662 = vmul.f32 %v3647, %v3649
    %v3664 = vperm.slane %v3407, 0
    %v3666 = vadd.f32 %v3651, %v3664
    %v3667 = vadd.f32 %v3652, %v3664
    %v3668 = vadd.f32 %v3653, %v3664
    %v3669 = vadd.f32 %v3654, %v3664
    %v3670 = vadd.f32 %v3655, %v3664
    %v3671 = vadd.f32 %v3656, %v3664
    %v3672 = vadd.f32 %v3657, %v3664
    %v3673 = vadd.f32 %v3658, %v3664
    %v3674 = vadd.f32 %v3659, %v3664
    %v3675 = vadd.f32 %v3660, %v3664
    %v3676 = vadd.f32 %v3661, %v3664
    %v3677 = vadd.f32 %v3662, %v3664
    %v3678 = vpack.c.bf16 %v3667, %v3666
    %v3679 = vpack.c.bf16 %v3669, %v3668
    %v3680 = vpack.c.bf16 %v3671, %v3670
    %v3681 = vpack.c.bf16 %v3673, %v3672
    %v3682 = vpack.c.bf16 %v3675, %v3674
    %v3683 = vpack.c.bf16 %v3677, %v3676
    %s3684 = scalar_lea.vmem [#allocation2], 192
    %v3685 = vld [vmem:[%s3684] sm:$0xff]
    %v3686 = vld [vmem:[%s3684 + $0x8] sm:$0xf]
    %v3687 = vld [vmem:[%s3684 + $0xc] sm:$0xff]
    %v3688 = vld [vmem:[%s3684 + $0x14] sm:$0xf]
    %v3689 = vld [vmem:[%s3684 + $0x18] sm:$0xff]
    %v3690 = vld [vmem:[%s3684 + $0x20] sm:$0xf]
    %v3691 = vld [vmem:[%s3684 + $0x24] sm:$0xff]
    %v3692 = vld [vmem:[%s3684 + $0x2c] sm:$0xf]
    %v3693 = vld [vmem:[%s3684 + $0x30] sm:$0xff]
    %v3694 = vld [vmem:[%s3684 + $0x38] sm:$0xf]
    %v3695 = vld [vmem:[%s3684 + $0x3c] sm:$0xff]
    %v3696 = vld [vmem:[%s3684 + $0x44] sm:$0xf]
    %v3697 = vld [vmem:[%s3684 + $0x48] sm:$0xff]
    %v3698 = vld [vmem:[%s3684 + $0x50] sm:$0xf]
    %v3699 = vld [vmem:[%s3684 + $0x54] sm:$0xff]
    %v3700 = vld [vmem:[%s3684 + $0x5c] sm:$0xf]
    %v3701 = vld [vmem:[%s3684 + $0x60] sm:$0xff]
    %v3702 = vld [vmem:[%s3684 + $0x68] sm:$0xf]
    %v3703 = vld [vmem:[%s3684 + $0x6c] sm:$0xff]
    %v3704 = vld [vmem:[%s3684 + $0x74] sm:$0xf]
    %v3705 = vld [vmem:[%s3684 + $0x78] sm:$0xff]
    %v3706 = vld [vmem:[%s3684 + $0x80] sm:$0xf]
    %v3707 = vld [vmem:[%s3684 + $0x84] sm:$0xff]
    %v3708 = vld [vmem:[%s3684 + $0x8c] sm:$0xf]
    %v3709 = vld [vmem:[%s3684 + $0x90] sm:$0xff]
    %v3710 = vld [vmem:[%s3684 + $0x98] sm:$0xf]
    %v3711 = vld [vmem:[%s3684 + $0x9c] sm:$0xff]
    %v3712 = vld [vmem:[%s3684 + $0xa4] sm:$0xf]
    %v3713 = vld [vmem:[%s3684 + $0xa8] sm:$0xff]
    %v3714 = vld [vmem:[%s3684 + $0xb0] sm:$0xf]
    %v3715 = vld [vmem:[%s3684 + $0xb4] sm:$0xff]
    %v3716 = vld [vmem:[%s3684 + $0xbc] sm:$0xf]
    %v3749 = vunpack.c.l.b16 %v3685
    %v3750 = vunpack.c.h.b16 %v3685
    %v3751 = vunpack.c.l.b16 %v3686
    %v3752 = vunpack.c.l.b16 %v3687
    %v3753 = vunpack.c.h.b16 %v3687
    %v3754 = vunpack.c.l.b16 %v3688
    %v3755 = vunpack.c.l.b16 %v3689
    %v3756 = vunpack.c.h.b16 %v3689
    %v3757 = vunpack.c.l.b16 %v3690
    %v3758 = vunpack.c.l.b16 %v3691
    %v3759 = vunpack.c.h.b16 %v3691
    %v3760 = vunpack.c.l.b16 %v3692
    %v3761 = vunpack.c.l.b16 %v3693
    %v3762 = vunpack.c.h.b16 %v3693
    %v3763 = vunpack.c.l.b16 %v3694
    %v3764 = vunpack.c.l.b16 %v3695
    %v3765 = vunpack.c.h.b16 %v3695
    %v3766 = vunpack.c.l.b16 %v3696
    %v3767 = vunpack.c.l.b16 %v3697
    %v3768 = vunpack.c.h.b16 %v3697
    %v3769 = vunpack.c.l.b16 %v3698
    %v3770 = vunpack.c.l.b16 %v3699
    %v3771 = vunpack.c.h.b16 %v3699
    %v3772 = vunpack.c.l.b16 %v3700
    %v3773 = vunpack.c.l.b16 %v3701
    %v3774 = vunpack.c.h.b16 %v3701
    %v3775 = vunpack.c.l.b16 %v3702
    %v3776 = vunpack.c.l.b16 %v3703
    %v3777 = vunpack.c.h.b16 %v3703
    %v3778 = vunpack.c.l.b16 %v3704
    %v3779 = vunpack.c.l.b16 %v3705
    %v3780 = vunpack.c.h.b16 %v3705
    %v3781 = vunpack.c.l.b16 %v3706
    %v3782 = vunpack.c.l.b16 %v3707
    %v3783 = vunpack.c.h.b16 %v3707
    %v3784 = vunpack.c.l.b16 %v3708
    %v3785 = vunpack.c.l.b16 %v3709
    %v3786 = vunpack.c.h.b16 %v3709
    %v3787 = vunpack.c.l.b16 %v3710
    %v3788 = vunpack.c.l.b16 %v3711
    %v3789 = vunpack.c.h.b16 %v3711
    %v3790 = vunpack.c.l.b16 %v3712
    %v3791 = vunpack.c.l.b16 %v3713
    %v3792 = vunpack.c.h.b16 %v3713
    %v3793 = vunpack.c.l.b16 %v3714
    %v3794 = vunpack.c.l.b16 %v3715
    %v3795 = vunpack.c.h.b16 %v3715
    %v3796 = vunpack.c.l.b16 %v3716
    %v3797 = vpack.c.b16 %v3752, %v3749
    %v3798 = vpack.c.b16 %v3753, %v3750
    %v3799 = vpack.c.b16 %v3754, %v3751
    %v3800 = vpack.c.b16 %v3758, %v3755
    %v3801 = vpack.c.b16 %v3759, %v3756
    %v3802 = vpack.c.b16 %v3760, %v3757
    %v3803 = vpack.c.b16 %v3764, %v3761
    %v3804 = vpack.c.b16 %v3765, %v3762
    %v3805 = vpack.c.b16 %v3766, %v3763
    %v3806 = vpack.c.b16 %v3770, %v3767
    %v3807 = vpack.c.b16 %v3771, %v3768
    %v3808 = vpack.c.b16 %v3772, %v3769
    %v3809 = vpack.c.b16 %v3776, %v3773
    %v3810 = vpack.c.b16 %v3777, %v3774
    %v3811 = vpack.c.b16 %v3778, %v3775
    %v3812 = vpack.c.b16 %v3782, %v3779
    %v3813 = vpack.c.b16 %v3783, %v3780
    %v3814 = vpack.c.b16 %v3784, %v3781
    %v3815 = vpack.c.b16 %v3788, %v3785
    %v3816 = vpack.c.b16 %v3789, %v3786
    %v3817 = vpack.c.b16 %v3790, %v3787
    %v3818 = vpack.c.b16 %v3794, %v3791
    %v3819 = vpack.c.b16 %v3795, %v3792
    %v3820 = vpack.c.b16 %v3796, %v3793
    %3845 = vmatpush.bf16.msra.mxu0 %v3818
    %3846 = vmatpush.bf16.msra.mxu0 %v3815
    %3847 = vmatpush.bf16.msra.mxu0 %v3812
    %3848 = vmatpush.bf16.msra.mxu0 %v3809
    %3849 = vmatpush.bf16.msra.mxu0 %v3806
    %3850 = vmatpush.bf16.msra.mxu0 %v3803
    %3851 = vmatpush.bf16.msra.mxu0 %v3800
    %3852 = vmatpush.bf16.msra.mxu0 %v3797
    %3853 = vmatmul.bf16.gmra.mxu0 %v3678
    %v3854 = vpop.f32.mrf.mxu0
    %v3855 = vadd.f32 0.0, %v3854
    %v3856 = vpop.f32.mrf.mxu0
    %v3857 = vadd.f32 0.0, %v3856
    %3858 = vmatmul.bf16.gmra.mxu0 %v3679
    %v3859 = vpop.f32.mrf.mxu0
    %v3860 = vadd.f32 0.0, %v3859
    %v3861 = vpop.f32.mrf.mxu0
    %v3862 = vadd.f32 0.0, %v3861
    %3863 = vmatmul.bf16.gmra.mxu0 %v3680
    %v3864 = vpop.f32.mrf.mxu0
    %v3865 = vadd.f32 0.0, %v3864
    %v3866 = vpop.f32.mrf.mxu0
    %v3867 = vadd.f32 0.0, %v3866
    %3868 = vmatmul.bf16.gmra.mxu0 %v3681
    %v3869 = vpop.f32.mrf.mxu0
    %v3870 = vadd.f32 0.0, %v3869
    %v3871 = vpop.f32.mrf.mxu0
    %v3872 = vadd.f32 0.0, %v3871
    %3873 = vmatmul.bf16.gmra.mxu0 %v3682
    %v3874 = vpop.f32.mrf.mxu0
    %v3875 = vadd.f32 0.0, %v3874
    %v3876 = vpop.f32.mrf.mxu0
    %v3877 = vadd.f32 0.0, %v3876
    %3878 = vmatmul.bf16.gmra.mxu0 %v3683
    %v3879 = vpop.f32.mrf.mxu0
    %v3880 = vadd.f32 0.0, %v3879
    %v3881 = vpop.f32.mrf.mxu0
    %v3882 = vadd.f32 0.0, %v3881
    %3883 = vdwg.mxu0
    %3884 = vmatpush.bf16.msra.mxu0 %v3819
    %3885 = vmatpush.bf16.msra.mxu0 %v3816
    %3886 = vmatpush.bf16.msra.mxu0 %v3813
    %3887 = vmatpush.bf16.msra.mxu0 %v3810
    %3888 = vmatpush.bf16.msra.mxu0 %v3807
    %3889 = vmatpush.bf16.msra.mxu0 %v3804
    %3890 = vmatpush.bf16.msra.mxu0 %v3801
    %3891 = vmatpush.bf16.msra.mxu0 %v3798
    %3892 = vmatmul.bf16.gmra.mxu0 %v3678
    %v3893 = vpop.f32.mrf.mxu0
    %v3894 = vadd.f32 0.0, %v3893
    %v3895 = vpop.f32.mrf.mxu0
    %v3896 = vadd.f32 0.0, %v3895
    %3897 = vmatmul.bf16.gmra.mxu0 %v3679
    %v3898 = vpop.f32.mrf.mxu0
    %v3899 = vadd.f32 0.0, %v3898
    %v3900 = vpop.f32.mrf.mxu0
    %v3901 = vadd.f32 0.0, %v3900
    %3902 = vmatmul.bf16.gmra.mxu0 %v3680
    %v3903 = vpop.f32.mrf.mxu0
    %v3904 = vadd.f32 0.0, %v3903
    %v3905 = vpop.f32.mrf.mxu0
    %v3906 = vadd.f32 0.0, %v3905
    %3907 = vmatmul.bf16.gmra.mxu0 %v3681
    %v3908 = vpop.f32.mrf.mxu0
    %v3909 = vadd.f32 0.0, %v3908
    %v3910 = vpop.f32.mrf.mxu0
    %v3911 = vadd.f32 0.0, %v3910
    %3912 = vmatmul.bf16.gmra.mxu0 %v3682
    %v3913 = vpop.f32.mrf.mxu0
    %v3914 = vadd.f32 0.0, %v3913
    %v3915 = vpop.f32.mrf.mxu0
    %v3916 = vadd.f32 0.0, %v3915
    %3917 = vmatmul.bf16.gmra.mxu0 %v3683
    %v3918 = vpop.f32.mrf.mxu0
    %v3919 = vadd.f32 0.0, %v3918
    %v3920 = vpop.f32.mrf.mxu0
    %v3921 = vadd.f32 0.0, %v3920
    %3922 = vdwg.mxu0
    %3923 = vmatpush.bf16.msra.mxu0 %v3820
    %3924 = vmatpush.bf16.msra.mxu0 %v3817
    %3925 = vmatpush.bf16.msra.mxu0 %v3814
    %3926 = vmatpush.bf16.msra.mxu0 %v3811
    %3927 = vmatpush.bf16.msra.mxu0 %v3808
    %3928 = vmatpush.bf16.msra.mxu0 %v3805
    %3929 = vmatpush.bf16.msra.mxu0 %v3802
    %3930 = vmatpush.bf16.msra.mxu0 %v3799
    %3931 = vmatmul.bf16.gmra.mxu0 %v3678
    %v3932 = vpop.f32.mrf.mxu0
    %v3933 = vadd.f32 0.0, %v3932
    %v3934 = vpop.f32.mrf.mxu0
    %v3935 = vadd.f32 0.0, %v3934
    %3936 = vmatmul.bf16.gmra.mxu0 %v3679
    %v3937 = vpop.f32.mrf.mxu0
    %v3938 = vadd.f32 0.0, %v3937
    %v3939 = vpop.f32.mrf.mxu0
    %v3940 = vadd.f32 0.0, %v3939
    %3941 = vmatmul.bf16.gmra.mxu0 %v3680
    %v3942 = vpop.f32.mrf.mxu0
    %v3943 = vadd.f32 0.0, %v3942
    %v3944 = vpop.f32.mrf.mxu0
    %v3945 = vadd.f32 0.0, %v3944
    %3946 = vmatmul.bf16.gmra.mxu0 %v3681
    %v3947 = vpop.f32.mrf.mxu0
    %v3948 = vadd.f32 0.0, %v3947
    %v3949 = vpop.f32.mrf.mxu0
    %v3950 = vadd.f32 0.0, %v3949
    %3951 = vmatmul.bf16.gmra.mxu0 %v3682
    %v3952 = vpop.f32.mrf.mxu0
    %v3953 = vadd.f32 0.0, %v3952
    %v3954 = vpop.f32.mrf.mxu0
    %v3955 = vadd.f32 0.0, %v3954
    %3956 = vmatmul.bf16.gmra.mxu0 %v3683
    %v3957 = vpop.f32.mrf.mxu0
    %v3958 = vadd.f32 0.0, %v3957
    %v3959 = vpop.f32.mrf.mxu0
    %v3960 = vadd.f32 0.0, %v3959
    %3961 = vdwg.mxu0
    %v3962 = vpack.c.bf16 %v3855, %v3855
    %v3963 = vpack.c.bf16 %v3857, %v3857
    %v3964 = vpack.c.bf16 %v3860, %v3860
    %v3965 = vpack.c.bf16 %v3862, %v3862
    %v3966 = vpack.c.bf16 %v3865, %v3865
    %v3967 = vpack.c.bf16 %v3867, %v3867
    %v3968 = vpack.c.bf16 %v3870, %v3870
    %v3969 = vpack.c.bf16 %v3872, %v3872
    %v3970 = vpack.c.bf16 %v3875, %v3875
    %v3971 = vpack.c.bf16 %v3877, %v3877
    %v3972 = vpack.c.bf16 %v3880, %v3880
    %v3973 = vpack.c.bf16 %v3882, %v3882
    %v3974 = vpack.c.bf16 %v3896, %v3894
    %v3975 = vpack.c.bf16 %v3901, %v3899
    %v3976 = vpack.c.bf16 %v3906, %v3904
    %v3977 = vpack.c.bf16 %v3911, %v3909
    %v3978 = vpack.c.bf16 %v3916, %v3914
    %v3979 = vpack.c.bf16 %v3921, %v3919
    %v3980 = vpack.c.bf16 %v3935, %v3933
    %v3981 = vpack.c.bf16 %v3940, %v3938
    %v3982 = vpack.c.bf16 %v3945, %v3943
    %v3983 = vpack.c.bf16 %v3950, %v3948
    %v3984 = vpack.c.bf16 %v3955, %v3953
    %v3985 = vpack.c.bf16 %v3960, %v3958
    %s3986 = scalar_lea.vmem %s4, 64
    %v3987 = vld [vmem:[%s3986] sm:$0xf]
    %v3988 = vld [vmem:[%s3986 + $0x4] sm:$0xf]
    %v3989 = vld [vmem:[%s3986 + $0x8] sm:$0xf]
    %v3990 = vld [vmem:[%s3986 + $0xc] sm:$0xf]
    %v3991 = vld [vmem:[%s3986 + $0x10] sm:$0xf]
    %v3992 = vld [vmem:[%s3986 + $0x14] sm:$0xf]
    %v3993 = vld [vmem:[%s3986 + $0x18] sm:$0xf]
    %v3994 = vld [vmem:[%s3986 + $0x1c] sm:$0xf]
    %v3995 = vld [vmem:[%s3986 + $0x20] sm:$0xf]
    %v3996 = vld [vmem:[%s3986 + $0x24] sm:$0xf]
    %v3997 = vld [vmem:[%s3986 + $0x28] sm:$0xf]
    %v3998 = vld [vmem:[%s3986 + $0x2c] sm:$0xf]
    %s3999 = scalar_lea.vmem %s5, 64
    %v4000 = vld [vmem:[%s3999] sm:$0xf]
    %v4001 = vld [vmem:[%s3999 + $0x4] sm:$0xf]
    %v4002 = vld [vmem:[%s3999 + $0x8] sm:$0xf]
    %v4003 = vld [vmem:[%s3999 + $0xc] sm:$0xf]
    %v4004 = vld [vmem:[%s3999 + $0x10] sm:$0xf]
    %v4005 = vld [vmem:[%s3999 + $0x14] sm:$0xf]
    %v4006 = vld [vmem:[%s3999 + $0x18] sm:$0xf]
    %v4007 = vld [vmem:[%s3999 + $0x1c] sm:$0xf]
    %v4008 = vld [vmem:[%s3999 + $0x20] sm:$0xf]
    %v4009 = vld [vmem:[%s3999 + $0x24] sm:$0xf]
    %v4010 = vld [vmem:[%s3999 + $0x28] sm:$0xf]
    %v4011 = vld [vmem:[%s3999 + $0x2c] sm:$0xf]
    %v4024 = vunpack.c.l.b16 %v3987
    %v4025 = vunpack.c.l.b16 %v3988
    %v4026 = vunpack.c.l.b16 %v3989
    %v4027 = vunpack.c.l.b16 %v3990
    %v4028 = vunpack.c.l.b16 %v3991
    %v4029 = vunpack.c.l.b16 %v3992
    %v4030 = vunpack.c.l.b16 %v3993
    %v4031 = vunpack.c.l.b16 %v3994
    %v4032 = vunpack.c.l.b16 %v3995
    %v4033 = vunpack.c.l.b16 %v3996
    %v4034 = vunpack.c.l.b16 %v3997
    %v4035 = vunpack.c.l.b16 %v3998
    %v4036 = vpack.c.b16 %v4025, %v4024
    %v4037 = vpack.c.b16 %v4027, %v4026
    %v4038 = vpack.c.b16 %v4029, %v4028
    %v4039 = vpack.c.b16 %v4031, %v4030
    %v4040 = vpack.c.b16 %v4033, %v4032
    %v4041 = vpack.c.b16 %v4035, %v4034
    %4048 = vxpose.xlu0.c.b16.start [1/8] %v4036, 128
    %4049 = vxpose.xlu0.c.b16.cont [2/8] %v4037, 128
    %4050 = vxpose.xlu0.c.b16.cont [3/8] %v4038, 128
    %4051 = vxpose.xlu0.c.b16.cont [4/8] %v4039, 128
    %4052 = vxpose.xlu0.c.b16.cont [5/8] %v4040, 128
    %4053 = vxpose.xlu0.c.b16.cont [6/8] %v4041, 128
    %4054 = vxpose.xlu0.c.b16.cont [7/8] 0, 128
    %4055 = vxpose.xlu0.c.b16.end [8/8] 0, 128
    %v4056 = vpop.trf.xlu0
    %v4057 = vpop.trf.xlu0
    %v4058 = vpop.trf.xlu0
    %v4059 = vpop.trf.xlu0
    %v4060 = vpop.trf.xlu0
    %v4061 = vpop.trf.xlu0
    %v4062 = vpop.trf.xlu0
    %v4063 = vpop.trf.xlu0
    %v4065 = vsel %vm579, %v4056, 0
    %v4068 = vsel %vm579, %v4057, 0
    %v4071 = vsel %vm579, %v4058, 0
    %v4074 = vsel %vm579, %v4059, 0
    %4076 = vmatpush.bf16.msra.mxu0 0
    %4077 = vmatpush.bf16.msra.mxu0 0
    %4078 = vmatpush.bf16.msra.mxu0 %v3979
    %4079 = vmatpush.bf16.msra.mxu0 %v3978
    %4080 = vmatpush.bf16.msra.mxu0 %v3977
    %4081 = vmatpush.bf16.msra.mxu0 %v3976
    %4082 = vmatpush.bf16.msra.mxu0 %v3975
    %4083 = vmatpush.bf16.msra.mxu0 %v3974
    %4084 = vmatmul.bf16.gmra.mxu0 %v4065
    %v4085 = vpop.f32.mrf.mxu0
    %v4086 = vadd.f32 0.0, %v4085
    %v4087 = vpop.f32.mrf.mxu0
    %v4088 = vadd.f32 0.0, %v4087
    %4089 = vmatmul.bf16.gmra.mxu0 %v4068
    %v4090 = vpop.f32.mrf.mxu0
    %v4091 = vadd.f32 0.0, %v4090
    %v4092 = vpop.f32.mrf.mxu0
    %v4093 = vadd.f32 0.0, %v4092
    %4094 = vmatmul.bf16.gmra.mxu0 %v4071
    %v4095 = vpop.f32.mrf.mxu0
    %v4096 = vadd.f32 0.0, %v4095
    %v4097 = vpop.f32.mrf.mxu0
    %v4098 = vadd.f32 0.0, %v4097
    %4099 = vmatmul.bf16.gmra.mxu0 %v4074
    %v4100 = vpop.f32.mrf.mxu0
    %v4101 = vadd.f32 0.0, %v4100
    %v4102 = vpop.f32.mrf.mxu0
    %v4103 = vadd.f32 0.0, %v4102
    %4104 = vdwg.mxu0
    %v4105 = vpack.c.bf16 %v4086, %v4086
    %v4106 = vpack.c.bf16 %v4088, %v4088
    %v4107 = vpack.c.bf16 %v4091, %v4091
    %v4108 = vpack.c.bf16 %v4093, %v4093
    %v4109 = vpack.c.bf16 %v4096, %v4096
    %v4110 = vpack.c.bf16 %v4098, %v4098
    %v4111 = vpack.c.bf16 %v4101, %v4101
    %v4112 = vpack.c.bf16 %v4103, %v4103
    %v4125 = vunpack.c.l.b16 %v4000
    %v4126 = vunpack.c.l.b16 %v4001
    %v4127 = vunpack.c.l.b16 %v4002
    %v4128 = vunpack.c.l.b16 %v4003
    %v4129 = vunpack.c.l.b16 %v4004
    %v4130 = vunpack.c.l.b16 %v4005
    %v4131 = vunpack.c.l.b16 %v4006
    %v4132 = vunpack.c.l.b16 %v4007
    %v4133 = vunpack.c.l.b16 %v4008
    %v4134 = vunpack.c.l.b16 %v4009
    %v4135 = vunpack.c.l.b16 %v4010
    %v4136 = vunpack.c.l.b16 %v4011
    %v4137 = vpack.c.b16 %v4126, %v4125
    %v4138 = vpack.c.b16 %v4128, %v4127
    %v4139 = vpack.c.b16 %v4130, %v4129
    %v4140 = vpack.c.b16 %v4132, %v4131
    %v4141 = vpack.c.b16 %v4134, %v4133
    %v4142 = vpack.c.b16 %v4136, %v4135
    %4149 = vxpose.xlu0.c.b16.start [1/8] %v4137, 128
    %4150 = vxpose.xlu0.c.b16.cont [2/8] %v4138, 128
    %4151 = vxpose.xlu0.c.b16.cont [3/8] %v4139, 128
    %4152 = vxpose.xlu0.c.b16.cont [4/8] %v4140, 128
    %4153 = vxpose.xlu0.c.b16.cont [5/8] %v4141, 128
    %4154 = vxpose.xlu0.c.b16.cont [6/8] %v4142, 128
    %4155 = vxpose.xlu0.c.b16.cont [7/8] 0, 128
    %4156 = vxpose.xlu0.c.b16.end [8/8] 0, 128
    %v4157 = vpop.trf.xlu0
    %v4158 = vpop.trf.xlu0
    %v4159 = vpop.trf.xlu0
    %v4160 = vpop.trf.xlu0
    %v4161 = vpop.trf.xlu0
    %v4162 = vpop.trf.xlu0
    %v4163 = vpop.trf.xlu0
    %v4164 = vpop.trf.xlu0
    %v4166 = vsel %vm579, %v4157, 0
    %v4169 = vsel %vm579, %v4158, 0
    %v4172 = vsel %vm579, %v4159, 0
    %v4175 = vsel %vm579, %v4160, 0
    %4177 = vmatpush.bf16.msra.mxu0 0
    %4178 = vmatpush.bf16.msra.mxu0 0
    %4179 = vmatpush.bf16.msra.mxu0 %v3985
    %4180 = vmatpush.bf16.msra.mxu0 %v3984
    %4181 = vmatpush.bf16.msra.mxu0 %v3983
    %4182 = vmatpush.bf16.msra.mxu0 %v3982
    %4183 = vmatpush.bf16.msra.mxu0 %v3981
    %4184 = vmatpush.bf16.msra.mxu0 %v3980
    %4185 = vmatmul.bf16.gmra.mxu0 %v4166
    %v4186 = vpop.f32.mrf.mxu0
    %v4187 = vadd.f32 0.0, %v4186
    %v4188 = vpop.f32.mrf.mxu0
    %v4189 = vadd.f32 0.0, %v4188
    %4190 = vmatmul.bf16.gmra.mxu0 %v4169
    %v4191 = vpop.f32.mrf.mxu0
    %v4192 = vadd.f32 0.0, %v4191
    %v4193 = vpop.f32.mrf.mxu0
    %v4194 = vadd.f32 0.0, %v4193
    %4195 = vmatmul.bf16.gmra.mxu0 %v4172
    %v4196 = vpop.f32.mrf.mxu0
    %v4197 = vadd.f32 0.0, %v4196
    %v4198 = vpop.f32.mrf.mxu0
    %v4199 = vadd.f32 0.0, %v4198
    %4200 = vmatmul.bf16.gmra.mxu0 %v4175
    %v4201 = vpop.f32.mrf.mxu0
    %v4202 = vadd.f32 0.0, %v4201
    %v4203 = vpop.f32.mrf.mxu0
    %v4204 = vadd.f32 0.0, %v4203
    %4205 = vdwg.mxu0
    %v4206 = vpack.c.bf16 %v4187, %v4187
    %v4207 = vpack.c.bf16 %v4189, %v4189
    %v4208 = vpack.c.bf16 %v4192, %v4192
    %v4209 = vpack.c.bf16 %v4194, %v4194
    %v4210 = vpack.c.bf16 %v4197, %v4197
    %v4211 = vpack.c.bf16 %v4199, %v4199
    %v4212 = vpack.c.bf16 %v4202, %v4202
    %v4213 = vpack.c.bf16 %v4204, %v4204
    %v4226 = vunpack.c.l.b16 %v3962
    %v4227 = vunpack.c.l.b16 %v3963
    %v4228 = vunpack.c.l.b16 %v3964
    %v4229 = vunpack.c.l.b16 %v3965
    %v4230 = vunpack.c.l.b16 %v3966
    %v4231 = vunpack.c.l.b16 %v3967
    %v4232 = vunpack.c.l.b16 %v3968
    %v4233 = vunpack.c.l.b16 %v3969
    %v4234 = vunpack.c.l.b16 %v3970
    %v4235 = vunpack.c.l.b16 %v3971
    %v4236 = vunpack.c.l.b16 %v3972
    %v4237 = vunpack.c.l.b16 %v3973
    %v4238 = vpack.c.b16 %v4227, %v4226
    %v4239 = vpack.c.b16 %v4229, %v4228
    %v4240 = vpack.c.b16 %v4231, %v4230
    %v4241 = vpack.c.b16 %v4233, %v4232
    %v4242 = vpack.c.b16 %v4235, %v4234
    %v4243 = vpack.c.b16 %v4237, %v4236
    %v4252 = vunpack.c.l.b16 %v4105
    %v4253 = vunpack.c.l.b16 %v4106
    %v4254 = vunpack.c.l.b16 %v4107
    %v4255 = vunpack.c.l.b16 %v4108
    %v4256 = vunpack.c.l.b16 %v4109
    %v4257 = vunpack.c.l.b16 %v4110
    %v4258 = vunpack.c.l.b16 %v4111
    %v4259 = vunpack.c.l.b16 %v4112
    %v4260 = vpack.c.b16 %v4253, %v4252
    %v4261 = vpack.c.b16 %v4255, %v4254
    %v4262 = vpack.c.b16 %v4257, %v4256
    %v4263 = vpack.c.b16 %v4259, %v4258
    %v4265 = vsel %vm780, %v4238, 0
    %v4268 = vsel %vm780, %v4239, 0
    %v4271 = vsel %vm780, %v4240, 0
    %v4274 = vsel %vm780, %v4241, 0
    %v4277 = vsel %vm780, %v4242, 0
    %v4280 = vsel %vm780, %v4243, 0
    %v4283 = vsel %vm780, %v4260, 0
    %v4286 = vsel %vm780, %v4261, 0
    %v4289 = vsel %vm780, %v4262, 0
    %v4292 = vsel %vm780, %v4263, 0
    %4294 = vmatpush.bf16.xpose.msra.mxu0 0
    %4295 = vmatpush.bf16.xpose.msra.mxu0 0
    %4296 = vmatpush.bf16.xpose.msra.mxu0 0
    %4297 = vmatpush.bf16.xpose.msra.mxu0 0
    %4298 = vmatpush.bf16.xpose.msra.mxu0 %v4292
    %4299 = vmatpush.bf16.xpose.msra.mxu0 %v4289
    %4300 = vmatpush.bf16.xpose.msra.mxu0 %v4286
    %4301 = vmatpush.bf16.xpose.msra.mxu0 %v4283
    %4302 = vmatmul.bf16.gmra.mxu0 %v4265
    %v4303 = vpop.f32.mrf.mxu0
    %v4304 = vadd.f32 0.0, %v4303
    %v4305 = vpop.f32.mrf.mxu0
    %v4306 = vadd.f32 0.0, %v4305
    %4307 = vmatmul.bf16.gmra.mxu0 %v4268
    %v4308 = vpop.f32.mrf.mxu0
    %v4309 = vadd.f32 0.0, %v4308
    %v4310 = vpop.f32.mrf.mxu0
    %v4311 = vadd.f32 0.0, %v4310
    %4312 = vmatmul.bf16.gmra.mxu0 %v4271
    %v4313 = vpop.f32.mrf.mxu0
    %v4314 = vadd.f32 0.0, %v4313
    %v4315 = vpop.f32.mrf.mxu0
    %v4316 = vadd.f32 0.0, %v4315
    %4317 = vmatmul.bf16.gmra.mxu0 %v4274
    %v4318 = vpop.f32.mrf.mxu0
    %v4319 = vadd.f32 0.0, %v4318
    %v4320 = vpop.f32.mrf.mxu0
    %v4321 = vadd.f32 0.0, %v4320
    %4322 = vmatmul.bf16.gmra.mxu0 %v4277
    %v4323 = vpop.f32.mrf.mxu0
    %v4324 = vadd.f32 0.0, %v4323
    %v4325 = vpop.f32.mrf.mxu0
    %v4326 = vadd.f32 0.0, %v4325
    %4327 = vmatmul.bf16.gmra.mxu0 %v4280
    %v4328 = vpop.f32.mrf.mxu0
    %v4329 = vadd.f32 0.0, %v4328
    %v4330 = vpop.f32.mrf.mxu0
    %v4331 = vadd.f32 0.0, %v4330
    %4332 = vdwg.mxu0
    %v4333 = vsel %vm850, %v4304, -inf
    %4334 = vmax.xlane.f32.xlu0 %v4333
    %v4335 = vpop.xlane.xlu0 %4334
    %v4336 = vsel %vm850, %v4306, -inf
    %4337 = vmax.xlane.f32.xlu0 %v4336
    %v4338 = vpop.xlane.xlu0 %4337
    %v4339 = vsel %vm850, %v4309, -inf
    %4340 = vmax.xlane.f32.xlu0 %v4339
    %v4341 = vpop.xlane.xlu0 %4340
    %v4342 = vsel %vm850, %v4311, -inf
    %4343 = vmax.xlane.f32.xlu0 %v4342
    %v4344 = vpop.xlane.xlu0 %4343
    %v4345 = vsel %vm850, %v4314, -inf
    %4346 = vmax.xlane.f32.xlu0 %v4345
    %v4347 = vpop.xlane.xlu0 %4346
    %v4348 = vsel %vm850, %v4316, -inf
    %4349 = vmax.xlane.f32.xlu0 %v4348
    %v4350 = vpop.xlane.xlu0 %4349
    %v4351 = vsel %vm850, %v4319, -inf
    %4352 = vmax.xlane.f32.xlu0 %v4351
    %v4353 = vpop.xlane.xlu0 %4352
    %v4354 = vsel %vm850, %v4321, -inf
    %4355 = vmax.xlane.f32.xlu0 %v4354
    %v4356 = vpop.xlane.xlu0 %4355
    %v4357 = vsel %vm850, %v4324, -inf
    %4358 = vmax.xlane.f32.xlu0 %v4357
    %v4359 = vpop.xlane.xlu0 %4358
    %v4360 = vsel %vm850, %v4326, -inf
    %4361 = vmax.xlane.f32.xlu0 %v4360
    %v4362 = vpop.xlane.xlu0 %4361
    %v4363 = vsel %vm850, %v4329, -inf
    %4364 = vmax.xlane.f32.xlu0 %v4363
    %v4365 = vpop.xlane.xlu0 %4364
    %v4366 = vsel %vm850, %v4331, -inf
    %4367 = vmax.xlane.f32.xlu0 %v4366
    %v4368 = vpop.xlane.xlu0 %4367
    %v4369 = vsub.f32 %v4304, %v4335
    %v4370 = vsub.f32 %v4306, %v4338
    %v4371 = vsub.f32 %v4309, %v4341
    %v4372 = vsub.f32 %v4311, %v4344
    %v4373 = vsub.f32 %v4314, %v4347
    %v4374 = vsub.f32 %v4316, %v4350
    %v4375 = vsub.f32 %v4319, %v4353
    %v4376 = vsub.f32 %v4321, %v4356
    %v4377 = vsub.f32 %v4324, %v4359
    %v4378 = vsub.f32 %v4326, %v4362
    %v4379 = vsub.f32 %v4329, %v4365
    %v4380 = vsub.f32 %v4331, %v4368
    %v4381 = vmul.f32 %v4369, 1.442695
    %v4382 = vpow.pop %v4381
    %v4383 = vmul.f32 %v4370, 1.442695
    %v4384 = vpow.pop %v4383
    %v4385 = vmul.f32 %v4371, 1.442695
    %v4386 = vpow.pop %v4385
    %v4387 = vmul.f32 %v4372, 1.442695
    %v4388 = vpow.pop %v4387
    %v4389 = vmul.f32 %v4373, 1.442695
    %v4390 = vpow.pop %v4389
    %v4391 = vmul.f32 %v4374, 1.442695
    %v4392 = vpow.pop %v4391
    %v4393 = vmul.f32 %v4375, 1.442695
    %v4394 = vpow.pop %v4393
    %v4395 = vmul.f32 %v4376, 1.442695
    %v4396 = vpow.pop %v4395
    %v4397 = vmul.f32 %v4377, 1.442695
    %v4398 = vpow.pop %v4397
    %v4399 = vmul.f32 %v4378, 1.442695
    %v4400 = vpow.pop %v4399
    %v4401 = vmul.f32 %v4379, 1.442695
    %v4402 = vpow.pop %v4401
    %v4403 = vmul.f32 %v4380, 1.442695
    %v4404 = vpow.pop %v4403
    %v4405 = vsel %vm850, %v4382, 0.0
    %4406 = vadd.xlane.f32.xlu0 %v4405
    %v4407 = vpop.xlane.xlu0 %4406
    %v4408 = vsel %vm850, %v4384, 0.0
    %4409 = vadd.xlane.f32.xlu0 %v4408
    %v4410 = vpop.xlane.xlu0 %4409
    %v4411 = vsel %vm850, %v4386, 0.0
    %4412 = vadd.xlane.f32.xlu0 %v4411
    %v4413 = vpop.xlane.xlu0 %4412
    %v4414 = vsel %vm850, %v4388, 0.0
    %4415 = vadd.xlane.f32.xlu0 %v4414
    %v4416 = vpop.xlane.xlu0 %4415
    %v4417 = vsel %vm850, %v4390, 0.0
    %4418 = vadd.xlane.f32.xlu0 %v4417
    %v4419 = vpop.xlane.xlu0 %4418
    %v4420 = vsel %vm850, %v4392, 0.0
    %4421 = vadd.xlane.f32.xlu0 %v4420
    %v4422 = vpop.xlane.xlu0 %4421
    %v4423 = vsel %vm850, %v4394, 0.0
    %4424 = vadd.xlane.f32.xlu0 %v4423
    %v4425 = vpop.xlane.xlu0 %4424
    %v4426 = vsel %vm850, %v4396, 0.0
    %4427 = vadd.xlane.f32.xlu0 %v4426
    %v4428 = vpop.xlane.xlu0 %4427
    %v4429 = vsel %vm850, %v4398, 0.0
    %4430 = vadd.xlane.f32.xlu0 %v4429
    %v4431 = vpop.xlane.xlu0 %4430
    %v4432 = vsel %vm850, %v4400, 0.0
    %4433 = vadd.xlane.f32.xlu0 %v4432
    %v4434 = vpop.xlane.xlu0 %4433
    %v4435 = vsel %vm850, %v4402, 0.0
    %4436 = vadd.xlane.f32.xlu0 %v4435
    %v4437 = vpop.xlane.xlu0 %4436
    %v4438 = vsel %vm850, %v4404, 0.0
    %4439 = vadd.xlane.f32.xlu0 %v4438
    %v4440 = vpop.xlane.xlu0 %4439
    %v4441 = vrcp.pop %v4407
    %v4442 = vrcp.pop %v4410
    %v4443 = vrcp.pop %v4413
    %v4444 = vrcp.pop %v4416
    %v4445 = vrcp.pop %v4419
    %v4446 = vrcp.pop %v4422
    %v4447 = vrcp.pop %v4425
    %v4448 = vrcp.pop %v4428
    %v4449 = vrcp.pop %v4431
    %v4450 = vrcp.pop %v4434
    %v4451 = vrcp.pop %v4437
    %v4452 = vrcp.pop %v4440
    %v4453 = vmul.f32 %v4382, %v4441
    %v4454 = vmul.f32 %v4384, %v4442
    %v4455 = vmul.f32 %v4386, %v4443
    %v4456 = vmul.f32 %v4388, %v4444
    %v4457 = vmul.f32 %v4390, %v4445
    %v4458 = vmul.f32 %v4392, %v4446
    %v4459 = vmul.f32 %v4394, %v4447
    %v4460 = vmul.f32 %v4396, %v4448
    %v4461 = vmul.f32 %v4398, %v4449
    %v4462 = vmul.f32 %v4400, %v4450
    %v4463 = vmul.f32 %v4402, %v4451
    %v4464 = vmul.f32 %v4404, %v4452
    %v4465 = vpack.c.bf16 %v4454, %v4453
    %v4466 = vpack.c.bf16 %v4456, %v4455
    %v4467 = vpack.c.bf16 %v4458, %v4457
    %v4468 = vpack.c.bf16 %v4460, %v4459
    %v4469 = vpack.c.bf16 %v4462, %v4461
    %v4470 = vpack.c.bf16 %v4464, %v4463
    %v4479 = vunpack.c.l.b16 %v4206
    %v4480 = vunpack.c.l.b16 %v4207
    %v4481 = vunpack.c.l.b16 %v4208
    %v4482 = vunpack.c.l.b16 %v4209
    %v4483 = vunpack.c.l.b16 %v4210
    %v4484 = vunpack.c.l.b16 %v4211
    %v4485 = vunpack.c.l.b16 %v4212
    %v4486 = vunpack.c.l.b16 %v4213
    %v4487 = vpack.c.b16 %v4480, %v4479
    %v4488 = vpack.c.b16 %v4482, %v4481
    %v4489 = vpack.c.b16 %v4484, %v4483
    %v4490 = vpack.c.b16 %v4486, %v4485
    %v4496 = vsel %vm850, %v4465, 0
    %v4499 = vsel %vm850, %v4466, 0
    %v4502 = vsel %vm850, %v4467, 0
    %v4505 = vsel %vm850, %v4468, 0
    %v4508 = vsel %vm850, %v4469, 0
    %v4511 = vsel %vm850, %v4470, 0
    %4513 = vmatpush.bf16.msra.mxu0 0
    %4514 = vmatpush.bf16.msra.mxu0 0
    %4515 = vmatpush.bf16.msra.mxu0 0
    %4516 = vmatpush.bf16.msra.mxu0 0
    %4517 = vmatpush.bf16.msra.mxu0 %v4490
    %4518 = vmatpush.bf16.msra.mxu0 %v4489
    %4519 = vmatpush.bf16.msra.mxu0 %v4488
    %4520 = vmatpush.bf16.msra.mxu0 %v4487
    %4521 = vmatmul.bf16.gmra.mxu0 %v4496
    %v4522 = vpop.f32.mrf.mxu0
    %v4523 = vadd.f32 0.0, %v4522
    %v4524 = vpop.f32.mrf.mxu0
    %v4525 = vadd.f32 0.0, %v4524
    %4526 = vmatmul.bf16.gmra.mxu0 %v4499
    %v4527 = vpop.f32.mrf.mxu0
    %v4528 = vadd.f32 0.0, %v4527
    %v4529 = vpop.f32.mrf.mxu0
    %v4530 = vadd.f32 0.0, %v4529
    %4531 = vmatmul.bf16.gmra.mxu0 %v4502
    %v4532 = vpop.f32.mrf.mxu0
    %v4533 = vadd.f32 0.0, %v4532
    %v4534 = vpop.f32.mrf.mxu0
    %v4535 = vadd.f32 0.0, %v4534
    %4536 = vmatmul.bf16.gmra.mxu0 %v4505
    %v4537 = vpop.f32.mrf.mxu0
    %v4538 = vadd.f32 0.0, %v4537
    %v4539 = vpop.f32.mrf.mxu0
    %v4540 = vadd.f32 0.0, %v4539
    %4541 = vmatmul.bf16.gmra.mxu0 %v4508
    %v4542 = vpop.f32.mrf.mxu0
    %v4543 = vadd.f32 0.0, %v4542
    %v4544 = vpop.f32.mrf.mxu0
    %v4545 = vadd.f32 0.0, %v4544
    %4546 = vmatmul.bf16.gmra.mxu0 %v4511
    %v4547 = vpop.f32.mrf.mxu0
    %v4548 = vadd.f32 0.0, %v4547
    %v4549 = vpop.f32.mrf.mxu0
    %v4550 = vadd.f32 0.0, %v4549
    %4551 = vdwg.mxu0
    %4552 = vrot.lane.b32.xlu0 %v4238, 96
    %v4553 = vpop.permute.xlu0 %4552
    %4554 = vrot.lane.b32.xlu0 %v4239, 96
    %v4555 = vpop.permute.xlu0 %4554
    %4556 = vrot.lane.b32.xlu0 %v4240, 96
    %v4557 = vpop.permute.xlu0 %4556
    %4558 = vrot.lane.b32.xlu0 %v4241, 96
    %v4559 = vpop.permute.xlu0 %4558
    %4560 = vrot.lane.b32.xlu0 %v4242, 96
    %v4561 = vpop.permute.xlu0 %4560
    %4562 = vrot.lane.b32.xlu0 %v4243, 96
    %v4563 = vpop.permute.xlu0 %4562
    %4564 = vrot.lane.b32.xlu0 %v4260, 96
    %v4565 = vpop.permute.xlu0 %4564
    %4566 = vrot.lane.b32.xlu0 %v4261, 96
    %v4567 = vpop.permute.xlu0 %4566
    %4568 = vrot.lane.b32.xlu0 %v4262, 96
    %v4569 = vpop.permute.xlu0 %4568
    %4570 = vrot.lane.b32.xlu0 %v4263, 96
    %v4571 = vpop.permute.xlu0 %4570
    %v4573 = vsel %vm780, %v4553, 0
    %v4576 = vsel %vm780, %v4555, 0
    %v4579 = vsel %vm780, %v4557, 0
    %v4582 = vsel %vm780, %v4559, 0
    %v4585 = vsel %vm780, %v4561, 0
    %v4588 = vsel %vm780, %v4563, 0
    %v4591 = vsel %vm780, %v4565, 0
    %v4594 = vsel %vm780, %v4567, 0
    %v4597 = vsel %vm780, %v4569, 0
    %v4600 = vsel %vm780, %v4571, 0
    %4602 = vmatpush.bf16.xpose.msra.mxu0 0
    %4603 = vmatpush.bf16.xpose.msra.mxu0 0
    %4604 = vmatpush.bf16.xpose.msra.mxu0 0
    %4605 = vmatpush.bf16.xpose.msra.mxu0 0
    %4606 = vmatpush.bf16.xpose.msra.mxu0 %v4600
    %4607 = vmatpush.bf16.xpose.msra.mxu0 %v4597
    %4608 = vmatpush.bf16.xpose.msra.mxu0 %v4594
    %4609 = vmatpush.bf16.xpose.msra.mxu0 %v4591
    %4610 = vmatmul.bf16.gmra.mxu0 %v4573
    %v4611 = vpop.f32.mrf.mxu0
    %v4612 = vadd.f32 0.0, %v4611
    %v4613 = vpop.f32.mrf.mxu0
    %v4614 = vadd.f32 0.0, %v4613
    %4615 = vmatmul.bf16.gmra.mxu0 %v4576
    %v4616 = vpop.f32.mrf.mxu0
    %v4617 = vadd.f32 0.0, %v4616
    %v4618 = vpop.f32.mrf.mxu0
    %v4619 = vadd.f32 0.0, %v4618
    %4620 = vmatmul.bf16.gmra.mxu0 %v4579
    %v4621 = vpop.f32.mrf.mxu0
    %v4622 = vadd.f32 0.0, %v4621
    %v4623 = vpop.f32.mrf.mxu0
    %v4624 = vadd.f32 0.0, %v4623
    %4625 = vmatmul.bf16.gmra.mxu0 %v4582
    %v4626 = vpop.f32.mrf.mxu0
    %v4627 = vadd.f32 0.0, %v4626
    %v4628 = vpop.f32.mrf.mxu0
    %v4629 = vadd.f32 0.0, %v4628
    %4630 = vmatmul.bf16.gmra.mxu0 %v4585
    %v4631 = vpop.f32.mrf.mxu0
    %v4632 = vadd.f32 0.0, %v4631
    %v4633 = vpop.f32.mrf.mxu0
    %v4634 = vadd.f32 0.0, %v4633
    %4635 = vmatmul.bf16.gmra.mxu0 %v4588
    %v4636 = vpop.f32.mrf.mxu0
    %v4637 = vadd.f32 0.0, %v4636
    %v4638 = vpop.f32.mrf.mxu0
    %v4639 = vadd.f32 0.0, %v4638
    %4640 = vdwg.mxu0
    %v4641 = vsel %vm850, %v4612, -inf
    %4642 = vmax.xlane.f32.xlu0 %v4641
    %v4643 = vpop.xlane.xlu0 %4642
    %v4644 = vsel %vm850, %v4614, -inf
    %4645 = vmax.xlane.f32.xlu0 %v4644
    %v4646 = vpop.xlane.xlu0 %4645
    %v4647 = vsel %vm850, %v4617, -inf
    %4648 = vmax.xlane.f32.xlu0 %v4647
    %v4649 = vpop.xlane.xlu0 %4648
    %v4650 = vsel %vm850, %v4619, -inf
    %4651 = vmax.xlane.f32.xlu0 %v4650
    %v4652 = vpop.xlane.xlu0 %4651
    %v4653 = vsel %vm850, %v4622, -inf
    %4654 = vmax.xlane.f32.xlu0 %v4653
    %v4655 = vpop.xlane.xlu0 %4654
    %v4656 = vsel %vm850, %v4624, -inf
    %4657 = vmax.xlane.f32.xlu0 %v4656
    %v4658 = vpop.xlane.xlu0 %4657
    %v4659 = vsel %vm850, %v4627, -inf
    %4660 = vmax.xlane.f32.xlu0 %v4659
    %v4661 = vpop.xlane.xlu0 %4660
    %v4662 = vsel %vm850, %v4629, -inf
    %4663 = vmax.xlane.f32.xlu0 %v4662
    %v4664 = vpop.xlane.xlu0 %4663
    %v4665 = vsel %vm850, %v4632, -inf
    %4666 = vmax.xlane.f32.xlu0 %v4665
    %v4667 = vpop.xlane.xlu0 %4666
    %v4668 = vsel %vm850, %v4634, -inf
    %4669 = vmax.xlane.f32.xlu0 %v4668
    %v4670 = vpop.xlane.xlu0 %4669
    %v4671 = vsel %vm850, %v4637, -inf
    %4672 = vmax.xlane.f32.xlu0 %v4671
    %v4673 = vpop.xlane.xlu0 %4672
    %v4674 = vsel %vm850, %v4639, -inf
    %4675 = vmax.xlane.f32.xlu0 %v4674
    %v4676 = vpop.xlane.xlu0 %4675
    %v4677 = vsub.f32 %v4612, %v4643
    %v4678 = vsub.f32 %v4614, %v4646
    %v4679 = vsub.f32 %v4617, %v4649
    %v4680 = vsub.f32 %v4619, %v4652
    %v4681 = vsub.f32 %v4622, %v4655
    %v4682 = vsub.f32 %v4624, %v4658
    %v4683 = vsub.f32 %v4627, %v4661
    %v4684 = vsub.f32 %v4629, %v4664
    %v4685 = vsub.f32 %v4632, %v4667
    %v4686 = vsub.f32 %v4634, %v4670
    %v4687 = vsub.f32 %v4637, %v4673
    %v4688 = vsub.f32 %v4639, %v4676
    %v4689 = vmul.f32 %v4677, 1.442695
    %v4690 = vpow.pop %v4689
    %v4691 = vmul.f32 %v4678, 1.442695
    %v4692 = vpow.pop %v4691
    %v4693 = vmul.f32 %v4679, 1.442695
    %v4694 = vpow.pop %v4693
    %v4695 = vmul.f32 %v4680, 1.442695
    %v4696 = vpow.pop %v4695
    %v4697 = vmul.f32 %v4681, 1.442695
    %v4698 = vpow.pop %v4697
    %v4699 = vmul.f32 %v4682, 1.442695
    %v4700 = vpow.pop %v4699
    %v4701 = vmul.f32 %v4683, 1.442695
    %v4702 = vpow.pop %v4701
    %v4703 = vmul.f32 %v4684, 1.442695
    %v4704 = vpow.pop %v4703
    %v4705 = vmul.f32 %v4685, 1.442695
    %v4706 = vpow.pop %v4705
    %v4707 = vmul.f32 %v4686, 1.442695
    %v4708 = vpow.pop %v4707
    %v4709 = vmul.f32 %v4687, 1.442695
    %v4710 = vpow.pop %v4709
    %v4711 = vmul.f32 %v4688, 1.442695
    %v4712 = vpow.pop %v4711
    %v4713 = vsel %vm850, %v4690, 0.0
    %4714 = vadd.xlane.f32.xlu0 %v4713
    %v4715 = vpop.xlane.xlu0 %4714
    %v4716 = vsel %vm850, %v4692, 0.0
    %4717 = vadd.xlane.f32.xlu0 %v4716
    %v4718 = vpop.xlane.xlu0 %4717
    %v4719 = vsel %vm850, %v4694, 0.0
    %4720 = vadd.xlane.f32.xlu0 %v4719
    %v4721 = vpop.xlane.xlu0 %4720
    %v4722 = vsel %vm850, %v4696, 0.0
    %4723 = vadd.xlane.f32.xlu0 %v4722
    %v4724 = vpop.xlane.xlu0 %4723
    %v4725 = vsel %vm850, %v4698, 0.0
    %4726 = vadd.xlane.f32.xlu0 %v4725
    %v4727 = vpop.xlane.xlu0 %4726
    %v4728 = vsel %vm850, %v4700, 0.0
    %4729 = vadd.xlane.f32.xlu0 %v4728
    %v4730 = vpop.xlane.xlu0 %4729
    %v4731 = vsel %vm850, %v4702, 0.0
    %4732 = vadd.xlane.f32.xlu0 %v4731
    %v4733 = vpop.xlane.xlu0 %4732
    %v4734 = vsel %vm850, %v4704, 0.0
    %4735 = vadd.xlane.f32.xlu0 %v4734
    %v4736 = vpop.xlane.xlu0 %4735
    %v4737 = vsel %vm850, %v4706, 0.0
    %4738 = vadd.xlane.f32.xlu0 %v4737
    %v4739 = vpop.xlane.xlu0 %4738
    %v4740 = vsel %vm850, %v4708, 0.0
    %4741 = vadd.xlane.f32.xlu0 %v4740
    %v4742 = vpop.xlane.xlu0 %4741
    %v4743 = vsel %vm850, %v4710, 0.0
    %4744 = vadd.xlane.f32.xlu0 %v4743
    %v4745 = vpop.xlane.xlu0 %4744
    %v4746 = vsel %vm850, %v4712, 0.0
    %4747 = vadd.xlane.f32.xlu0 %v4746
    %v4748 = vpop.xlane.xlu0 %4747
    %v4749 = vrcp.pop %v4715
    %v4750 = vrcp.pop %v4718
    %v4751 = vrcp.pop %v4721
    %v4752 = vrcp.pop %v4724
    %v4753 = vrcp.pop %v4727
    %v4754 = vrcp.pop %v4730
    %v4755 = vrcp.pop %v4733
    %v4756 = vrcp.pop %v4736
    %v4757 = vrcp.pop %v4739
    %v4758 = vrcp.pop %v4742
    %v4759 = vrcp.pop %v4745
    %v4760 = vrcp.pop %v4748
    %v4761 = vmul.f32 %v4690, %v4749
    %v4762 = vmul.f32 %v4692, %v4750
    %v4763 = vmul.f32 %v4694, %v4751
    %v4764 = vmul.f32 %v4696, %v4752
    %v4765 = vmul.f32 %v4698, %v4753
    %v4766 = vmul.f32 %v4700, %v4754
    %v4767 = vmul.f32 %v4702, %v4755
    %v4768 = vmul.f32 %v4704, %v4756
    %v4769 = vmul.f32 %v4706, %v4757
    %v4770 = vmul.f32 %v4708, %v4758
    %v4771 = vmul.f32 %v4710, %v4759
    %v4772 = vmul.f32 %v4712, %v4760
    %v4773 = vpack.c.bf16 %v4762, %v4761
    %v4774 = vpack.c.bf16 %v4764, %v4763
    %v4775 = vpack.c.bf16 %v4766, %v4765
    %v4776 = vpack.c.bf16 %v4768, %v4767
    %v4777 = vpack.c.bf16 %v4770, %v4769
    %v4778 = vpack.c.bf16 %v4772, %v4771
    %4779 = vrot.lane.b32.xlu0 %v4487, 96
    %v4780 = vpop.permute.xlu0 %4779
    %4781 = vrot.lane.b32.xlu0 %v4488, 96
    %v4782 = vpop.permute.xlu0 %4781
    %4783 = vrot.lane.b32.xlu0 %v4489, 96
    %v4784 = vpop.permute.xlu0 %4783
    %4785 = vrot.lane.b32.xlu0 %v4490, 96
    %v4786 = vpop.permute.xlu0 %4785
    %v4792 = vsel %vm850, %v4773, 0
    %v4795 = vsel %vm850, %v4774, 0
    %v4798 = vsel %vm850, %v4775, 0
    %v4801 = vsel %vm850, %v4776, 0
    %v4804 = vsel %vm850, %v4777, 0
    %v4807 = vsel %vm850, %v4778, 0
    %4809 = vmatpush.bf16.msra.mxu0 0
    %4810 = vmatpush.bf16.msra.mxu0 0
    %4811 = vmatpush.bf16.msra.mxu0 0
    %4812 = vmatpush.bf16.msra.mxu0 0
    %4813 = vmatpush.bf16.msra.mxu0 %v4786
    %4814 = vmatpush.bf16.msra.mxu0 %v4784
    %4815 = vmatpush.bf16.msra.mxu0 %v4782
    %4816 = vmatpush.bf16.msra.mxu0 %v4780
    %4817 = vmatmul.bf16.gmra.mxu0 %v4792
    %v4818 = vpop.f32.mrf.mxu0
    %v4819 = vadd.f32 0.0, %v4818
    %v4820 = vpop.f32.mrf.mxu0
    %v4821 = vadd.f32 0.0, %v4820
    %4822 = vmatmul.bf16.gmra.mxu0 %v4795
    %v4823 = vpop.f32.mrf.mxu0
    %v4824 = vadd.f32 0.0, %v4823
    %v4825 = vpop.f32.mrf.mxu0
    %v4826 = vadd.f32 0.0, %v4825
    %4827 = vmatmul.bf16.gmra.mxu0 %v4798
    %v4828 = vpop.f32.mrf.mxu0
    %v4829 = vadd.f32 0.0, %v4828
    %v4830 = vpop.f32.mrf.mxu0
    %v4831 = vadd.f32 0.0, %v4830
    %4832 = vmatmul.bf16.gmra.mxu0 %v4801
    %v4833 = vpop.f32.mrf.mxu0
    %v4834 = vadd.f32 0.0, %v4833
    %v4835 = vpop.f32.mrf.mxu0
    %v4836 = vadd.f32 0.0, %v4835
    %4837 = vmatmul.bf16.gmra.mxu0 %v4804
    %v4838 = vpop.f32.mrf.mxu0
    %v4839 = vadd.f32 0.0, %v4838
    %v4840 = vpop.f32.mrf.mxu0
    %v4841 = vadd.f32 0.0, %v4840
    %4842 = vmatmul.bf16.gmra.mxu0 %v4807
    %v4843 = vpop.f32.mrf.mxu0
    %v4844 = vadd.f32 0.0, %v4843
    %v4845 = vpop.f32.mrf.mxu0
    %v4846 = vadd.f32 0.0, %v4845
    %4847 = vdwg.mxu0
    %4848 = vrot.lane.b32.xlu0 %v4238, 64
    %v4849 = vpop.permute.xlu0 %4848
    %4850 = vrot.lane.b32.xlu0 %v4239, 64
    %v4851 = vpop.permute.xlu0 %4850
    %4852 = vrot.lane.b32.xlu0 %v4240, 64
    %v4853 = vpop.permute.xlu0 %4852
    %4854 = vrot.lane.b32.xlu0 %v4241, 64
    %v4855 = vpop.permute.xlu0 %4854
    %4856 = vrot.lane.b32.xlu0 %v4242, 64
    %v4857 = vpop.permute.xlu0 %4856
    %4858 = vrot.lane.b32.xlu0 %v4243, 64
    %v4859 = vpop.permute.xlu0 %4858
    %4860 = vrot.lane.b32.xlu0 %v4260, 64
    %v4861 = vpop.permute.xlu0 %4860
    %4862 = vrot.lane.b32.xlu0 %v4261, 64
    %v4863 = vpop.permute.xlu0 %4862
    %4864 = vrot.lane.b32.xlu0 %v4262, 64
    %v4865 = vpop.permute.xlu0 %4864
    %4866 = vrot.lane.b32.xlu0 %v4263, 64
    %v4867 = vpop.permute.xlu0 %4866
    %v4869 = vsel %vm780, %v4849, 0
    %v4872 = vsel %vm780, %v4851, 0
    %v4875 = vsel %vm780, %v4853, 0
    %v4878 = vsel %vm780, %v4855, 0
    %v4881 = vsel %vm780, %v4857, 0
    %v4884 = vsel %vm780, %v4859, 0
    %v4887 = vsel %vm780, %v4861, 0
    %v4890 = vsel %vm780, %v4863, 0
    %v4893 = vsel %vm780, %v4865, 0
    %v4896 = vsel %vm780, %v4867, 0
    %4898 = vmatpush.bf16.xpose.msra.mxu0 0
    %4899 = vmatpush.bf16.xpose.msra.mxu0 0
    %4900 = vmatpush.bf16.xpose.msra.mxu0 0
    %4901 = vmatpush.bf16.xpose.msra.mxu0 0
    %4902 = vmatpush.bf16.xpose.msra.mxu0 %v4896
    %4903 = vmatpush.bf16.xpose.msra.mxu0 %v4893
    %4904 = vmatpush.bf16.xpose.msra.mxu0 %v4890
    %4905 = vmatpush.bf16.xpose.msra.mxu0 %v4887
    %4906 = vmatmul.bf16.gmra.mxu0 %v4869
    %v4907 = vpop.f32.mrf.mxu0
    %v4908 = vadd.f32 0.0, %v4907
    %v4909 = vpop.f32.mrf.mxu0
    %v4910 = vadd.f32 0.0, %v4909
    %4911 = vmatmul.bf16.gmra.mxu0 %v4872
    %v4912 = vpop.f32.mrf.mxu0
    %v4913 = vadd.f32 0.0, %v4912
    %v4914 = vpop.f32.mrf.mxu0
    %v4915 = vadd.f32 0.0, %v4914
    %4916 = vmatmul.bf16.gmra.mxu0 %v4875
    %v4917 = vpop.f32.mrf.mxu0
    %v4918 = vadd.f32 0.0, %v4917
    %v4919 = vpop.f32.mrf.mxu0
    %v4920 = vadd.f32 0.0, %v4919
    %4921 = vmatmul.bf16.gmra.mxu0 %v4878
    %v4922 = vpop.f32.mrf.mxu0
    %v4923 = vadd.f32 0.0, %v4922
    %v4924 = vpop.f32.mrf.mxu0
    %v4925 = vadd.f32 0.0, %v4924
    %4926 = vmatmul.bf16.gmra.mxu0 %v4881
    %v4927 = vpop.f32.mrf.mxu0
    %v4928 = vadd.f32 0.0, %v4927
    %v4929 = vpop.f32.mrf.mxu0
    %v4930 = vadd.f32 0.0, %v4929
    %4931 = vmatmul.bf16.gmra.mxu0 %v4884
    %v4932 = vpop.f32.mrf.mxu0
    %v4933 = vadd.f32 0.0, %v4932
    %v4934 = vpop.f32.mrf.mxu0
    %v4935 = vadd.f32 0.0, %v4934
    %4936 = vdwg.mxu0
    %v4937 = vsel %vm850, %v4908, -inf
    %4938 = vmax.xlane.f32.xlu0 %v4937
    %v4939 = vpop.xlane.xlu0 %4938
    %v4940 = vsel %vm850, %v4910, -inf
    %4941 = vmax.xlane.f32.xlu0 %v4940
    %v4942 = vpop.xlane.xlu0 %4941
    %v4943 = vsel %vm850, %v4913, -inf
    %4944 = vmax.xlane.f32.xlu0 %v4943
    %v4945 = vpop.xlane.xlu0 %4944
    %v4946 = vsel %vm850, %v4915, -inf
    %4947 = vmax.xlane.f32.xlu0 %v4946
    %v4948 = vpop.xlane.xlu0 %4947
    %v4949 = vsel %vm850, %v4918, -inf
    %4950 = vmax.xlane.f32.xlu0 %v4949
    %v4951 = vpop.xlane.xlu0 %4950
    %v4952 = vsel %vm850, %v4920, -inf
    %4953 = vmax.xlane.f32.xlu0 %v4952
    %v4954 = vpop.xlane.xlu0 %4953
    %v4955 = vsel %vm850, %v4923, -inf
    %4956 = vmax.xlane.f32.xlu0 %v4955
    %v4957 = vpop.xlane.xlu0 %4956
    %v4958 = vsel %vm850, %v4925, -inf
    %4959 = vmax.xlane.f32.xlu0 %v4958
    %v4960 = vpop.xlane.xlu0 %4959
    %v4961 = vsel %vm850, %v4928, -inf
    %4962 = vmax.xlane.f32.xlu0 %v4961
    %v4963 = vpop.xlane.xlu0 %4962
    %v4964 = vsel %vm850, %v4930, -inf
    %4965 = vmax.xlane.f32.xlu0 %v4964
    %v4966 = vpop.xlane.xlu0 %4965
    %v4967 = vsel %vm850, %v4933, -inf
    %4968 = vmax.xlane.f32.xlu0 %v4967
    %v4969 = vpop.xlane.xlu0 %4968
    %v4970 = vsel %vm850, %v4935, -inf
    %4971 = vmax.xlane.f32.xlu0 %v4970
    %v4972 = vpop.xlane.xlu0 %4971
    %v4973 = vsub.f32 %v4908, %v4939
    %v4974 = vsub.f32 %v4910, %v4942
    %v4975 = vsub.f32 %v4913, %v4945
    %v4976 = vsub.f32 %v4915, %v4948
    %v4977 = vsub.f32 %v4918, %v4951
    %v4978 = vsub.f32 %v4920, %v4954
    %v4979 = vsub.f32 %v4923, %v4957
    %v4980 = vsub.f32 %v4925, %v4960
    %v4981 = vsub.f32 %v4928, %v4963
    %v4982 = vsub.f32 %v4930, %v4966
    %v4983 = vsub.f32 %v4933, %v4969
    %v4984 = vsub.f32 %v4935, %v4972
    %v4985 = vmul.f32 %v4973, 1.442695
    %v4986 = vpow.pop %v4985
    %v4987 = vmul.f32 %v4974, 1.442695
    %v4988 = vpow.pop %v4987
    %v4989 = vmul.f32 %v4975, 1.442695
    %v4990 = vpow.pop %v4989
    %v4991 = vmul.f32 %v4976, 1.442695
    %v4992 = vpow.pop %v4991
    %v4993 = vmul.f32 %v4977, 1.442695
    %v4994 = vpow.pop %v4993
    %v4995 = vmul.f32 %v4978, 1.442695
    %v4996 = vpow.pop %v4995
    %v4997 = vmul.f32 %v4979, 1.442695
    %v4998 = vpow.pop %v4997
    %v4999 = vmul.f32 %v4980, 1.442695
    %v5000 = vpow.pop %v4999
    %v5001 = vmul.f32 %v4981, 1.442695
    %v5002 = vpow.pop %v5001
    %v5003 = vmul.f32 %v4982, 1.442695
    %v5004 = vpow.pop %v5003
    %v5005 = vmul.f32 %v4983, 1.442695
    %v5006 = vpow.pop %v5005
    %v5007 = vmul.f32 %v4984, 1.442695
    %v5008 = vpow.pop %v5007
    %v5009 = vsel %vm850, %v4986, 0.0
    %5010 = vadd.xlane.f32.xlu0 %v5009
    %v5011 = vpop.xlane.xlu0 %5010
    %v5012 = vsel %vm850, %v4988, 0.0
    %5013 = vadd.xlane.f32.xlu0 %v5012
    %v5014 = vpop.xlane.xlu0 %5013
    %v5015 = vsel %vm850, %v4990, 0.0
    %5016 = vadd.xlane.f32.xlu0 %v5015
    %v5017 = vpop.xlane.xlu0 %5016
    %v5018 = vsel %vm850, %v4992, 0.0
    %5019 = vadd.xlane.f32.xlu0 %v5018
    %v5020 = vpop.xlane.xlu0 %5019
    %v5021 = vsel %vm850, %v4994, 0.0
    %5022 = vadd.xlane.f32.xlu0 %v5021
    %v5023 = vpop.xlane.xlu0 %5022
    %v5024 = vsel %vm850, %v4996, 0.0
    %5025 = vadd.xlane.f32.xlu0 %v5024
    %v5026 = vpop.xlane.xlu0 %5025
    %v5027 = vsel %vm850, %v4998, 0.0
    %5028 = vadd.xlane.f32.xlu0 %v5027
    %v5029 = vpop.xlane.xlu0 %5028
    %v5030 = vsel %vm850, %v5000, 0.0
    %5031 = vadd.xlane.f32.xlu0 %v5030
    %v5032 = vpop.xlane.xlu0 %5031
    %v5033 = vsel %vm850, %v5002, 0.0
    %5034 = vadd.xlane.f32.xlu0 %v5033
    %v5035 = vpop.xlane.xlu0 %5034
    %v5036 = vsel %vm850, %v5004, 0.0
    %5037 = vadd.xlane.f32.xlu0 %v5036
    %v5038 = vpop.xlane.xlu0 %5037
    %v5039 = vsel %vm850, %v5006, 0.0
    %5040 = vadd.xlane.f32.xlu0 %v5039
    %v5041 = vpop.xlane.xlu0 %5040
    %v5042 = vsel %vm850, %v5008, 0.0
    %5043 = vadd.xlane.f32.xlu0 %v5042
    %v5044 = vpop.xlane.xlu0 %5043
    %v5045 = vrcp.pop %v5011
    %v5046 = vrcp.pop %v5014
    %v5047 = vrcp.pop %v5017
    %v5048 = vrcp.pop %v5020
    %v5049 = vrcp.pop %v5023
    %v5050 = vrcp.pop %v5026
    %v5051 = vrcp.pop %v5029
    %v5052 = vrcp.pop %v5032
    %v5053 = vrcp.pop %v5035
    %v5054 = vrcp.pop %v5038
    %v5055 = vrcp.pop %v5041
    %v5056 = vrcp.pop %v5044
    %v5057 = vmul.f32 %v4986, %v5045
    %v5058 = vmul.f32 %v4988, %v5046
    %v5059 = vmul.f32 %v4990, %v5047
    %v5060 = vmul.f32 %v4992, %v5048
    %v5061 = vmul.f32 %v4994, %v5049
    %v5062 = vmul.f32 %v4996, %v5050
    %v5063 = vmul.f32 %v4998, %v5051
    %v5064 = vmul.f32 %v5000, %v5052
    %v5065 = vmul.f32 %v5002, %v5053
    %v5066 = vmul.f32 %v5004, %v5054
    %v5067 = vmul.f32 %v5006, %v5055
    %v5068 = vmul.f32 %v5008, %v5056
    %v5069 = vpack.c.bf16 %v5058, %v5057
    %v5070 = vpack.c.bf16 %v5060, %v5059
    %v5071 = vpack.c.bf16 %v5062, %v5061
    %v5072 = vpack.c.bf16 %v5064, %v5063
    %v5073 = vpack.c.bf16 %v5066, %v5065
    %v5074 = vpack.c.bf16 %v5068, %v5067
    %5075 = vrot.lane.b32.xlu0 %v4487, 64
    %v5076 = vpop.permute.xlu0 %5075
    %5077 = vrot.lane.b32.xlu0 %v4488, 64
    %v5078 = vpop.permute.xlu0 %5077
    %5079 = vrot.lane.b32.xlu0 %v4489, 64
    %v5080 = vpop.permute.xlu0 %5079
    %5081 = vrot.lane.b32.xlu0 %v4490, 64
    %v5082 = vpop.permute.xlu0 %5081
    %v5088 = vsel %vm850, %v5069, 0
    %v5091 = vsel %vm850, %v5070, 0
    %v5094 = vsel %vm850, %v5071, 0
    %v5097 = vsel %vm850, %v5072, 0
    %v5100 = vsel %vm850, %v5073, 0
    %v5103 = vsel %vm850, %v5074, 0
    %5105 = vmatpush.bf16.msra.mxu0 0
    %5106 = vmatpush.bf16.msra.mxu0 0
    %5107 = vmatpush.bf16.msra.mxu0 0
    %5108 = vmatpush.bf16.msra.mxu0 0
    %5109 = vmatpush.bf16.msra.mxu0 %v5082
    %5110 = vmatpush.bf16.msra.mxu0 %v5080
    %5111 = vmatpush.bf16.msra.mxu0 %v5078
    %5112 = vmatpush.bf16.msra.mxu0 %v5076
    %5113 = vmatmul.bf16.gmra.mxu0 %v5088
    %v5114 = vpop.f32.mrf.mxu0
    %v5115 = vadd.f32 0.0, %v5114
    %v5116 = vpop.f32.mrf.mxu0
    %v5117 = vadd.f32 0.0, %v5116
    %5118 = vmatmul.bf16.gmra.mxu0 %v5091
    %v5119 = vpop.f32.mrf.mxu0
    %v5120 = vadd.f32 0.0, %v5119
    %v5121 = vpop.f32.mrf.mxu0
    %v5122 = vadd.f32 0.0, %v5121
    %5123 = vmatmul.bf16.gmra.mxu0 %v5094
    %v5124 = vpop.f32.mrf.mxu0
    %v5125 = vadd.f32 0.0, %v5124
    %v5126 = vpop.f32.mrf.mxu0
    %v5127 = vadd.f32 0.0, %v5126
    %5128 = vmatmul.bf16.gmra.mxu0 %v5097
    %v5129 = vpop.f32.mrf.mxu0
    %v5130 = vadd.f32 0.0, %v5129
    %v5131 = vpop.f32.mrf.mxu0
    %v5132 = vadd.f32 0.0, %v5131
    %5133 = vmatmul.bf16.gmra.mxu0 %v5100
    %v5134 = vpop.f32.mrf.mxu0
    %v5135 = vadd.f32 0.0, %v5134
    %v5136 = vpop.f32.mrf.mxu0
    %v5137 = vadd.f32 0.0, %v5136
    %5138 = vmatmul.bf16.gmra.mxu0 %v5103
    %v5139 = vpop.f32.mrf.mxu0
    %v5140 = vadd.f32 0.0, %v5139
    %v5141 = vpop.f32.mrf.mxu0
    %v5142 = vadd.f32 0.0, %v5141
    %5143 = vdwg.mxu0
    %5144 = vrot.lane.b32.xlu0 %v4238, 32
    %v5145 = vpop.permute.xlu0 %5144
    %5146 = vrot.lane.b32.xlu0 %v4239, 32
    %v5147 = vpop.permute.xlu0 %5146
    %5148 = vrot.lane.b32.xlu0 %v4240, 32
    %v5149 = vpop.permute.xlu0 %5148
    %5150 = vrot.lane.b32.xlu0 %v4241, 32
    %v5151 = vpop.permute.xlu0 %5150
    %5152 = vrot.lane.b32.xlu0 %v4242, 32
    %v5153 = vpop.permute.xlu0 %5152
    %5154 = vrot.lane.b32.xlu0 %v4243, 32
    %v5155 = vpop.permute.xlu0 %5154
    %5156 = vrot.lane.b32.xlu0 %v4260, 32
    %v5157 = vpop.permute.xlu0 %5156
    %5158 = vrot.lane.b32.xlu0 %v4261, 32
    %v5159 = vpop.permute.xlu0 %5158
    %5160 = vrot.lane.b32.xlu0 %v4262, 32
    %v5161 = vpop.permute.xlu0 %5160
    %5162 = vrot.lane.b32.xlu0 %v4263, 32
    %v5163 = vpop.permute.xlu0 %5162
    %v5165 = vsel %vm780, %v5145, 0
    %v5168 = vsel %vm780, %v5147, 0
    %v5171 = vsel %vm780, %v5149, 0
    %v5174 = vsel %vm780, %v5151, 0
    %v5177 = vsel %vm780, %v5153, 0
    %v5180 = vsel %vm780, %v5155, 0
    %v5183 = vsel %vm780, %v5157, 0
    %v5186 = vsel %vm780, %v5159, 0
    %v5189 = vsel %vm780, %v5161, 0
    %v5192 = vsel %vm780, %v5163, 0
    %5194 = vmatpush.bf16.xpose.msra.mxu0 0
    %5195 = vmatpush.bf16.xpose.msra.mxu0 0
    %5196 = vmatpush.bf16.xpose.msra.mxu0 0
    %5197 = vmatpush.bf16.xpose.msra.mxu0 0
    %5198 = vmatpush.bf16.xpose.msra.mxu0 %v5192
    %5199 = vmatpush.bf16.xpose.msra.mxu0 %v5189
    %5200 = vmatpush.bf16.xpose.msra.mxu0 %v5186
    %5201 = vmatpush.bf16.xpose.msra.mxu0 %v5183
    %5202 = vmatmul.bf16.gmra.mxu0 %v5165
    %v5203 = vpop.f32.mrf.mxu0
    %v5204 = vadd.f32 0.0, %v5203
    %v5205 = vpop.f32.mrf.mxu0
    %v5206 = vadd.f32 0.0, %v5205
    %5207 = vmatmul.bf16.gmra.mxu0 %v5168
    %v5208 = vpop.f32.mrf.mxu0
    %v5209 = vadd.f32 0.0, %v5208
    %v5210 = vpop.f32.mrf.mxu0
    %v5211 = vadd.f32 0.0, %v5210
    %5212 = vmatmul.bf16.gmra.mxu0 %v5171
    %v5213 = vpop.f32.mrf.mxu0
    %v5214 = vadd.f32 0.0, %v5213
    %v5215 = vpop.f32.mrf.mxu0
    %v5216 = vadd.f32 0.0, %v5215
    %5217 = vmatmul.bf16.gmra.mxu0 %v5174
    %v5218 = vpop.f32.mrf.mxu0
    %v5219 = vadd.f32 0.0, %v5218
    %v5220 = vpop.f32.mrf.mxu0
    %v5221 = vadd.f32 0.0, %v5220
    %5222 = vmatmul.bf16.gmra.mxu0 %v5177
    %v5223 = vpop.f32.mrf.mxu0
    %v5224 = vadd.f32 0.0, %v5223
    %v5225 = vpop.f32.mrf.mxu0
    %v5226 = vadd.f32 0.0, %v5225
    %5227 = vmatmul.bf16.gmra.mxu0 %v5180
    %v5228 = vpop.f32.mrf.mxu0
    %v5229 = vadd.f32 0.0, %v5228
    %v5230 = vpop.f32.mrf.mxu0
    %v5231 = vadd.f32 0.0, %v5230
    %5232 = vdwg.mxu0
    %v5233 = vsel %vm850, %v5204, -inf
    %5234 = vmax.xlane.f32.xlu0 %v5233
    %v5235 = vpop.xlane.xlu0 %5234
    %v5236 = vsel %vm850, %v5206, -inf
    %5237 = vmax.xlane.f32.xlu0 %v5236
    %v5238 = vpop.xlane.xlu0 %5237
    %v5239 = vsel %vm850, %v5209, -inf
    %5240 = vmax.xlane.f32.xlu0 %v5239
    %v5241 = vpop.xlane.xlu0 %5240
    %v5242 = vsel %vm850, %v5211, -inf
    %5243 = vmax.xlane.f32.xlu0 %v5242
    %v5244 = vpop.xlane.xlu0 %5243
    %v5245 = vsel %vm850, %v5214, -inf
    %5246 = vmax.xlane.f32.xlu0 %v5245
    %v5247 = vpop.xlane.xlu0 %5246
    %v5248 = vsel %vm850, %v5216, -inf
    %5249 = vmax.xlane.f32.xlu0 %v5248
    %v5250 = vpop.xlane.xlu0 %5249
    %v5251 = vsel %vm850, %v5219, -inf
    %5252 = vmax.xlane.f32.xlu0 %v5251
    %v5253 = vpop.xlane.xlu0 %5252
    %v5254 = vsel %vm850, %v5221, -inf
    %5255 = vmax.xlane.f32.xlu0 %v5254
    %v5256 = vpop.xlane.xlu0 %5255
    %v5257 = vsel %vm850, %v5224, -inf
    %5258 = vmax.xlane.f32.xlu0 %v5257
    %v5259 = vpop.xlane.xlu0 %5258
    %v5260 = vsel %vm850, %v5226, -inf
    %5261 = vmax.xlane.f32.xlu0 %v5260
    %v5262 = vpop.xlane.xlu0 %5261
    %v5263 = vsel %vm850, %v5229, -inf
    %5264 = vmax.xlane.f32.xlu0 %v5263
    %v5265 = vpop.xlane.xlu0 %5264
    %v5266 = vsel %vm850, %v5231, -inf
    %5267 = vmax.xlane.f32.xlu0 %v5266
    %v5268 = vpop.xlane.xlu0 %5267
    %v5269 = vsub.f32 %v5204, %v5235
    %v5270 = vsub.f32 %v5206, %v5238
    %v5271 = vsub.f32 %v5209, %v5241
    %v5272 = vsub.f32 %v5211, %v5244
    %v5273 = vsub.f32 %v5214, %v5247
    %v5274 = vsub.f32 %v5216, %v5250
    %v5275 = vsub.f32 %v5219, %v5253
    %v5276 = vsub.f32 %v5221, %v5256
    %v5277 = vsub.f32 %v5224, %v5259
    %v5278 = vsub.f32 %v5226, %v5262
    %v5279 = vsub.f32 %v5229, %v5265
    %v5280 = vsub.f32 %v5231, %v5268
    %v5281 = vmul.f32 %v5269, 1.442695
    %v5282 = vpow.pop %v5281
    %v5283 = vmul.f32 %v5270, 1.442695
    %v5284 = vpow.pop %v5283
    %v5285 = vmul.f32 %v5271, 1.442695
    %v5286 = vpow.pop %v5285
    %v5287 = vmul.f32 %v5272, 1.442695
    %v5288 = vpow.pop %v5287
    %v5289 = vmul.f32 %v5273, 1.442695
    %v5290 = vpow.pop %v5289
    %v5291 = vmul.f32 %v5274, 1.442695
    %v5292 = vpow.pop %v5291
    %v5293 = vmul.f32 %v5275, 1.442695
    %v5294 = vpow.pop %v5293
    %v5295 = vmul.f32 %v5276, 1.442695
    %v5296 = vpow.pop %v5295
    %v5297 = vmul.f32 %v5277, 1.442695
    %v5298 = vpow.pop %v5297
    %v5299 = vmul.f32 %v5278, 1.442695
    %v5300 = vpow.pop %v5299
    %v5301 = vmul.f32 %v5279, 1.442695
    %v5302 = vpow.pop %v5301
    %v5303 = vmul.f32 %v5280, 1.442695
    %v5304 = vpow.pop %v5303
    %v5305 = vsel %vm850, %v5282, 0.0
    %5306 = vadd.xlane.f32.xlu0 %v5305
    %v5307 = vpop.xlane.xlu0 %5306
    %v5308 = vsel %vm850, %v5284, 0.0
    %5309 = vadd.xlane.f32.xlu0 %v5308
    %v5310 = vpop.xlane.xlu0 %5309
    %v5311 = vsel %vm850, %v5286, 0.0
    %5312 = vadd.xlane.f32.xlu0 %v5311
    %v5313 = vpop.xlane.xlu0 %5312
    %v5314 = vsel %vm850, %v5288, 0.0
    %5315 = vadd.xlane.f32.xlu0 %v5314
    %v5316 = vpop.xlane.xlu0 %5315
    %v5317 = vsel %vm850, %v5290, 0.0
    %5318 = vadd.xlane.f32.xlu0 %v5317
    %v5319 = vpop.xlane.xlu0 %5318
    %v5320 = vsel %vm850, %v5292, 0.0
    %5321 = vadd.xlane.f32.xlu0 %v5320
    %v5322 = vpop.xlane.xlu0 %5321
    %v5323 = vsel %vm850, %v5294, 0.0
    %5324 = vadd.xlane.f32.xlu0 %v5323
    %v5325 = vpop.xlane.xlu0 %5324
    %v5326 = vsel %vm850, %v5296, 0.0
    %5327 = vadd.xlane.f32.xlu0 %v5326
    %v5328 = vpop.xlane.xlu0 %5327
    %v5329 = vsel %vm850, %v5298, 0.0
    %5330 = vadd.xlane.f32.xlu0 %v5329
    %v5331 = vpop.xlane.xlu0 %5330
    %v5332 = vsel %vm850, %v5300, 0.0
    %5333 = vadd.xlane.f32.xlu0 %v5332
    %v5334 = vpop.xlane.xlu0 %5333
    %v5335 = vsel %vm850, %v5302, 0.0
    %5336 = vadd.xlane.f32.xlu0 %v5335
    %v5337 = vpop.xlane.xlu0 %5336
    %v5338 = vsel %vm850, %v5304, 0.0
    %5339 = vadd.xlane.f32.xlu0 %v5338
    %v5340 = vpop.xlane.xlu0 %5339
    %v5341 = vrcp.pop %v5307
    %v5342 = vrcp.pop %v5310
    %v5343 = vrcp.pop %v5313
    %v5344 = vrcp.pop %v5316
    %v5345 = vrcp.pop %v5319
    %v5346 = vrcp.pop %v5322
    %v5347 = vrcp.pop %v5325
    %v5348 = vrcp.pop %v5328
    %v5349 = vrcp.pop %v5331
    %v5350 = vrcp.pop %v5334
    %v5351 = vrcp.pop %v5337
    %v5352 = vrcp.pop %v5340
    %v5353 = vmul.f32 %v5282, %v5341
    %v5354 = vmul.f32 %v5284, %v5342
    %v5355 = vmul.f32 %v5286, %v5343
    %v5356 = vmul.f32 %v5288, %v5344
    %v5357 = vmul.f32 %v5290, %v5345
    %v5358 = vmul.f32 %v5292, %v5346
    %v5359 = vmul.f32 %v5294, %v5347
    %v5360 = vmul.f32 %v5296, %v5348
    %v5361 = vmul.f32 %v5298, %v5349
    %v5362 = vmul.f32 %v5300, %v5350
    %v5363 = vmul.f32 %v5302, %v5351
    %v5364 = vmul.f32 %v5304, %v5352
    %v5365 = vpack.c.bf16 %v5354, %v5353
    %v5366 = vpack.c.bf16 %v5356, %v5355
    %v5367 = vpack.c.bf16 %v5358, %v5357
    %v5368 = vpack.c.bf16 %v5360, %v5359
    %v5369 = vpack.c.bf16 %v5362, %v5361
    %v5370 = vpack.c.bf16 %v5364, %v5363
    %5371 = vrot.lane.b32.xlu0 %v4487, 32
    %v5372 = vpop.permute.xlu0 %5371
    %5373 = vrot.lane.b32.xlu0 %v4488, 32
    %v5374 = vpop.permute.xlu0 %5373
    %5375 = vrot.lane.b32.xlu0 %v4489, 32
    %v5376 = vpop.permute.xlu0 %5375
    %5377 = vrot.lane.b32.xlu0 %v4490, 32
    %v5378 = vpop.permute.xlu0 %5377
    %v5384 = vsel %vm850, %v5365, 0
    %v5387 = vsel %vm850, %v5366, 0
    %v5390 = vsel %vm850, %v5367, 0
    %v5393 = vsel %vm850, %v5368, 0
    %v5396 = vsel %vm850, %v5369, 0
    %v5399 = vsel %vm850, %v5370, 0
    %5401 = vmatpush.bf16.msra.mxu0 0
    %5402 = vmatpush.bf16.msra.mxu0 0
    %5403 = vmatpush.bf16.msra.mxu0 0
    %5404 = vmatpush.bf16.msra.mxu0 0
    %5405 = vmatpush.bf16.msra.mxu0 %v5378
    %5406 = vmatpush.bf16.msra.mxu0 %v5376
    %5407 = vmatpush.bf16.msra.mxu0 %v5374
    %5408 = vmatpush.bf16.msra.mxu0 %v5372
    %5409 = vmatmul.bf16.gmra.mxu0 %v5384
    %v5410 = vpop.f32.mrf.mxu0
    %v5411 = vadd.f32 0.0, %v5410
    %v5412 = vpop.f32.mrf.mxu0
    %v5413 = vadd.f32 0.0, %v5412
    %5414 = vmatmul.bf16.gmra.mxu0 %v5387
    %v5415 = vpop.f32.mrf.mxu0
    %v5416 = vadd.f32 0.0, %v5415
    %v5417 = vpop.f32.mrf.mxu0
    %v5418 = vadd.f32 0.0, %v5417
    %5419 = vmatmul.bf16.gmra.mxu0 %v5390
    %v5420 = vpop.f32.mrf.mxu0
    %v5421 = vadd.f32 0.0, %v5420
    %v5422 = vpop.f32.mrf.mxu0
    %v5423 = vadd.f32 0.0, %v5422
    %5424 = vmatmul.bf16.gmra.mxu0 %v5393
    %v5425 = vpop.f32.mrf.mxu0
    %v5426 = vadd.f32 0.0, %v5425
    %v5427 = vpop.f32.mrf.mxu0
    %v5428 = vadd.f32 0.0, %v5427
    %5429 = vmatmul.bf16.gmra.mxu0 %v5396
    %v5430 = vpop.f32.mrf.mxu0
    %v5431 = vadd.f32 0.0, %v5430
    %v5432 = vpop.f32.mrf.mxu0
    %v5433 = vadd.f32 0.0, %v5432
    %5434 = vmatmul.bf16.gmra.mxu0 %v5399
    %v5435 = vpop.f32.mrf.mxu0
    %v5436 = vadd.f32 0.0, %v5435
    %v5437 = vpop.f32.mrf.mxu0
    %v5438 = vadd.f32 0.0, %v5437
    %5439 = vdwg.mxu0
    %5452 = vrot.lane.b32.xlu0 %v4819, 32
    %v5453 = vpop.permute.xlu0 %5452
    %5454 = vrot.lane.b32.xlu0 %v4821, 32
    %v5455 = vpop.permute.xlu0 %5454
    %5456 = vrot.lane.b32.xlu0 %v4824, 32
    %v5457 = vpop.permute.xlu0 %5456
    %5458 = vrot.lane.b32.xlu0 %v4826, 32
    %v5459 = vpop.permute.xlu0 %5458
    %5460 = vrot.lane.b32.xlu0 %v4829, 32
    %v5461 = vpop.permute.xlu0 %5460
    %5462 = vrot.lane.b32.xlu0 %v4831, 32
    %v5463 = vpop.permute.xlu0 %5462
    %5464 = vrot.lane.b32.xlu0 %v4834, 32
    %v5465 = vpop.permute.xlu0 %5464
    %5466 = vrot.lane.b32.xlu0 %v4836, 32
    %v5467 = vpop.permute.xlu0 %5466
    %5468 = vrot.lane.b32.xlu0 %v4839, 32
    %v5469 = vpop.permute.xlu0 %5468
    %5470 = vrot.lane.b32.xlu0 %v4841, 32
    %v5471 = vpop.permute.xlu0 %5470
    %5472 = vrot.lane.b32.xlu0 %v4844, 32
    %v5473 = vpop.permute.xlu0 %5472
    %5474 = vrot.lane.b32.xlu0 %v4846, 32
    %v5475 = vpop.permute.xlu0 %5474
    %5500 = vrot.lane.b32.xlu0 %v5115, 64
    %v5501 = vpop.permute.xlu0 %5500
    %5502 = vrot.lane.b32.xlu0 %v5117, 64
    %v5503 = vpop.permute.xlu0 %5502
    %5504 = vrot.lane.b32.xlu0 %v5120, 64
    %v5505 = vpop.permute.xlu0 %5504
    %5506 = vrot.lane.b32.xlu0 %v5122, 64
    %v5507 = vpop.permute.xlu0 %5506
    %5508 = vrot.lane.b32.xlu0 %v5125, 64
    %v5509 = vpop.permute.xlu0 %5508
    %5510 = vrot.lane.b32.xlu0 %v5127, 64
    %v5511 = vpop.permute.xlu0 %5510
    %5512 = vrot.lane.b32.xlu0 %v5130, 64
    %v5513 = vpop.permute.xlu0 %5512
    %5514 = vrot.lane.b32.xlu0 %v5132, 64
    %v5515 = vpop.permute.xlu0 %5514
    %5516 = vrot.lane.b32.xlu0 %v5135, 64
    %v5517 = vpop.permute.xlu0 %5516
    %5518 = vrot.lane.b32.xlu0 %v5137, 64
    %v5519 = vpop.permute.xlu0 %5518
    %5520 = vrot.lane.b32.xlu0 %v5140, 64
    %v5521 = vpop.permute.xlu0 %5520
    %5522 = vrot.lane.b32.xlu0 %v5142, 64
    %v5523 = vpop.permute.xlu0 %5522
    %5548 = vrot.lane.b32.xlu0 %v5411, 96
    %v5549 = vpop.permute.xlu0 %5548
    %5550 = vrot.lane.b32.xlu0 %v5413, 96
    %v5551 = vpop.permute.xlu0 %5550
    %5552 = vrot.lane.b32.xlu0 %v5416, 96
    %v5553 = vpop.permute.xlu0 %5552
    %5554 = vrot.lane.b32.xlu0 %v5418, 96
    %v5555 = vpop.permute.xlu0 %5554
    %5556 = vrot.lane.b32.xlu0 %v5421, 96
    %v5557 = vpop.permute.xlu0 %5556
    %5558 = vrot.lane.b32.xlu0 %v5423, 96
    %v5559 = vpop.permute.xlu0 %5558
    %5560 = vrot.lane.b32.xlu0 %v5426, 96
    %v5561 = vpop.permute.xlu0 %5560
    %5562 = vrot.lane.b32.xlu0 %v5428, 96
    %v5563 = vpop.permute.xlu0 %5562
    %5564 = vrot.lane.b32.xlu0 %v5431, 96
    %v5565 = vpop.permute.xlu0 %5564
    %5566 = vrot.lane.b32.xlu0 %v5433, 96
    %v5567 = vpop.permute.xlu0 %5566
    %5568 = vrot.lane.b32.xlu0 %v5436, 96
    %v5569 = vpop.permute.xlu0 %5568
    %5570 = vrot.lane.b32.xlu0 %v5438, 96
    %v5571 = vpop.permute.xlu0 %5570
    %v5584 = vsel %vm780, %v4523, %v5453
    %v5585 = vsel %vm780, %v4525, %v5455
    %v5586 = vsel %vm780, %v4528, %v5457
    %v5587 = vsel %vm780, %v4530, %v5459
    %v5588 = vsel %vm780, %v4533, %v5461
    %v5589 = vsel %vm780, %v4535, %v5463
    %v5590 = vsel %vm780, %v4538, %v5465
    %v5591 = vsel %vm780, %v4540, %v5467
    %v5592 = vsel %vm780, %v4543, %v5469
    %v5593 = vsel %vm780, %v4545, %v5471
    %v5594 = vsel %vm780, %v4548, %v5473
    %v5595 = vsel %vm780, %v4550, %v5475
    %v5596 = vsel %vm850, %v5584, %v5501
    %v5597 = vsel %vm850, %v5585, %v5503
    %v5598 = vsel %vm850, %v5586, %v5505
    %v5599 = vsel %vm850, %v5587, %v5507
    %v5600 = vsel %vm850, %v5588, %v5509
    %v5601 = vsel %vm850, %v5589, %v5511
    %v5602 = vsel %vm850, %v5590, %v5513
    %v5603 = vsel %vm850, %v5591, %v5515
    %v5604 = vsel %vm850, %v5592, %v5517
    %v5605 = vsel %vm850, %v5593, %v5519
    %v5606 = vsel %vm850, %v5594, %v5521
    %v5607 = vsel %vm850, %v5595, %v5523
    %v5608 = vsel %vm579, %v5596, %v5549
    %v5609 = vsel %vm579, %v5597, %v5551
    %v5610 = vsel %vm579, %v5598, %v5553
    %v5611 = vsel %vm579, %v5599, %v5555
    %v5612 = vsel %vm579, %v5600, %v5557
    %v5613 = vsel %vm579, %v5601, %v5559
    %v5614 = vsel %vm579, %v5602, %v5561
    %v5615 = vsel %vm579, %v5603, %v5563
    %v5616 = vsel %vm579, %v5604, %v5565
    %v5617 = vsel %vm579, %v5605, %v5567
    %v5618 = vsel %vm579, %v5606, %v5569
    %v5619 = vsel %vm579, %v5607, %v5571
    %v5620 = vpack.c.bf16 %v5609, %v5608
    %v5621 = vpack.c.bf16 %v5611, %v5610
    %v5622 = vpack.c.bf16 %v5613, %v5612
    %v5623 = vpack.c.bf16 %v5615, %v5614
    %v5624 = vpack.c.bf16 %v5617, %v5616
    %v5625 = vpack.c.bf16 %v5619, %v5618
    %s5626 = scalar_lea.vmem %s6, 64
    %v5627 = vld [vmem:[%s5626] sm:$0xf]
    %v5628 = vld [vmem:[%s5626 + $0x4] sm:$0xf]
    %v5629 = vld [vmem:[%s5626 + $0x8] sm:$0xf]
    %v5630 = vld [vmem:[%s5626 + $0xc] sm:$0xf]
    %v5631 = vld [vmem:[%s5626 + $0x10] sm:$0xf]
    %v5632 = vld [vmem:[%s5626 + $0x14] sm:$0xf]
    %v5633 = vld [vmem:[%s5626 + $0x18] sm:$0xf]
    %v5634 = vld [vmem:[%s5626 + $0x1c] sm:$0xf]
    %v5635 = vld [vmem:[%s5626 + $0x20] sm:$0xf]
    %v5636 = vld [vmem:[%s5626 + $0x24] sm:$0xf]
    %v5637 = vld [vmem:[%s5626 + $0x28] sm:$0xf]
    %v5638 = vld [vmem:[%s5626 + $0x2c] sm:$0xf]
    %v5639 = vld [vmem:[%s5626 + $0x30] sm:$0xf]
    %v5640 = vld [vmem:[%s5626 + $0x34] sm:$0xf]
    %v5641 = vld [vmem:[%s5626 + $0x38] sm:$0xf]
    %v5642 = vld [vmem:[%s5626 + $0x3c] sm:$0xf]
    %s5643 = scalar_lea.vmem %s7, 1
    %v5644 = vld [vmem:[%s5643] sm:$0x1]
    %v5646 = vperm.slane %v5644, 0
    %v5664 = vunpack.c.l.b16 %v5627
    %v5665 = vunpack.c.l.b16 %v5628
    %v5666 = vunpack.c.l.b16 %v5629
    %v5667 = vunpack.c.l.b16 %v5630
    %v5668 = vunpack.c.l.b16 %v5631
    %v5669 = vunpack.c.l.b16 %v5632
    %v5670 = vunpack.c.l.b16 %v5633
    %v5671 = vunpack.c.l.b16 %v5634
    %v5672 = vunpack.c.l.b16 %v5635
    %v5673 = vunpack.c.l.b16 %v5636
    %v5674 = vunpack.c.l.b16 %v5637
    %v5675 = vunpack.c.l.b16 %v5638
    %v5676 = vunpack.c.l.b16 %v5639
    %v5677 = vunpack.c.l.b16 %v5640
    %v5678 = vunpack.c.l.b16 %v5641
    %v5679 = vunpack.c.l.b16 %v5642
    %v5680 = vpack.c.b16 %v5665, %v5664
    %v5681 = vpack.c.b16 %v5667, %v5666
    %v5682 = vpack.c.b16 %v5669, %v5668
    %v5683 = vpack.c.b16 %v5671, %v5670
    %v5684 = vpack.c.b16 %v5673, %v5672
    %v5685 = vpack.c.b16 %v5675, %v5674
    %v5686 = vpack.c.b16 %v5677, %v5676
    %v5687 = vpack.c.b16 %v5679, %v5678
    %5696 = vmatpush.bf16.msra.mxu0 %v5687
    %5697 = vmatpush.bf16.msra.mxu0 %v5686
    %5698 = vmatpush.bf16.msra.mxu0 %v5685
    %5699 = vmatpush.bf16.msra.mxu0 %v5684
    %5700 = vmatpush.bf16.msra.mxu0 %v5683
    %5701 = vmatpush.bf16.msra.mxu0 %v5682
    %5702 = vmatpush.bf16.msra.mxu0 %v5681
    %5703 = vmatpush.bf16.msra.mxu0 %v5680
    %5704 = vmatmul.bf16.gmra.mxu0 %v5620
    %v5705 = vpop.f32.mrf.mxu0
    %v5706 = vadd.f32 %v5646, %v5705
    %v5707 = vpop.f32.mrf.mxu0
    %v5708 = vadd.f32 %v5646, %v5707
    %5709 = vmatmul.bf16.gmra.mxu0 %v5621
    %v5710 = vpop.f32.mrf.mxu0
    %v5711 = vadd.f32 %v5646, %v5710
    %v5712 = vpop.f32.mrf.mxu0
    %v5713 = vadd.f32 %v5646, %v5712
    %5714 = vmatmul.bf16.gmra.mxu0 %v5622
    %v5715 = vpop.f32.mrf.mxu0
    %v5716 = vadd.f32 %v5646, %v5715
    %v5717 = vpop.f32.mrf.mxu0
    %v5718 = vadd.f32 %v5646, %v5717
    %5719 = vmatmul.bf16.gmra.mxu0 %v5623
    %v5720 = vpop.f32.mrf.mxu0
    %v5721 = vadd.f32 %v5646, %v5720
    %v5722 = vpop.f32.mrf.mxu0
    %v5723 = vadd.f32 %v5646, %v5722
    %5724 = vmatmul.bf16.gmra.mxu0 %v5624
    %v5725 = vpop.f32.mrf.mxu0
    %v5726 = vadd.f32 %v5646, %v5725
    %v5727 = vpop.f32.mrf.mxu0
    %v5728 = vadd.f32 %v5646, %v5727
    %5729 = vmatmul.bf16.gmra.mxu0 %v5625
    %v5730 = vpop.f32.mrf.mxu0
    %v5731 = vadd.f32 %v5646, %v5730
    %v5732 = vpop.f32.mrf.mxu0
    %v5733 = vadd.f32 %v5646, %v5732
    %5734 = vdwg.mxu0
    %v5735 = vadd.f32 %v3666, %v5706
    %v5736 = vadd.f32 %v3667, %v5708
    %v5737 = vadd.f32 %v3668, %v5711
    %v5738 = vadd.f32 %v3669, %v5713
    %v5739 = vadd.f32 %v3670, %v5716
    %v5740 = vadd.f32 %v3671, %v5718
    %v5741 = vadd.f32 %v3672, %v5721
    %v5742 = vadd.f32 %v3673, %v5723
    %v5743 = vadd.f32 %v3674, %v5726
    %v5744 = vadd.f32 %v3675, %v5728
    %v5745 = vadd.f32 %v3676, %v5731
    %v5746 = vadd.f32 %v3677, %v5733
    %s5747 = scalar_lea.vmem %s8, 1
    %v5748 = vld [vmem:[%s5747] sm:$0x1]
    %s5749 = scalar_lea.vmem %s9, 1
    %v5750 = vld [vmem:[%s5749] sm:$0x1]
    %5751 = vadd.xlane.f32.xlu0 %v5735
    %v5752 = vpop.xlane.xlu0 %5751
    %5753 = vadd.xlane.f32.xlu0 %v5736
    %v5754 = vpop.xlane.xlu0 %5753
    %5755 = vadd.xlane.f32.xlu0 %v5737
    %v5756 = vpop.xlane.xlu0 %5755
    %5757 = vadd.xlane.f32.xlu0 %v5738
    %v5758 = vpop.xlane.xlu0 %5757
    %5759 = vadd.xlane.f32.xlu0 %v5739
    %v5760 = vpop.xlane.xlu0 %5759
    %5761 = vadd.xlane.f32.xlu0 %v5740
    %v5762 = vpop.xlane.xlu0 %5761
    %5763 = vadd.xlane.f32.xlu0 %v5741
    %v5764 = vpop.xlane.xlu0 %5763
    %5765 = vadd.xlane.f32.xlu0 %v5742
    %v5766 = vpop.xlane.xlu0 %5765
    %5767 = vadd.xlane.f32.xlu0 %v5743
    %v5768 = vpop.xlane.xlu0 %5767
    %5769 = vadd.xlane.f32.xlu0 %v5744
    %v5770 = vpop.xlane.xlu0 %5769
    %5771 = vadd.xlane.f32.xlu0 %v5745
    %v5772 = vpop.xlane.xlu0 %5771
    %5773 = vadd.xlane.f32.xlu0 %v5746
    %v5774 = vpop.xlane.xlu0 %5773
    %v5775 = vmul.f32 %v5752, %v2295
    %v5776 = vmul.f32 %v5754, %v2295
    %v5777 = vmul.f32 %v5756, %v2295
    %v5778 = vmul.f32 %v5758, %v2295
    %v5779 = vmul.f32 %v5760, %v2295
    %v5780 = vmul.f32 %v5762, %v2295
    %v5781 = vmul.f32 %v5764, %v2295
    %v5782 = vmul.f32 %v5766, %v2295
    %v5783 = vmul.f32 %v5768, %v2295
    %v5784 = vmul.f32 %v5770, %v2295
    %v5785 = vmul.f32 %v5772, %v2295
    %v5786 = vmul.f32 %v5774, %v2295
    %v5787 = vsub.f32 %v5735, %v5775
    %v5788 = vsub.f32 %v5736, %v5776
    %v5789 = vsub.f32 %v5737, %v5777
    %v5790 = vsub.f32 %v5738, %v5778
    %v5791 = vsub.f32 %v5739, %v5779
    %v5792 = vsub.f32 %v5740, %v5780
    %v5793 = vsub.f32 %v5741, %v5781
    %v5794 = vsub.f32 %v5742, %v5782
    %v5795 = vsub.f32 %v5743, %v5783
    %v5796 = vsub.f32 %v5744, %v5784
    %v5797 = vsub.f32 %v5745, %v5785
    %v5798 = vsub.f32 %v5746, %v5786
    %v5799 = vmul.f32 %v5787, %v5787
    %v5800 = vmul.f32 %v5788, %v5788
    %v5801 = vmul.f32 %v5789, %v5789
    %v5802 = vmul.f32 %v5790, %v5790
    %v5803 = vmul.f32 %v5791, %v5791
    %v5804 = vmul.f32 %v5792, %v5792
    %v5805 = vmul.f32 %v5793, %v5793
    %v5806 = vmul.f32 %v5794, %v5794
    %v5807 = vmul.f32 %v5795, %v5795
    %v5808 = vmul.f32 %v5796, %v5796
    %v5809 = vmul.f32 %v5797, %v5797
    %v5810 = vmul.f32 %v5798, %v5798
    %5811 = vadd.xlane.f32.xlu0 %v5799
    %v5812 = vpop.xlane.xlu0 %5811
    %5813 = vadd.xlane.f32.xlu0 %v5800
    %v5814 = vpop.xlane.xlu0 %5813
    %5815 = vadd.xlane.f32.xlu0 %v5801
    %v5816 = vpop.xlane.xlu0 %5815
    %5817 = vadd.xlane.f32.xlu0 %v5802
    %v5818 = vpop.xlane.xlu0 %5817
    %5819 = vadd.xlane.f32.xlu0 %v5803
    %v5820 = vpop.xlane.xlu0 %5819
    %5821 = vadd.xlane.f32.xlu0 %v5804
    %v5822 = vpop.xlane.xlu0 %5821
    %5823 = vadd.xlane.f32.xlu0 %v5805
    %v5824 = vpop.xlane.xlu0 %5823
    %5825 = vadd.xlane.f32.xlu0 %v5806
    %v5826 = vpop.xlane.xlu0 %5825
    %5827 = vadd.xlane.f32.xlu0 %v5807
    %v5828 = vpop.xlane.xlu0 %5827
    %5829 = vadd.xlane.f32.xlu0 %v5808
    %v5830 = vpop.xlane.xlu0 %5829
    %5831 = vadd.xlane.f32.xlu0 %v5809
    %v5832 = vpop.xlane.xlu0 %5831
    %5833 = vadd.xlane.f32.xlu0 %v5810
    %v5834 = vpop.xlane.xlu0 %5833
    %v5835 = vmul.f32 %v5812, %v2295
    %v5836 = vmul.f32 %v5814, %v2295
    %v5837 = vmul.f32 %v5816, %v2295
    %v5838 = vmul.f32 %v5818, %v2295
    %v5839 = vmul.f32 %v5820, %v2295
    %v5840 = vmul.f32 %v5822, %v2295
    %v5841 = vmul.f32 %v5824, %v2295
    %v5842 = vmul.f32 %v5826, %v2295
    %v5843 = vmul.f32 %v5828, %v2295
    %v5844 = vmul.f32 %v5830, %v2295
    %v5845 = vmul.f32 %v5832, %v2295
    %v5846 = vmul.f32 %v5834, %v2295
    %v5847 = vadd.f32 %v5835, 1e-05
    %v5848 = vadd.f32 %v5836, 1e-05
    %v5849 = vadd.f32 %v5837, 1e-05
    %v5850 = vadd.f32 %v5838, 1e-05
    %v5851 = vadd.f32 %v5839, 1e-05
    %v5852 = vadd.f32 %v5840, 1e-05
    %v5853 = vadd.f32 %v5841, 1e-05
    %v5854 = vadd.f32 %v5842, 1e-05
    %v5855 = vadd.f32 %v5843, 1e-05
    %v5856 = vadd.f32 %v5844, 1e-05
    %v5857 = vadd.f32 %v5845, 1e-05
    %v5858 = vadd.f32 %v5846, 1e-05
    %v5859 = vrsqrt.pop %v5847
    %v5860 = vmul.f32 %v5859, %v5847
    %v5861 = vmul.f32 %v5860, %v5859
    %v5862 = vmul.f32 0.5, %v5861
    %v5863 = vsub.f32 1.5, %v5862
    %v5864 = vmul.f32 %v5859, %v5863
    %vm5865 = vweird.f32 %v5847
    %vm5866 = vweird.f32 %v5859
    %vm5867 = vmor %vm5865, %vm5866
    %v5868 = vsel %vm5867, %v5859, %v5864
    %v5869 = vrsqrt.pop %v5848
    %v5870 = vmul.f32 %v5869, %v5848
    %v5871 = vmul.f32 %v5870, %v5869
    %v5872 = vmul.f32 0.5, %v5871
    %v5873 = vsub.f32 1.5, %v5872
    %v5874 = vmul.f32 %v5869, %v5873
    %vm5875 = vweird.f32 %v5848
    %vm5876 = vweird.f32 %v5869
    %vm5877 = vmor %vm5875, %vm5876
    %v5878 = vsel %vm5877, %v5869, %v5874
    %v5879 = vrsqrt.pop %v5849
    %v5880 = vmul.f32 %v5879, %v5849
    %v5881 = vmul.f32 %v5880, %v5879
    %v5882 = vmul.f32 0.5, %v5881
    %v5883 = vsub.f32 1.5, %v5882
    %v5884 = vmul.f32 %v5879, %v5883
    %vm5885 = vweird.f32 %v5849
    %vm5886 = vweird.f32 %v5879
    %vm5887 = vmor %vm5885, %vm5886
    %v5888 = vsel %vm5887, %v5879, %v5884
    %v5889 = vrsqrt.pop %v5850
    %v5890 = vmul.f32 %v5889, %v5850
    %v5891 = vmul.f32 %v5890, %v5889
    %v5892 = vmul.f32 0.5, %v5891
    %v5893 = vsub.f32 1.5, %v5892
    %v5894 = vmul.f32 %v5889, %v5893
    %vm5895 = vweird.f32 %v5850
    %vm5896 = vweird.f32 %v5889
    %vm5897 = vmor %vm5895, %vm5896
    %v5898 = vsel %vm5897, %v5889, %v5894
    %v5899 = vrsqrt.pop %v5851
    %v5900 = vmul.f32 %v5899, %v5851
    %v5901 = vmul.f32 %v5900, %v5899
    %v5902 = vmul.f32 0.5, %v5901
    %v5903 = vsub.f32 1.5, %v5902
    %v5904 = vmul.f32 %v5899, %v5903
    %vm5905 = vweird.f32 %v5851
    %vm5906 = vweird.f32 %v5899
    %vm5907 = vmor %vm5905, %vm5906
    %v5908 = vsel %vm5907, %v5899, %v5904
    %v5909 = vrsqrt.pop %v5852
    %v5910 = vmul.f32 %v5909, %v5852
    %v5911 = vmul.f32 %v5910, %v5909
    %v5912 = vmul.f32 0.5, %v5911
    %v5913 = vsub.f32 1.5, %v5912
    %v5914 = vmul.f32 %v5909, %v5913
    %vm5915 = vweird.f32 %v5852
    %vm5916 = vweird.f32 %v5909
    %vm5917 = vmor %vm5915, %vm5916
    %v5918 = vsel %vm5917, %v5909, %v5914
    %v5919 = vrsqrt.pop %v5853
    %v5920 = vmul.f32 %v5919, %v5853
    %v5921 = vmul.f32 %v5920, %v5919
    %v5922 = vmul.f32 0.5, %v5921
    %v5923 = vsub.f32 1.5, %v5922
    %v5924 = vmul.f32 %v5919, %v5923
    %vm5925 = vweird.f32 %v5853
    %vm5926 = vweird.f32 %v5919
    %vm5927 = vmor %vm5925, %vm5926
    %v5928 = vsel %vm5927, %v5919, %v5924
    %v5929 = vrsqrt.pop %v5854
    %v5930 = vmul.f32 %v5929, %v5854
    %v5931 = vmul.f32 %v5930, %v5929
    %v5932 = vmul.f32 0.5, %v5931
    %v5933 = vsub.f32 1.5, %v5932
    %v5934 = vmul.f32 %v5929, %v5933
    %vm5935 = vweird.f32 %v5854
    %vm5936 = vweird.f32 %v5929
    %vm5937 = vmor %vm5935, %vm5936
    %v5938 = vsel %vm5937, %v5929, %v5934
    %v5939 = vrsqrt.pop %v5855
    %v5940 = vmul.f32 %v5939, %v5855
    %v5941 = vmul.f32 %v5940, %v5939
    %v5942 = vmul.f32 0.5, %v5941
    %v5943 = vsub.f32 1.5, %v5942
    %v5944 = vmul.f32 %v5939, %v5943
    %vm5945 = vweird.f32 %v5855
    %vm5946 = vweird.f32 %v5939
    %vm5947 = vmor %vm5945, %vm5946
    %v5948 = vsel %vm5947, %v5939, %v5944
    %v5949 = vrsqrt.pop %v5856
    %v5950 = vmul.f32 %v5949, %v5856
    %v5951 = vmul.f32 %v5950, %v5949
    %v5952 = vmul.f32 0.5, %v5951
    %v5953 = vsub.f32 1.5, %v5952
    %v5954 = vmul.f32 %v5949, %v5953
    %vm5955 = vweird.f32 %v5856
    %vm5956 = vweird.f32 %v5949
    %vm5957 = vmor %vm5955, %vm5956
    %v5958 = vsel %vm5957, %v5949, %v5954
    %v5959 = vrsqrt.pop %v5857
    %v5960 = vmul.f32 %v5959, %v5857
    %v5961 = vmul.f32 %v5960, %v5959
    %v5962 = vmul.f32 0.5, %v5961
    %v5963 = vsub.f32 1.5, %v5962
    %v5964 = vmul.f32 %v5959, %v5963
    %vm5965 = vweird.f32 %v5857
    %vm5966 = vweird.f32 %v5959
    %vm5967 = vmor %vm5965, %vm5966
    %v5968 = vsel %vm5967, %v5959, %v5964
    %v5969 = vrsqrt.pop %v5858
    %v5970 = vmul.f32 %v5969, %v5858
    %v5971 = vmul.f32 %v5970, %v5969
    %v5972 = vmul.f32 0.5, %v5971
    %v5973 = vsub.f32 1.5, %v5972
    %v5974 = vmul.f32 %v5969, %v5973
    %vm5975 = vweird.f32 %v5858
    %vm5976 = vweird.f32 %v5969
    %vm5977 = vmor %vm5975, %vm5976
    %v5978 = vsel %vm5977, %v5969, %v5974
    %v5979 = vmul.f32 %v5787, %v5868
    %v5980 = vmul.f32 %v5788, %v5878
    %v5981 = vmul.f32 %v5789, %v5888
    %v5982 = vmul.f32 %v5790, %v5898
    %v5983 = vmul.f32 %v5791, %v5908
    %v5984 = vmul.f32 %v5792, %v5918
    %v5985 = vmul.f32 %v5793, %v5928
    %v5986 = vmul.f32 %v5794, %v5938
    %v5987 = vmul.f32 %v5795, %v5948
    %v5988 = vmul.f32 %v5796, %v5958
    %v5989 = vmul.f32 %v5797, %v5968
    %v5990 = vmul.f32 %v5798, %v5978
    %v5992 = vperm.slane %v5748, 0
    %v5994 = vmul.f32 %v5979, %v5992
    %v5995 = vmul.f32 %v5980, %v5992
    %v5996 = vmul.f32 %v5981, %v5992
    %v5997 = vmul.f32 %v5982, %v5992
    %v5998 = vmul.f32 %v5983, %v5992
    %v5999 = vmul.f32 %v5984, %v5992
    %v6000 = vmul.f32 %v5985, %v5992
    %v6001 = vmul.f32 %v5986, %v5992
    %v6002 = vmul.f32 %v5987, %v5992
    %v6003 = vmul.f32 %v5988, %v5992
    %v6004 = vmul.f32 %v5989, %v5992
    %v6005 = vmul.f32 %v5990, %v5992
    %v6007 = vperm.slane %v5750, 0
    %v6009 = vadd.f32 %v5994, %v6007
    %v6010 = vadd.f32 %v5995, %v6007
    %v6011 = vadd.f32 %v5996, %v6007
    %v6012 = vadd.f32 %v5997, %v6007
    %v6013 = vadd.f32 %v5998, %v6007
    %v6014 = vadd.f32 %v5999, %v6007
    %v6015 = vadd.f32 %v6000, %v6007
    %v6016 = vadd.f32 %v6001, %v6007
    %v6017 = vadd.f32 %v6002, %v6007
    %v6018 = vadd.f32 %v6003, %v6007
    %v6019 = vadd.f32 %v6004, %v6007
    %v6020 = vadd.f32 %v6005, %v6007
    %v6021 = vpack.c.bf16 %v6010, %v6009
    %v6022 = vpack.c.bf16 %v6012, %v6011
    %v6023 = vpack.c.bf16 %v6014, %v6013
    %v6024 = vpack.c.bf16 %v6016, %v6015
    %v6025 = vpack.c.bf16 %v6018, %v6017
    %v6026 = vpack.c.bf16 %v6020, %v6019
    %s6027 = scalar_lea.vmem [#allocation5], 256
    %v6028 = vld [vmem:[%s6027] sm:$0xff]
    %v6029 = vld [vmem:[%s6027 + $0x8] sm:$0xff]
    %v6030 = vld [vmem:[%s6027 + $0x10] sm:$0xff]
    %v6031 = vld [vmem:[%s6027 + $0x18] sm:$0xff]
    %v6032 = vld [vmem:[%s6027 + $0x20] sm:$0xff]
    %v6033 = vld [vmem:[%s6027 + $0x28] sm:$0xff]
    %v6034 = vld [vmem:[%s6027 + $0x30] sm:$0xff]
    %v6035 = vld [vmem:[%s6027 + $0x38] sm:$0xff]
    %v6036 = vld [vmem:[%s6027 + $0x40] sm:$0xff]
    %v6037 = vld [vmem:[%s6027 + $0x48] sm:$0xff]
    %v6038 = vld [vmem:[%s6027 + $0x50] sm:$0xff]
    %v6039 = vld [vmem:[%s6027 + $0x58] sm:$0xff]
    %v6040 = vld [vmem:[%s6027 + $0x60] sm:$0xff]
    %v6041 = vld [vmem:[%s6027 + $0x68] sm:$0xff]
    %v6042 = vld [vmem:[%s6027 + $0x70] sm:$0xff]
    %v6043 = vld [vmem:[%s6027 + $0x78] sm:$0xff]
    %v6044 = vld [vmem:[%s6027 + $0x80] sm:$0xff]
    %v6045 = vld [vmem:[%s6027 + $0x88] sm:$0xff]
    %v6046 = vld [vmem:[%s6027 + $0x90] sm:$0xff]
    %v6047 = vld [vmem:[%s6027 + $0x98] sm:$0xff]
    %v6048 = vld [vmem:[%s6027 + $0xa0] sm:$0xff]
    %v6049 = vld [vmem:[%s6027 + $0xa8] sm:$0xff]
    %v6050 = vld [vmem:[%s6027 + $0xb0] sm:$0xff]
    %v6051 = vld [vmem:[%s6027 + $0xb8] sm:$0xff]
    %v6052 = vld [vmem:[%s6027 + $0xc0] sm:$0xff]
    %v6053 = vld [vmem:[%s6027 + $0xc8] sm:$0xff]
    %v6054 = vld [vmem:[%s6027 + $0xd0] sm:$0xff]
    %v6055 = vld [vmem:[%s6027 + $0xd8] sm:$0xff]
    %v6056 = vld [vmem:[%s6027 + $0xe0] sm:$0xff]
    %v6057 = vld [vmem:[%s6027 + $0xe8] sm:$0xff]
    %v6058 = vld [vmem:[%s6027 + $0xf0] sm:$0xff]
    %v6059 = vld [vmem:[%s6027 + $0xf8] sm:$0xff]
    %s6060 = scalar_lea.vmem %s11, 4
    %v6061 = vld [vmem:[%s6060] sm:$0xf]
    %v6063 = vperm.slane %v6061, 0
    %v6064 = vperm.slane %v6061, 1
    %v6065 = vperm.slane %v6061, 2
    %v6066 = vperm.slane %v6061, 3
    %v6103 = vunpack.c.l.b16 %v6028
    %v6104 = vunpack.c.h.b16 %v6028
    %v6105 = vunpack.c.l.b16 %v6029
    %v6106 = vunpack.c.h.b16 %v6029
    %v6107 = vunpack.c.l.b16 %v6030
    %v6108 = vunpack.c.h.b16 %v6030
    %v6109 = vunpack.c.l.b16 %v6031
    %v6110 = vunpack.c.h.b16 %v6031
    %v6111 = vunpack.c.l.b16 %v6032
    %v6112 = vunpack.c.h.b16 %v6032
    %v6113 = vunpack.c.l.b16 %v6033
    %v6114 = vunpack.c.h.b16 %v6033
    %v6115 = vunpack.c.l.b16 %v6034
    %v6116 = vunpack.c.h.b16 %v6034
    %v6117 = vunpack.c.l.b16 %v6035
    %v6118 = vunpack.c.h.b16 %v6035
    %v6119 = vunpack.c.l.b16 %v6036
    %v6120 = vunpack.c.h.b16 %v6036
    %v6121 = vunpack.c.l.b16 %v6037
    %v6122 = vunpack.c.h.b16 %v6037
    %v6123 = vunpack.c.l.b16 %v6038
    %v6124 = vunpack.c.h.b16 %v6038
    %v6125 = vunpack.c.l.b16 %v6039
    %v6126 = vunpack.c.h.b16 %v6039
    %v6127 = vunpack.c.l.b16 %v6040
    %v6128 = vunpack.c.h.b16 %v6040
    %v6129 = vunpack.c.l.b16 %v6041
    %v6130 = vunpack.c.h.b16 %v6041
    %v6131 = vunpack.c.l.b16 %v6042
    %v6132 = vunpack.c.h.b16 %v6042
    %v6133 = vunpack.c.l.b16 %v6043
    %v6134 = vunpack.c.h.b16 %v6043
    %v6135 = vunpack.c.l.b16 %v6044
    %v6136 = vunpack.c.h.b16 %v6044
    %v6137 = vunpack.c.l.b16 %v6045
    %v6138 = vunpack.c.h.b16 %v6045
    %v6139 = vunpack.c.l.b16 %v6046
    %v6140 = vunpack.c.h.b16 %v6046
    %v6141 = vunpack.c.l.b16 %v6047
    %v6142 = vunpack.c.h.b16 %v6047
    %v6143 = vunpack.c.l.b16 %v6048
    %v6144 = vunpack.c.h.b16 %v6048
    %v6145 = vunpack.c.l.b16 %v6049
    %v6146 = vunpack.c.h.b16 %v6049
    %v6147 = vunpack.c.l.b16 %v6050
    %v6148 = vunpack.c.h.b16 %v6050
    %v6149 = vunpack.c.l.b16 %v6051
    %v6150 = vunpack.c.h.b16 %v6051
    %v6151 = vunpack.c.l.b16 %v6052
    %v6152 = vunpack.c.h.b16 %v6052
    %v6153 = vunpack.c.l.b16 %v6053
    %v6154 = vunpack.c.h.b16 %v6053
    %v6155 = vunpack.c.l.b16 %v6054
    %v6156 = vunpack.c.h.b16 %v6054
    %v6157 = vunpack.c.l.b16 %v6055
    %v6158 = vunpack.c.h.b16 %v6055
    %v6159 = vunpack.c.l.b16 %v6056
    %v6160 = vunpack.c.h.b16 %v6056
    %v6161 = vunpack.c.l.b16 %v6057
    %v6162 = vunpack.c.h.b16 %v6057
    %v6163 = vunpack.c.l.b16 %v6058
    %v6164 = vunpack.c.h.b16 %v6058
    %v6165 = vunpack.c.l.b16 %v6059
    %v6166 = vunpack.c.h.b16 %v6059
    %v6167 = vpack.c.b16 %v6107, %v6103
    %v6168 = vpack.c.b16 %v6108, %v6104
    %v6169 = vpack.c.b16 %v6109, %v6105
    %v6170 = vpack.c.b16 %v6110, %v6106
    %v6171 = vpack.c.b16 %v6115, %v6111
    %v6172 = vpack.c.b16 %v6116, %v6112
    %v6173 = vpack.c.b16 %v6117, %v6113
    %v6174 = vpack.c.b16 %v6118, %v6114
    %v6175 = vpack.c.b16 %v6123, %v6119
    %v6176 = vpack.c.b16 %v6124, %v6120
    %v6177 = vpack.c.b16 %v6125, %v6121
    %v6178 = vpack.c.b16 %v6126, %v6122
    %v6179 = vpack.c.b16 %v6131, %v6127
    %v6180 = vpack.c.b16 %v6132, %v6128
    %v6181 = vpack.c.b16 %v6133, %v6129
    %v6182 = vpack.c.b16 %v6134, %v6130
    %v6183 = vpack.c.b16 %v6139, %v6135
    %v6184 = vpack.c.b16 %v6140, %v6136
    %v6185 = vpack.c.b16 %v6141, %v6137
    %v6186 = vpack.c.b16 %v6142, %v6138
    %v6187 = vpack.c.b16 %v6147, %v6143
    %v6188 = vpack.c.b16 %v6148, %v6144
    %v6189 = vpack.c.b16 %v6149, %v6145
    %v6190 = vpack.c.b16 %v6150, %v6146
    %v6191 = vpack.c.b16 %v6155, %v6151
    %v6192 = vpack.c.b16 %v6156, %v6152
    %v6193 = vpack.c.b16 %v6157, %v6153
    %v6194 = vpack.c.b16 %v6158, %v6154
    %v6195 = vpack.c.b16 %v6163, %v6159
    %v6196 = vpack.c.b16 %v6164, %v6160
    %v6197 = vpack.c.b16 %v6165, %v6161
    %v6198 = vpack.c.b16 %v6166, %v6162
    %6231 = vmatpush.bf16.msra.mxu0 %v6195
    %6232 = vmatpush.bf16.msra.mxu0 %v6191
    %6233 = vmatpush.bf16.msra.mxu0 %v6187
    %6234 = vmatpush.bf16.msra.mxu0 %v6183
    %6235 = vmatpush.bf16.msra.mxu0 %v6179
    %6236 = vmatpush.bf16.msra.mxu0 %v6175
    %6237 = vmatpush.bf16.msra.mxu0 %v6171
    %6238 = vmatpush.bf16.msra.mxu0 %v6167
    %6239 = vmatmul.bf16.gmra.mxu0 %v6021
    %v6240 = vpop.f32.mrf.mxu0
    %v6241 = vadd.f32 %v6063, %v6240
    %v6242 = vpop.f32.mrf.mxu0
    %v6243 = vadd.f32 %v6063, %v6242
    %6244 = vmatmul.bf16.gmra.mxu0 %v6022
    %v6245 = vpop.f32.mrf.mxu0
    %v6246 = vadd.f32 %v6063, %v6245
    %v6247 = vpop.f32.mrf.mxu0
    %v6248 = vadd.f32 %v6063, %v6247
    %6249 = vmatmul.bf16.gmra.mxu0 %v6023
    %v6250 = vpop.f32.mrf.mxu0
    %v6251 = vadd.f32 %v6063, %v6250
    %v6252 = vpop.f32.mrf.mxu0
    %v6253 = vadd.f32 %v6063, %v6252
    %6254 = vmatmul.bf16.gmra.mxu0 %v6024
    %v6255 = vpop.f32.mrf.mxu0
    %v6256 = vadd.f32 %v6063, %v6255
    %v6257 = vpop.f32.mrf.mxu0
    %v6258 = vadd.f32 %v6063, %v6257
    %6259 = vmatmul.bf16.gmra.mxu0 %v6025
    %v6260 = vpop.f32.mrf.mxu0
    %v6261 = vadd.f32 %v6063, %v6260
    %v6262 = vpop.f32.mrf.mxu0
    %v6263 = vadd.f32 %v6063, %v6262
    %6264 = vmatmul.bf16.gmra.mxu0 %v6026
    %v6265 = vpop.f32.mrf.mxu0
    %v6266 = vadd.f32 %v6063, %v6265
    %v6267 = vpop.f32.mrf.mxu0
    %v6268 = vadd.f32 %v6063, %v6267
    %6269 = vdwg.mxu0
    %6270 = vmatpush.bf16.msra.mxu0 %v6196
    %6271 = vmatpush.bf16.msra.mxu0 %v6192
    %6272 = vmatpush.bf16.msra.mxu0 %v6188
    %6273 = vmatpush.bf16.msra.mxu0 %v6184
    %6274 = vmatpush.bf16.msra.mxu0 %v6180
    %6275 = vmatpush.bf16.msra.mxu0 %v6176
    %6276 = vmatpush.bf16.msra.mxu0 %v6172
    %6277 = vmatpush.bf16.msra.mxu0 %v6168
    %6278 = vmatmul.bf16.gmra.mxu0 %v6021
    %v6279 = vpop.f32.mrf.mxu0
    %v6280 = vadd.f32 %v6064, %v6279
    %v6281 = vpop.f32.mrf.mxu0
    %v6282 = vadd.f32 %v6064, %v6281
    %6283 = vmatmul.bf16.gmra.mxu0 %v6022
    %v6284 = vpop.f32.mrf.mxu0
    %v6285 = vadd.f32 %v6064, %v6284
    %v6286 = vpop.f32.mrf.mxu0
    %v6287 = vadd.f32 %v6064, %v6286
    %6288 = vmatmul.bf16.gmra.mxu0 %v6023
    %v6289 = vpop.f32.mrf.mxu0
    %v6290 = vadd.f32 %v6064, %v6289
    %v6291 = vpop.f32.mrf.mxu0
    %v6292 = vadd.f32 %v6064, %v6291
    %6293 = vmatmul.bf16.gmra.mxu0 %v6024
    %v6294 = vpop.f32.mrf.mxu0
    %v6295 = vadd.f32 %v6064, %v6294
    %v6296 = vpop.f32.mrf.mxu0
    %v6297 = vadd.f32 %v6064, %v6296
    %6298 = vmatmul.bf16.gmra.mxu0 %v6025
    %v6299 = vpop.f32.mrf.mxu0
    %v6300 = vadd.f32 %v6064, %v6299
    %v6301 = vpop.f32.mrf.mxu0
    %v6302 = vadd.f32 %v6064, %v6301
    %6303 = vmatmul.bf16.gmra.mxu0 %v6026
    %v6304 = vpop.f32.mrf.mxu0
    %v6305 = vadd.f32 %v6064, %v6304
    %v6306 = vpop.f32.mrf.mxu0
    %v6307 = vadd.f32 %v6064, %v6306
    %6308 = vdwg.mxu0
    %6309 = vmatpush.bf16.msra.mxu0 %v6197
    %6310 = vmatpush.bf16.msra.mxu0 %v6193
    %6311 = vmatpush.bf16.msra.mxu0 %v6189
    %6312 = vmatpush.bf16.msra.mxu0 %v6185
    %6313 = vmatpush.bf16.msra.mxu0 %v6181
    %6314 = vmatpush.bf16.msra.mxu0 %v6177
    %6315 = vmatpush.bf16.msra.mxu0 %v6173
    %6316 = vmatpush.bf16.msra.mxu0 %v6169
    %6317 = vmatmul.bf16.gmra.mxu0 %v6021
    %v6318 = vpop.f32.mrf.mxu0
    %v6319 = vadd.f32 %v6065, %v6318
    %v6320 = vpop.f32.mrf.mxu0
    %v6321 = vadd.f32 %v6065, %v6320
    %6322 = vmatmul.bf16.gmra.mxu0 %v6022
    %v6323 = vpop.f32.mrf.mxu0
    %v6324 = vadd.f32 %v6065, %v6323
    %v6325 = vpop.f32.mrf.mxu0
    %v6326 = vadd.f32 %v6065, %v6325
    %6327 = vmatmul.bf16.gmra.mxu0 %v6023
    %v6328 = vpop.f32.mrf.mxu0
    %v6329 = vadd.f32 %v6065, %v6328
    %v6330 = vpop.f32.mrf.mxu0
    %v6331 = vadd.f32 %v6065, %v6330
    %6332 = vmatmul.bf16.gmra.mxu0 %v6024
    %v6333 = vpop.f32.mrf.mxu0
    %v6334 = vadd.f32 %v6065, %v6333
    %v6335 = vpop.f32.mrf.mxu0
    %v6336 = vadd.f32 %v6065, %v6335
    %6337 = vmatmul.bf16.gmra.mxu0 %v6025
    %v6338 = vpop.f32.mrf.mxu0
    %v6339 = vadd.f32 %v6065, %v6338
    %v6340 = vpop.f32.mrf.mxu0
    %v6341 = vadd.f32 %v6065, %v6340
    %6342 = vmatmul.bf16.gmra.mxu0 %v6026
    %v6343 = vpop.f32.mrf.mxu0
    %v6344 = vadd.f32 %v6065, %v6343
    %v6345 = vpop.f32.mrf.mxu0
    %v6346 = vadd.f32 %v6065, %v6345
    %6347 = vdwg.mxu0
    %6348 = vmatpush.bf16.msra.mxu0 %v6198
    %6349 = vmatpush.bf16.msra.mxu0 %v6194
    %6350 = vmatpush.bf16.msra.mxu0 %v6190
    %6351 = vmatpush.bf16.msra.mxu0 %v6186
    %6352 = vmatpush.bf16.msra.mxu0 %v6182
    %6353 = vmatpush.bf16.msra.mxu0 %v6178
    %6354 = vmatpush.bf16.msra.mxu0 %v6174
    %6355 = vmatpush.bf16.msra.mxu0 %v6170
    %6356 = vmatmul.bf16.gmra.mxu0 %v6021
    %v6357 = vpop.f32.mrf.mxu0
    %v6358 = vadd.f32 %v6066, %v6357
    %v6359 = vpop.f32.mrf.mxu0
    %v6360 = vadd.f32 %v6066, %v6359
    %6361 = vmatmul.bf16.gmra.mxu0 %v6022
    %v6362 = vpop.f32.mrf.mxu0
    %v6363 = vadd.f32 %v6066, %v6362
    %v6364 = vpop.f32.mrf.mxu0
    %v6365 = vadd.f32 %v6066, %v6364
    %6366 = vmatmul.bf16.gmra.mxu0 %v6023
    %v6367 = vpop.f32.mrf.mxu0
    %v6368 = vadd.f32 %v6066, %v6367
    %v6369 = vpop.f32.mrf.mxu0
    %v6370 = vadd.f32 %v6066, %v6369
    %6371 = vmatmul.bf16.gmra.mxu0 %v6024
    %v6372 = vpop.f32.mrf.mxu0
    %v6373 = vadd.f32 %v6066, %v6372
    %v6374 = vpop.f32.mrf.mxu0
    %v6375 = vadd.f32 %v6066, %v6374
    %6376 = vmatmul.bf16.gmra.mxu0 %v6025
    %v6377 = vpop.f32.mrf.mxu0
    %v6378 = vadd.f32 %v6066, %v6377
    %v6379 = vpop.f32.mrf.mxu0
    %v6380 = vadd.f32 %v6066, %v6379
    %6381 = vmatmul.bf16.gmra.mxu0 %v6026
    %v6382 = vpop.f32.mrf.mxu0
    %v6383 = vadd.f32 %v6066, %v6382
    %v6384 = vpop.f32.mrf.mxu0
    %v6385 = vadd.f32 %v6066, %v6384
    %6386 = vdwg.mxu0
    %v6387 = vmax.f32 %v6241, 0.0
    %v6388 = vmax.f32 %v6280, 0.0
    %v6389 = vmax.f32 %v6319, 0.0
    %v6390 = vmax.f32 %v6358, 0.0
    %v6391 = vmax.f32 %v6243, 0.0
    %v6392 = vmax.f32 %v6282, 0.0
    %v6393 = vmax.f32 %v6321, 0.0
    %v6394 = vmax.f32 %v6360, 0.0
    %v6395 = vmax.f32 %v6246, 0.0
    %v6396 = vmax.f32 %v6285, 0.0
    %v6397 = vmax.f32 %v6324, 0.0
    %v6398 = vmax.f32 %v6363, 0.0
    %v6399 = vmax.f32 %v6248, 0.0
    %v6400 = vmax.f32 %v6287, 0.0
    %v6401 = vmax.f32 %v6326, 0.0
    %v6402 = vmax.f32 %v6365, 0.0
    %v6403 = vmax.f32 %v6251, 0.0
    %v6404 = vmax.f32 %v6290, 0.0
    %v6405 = vmax.f32 %v6329, 0.0
    %v6406 = vmax.f32 %v6368, 0.0
    %v6407 = vmax.f32 %v6253, 0.0
    %v6408 = vmax.f32 %v6292, 0.0
    %v6409 = vmax.f32 %v6331, 0.0
    %v6410 = vmax.f32 %v6370, 0.0
    %v6411 = vmax.f32 %v6256, 0.0
    %v6412 = vmax.f32 %v6295, 0.0
    %v6413 = vmax.f32 %v6334, 0.0
    %v6414 = vmax.f32 %v6373, 0.0
    %v6415 = vmax.f32 %v6258, 0.0
    %v6416 = vmax.f32 %v6297, 0.0
    %v6417 = vmax.f32 %v6336, 0.0
    %v6418 = vmax.f32 %v6375, 0.0
    %v6419 = vmax.f32 %v6261, 0.0
    %v6420 = vmax.f32 %v6300, 0.0
    %v6421 = vmax.f32 %v6339, 0.0
    %v6422 = vmax.f32 %v6378, 0.0
    %v6423 = vmax.f32 %v6263, 0.0
    %v6424 = vmax.f32 %v6302, 0.0
    %v6425 = vmax.f32 %v6341, 0.0
    %v6426 = vmax.f32 %v6380, 0.0
    %v6427 = vmax.f32 %v6266, 0.0
    %v6428 = vmax.f32 %v6305, 0.0
    %v6429 = vmax.f32 %v6344, 0.0
    %v6430 = vmax.f32 %v6383, 0.0
    %v6431 = vmax.f32 %v6268, 0.0
    %v6432 = vmax.f32 %v6307, 0.0
    %v6433 = vmax.f32 %v6346, 0.0
    %v6434 = vmax.f32 %v6385, 0.0
    %v6435 = vpack.c.bf16 %v6391, %v6387
    %v6436 = vpack.c.bf16 %v6392, %v6388
    %v6437 = vpack.c.bf16 %v6393, %v6389
    %v6438 = vpack.c.bf16 %v6394, %v6390
    %v6439 = vpack.c.bf16 %v6399, %v6395
    %v6440 = vpack.c.bf16 %v6400, %v6396
    %v6441 = vpack.c.bf16 %v6401, %v6397
    %v6442 = vpack.c.bf16 %v6402, %v6398
    %v6443 = vpack.c.bf16 %v6407, %v6403
    %v6444 = vpack.c.bf16 %v6408, %v6404
    %v6445 = vpack.c.bf16 %v6409, %v6405
    %v6446 = vpack.c.bf16 %v6410, %v6406
    %v6447 = vpack.c.bf16 %v6415, %v6411
    %v6448 = vpack.c.bf16 %v6416, %v6412
    %v6449 = vpack.c.bf16 %v6417, %v6413
    %v6450 = vpack.c.bf16 %v6418, %v6414
    %v6451 = vpack.c.bf16 %v6423, %v6419
    %v6452 = vpack.c.bf16 %v6424, %v6420
    %v6453 = vpack.c.bf16 %v6425, %v6421
    %v6454 = vpack.c.bf16 %v6426, %v6422
    %v6455 = vpack.c.bf16 %v6431, %v6427
    %v6456 = vpack.c.bf16 %v6432, %v6428
    %v6457 = vpack.c.bf16 %v6433, %v6429
    %v6458 = vpack.c.bf16 %v6434, %v6430
    %s6459 = scalar_lea.vmem [#allocation7], 256
    %v6460 = vld [vmem:[%s6459] sm:$0xf]
    %v6461 = vld [vmem:[%s6459 + $0x4] sm:$0xf]
    %v6462 = vld [vmem:[%s6459 + $0x8] sm:$0xf]
    %v6463 = vld [vmem:[%s6459 + $0xc] sm:$0xf]
    %v6464 = vld [vmem:[%s6459 + $0x10] sm:$0xf]
    %v6465 = vld [vmem:[%s6459 + $0x14] sm:$0xf]
    %v6466 = vld [vmem:[%s6459 + $0x18] sm:$0xf]
    %v6467 = vld [vmem:[%s6459 + $0x1c] sm:$0xf]
    %v6468 = vld [vmem:[%s6459 + $0x20] sm:$0xf]
    %v6469 = vld [vmem:[%s6459 + $0x24] sm:$0xf]
    %v6470 = vld [vmem:[%s6459 + $0x28] sm:$0xf]
    %v6471 = vld [vmem:[%s6459 + $0x2c] sm:$0xf]
    %v6472 = vld [vmem:[%s6459 + $0x30] sm:$0xf]
    %v6473 = vld [vmem:[%s6459 + $0x34] sm:$0xf]
    %v6474 = vld [vmem:[%s6459 + $0x38] sm:$0xf]
    %v6475 = vld [vmem:[%s6459 + $0x3c] sm:$0xf]
    %v6476 = vld [vmem:[%s6459 + $0x40] sm:$0xf]
    %v6477 = vld [vmem:[%s6459 + $0x44] sm:$0xf]
    %v6478 = vld [vmem:[%s6459 + $0x48] sm:$0xf]
    %v6479 = vld [vmem:[%s6459 + $0x4c] sm:$0xf]
    %v6480 = vld [vmem:[%s6459 + $0x50] sm:$0xf]
    %v6481 = vld [vmem:[%s6459 + $0x54] sm:$0xf]
    %v6482 = vld [vmem:[%s6459 + $0x58] sm:$0xf]
    %v6483 = vld [vmem:[%s6459 + $0x5c] sm:$0xf]
    %v6484 = vld [vmem:[%s6459 + $0x60] sm:$0xf]
    %v6485 = vld [vmem:[%s6459 + $0x64] sm:$0xf]
    %v6486 = vld [vmem:[%s6459 + $0x68] sm:$0xf]
    %v6487 = vld [vmem:[%s6459 + $0x6c] sm:$0xf]
    %v6488 = vld [vmem:[%s6459 + $0x70] sm:$0xf]
    %v6489 = vld [vmem:[%s6459 + $0x74] sm:$0xf]
    %v6490 = vld [vmem:[%s6459 + $0x78] sm:$0xf]
    %v6491 = vld [vmem:[%s6459 + $0x7c] sm:$0xf]
    %v6492 = vld [vmem:[%s6459 + $0x80] sm:$0xf]
    %v6493 = vld [vmem:[%s6459 + $0x84] sm:$0xf]
    %v6494 = vld [vmem:[%s6459 + $0x88] sm:$0xf]
    %v6495 = vld [vmem:[%s6459 + $0x8c] sm:$0xf]
    %v6496 = vld [vmem:[%s6459 + $0x90] sm:$0xf]
    %v6497 = vld [vmem:[%s6459 + $0x94] sm:$0xf]
    %v6498 = vld [vmem:[%s6459 + $0x98] sm:$0xf]
    %v6499 = vld [vmem:[%s6459 + $0x9c] sm:$0xf]
    %v6500 = vld [vmem:[%s6459 + $0xa0] sm:$0xf]
    %v6501 = vld [vmem:[%s6459 + $0xa4] sm:$0xf]
    %v6502 = vld [vmem:[%s6459 + $0xa8] sm:$0xf]
    %v6503 = vld [vmem:[%s6459 + $0xac] sm:$0xf]
    %v6504 = vld [vmem:[%s6459 + $0xb0] sm:$0xf]
    %v6505 = vld [vmem:[%s6459 + $0xb4] sm:$0xf]
    %v6506 = vld [vmem:[%s6459 + $0xb8] sm:$0xf]
    %v6507 = vld [vmem:[%s6459 + $0xbc] sm:$0xf]
    %v6508 = vld [vmem:[%s6459 + $0xc0] sm:$0xf]
    %v6509 = vld [vmem:[%s6459 + $0xc4] sm:$0xf]
    %v6510 = vld [vmem:[%s6459 + $0xc8] sm:$0xf]
    %v6511 = vld [vmem:[%s6459 + $0xcc] sm:$0xf]
    %v6512 = vld [vmem:[%s6459 + $0xd0] sm:$0xf]
    %v6513 = vld [vmem:[%s6459 + $0xd4] sm:$0xf]
    %v6514 = vld [vmem:[%s6459 + $0xd8] sm:$0xf]
    %v6515 = vld [vmem:[%s6459 + $0xdc] sm:$0xf]
    %v6516 = vld [vmem:[%s6459 + $0xe0] sm:$0xf]
    %v6517 = vld [vmem:[%s6459 + $0xe4] sm:$0xf]
    %v6518 = vld [vmem:[%s6459 + $0xe8] sm:$0xf]
    %v6519 = vld [vmem:[%s6459 + $0xec] sm:$0xf]
    %v6520 = vld [vmem:[%s6459 + $0xf0] sm:$0xf]
    %v6521 = vld [vmem:[%s6459 + $0xf4] sm:$0xf]
    %v6522 = vld [vmem:[%s6459 + $0xf8] sm:$0xf]
    %v6523 = vld [vmem:[%s6459 + $0xfc] sm:$0xf]
    %s6524 = scalar_lea.vmem %s13, 1
    %v6525 = vld [vmem:[%s6524] sm:$0x1]
    %v6527 = vperm.slane %v6525, 0
    %v6593 = vunpack.c.l.b16 %v6460
    %v6594 = vunpack.c.l.b16 %v6461
    %v6595 = vunpack.c.l.b16 %v6462
    %v6596 = vunpack.c.l.b16 %v6463
    %v6597 = vunpack.c.l.b16 %v6464
    %v6598 = vunpack.c.l.b16 %v6465
    %v6599 = vunpack.c.l.b16 %v6466
    %v6600 = vunpack.c.l.b16 %v6467
    %v6601 = vunpack.c.l.b16 %v6468
    %v6602 = vunpack.c.l.b16 %v6469
    %v6603 = vunpack.c.l.b16 %v6470
    %v6604 = vunpack.c.l.b16 %v6471
    %v6605 = vunpack.c.l.b16 %v6472
    %v6606 = vunpack.c.l.b16 %v6473
    %v6607 = vunpack.c.l.b16 %v6474
    %v6608 = vunpack.c.l.b16 %v6475
    %v6609 = vunpack.c.l.b16 %v6476
    %v6610 = vunpack.c.l.b16 %v6477
    %v6611 = vunpack.c.l.b16 %v6478
    %v6612 = vunpack.c.l.b16 %v6479
    %v6613 = vunpack.c.l.b16 %v6480
    %v6614 = vunpack.c.l.b16 %v6481
    %v6615 = vunpack.c.l.b16 %v6482
    %v6616 = vunpack.c.l.b16 %v6483
    %v6617 = vunpack.c.l.b16 %v6484
    %v6618 = vunpack.c.l.b16 %v6485
    %v6619 = vunpack.c.l.b16 %v6486
    %v6620 = vunpack.c.l.b16 %v6487
    %v6621 = vunpack.c.l.b16 %v6488
    %v6622 = vunpack.c.l.b16 %v6489
    %v6623 = vunpack.c.l.b16 %v6490
    %v6624 = vunpack.c.l.b16 %v6491
    %v6625 = vunpack.c.l.b16 %v6492
    %v6626 = vunpack.c.l.b16 %v6493
    %v6627 = vunpack.c.l.b16 %v6494
    %v6628 = vunpack.c.l.b16 %v6495
    %v6629 = vunpack.c.l.b16 %v6496
    %v6630 = vunpack.c.l.b16 %v6497
    %v6631 = vunpack.c.l.b16 %v6498
    %v6632 = vunpack.c.l.b16 %v6499
    %v6633 = vunpack.c.l.b16 %v6500
    %v6634 = vunpack.c.l.b16 %v6501
    %v6635 = vunpack.c.l.b16 %v6502
    %v6636 = vunpack.c.l.b16 %v6503
    %v6637 = vunpack.c.l.b16 %v6504
    %v6638 = vunpack.c.l.b16 %v6505
    %v6639 = vunpack.c.l.b16 %v6506
    %v6640 = vunpack.c.l.b16 %v6507
    %v6641 = vunpack.c.l.b16 %v6508
    %v6642 = vunpack.c.l.b16 %v6509
    %v6643 = vunpack.c.l.b16 %v6510
    %v6644 = vunpack.c.l.b16 %v6511
    %v6645 = vunpack.c.l.b16 %v6512
    %v6646 = vunpack.c.l.b16 %v6513
    %v6647 = vunpack.c.l.b16 %v6514
    %v6648 = vunpack.c.l.b16 %v6515
    %v6649 = vunpack.c.l.b16 %v6516
    %v6650 = vunpack.c.l.b16 %v6517
    %v6651 = vunpack.c.l.b16 %v6518
    %v6652 = vunpack.c.l.b16 %v6519
    %v6653 = vunpack.c.l.b16 %v6520
    %v6654 = vunpack.c.l.b16 %v6521
    %v6655 = vunpack.c.l.b16 %v6522
    %v6656 = vunpack.c.l.b16 %v6523
    %v6657 = vpack.c.b16 %v6594, %v6593
    %v6658 = vpack.c.b16 %v6596, %v6595
    %v6659 = vpack.c.b16 %v6598, %v6597
    %v6660 = vpack.c.b16 %v6600, %v6599
    %v6661 = vpack.c.b16 %v6602, %v6601
    %v6662 = vpack.c.b16 %v6604, %v6603
    %v6663 = vpack.c.b16 %v6606, %v6605
    %v6664 = vpack.c.b16 %v6608, %v6607
    %v6665 = vpack.c.b16 %v6610, %v6609
    %v6666 = vpack.c.b16 %v6612, %v6611
    %v6667 = vpack.c.b16 %v6614, %v6613
    %v6668 = vpack.c.b16 %v6616, %v6615
    %v6669 = vpack.c.b16 %v6618, %v6617
    %v6670 = vpack.c.b16 %v6620, %v6619
    %v6671 = vpack.c.b16 %v6622, %v6621
    %v6672 = vpack.c.b16 %v6624, %v6623
    %v6673 = vpack.c.b16 %v6626, %v6625
    %v6674 = vpack.c.b16 %v6628, %v6627
    %v6675 = vpack.c.b16 %v6630, %v6629
    %v6676 = vpack.c.b16 %v6632, %v6631
    %v6677 = vpack.c.b16 %v6634, %v6633
    %v6678 = vpack.c.b16 %v6636, %v6635
    %v6679 = vpack.c.b16 %v6638, %v6637
    %v6680 = vpack.c.b16 %v6640, %v6639
    %v6681 = vpack.c.b16 %v6642, %v6641
    %v6682 = vpack.c.b16 %v6644, %v6643
    %v6683 = vpack.c.b16 %v6646, %v6645
    %v6684 = vpack.c.b16 %v6648, %v6647
    %v6685 = vpack.c.b16 %v6650, %v6649
    %v6686 = vpack.c.b16 %v6652, %v6651
    %v6687 = vpack.c.b16 %v6654, %v6653
    %v6688 = vpack.c.b16 %v6656, %v6655
    %6721 = vmatpush.bf16.msra.mxu0 %v6664
    %6722 = vmatpush.bf16.msra.mxu0 %v6663
    %6723 = vmatpush.bf16.msra.mxu0 %v6662
    %6724 = vmatpush.bf16.msra.mxu0 %v6661
    %6725 = vmatpush.bf16.msra.mxu0 %v6660
    %6726 = vmatpush.bf16.msra.mxu0 %v6659
    %6727 = vmatpush.bf16.msra.mxu0 %v6658
    %6728 = vmatpush.bf16.msra.mxu0 %v6657
    %6729 = vmatmul.bf16.gmra.mxu0 %v6435
    %v6730 = vpop.f32.mrf.mxu0
    %v6731 = vadd.f32 %v6527, %v6730
    %v6732 = vpop.f32.mrf.mxu0
    %v6733 = vadd.f32 %v6527, %v6732
    %6734 = vmatmul.bf16.gmra.mxu0 %v6439
    %v6735 = vpop.f32.mrf.mxu0
    %v6736 = vadd.f32 %v6527, %v6735
    %v6737 = vpop.f32.mrf.mxu0
    %v6738 = vadd.f32 %v6527, %v6737
    %6739 = vmatmul.bf16.gmra.mxu0 %v6443
    %v6740 = vpop.f32.mrf.mxu0
    %v6741 = vadd.f32 %v6527, %v6740
    %v6742 = vpop.f32.mrf.mxu0
    %v6743 = vadd.f32 %v6527, %v6742
    %6744 = vmatmul.bf16.gmra.mxu0 %v6447
    %v6745 = vpop.f32.mrf.mxu0
    %v6746 = vadd.f32 %v6527, %v6745
    %v6747 = vpop.f32.mrf.mxu0
    %v6748 = vadd.f32 %v6527, %v6747
    %6749 = vmatmul.bf16.gmra.mxu0 %v6451
    %v6750 = vpop.f32.mrf.mxu0
    %v6751 = vadd.f32 %v6527, %v6750
    %v6752 = vpop.f32.mrf.mxu0
    %v6753 = vadd.f32 %v6527, %v6752
    %6754 = vmatmul.bf16.gmra.mxu0 %v6455
    %v6755 = vpop.f32.mrf.mxu0
    %v6756 = vadd.f32 %v6527, %v6755
    %v6757 = vpop.f32.mrf.mxu0
    %v6758 = vadd.f32 %v6527, %v6757
    %6759 = vdwg.mxu0
    %6760 = vmatpush.bf16.msra.mxu0 %v6672
    %6761 = vmatpush.bf16.msra.mxu0 %v6671
    %6762 = vmatpush.bf16.msra.mxu0 %v6670
    %6763 = vmatpush.bf16.msra.mxu0 %v6669
    %6764 = vmatpush.bf16.msra.mxu0 %v6668
    %6765 = vmatpush.bf16.msra.mxu0 %v6667
    %6766 = vmatpush.bf16.msra.mxu0 %v6666
    %6767 = vmatpush.bf16.msra.mxu0 %v6665
    %6768 = vmatmul.bf16.gmra.mxu0 %v6436
    %v6769 = vpop.f32.mrf.mxu0
    %v6770 = vadd.f32 %v6731, %v6769
    %v6771 = vpop.f32.mrf.mxu0
    %v6772 = vadd.f32 %v6733, %v6771
    %6773 = vmatmul.bf16.gmra.mxu0 %v6440
    %v6774 = vpop.f32.mrf.mxu0
    %v6775 = vadd.f32 %v6736, %v6774
    %v6776 = vpop.f32.mrf.mxu0
    %v6777 = vadd.f32 %v6738, %v6776
    %6778 = vmatmul.bf16.gmra.mxu0 %v6444
    %v6779 = vpop.f32.mrf.mxu0
    %v6780 = vadd.f32 %v6741, %v6779
    %v6781 = vpop.f32.mrf.mxu0
    %v6782 = vadd.f32 %v6743, %v6781
    %6783 = vmatmul.bf16.gmra.mxu0 %v6448
    %v6784 = vpop.f32.mrf.mxu0
    %v6785 = vadd.f32 %v6746, %v6784
    %v6786 = vpop.f32.mrf.mxu0
    %v6787 = vadd.f32 %v6748, %v6786
    %6788 = vmatmul.bf16.gmra.mxu0 %v6452
    %v6789 = vpop.f32.mrf.mxu0
    %v6790 = vadd.f32 %v6751, %v6789
    %v6791 = vpop.f32.mrf.mxu0
    %v6792 = vadd.f32 %v6753, %v6791
    %6793 = vmatmul.bf16.gmra.mxu0 %v6456
    %v6794 = vpop.f32.mrf.mxu0
    %v6795 = vadd.f32 %v6756, %v6794
    %v6796 = vpop.f32.mrf.mxu0
    %v6797 = vadd.f32 %v6758, %v6796
    %6798 = vdwg.mxu0
    %6799 = vmatpush.bf16.msra.mxu0 %v6680
    %6800 = vmatpush.bf16.msra.mxu0 %v6679
    %6801 = vmatpush.bf16.msra.mxu0 %v6678
    %6802 = vmatpush.bf16.msra.mxu0 %v6677
    %6803 = vmatpush.bf16.msra.mxu0 %v6676
    %6804 = vmatpush.bf16.msra.mxu0 %v6675
    %6805 = vmatpush.bf16.msra.mxu0 %v6674
    %6806 = vmatpush.bf16.msra.mxu0 %v6673
    %6807 = vmatmul.bf16.gmra.mxu0 %v6437
    %v6808 = vpop.f32.mrf.mxu0
    %v6809 = vadd.f32 %v6770, %v6808
    %v6810 = vpop.f32.mrf.mxu0
    %v6811 = vadd.f32 %v6772, %v6810
    %6812 = vmatmul.bf16.gmra.mxu0 %v6441
    %v6813 = vpop.f32.mrf.mxu0
    %v6814 = vadd.f32 %v6775, %v6813
    %v6815 = vpop.f32.mrf.mxu0
    %v6816 = vadd.f32 %v6777, %v6815
    %6817 = vmatmul.bf16.gmra.mxu0 %v6445
    %v6818 = vpop.f32.mrf.mxu0
    %v6819 = vadd.f32 %v6780, %v6818
    %v6820 = vpop.f32.mrf.mxu0
    %v6821 = vadd.f32 %v6782, %v6820
    %6822 = vmatmul.bf16.gmra.mxu0 %v6449
    %v6823 = vpop.f32.mrf.mxu0
    %v6824 = vadd.f32 %v6785, %v6823
    %v6825 = vpop.f32.mrf.mxu0
    %v6826 = vadd.f32 %v6787, %v6825
    %6827 = vmatmul.bf16.gmra.mxu0 %v6453
    %v6828 = vpop.f32.mrf.mxu0
    %v6829 = vadd.f32 %v6790, %v6828
    %v6830 = vpop.f32.mrf.mxu0
    %v6831 = vadd.f32 %v6792, %v6830
    %6832 = vmatmul.bf16.gmra.mxu0 %v6457
    %v6833 = vpop.f32.mrf.mxu0
    %v6834 = vadd.f32 %v6795, %v6833
    %v6835 = vpop.f32.mrf.mxu0
    %v6836 = vadd.f32 %v6797, %v6835
    %6837 = vdwg.mxu0
    %6838 = vmatpush.bf16.msra.mxu0 %v6688
    %6839 = vmatpush.bf16.msra.mxu0 %v6687
    %6840 = vmatpush.bf16.msra.mxu0 %v6686
    %6841 = vmatpush.bf16.msra.mxu0 %v6685
    %6842 = vmatpush.bf16.msra.mxu0 %v6684
    %6843 = vmatpush.bf16.msra.mxu0 %v6683
    %6844 = vmatpush.bf16.msra.mxu0 %v6682
    %6845 = vmatpush.bf16.msra.mxu0 %v6681
    %6846 = vmatmul.bf16.gmra.mxu0 %v6438
    %v6847 = vpop.f32.mrf.mxu0
    %v6848 = vadd.f32 %v6809, %v6847
    %v6849 = vpop.f32.mrf.mxu0
    %v6850 = vadd.f32 %v6811, %v6849
    %6851 = vmatmul.bf16.gmra.mxu0 %v6442
    %v6852 = vpop.f32.mrf.mxu0
    %v6853 = vadd.f32 %v6814, %v6852
    %v6854 = vpop.f32.mrf.mxu0
    %v6855 = vadd.f32 %v6816, %v6854
    %6856 = vmatmul.bf16.gmra.mxu0 %v6446
    %v6857 = vpop.f32.mrf.mxu0
    %v6858 = vadd.f32 %v6819, %v6857
    %v6859 = vpop.f32.mrf.mxu0
    %v6860 = vadd.f32 %v6821, %v6859
    %6861 = vmatmul.bf16.gmra.mxu0 %v6450
    %v6862 = vpop.f32.mrf.mxu0
    %v6863 = vadd.f32 %v6824, %v6862
    %v6864 = vpop.f32.mrf.mxu0
    %v6865 = vadd.f32 %v6826, %v6864
    %6866 = vmatmul.bf16.gmra.mxu0 %v6454
    %v6867 = vpop.f32.mrf.mxu0
    %v6868 = vadd.f32 %v6829, %v6867
    %v6869 = vpop.f32.mrf.mxu0
    %v6870 = vadd.f32 %v6831, %v6869
    %6871 = vmatmul.bf16.gmra.mxu0 %v6458
    %v6872 = vpop.f32.mrf.mxu0
    %v6873 = vadd.f32 %v6834, %v6872
    %v6874 = vpop.f32.mrf.mxu0
    %v6875 = vadd.f32 %v6836, %v6874
    %6876 = vdwg.mxu0
    %v6877 = vadd.f32 %v6009, %v6848
    %v6878 = vadd.f32 %v6010, %v6850
    %v6879 = vadd.f32 %v6011, %v6853
    %v6880 = vadd.f32 %v6012, %v6855
    %v6881 = vadd.f32 %v6013, %v6858
    %v6882 = vadd.f32 %v6014, %v6860
    %v6883 = vadd.f32 %v6015, %v6863
    %v6884 = vadd.f32 %v6016, %v6865
    %v6885 = vadd.f32 %v6017, %v6868
    %v6886 = vadd.f32 %v6018, %v6870
    %v6887 = vadd.f32 %v6019, %v6873
    %v6888 = vadd.f32 %v6020, %v6875
    %s6889 = scalar_lea.vmem %s14, 1
    %v6890 = vld [vmem:[%s6889] sm:$0x1]
    %s6891 = scalar_lea.vmem %s15, 1
    %v6892 = vld [vmem:[%s6891] sm:$0x1]
    %6893 = vadd.xlane.f32.xlu0 %v6877
    %v6894 = vpop.xlane.xlu0 %6893
    %6895 = vadd.xlane.f32.xlu0 %v6878
    %v6896 = vpop.xlane.xlu0 %6895
    %6897 = vadd.xlane.f32.xlu0 %v6879
    %v6898 = vpop.xlane.xlu0 %6897
    %6899 = vadd.xlane.f32.xlu0 %v6880
    %v6900 = vpop.xlane.xlu0 %6899
    %6901 = vadd.xlane.f32.xlu0 %v6881
    %v6902 = vpop.xlane.xlu0 %6901
    %6903 = vadd.xlane.f32.xlu0 %v6882
    %v6904 = vpop.xlane.xlu0 %6903
    %6905 = vadd.xlane.f32.xlu0 %v6883
    %v6906 = vpop.xlane.xlu0 %6905
    %6907 = vadd.xlane.f32.xlu0 %v6884
    %v6908 = vpop.xlane.xlu0 %6907
    %6909 = vadd.xlane.f32.xlu0 %v6885
    %v6910 = vpop.xlane.xlu0 %6909
    %6911 = vadd.xlane.f32.xlu0 %v6886
    %v6912 = vpop.xlane.xlu0 %6911
    %6913 = vadd.xlane.f32.xlu0 %v6887
    %v6914 = vpop.xlane.xlu0 %6913
    %6915 = vadd.xlane.f32.xlu0 %v6888
    %v6916 = vpop.xlane.xlu0 %6915
    %v6917 = vmul.f32 %v6894, %v2295
    %v6918 = vmul.f32 %v6896, %v2295
    %v6919 = vmul.f32 %v6898, %v2295
    %v6920 = vmul.f32 %v6900, %v2295
    %v6921 = vmul.f32 %v6902, %v2295
    %v6922 = vmul.f32 %v6904, %v2295
    %v6923 = vmul.f32 %v6906, %v2295
    %v6924 = vmul.f32 %v6908, %v2295
    %v6925 = vmul.f32 %v6910, %v2295
    %v6926 = vmul.f32 %v6912, %v2295
    %v6927 = vmul.f32 %v6914, %v2295
    %v6928 = vmul.f32 %v6916, %v2295
    %v6929 = vsub.f32 %v6877, %v6917
    %v6930 = vsub.f32 %v6878, %v6918
    %v6931 = vsub.f32 %v6879, %v6919
    %v6932 = vsub.f32 %v6880, %v6920
    %v6933 = vsub.f32 %v6881, %v6921
    %v6934 = vsub.f32 %v6882, %v6922
    %v6935 = vsub.f32 %v6883, %v6923
    %v6936 = vsub.f32 %v6884, %v6924
    %v6937 = vsub.f32 %v6885, %v6925
    %v6938 = vsub.f32 %v6886, %v6926
    %v6939 = vsub.f32 %v6887, %v6927
    %v6940 = vsub.f32 %v6888, %v6928
    %v6941 = vmul.f32 %v6929, %v6929
    %v6942 = vmul.f32 %v6930, %v6930
    %v6943 = vmul.f32 %v6931, %v6931
    %v6944 = vmul.f32 %v6932, %v6932
    %v6945 = vmul.f32 %v6933, %v6933
    %v6946 = vmul.f32 %v6934, %v6934
    %v6947 = vmul.f32 %v6935, %v6935
    %v6948 = vmul.f32 %v6936, %v6936
    %v6949 = vmul.f32 %v6937, %v6937
    %v6950 = vmul.f32 %v6938, %v6938
    %v6951 = vmul.f32 %v6939, %v6939
    %v6952 = vmul.f32 %v6940, %v6940
    %6953 = vadd.xlane.f32.xlu0 %v6941
    %v6954 = vpop.xlane.xlu0 %6953
    %6955 = vadd.xlane.f32.xlu0 %v6942
    %v6956 = vpop.xlane.xlu0 %6955
    %6957 = vadd.xlane.f32.xlu0 %v6943
    %v6958 = vpop.xlane.xlu0 %6957
    %6959 = vadd.xlane.f32.xlu0 %v6944
    %v6960 = vpop.xlane.xlu0 %6959
    %6961 = vadd.xlane.f32.xlu0 %v6945
    %v6962 = vpop.xlane.xlu0 %6961
    %6963 = vadd.xlane.f32.xlu0 %v6946
    %v6964 = vpop.xlane.xlu0 %6963
    %6965 = vadd.xlane.f32.xlu0 %v6947
    %v6966 = vpop.xlane.xlu0 %6965
    %6967 = vadd.xlane.f32.xlu0 %v6948
    %v6968 = vpop.xlane.xlu0 %6967
    %6969 = vadd.xlane.f32.xlu0 %v6949
    %v6970 = vpop.xlane.xlu0 %6969
    %6971 = vadd.xlane.f32.xlu0 %v6950
    %v6972 = vpop.xlane.xlu0 %6971
    %6973 = vadd.xlane.f32.xlu0 %v6951
    %v6974 = vpop.xlane.xlu0 %6973
    %6975 = vadd.xlane.f32.xlu0 %v6952
    %v6976 = vpop.xlane.xlu0 %6975
    %v6977 = vmul.f32 %v6954, %v2295
    %v6978 = vmul.f32 %v6956, %v2295
    %v6979 = vmul.f32 %v6958, %v2295
    %v6980 = vmul.f32 %v6960, %v2295
    %v6981 = vmul.f32 %v6962, %v2295
    %v6982 = vmul.f32 %v6964, %v2295
    %v6983 = vmul.f32 %v6966, %v2295
    %v6984 = vmul.f32 %v6968, %v2295
    %v6985 = vmul.f32 %v6970, %v2295
    %v6986 = vmul.f32 %v6972, %v2295
    %v6987 = vmul.f32 %v6974, %v2295
    %v6988 = vmul.f32 %v6976, %v2295
    %v6989 = vadd.f32 %v6977, 1e-05
    %v6990 = vadd.f32 %v6978, 1e-05
    %v6991 = vadd.f32 %v6979, 1e-05
    %v6992 = vadd.f32 %v6980, 1e-05
    %v6993 = vadd.f32 %v6981, 1e-05
    %v6994 = vadd.f32 %v6982, 1e-05
    %v6995 = vadd.f32 %v6983, 1e-05
    %v6996 = vadd.f32 %v6984, 1e-05
    %v6997 = vadd.f32 %v6985, 1e-05
    %v6998 = vadd.f32 %v6986, 1e-05
    %v6999 = vadd.f32 %v6987, 1e-05
    %v7000 = vadd.f32 %v6988, 1e-05
    %v7001 = vrsqrt.pop %v6989
    %v7002 = vmul.f32 %v7001, %v6989
    %v7003 = vmul.f32 %v7002, %v7001
    %v7004 = vmul.f32 0.5, %v7003
    %v7005 = vsub.f32 1.5, %v7004
    %v7006 = vmul.f32 %v7001, %v7005
    %vm7007 = vweird.f32 %v6989
    %vm7008 = vweird.f32 %v7001
    %vm7009 = vmor %vm7007, %vm7008
    %v7010 = vsel %vm7009, %v7001, %v7006
    %v7011 = vrsqrt.pop %v6990
    %v7012 = vmul.f32 %v7011, %v6990
    %v7013 = vmul.f32 %v7012, %v7011
    %v7014 = vmul.f32 0.5, %v7013
    %v7015 = vsub.f32 1.5, %v7014
    %v7016 = vmul.f32 %v7011, %v7015
    %vm7017 = vweird.f32 %v6990
    %vm7018 = vweird.f32 %v7011
    %vm7019 = vmor %vm7017, %vm7018
    %v7020 = vsel %vm7019, %v7011, %v7016
    %v7021 = vrsqrt.pop %v6991
    %v7022 = vmul.f32 %v7021, %v6991
    %v7023 = vmul.f32 %v7022, %v7021
    %v7024 = vmul.f32 0.5, %v7023
    %v7025 = vsub.f32 1.5, %v7024
    %v7026 = vmul.f32 %v7021, %v7025
    %vm7027 = vweird.f32 %v6991
    %vm7028 = vweird.f32 %v7021
    %vm7029 = vmor %vm7027, %vm7028
    %v7030 = vsel %vm7029, %v7021, %v7026
    %v7031 = vrsqrt.pop %v6992
    %v7032 = vmul.f32 %v7031, %v6992
    %v7033 = vmul.f32 %v7032, %v7031
    %v7034 = vmul.f32 0.5, %v7033
    %v7035 = vsub.f32 1.5, %v7034
    %v7036 = vmul.f32 %v7031, %v7035
    %vm7037 = vweird.f32 %v6992
    %vm7038 = vweird.f32 %v7031
    %vm7039 = vmor %vm7037, %vm7038
    %v7040 = vsel %vm7039, %v7031, %v7036
    %v7041 = vrsqrt.pop %v6993
    %v7042 = vmul.f32 %v7041, %v6993
    %v7043 = vmul.f32 %v7042, %v7041
    %v7044 = vmul.f32 0.5, %v7043
    %v7045 = vsub.f32 1.5, %v7044
    %v7046 = vmul.f32 %v7041, %v7045
    %vm7047 = vweird.f32 %v6993
    %vm7048 = vweird.f32 %v7041
    %vm7049 = vmor %vm7047, %vm7048
    %v7050 = vsel %vm7049, %v7041, %v7046
    %v7051 = vrsqrt.pop %v6994
    %v7052 = vmul.f32 %v7051, %v6994
    %v7053 = vmul.f32 %v7052, %v7051
    %v7054 = vmul.f32 0.5, %v7053
    %v7055 = vsub.f32 1.5, %v7054
    %v7056 = vmul.f32 %v7051, %v7055
    %vm7057 = vweird.f32 %v6994
    %vm7058 = vweird.f32 %v7051
    %vm7059 = vmor %vm7057, %vm7058
    %v7060 = vsel %vm7059, %v7051, %v7056
    %v7061 = vrsqrt.pop %v6995
    %v7062 = vmul.f32 %v7061, %v6995
    %v7063 = vmul.f32 %v7062, %v7061
    %v7064 = vmul.f32 0.5, %v7063
    %v7065 = vsub.f32 1.5, %v7064
    %v7066 = vmul.f32 %v7061, %v7065
    %vm7067 = vweird.f32 %v6995
    %vm7068 = vweird.f32 %v7061
    %vm7069 = vmor %vm7067, %vm7068
    %v7070 = vsel %vm7069, %v7061, %v7066
    %v7071 = vrsqrt.pop %v6996
    %v7072 = vmul.f32 %v7071, %v6996
    %v7073 = vmul.f32 %v7072, %v7071
    %v7074 = vmul.f32 0.5, %v7073
    %v7075 = vsub.f32 1.5, %v7074
    %v7076 = vmul.f32 %v7071, %v7075
    %vm7077 = vweird.f32 %v6996
    %vm7078 = vweird.f32 %v7071
    %vm7079 = vmor %vm7077, %vm7078
    %v7080 = vsel %vm7079, %v7071, %v7076
    %v7081 = vrsqrt.pop %v6997
    %v7082 = vmul.f32 %v7081, %v6997
    %v7083 = vmul.f32 %v7082, %v7081
    %v7084 = vmul.f32 0.5, %v7083
    %v7085 = vsub.f32 1.5, %v7084
    %v7086 = vmul.f32 %v7081, %v7085
    %vm7087 = vweird.f32 %v6997
    %vm7088 = vweird.f32 %v7081
    %vm7089 = vmor %vm7087, %vm7088
    %v7090 = vsel %vm7089, %v7081, %v7086
    %v7091 = vrsqrt.pop %v6998
    %v7092 = vmul.f32 %v7091, %v6998
    %v7093 = vmul.f32 %v7092, %v7091
    %v7094 = vmul.f32 0.5, %v7093
    %v7095 = vsub.f32 1.5, %v7094
    %v7096 = vmul.f32 %v7091, %v7095
    %vm7097 = vweird.f32 %v6998
    %vm7098 = vweird.f32 %v7091
    %vm7099 = vmor %vm7097, %vm7098
    %v7100 = vsel %vm7099, %v7091, %v7096
    %v7101 = vrsqrt.pop %v6999
    %v7102 = vmul.f32 %v7101, %v6999
    %v7103 = vmul.f32 %v7102, %v7101
    %v7104 = vmul.f32 0.5, %v7103
    %v7105 = vsub.f32 1.5, %v7104
    %v7106 = vmul.f32 %v7101, %v7105
    %vm7107 = vweird.f32 %v6999
    %vm7108 = vweird.f32 %v7101
    %vm7109 = vmor %vm7107, %vm7108
    %v7110 = vsel %vm7109, %v7101, %v7106
    %v7111 = vrsqrt.pop %v7000
    %v7112 = vmul.f32 %v7111, %v7000
    %v7113 = vmul.f32 %v7112, %v7111
    %v7114 = vmul.f32 0.5, %v7113
    %v7115 = vsub.f32 1.5, %v7114
    %v7116 = vmul.f32 %v7111, %v7115
    %vm7117 = vweird.f32 %v7000
    %vm7118 = vweird.f32 %v7111
    %vm7119 = vmor %vm7117, %vm7118
    %v7120 = vsel %vm7119, %v7111, %v7116
    %v7121 = vmul.f32 %v6929, %v7010
    %v7122 = vmul.f32 %v6930, %v7020
    %v7123 = vmul.f32 %v6931, %v7030
    %v7124 = vmul.f32 %v6932, %v7040
    %v7125 = vmul.f32 %v6933, %v7050
    %v7126 = vmul.f32 %v6934, %v7060
    %v7127 = vmul.f32 %v6935, %v7070
    %v7128 = vmul.f32 %v6936, %v7080
    %v7129 = vmul.f32 %v6937, %v7090
    %v7130 = vmul.f32 %v6938, %v7100
    %v7131 = vmul.f32 %v6939, %v7110
    %v7132 = vmul.f32 %v6940, %v7120
    %v7134 = vperm.slane %v6890, 0
    %v7136 = vmul.f32 %v7121, %v7134
    %v7137 = vmul.f32 %v7122, %v7134
    %v7138 = vmul.f32 %v7123, %v7134
    %v7139 = vmul.f32 %v7124, %v7134
    %v7140 = vmul.f32 %v7125, %v7134
    %v7141 = vmul.f32 %v7126, %v7134
    %v7142 = vmul.f32 %v7127, %v7134
    %v7143 = vmul.f32 %v7128, %v7134
    %v7144 = vmul.f32 %v7129, %v7134
    %v7145 = vmul.f32 %v7130, %v7134
    %v7146 = vmul.f32 %v7131, %v7134
    %v7147 = vmul.f32 %v7132, %v7134
    %v7149 = vperm.slane %v6892, 0
    %v7151 = vadd.f32 %v7136, %v7149
    %v7152 = vadd.f32 %v7137, %v7149
    %v7153 = vadd.f32 %v7138, %v7149
    %v7154 = vadd.f32 %v7139, %v7149
    %v7155 = vadd.f32 %v7140, %v7149
    %v7156 = vadd.f32 %v7141, %v7149
    %v7157 = vadd.f32 %v7142, %v7149
    %v7158 = vadd.f32 %v7143, %v7149
    %v7159 = vadd.f32 %v7144, %v7149
    %v7160 = vadd.f32 %v7145, %v7149
    %v7161 = vadd.f32 %v7146, %v7149
    %v7162 = vadd.f32 %v7147, %v7149
    %v7163 = vpack.c.bf16 %v7152, %v7151
    %v7164 = vpack.c.bf16 %v7154, %v7153
    %v7165 = vpack.c.bf16 %v7156, %v7155
    %v7166 = vpack.c.bf16 %v7158, %v7157
    %v7167 = vpack.c.bf16 %v7160, %v7159
    %v7168 = vpack.c.bf16 %v7162, %v7161
    %v7169 = vld [vmem:[%s16] sm:$0xf]
    %v7170 = vld [vmem:[%s16 + $0x4] sm:$0xf]
    %v7171 = vld [vmem:[%s16 + $0x8] sm:$0xf]
    %v7172 = vld [vmem:[%s16 + $0xc] sm:$0xf]
    %v7173 = vld [vmem:[%s16 + $0x10] sm:$0xf]
    %v7174 = vld [vmem:[%s16 + $0x14] sm:$0xf]
    %v7175 = vld [vmem:[%s16 + $0x18] sm:$0xf]
    %v7176 = vld [vmem:[%s16 + $0x1c] sm:$0xf]
    %v7177 = vld [vmem:[%s16 + $0x20] sm:$0xf]
    %v7178 = vld [vmem:[%s16 + $0x24] sm:$0xf]
    %v7179 = vld [vmem:[%s16 + $0x28] sm:$0xf]
    %v7180 = vld [vmem:[%s16 + $0x2c] sm:$0xf]
    %v7181 = vld [vmem:[%s16 + $0x30] sm:$0xf]
    %v7182 = vld [vmem:[%s16 + $0x34] sm:$0xf]
    %v7183 = vld [vmem:[%s16 + $0x38] sm:$0xf]
    %v7184 = vld [vmem:[%s16 + $0x3c] sm:$0xf]
    %v7185 = vld [vmem:[%s17] sm:$0x1]
    %v7187 = vperm.slane %v7185, 0
    %v7205 = vunpack.c.l.b16 %v7169
    %v7206 = vunpack.c.l.b16 %v7170
    %v7207 = vunpack.c.l.b16 %v7171
    %v7208 = vunpack.c.l.b16 %v7172
    %v7209 = vunpack.c.l.b16 %v7173
    %v7210 = vunpack.c.l.b16 %v7174
    %v7211 = vunpack.c.l.b16 %v7175
    %v7212 = vunpack.c.l.b16 %v7176
    %v7213 = vunpack.c.l.b16 %v7177
    %v7214 = vunpack.c.l.b16 %v7178
    %v7215 = vunpack.c.l.b16 %v7179
    %v7216 = vunpack.c.l.b16 %v7180
    %v7217 = vunpack.c.l.b16 %v7181
    %v7218 = vunpack.c.l.b16 %v7182
    %v7219 = vunpack.c.l.b16 %v7183
    %v7220 = vunpack.c.l.b16 %v7184
    %v7221 = vpack.c.b16 %v7206, %v7205
    %v7222 = vpack.c.b16 %v7208, %v7207
    %v7223 = vpack.c.b16 %v7210, %v7209
    %v7224 = vpack.c.b16 %v7212, %v7211
    %v7225 = vpack.c.b16 %v7214, %v7213
    %v7226 = vpack.c.b16 %v7216, %v7215
    %v7227 = vpack.c.b16 %v7218, %v7217
    %v7228 = vpack.c.b16 %v7220, %v7219
    %7237 = vmatpush.bf16.msra.mxu0 %v7228
    %7238 = vmatpush.bf16.msra.mxu0 %v7227
    %7239 = vmatpush.bf16.msra.mxu0 %v7226
    %7240 = vmatpush.bf16.msra.mxu0 %v7225
    %7241 = vmatpush.bf16.msra.mxu0 %v7224
    %7242 = vmatpush.bf16.msra.mxu0 %v7223
    %7243 = vmatpush.bf16.msra.mxu0 %v7222
    %7244 = vmatpush.bf16.msra.mxu0 %v7221
    %7245 = vmatmul.bf16.gmra.mxu0 %v7163
    %v7246 = vpop.f32.mrf.mxu0
    %v7247 = vadd.f32 %v7187, %v7246
    %v7248 = vpop.f32.mrf.mxu0
    %v7249 = vadd.f32 %v7187, %v7248
    %7250 = vmatmul.bf16.gmra.mxu0 %v7164
    %v7251 = vpop.f32.mrf.mxu0
    %v7252 = vadd.f32 %v7187, %v7251
    %v7253 = vpop.f32.mrf.mxu0
    %v7254 = vadd.f32 %v7187, %v7253
    %7255 = vmatmul.bf16.gmra.mxu0 %v7165
    %v7256 = vpop.f32.mrf.mxu0
    %v7257 = vadd.f32 %v7187, %v7256
    %v7258 = vpop.f32.mrf.mxu0
    %v7259 = vadd.f32 %v7187, %v7258
    %7260 = vmatmul.bf16.gmra.mxu0 %v7166
    %v7261 = vpop.f32.mrf.mxu0
    %v7262 = vadd.f32 %v7187, %v7261
    %v7263 = vpop.f32.mrf.mxu0
    %v7264 = vadd.f32 %v7187, %v7263
    %7265 = vmatmul.bf16.gmra.mxu0 %v7167
    %v7266 = vpop.f32.mrf.mxu0
    %v7267 = vadd.f32 %v7187, %v7266
    %v7268 = vpop.f32.mrf.mxu0
    %v7269 = vadd.f32 %v7187, %v7268
    %7270 = vmatmul.bf16.gmra.mxu0 %v7168
    %v7271 = vpop.f32.mrf.mxu0
    %v7272 = vadd.f32 %v7187, %v7271
    %v7273 = vpop.f32.mrf.mxu0
    %v7274 = vadd.f32 %v7187, %v7273
    %7275 = vdwg.mxu0
    %v7276 = vxor.u32 %v7247, 2147483648
    %v7277 = vxor.u32 %v7249, 2147483648
    %v7278 = vxor.u32 %v7252, 2147483648
    %v7279 = vxor.u32 %v7254, 2147483648
    %v7280 = vxor.u32 %v7257, 2147483648
    %v7281 = vxor.u32 %v7259, 2147483648
    %v7282 = vxor.u32 %v7262, 2147483648
    %v7283 = vxor.u32 %v7264, 2147483648
    %v7284 = vxor.u32 %v7267, 2147483648
    %v7285 = vxor.u32 %v7269, 2147483648
    %v7286 = vxor.u32 %v7272, 2147483648
    %v7287 = vxor.u32 %v7274, 2147483648
    %v7288 = vmul.f32 %v7276, 1.442695
    %v7289 = vpow.pop %v7288
    %v7290 = vmul.f32 %v7277, 1.442695
    %v7291 = vpow.pop %v7290
    %v7292 = vmul.f32 %v7278, 1.442695
    %v7293 = vpow.pop %v7292
    %v7294 = vmul.f32 %v7279, 1.442695
    %v7295 = vpow.pop %v7294
    %v7296 = vmul.f32 %v7280, 1.442695
    %v7297 = vpow.pop %v7296
    %v7298 = vmul.f32 %v7281, 1.442695
    %v7299 = vpow.pop %v7298
    %v7300 = vmul.f32 %v7282, 1.442695
    %v7301 = vpow.pop %v7300
    %v7302 = vmul.f32 %v7283, 1.442695
    %v7303 = vpow.pop %v7302
    %v7304 = vmul.f32 %v7284, 1.442695
    %v7305 = vpow.pop %v7304
    %v7306 = vmul.f32 %v7285, 1.442695
    %v7307 = vpow.pop %v7306
    %v7308 = vmul.f32 %v7286, 1.442695
    %v7309 = vpow.pop %v7308
    %v7310 = vmul.f32 %v7287, 1.442695
    %v7311 = vpow.pop %v7310
    %v7312 = vadd.f32 %v7289, 1.0
    %v7313 = vadd.f32 %v7291, 1.0
    %v7314 = vadd.f32 %v7293, 1.0
    %v7315 = vadd.f32 %v7295, 1.0
    %v7316 = vadd.f32 %v7297, 1.0
    %v7317 = vadd.f32 %v7299, 1.0
    %v7318 = vadd.f32 %v7301, 1.0
    %v7319 = vadd.f32 %v7303, 1.0
    %v7320 = vadd.f32 %v7305, 1.0
    %v7321 = vadd.f32 %v7307, 1.0
    %v7322 = vadd.f32 %v7309, 1.0
    %v7323 = vadd.f32 %v7311, 1.0
    %v7324 = vrcp.pop %v7312
    %v7325 = vmul.f32 %v7312, %v7324
    %v7326 = vsub.f32 1.0, %v7325
    %v7327 = vmul.f32 %v7324, %v7326
    %v7328 = vadd.f32 %v7324, %v7327
    %vm7329 = vweird.f32 %v7312
    %vm7330 = vweird.f32 %v7324
    %vm7331 = vmor %vm7329, %vm7330
    %v7332 = vsel %vm7331, %v7324, %v7328
    %v7333 = vand.u32 2147483647, %v7312
    %vm7334 = vcmp.eq.f32.partialorder %v7333, 8.507059e+37
    %v7335 = vand.u32 %v7312, 2147483648
    %v7336 = vor.u32 1.1754944e-38, %v7335
    %v7337 = vsel %vm7334, %v7336, %v7332
    %v7338 = vmul.f32 1.0, %v7337
    %v7339 = vrcp.pop %v7313
    %v7340 = vmul.f32 %v7313, %v7339
    %v7341 = vsub.f32 1.0, %v7340
    %v7342 = vmul.f32 %v7339, %v7341
    %v7343 = vadd.f32 %v7339, %v7342
    %vm7344 = vweird.f32 %v7313
    %vm7345 = vweird.f32 %v7339
    %vm7346 = vmor %vm7344, %vm7345
    %v7347 = vsel %vm7346, %v7339, %v7343
    %v7348 = vand.u32 2147483647, %v7313
    %vm7349 = vcmp.eq.f32.partialorder %v7348, 8.507059e+37
    %v7350 = vand.u32 %v7313, 2147483648
    %v7351 = vor.u32 1.1754944e-38, %v7350
    %v7352 = vsel %vm7349, %v7351, %v7347
    %v7353 = vmul.f32 1.0, %v7352
    %v7354 = vrcp.pop %v7314
    %v7355 = vmul.f32 %v7314, %v7354
    %v7356 = vsub.f32 1.0, %v7355
    %v7357 = vmul.f32 %v7354, %v7356
    %v7358 = vadd.f32 %v7354, %v7357
    %vm7359 = vweird.f32 %v7314
    %vm7360 = vweird.f32 %v7354
    %vm7361 = vmor %vm7359, %vm7360
    %v7362 = vsel %vm7361, %v7354, %v7358
    %v7363 = vand.u32 2147483647, %v7314
    %vm7364 = vcmp.eq.f32.partialorder %v7363, 8.507059e+37
    %v7365 = vand.u32 %v7314, 2147483648
    %v7366 = vor.u32 1.1754944e-38, %v7365
    %v7367 = vsel %vm7364, %v7366, %v7362
    %v7368 = vmul.f32 1.0, %v7367
    %v7369 = vrcp.pop %v7315
    %v7370 = vmul.f32 %v7315, %v7369
    %v7371 = vsub.f32 1.0, %v7370
    %v7372 = vmul.f32 %v7369, %v7371
    %v7373 = vadd.f32 %v7369, %v7372
    %vm7374 = vweird.f32 %v7315
    %vm7375 = vweird.f32 %v7369
    %vm7376 = vmor %vm7374, %vm7375
    %v7377 = vsel %vm7376, %v7369, %v7373
    %v7378 = vand.u32 2147483647, %v7315
    %vm7379 = vcmp.eq.f32.partialorder %v7378, 8.507059e+37
    %v7380 = vand.u32 %v7315, 2147483648
    %v7381 = vor.u32 1.1754944e-38, %v7380
    %v7382 = vsel %vm7379, %v7381, %v7377
    %v7383 = vmul.f32 1.0, %v7382
    %v7384 = vrcp.pop %v7316
    %v7385 = vmul.f32 %v7316, %v7384
    %v7386 = vsub.f32 1.0, %v7385
    %v7387 = vmul.f32 %v7384, %v7386
    %v7388 = vadd.f32 %v7384, %v7387
    %vm7389 = vweird.f32 %v7316
    %vm7390 = vweird.f32 %v7384
    %vm7391 = vmor %vm7389, %vm7390
    %v7392 = vsel %vm7391, %v7384, %v7388
    %v7393 = vand.u32 2147483647, %v7316
    %vm7394 = vcmp.eq.f32.partialorder %v7393, 8.507059e+37
    %v7395 = vand.u32 %v7316, 2147483648
    %v7396 = vor.u32 1.1754944e-38, %v7395
    %v7397 = vsel %vm7394, %v7396, %v7392
    %v7398 = vmul.f32 1.0, %v7397
    %v7399 = vrcp.pop %v7317
    %v7400 = vmul.f32 %v7317, %v7399
    %v7401 = vsub.f32 1.0, %v7400
    %v7402 = vmul.f32 %v7399, %v7401
    %v7403 = vadd.f32 %v7399, %v7402
    %vm7404 = vweird.f32 %v7317
    %vm7405 = vweird.f32 %v7399
    %vm7406 = vmor %vm7404, %vm7405
    %v7407 = vsel %vm7406, %v7399, %v7403
    %v7408 = vand.u32 2147483647, %v7317
    %vm7409 = vcmp.eq.f32.partialorder %v7408, 8.507059e+37
    %v7410 = vand.u32 %v7317, 2147483648
    %v7411 = vor.u32 1.1754944e-38, %v7410
    %v7412 = vsel %vm7409, %v7411, %v7407
    %v7413 = vmul.f32 1.0, %v7412
    %v7414 = vrcp.pop %v7318
    %v7415 = vmul.f32 %v7318, %v7414
    %v7416 = vsub.f32 1.0, %v7415
    %v7417 = vmul.f32 %v7414, %v7416
    %v7418 = vadd.f32 %v7414, %v7417
    %vm7419 = vweird.f32 %v7318
    %vm7420 = vweird.f32 %v7414
    %vm7421 = vmor %vm7419, %vm7420
    %v7422 = vsel %vm7421, %v7414, %v7418
    %v7423 = vand.u32 2147483647, %v7318
    %vm7424 = vcmp.eq.f32.partialorder %v7423, 8.507059e+37
    %v7425 = vand.u32 %v7318, 2147483648
    %v7426 = vor.u32 1.1754944e-38, %v7425
    %v7427 = vsel %vm7424, %v7426, %v7422
    %v7428 = vmul.f32 1.0, %v7427
    %v7429 = vrcp.pop %v7319
    %v7430 = vmul.f32 %v7319, %v7429
    %v7431 = vsub.f32 1.0, %v7430
    %v7432 = vmul.f32 %v7429, %v7431
    %v7433 = vadd.f32 %v7429, %v7432
    %vm7434 = vweird.f32 %v7319
    %vm7435 = vweird.f32 %v7429
    %vm7436 = vmor %vm7434, %vm7435
    %v7437 = vsel %vm7436, %v7429, %v7433
    %v7438 = vand.u32 2147483647, %v7319
    %vm7439 = vcmp.eq.f32.partialorder %v7438, 8.507059e+37
    %v7440 = vand.u32 %v7319, 2147483648
    %v7441 = vor.u32 1.1754944e-38, %v7440
    %v7442 = vsel %vm7439, %v7441, %v7437
    %v7443 = vmul.f32 1.0, %v7442
    %v7444 = vrcp.pop %v7320
    %v7445 = vmul.f32 %v7320, %v7444
    %v7446 = vsub.f32 1.0, %v7445
    %v7447 = vmul.f32 %v7444, %v7446
    %v7448 = vadd.f32 %v7444, %v7447
    %vm7449 = vweird.f32 %v7320
    %vm7450 = vweird.f32 %v7444
    %vm7451 = vmor %vm7449, %vm7450
    %v7452 = vsel %vm7451, %v7444, %v7448
    %v7453 = vand.u32 2147483647, %v7320
    %vm7454 = vcmp.eq.f32.partialorder %v7453, 8.507059e+37
    %v7455 = vand.u32 %v7320, 2147483648
    %v7456 = vor.u32 1.1754944e-38, %v7455
    %v7457 = vsel %vm7454, %v7456, %v7452
    %v7458 = vmul.f32 1.0, %v7457
    %v7459 = vrcp.pop %v7321
    %v7460 = vmul.f32 %v7321, %v7459
    %v7461 = vsub.f32 1.0, %v7460
    %v7462 = vmul.f32 %v7459, %v7461
    %v7463 = vadd.f32 %v7459, %v7462
    %vm7464 = vweird.f32 %v7321
    %vm7465 = vweird.f32 %v7459
    %vm7466 = vmor %vm7464, %vm7465
    %v7467 = vsel %vm7466, %v7459, %v7463
    %v7468 = vand.u32 2147483647, %v7321
    %vm7469 = vcmp.eq.f32.partialorder %v7468, 8.507059e+37
    %v7470 = vand.u32 %v7321, 2147483648
    %v7471 = vor.u32 1.1754944e-38, %v7470
    %v7472 = vsel %vm7469, %v7471, %v7467
    %v7473 = vmul.f32 1.0, %v7472
    %v7474 = vrcp.pop %v7322
    %v7475 = vmul.f32 %v7322, %v7474
    %v7476 = vsub.f32 1.0, %v7475
    %v7477 = vmul.f32 %v7474, %v7476
    %v7478 = vadd.f32 %v7474, %v7477
    %vm7479 = vweird.f32 %v7322
    %vm7480 = vweird.f32 %v7474
    %vm7481 = vmor %vm7479, %vm7480
    %v7482 = vsel %vm7481, %v7474, %v7478
    %v7483 = vand.u32 2147483647, %v7322
    %vm7484 = vcmp.eq.f32.partialorder %v7483, 8.507059e+37
    %v7485 = vand.u32 %v7322, 2147483648
    %v7486 = vor.u32 1.1754944e-38, %v7485
    %v7487 = vsel %vm7484, %v7486, %v7482
    %v7488 = vmul.f32 1.0, %v7487
    %v7489 = vrcp.pop %v7323
    %v7490 = vmul.f32 %v7323, %v7489
    %v7491 = vsub.f32 1.0, %v7490
    %v7492 = vmul.f32 %v7489, %v7491
    %v7493 = vadd.f32 %v7489, %v7492
    %vm7494 = vweird.f32 %v7323
    %vm7495 = vweird.f32 %v7489
    %vm7496 = vmor %vm7494, %vm7495
    %v7497 = vsel %vm7496, %v7489, %v7493
    %v7498 = vand.u32 2147483647, %v7323
    %vm7499 = vcmp.eq.f32.partialorder %v7498, 8.507059e+37
    %v7500 = vand.u32 %v7323, 2147483648
    %v7501 = vor.u32 1.1754944e-38, %v7500
    %v7502 = vsel %vm7499, %v7501, %v7497
    %v7503 = vmul.f32 1.0, %v7502
    %7504 = vst [vmem:[#allocation8] sm:$0xff] %v7338
    %7505 = vst [vmem:[#allocation8 + $0x8] sm:$0xff] %v7353
    %7506 = vst [vmem:[#allocation8 + $0x10] sm:$0xff] %v7368
    %7507 = vst [vmem:[#allocation8 + $0x18] sm:$0xff] %v7383
    %7508 = vst [vmem:[#allocation8 + $0x20] sm:$0xff] %v7398
    %7509 = vst [vmem:[#allocation8 + $0x28] sm:$0xff] %v7413
    %7510 = vst [vmem:[#allocation8 + $0x30] sm:$0xff] %v7428
    %7511 = vst [vmem:[#allocation8 + $0x38] sm:$0xff] %v7443
    %7512 = vst [vmem:[#allocation8 + $0x40] sm:$0xff] %v7458
    %7513 = vst [vmem:[#allocation8 + $0x48] sm:$0xff] %v7473
    %7514 = vst [vmem:[#allocation8 + $0x50] sm:$0xff] %v7488
    %7515 = vst [vmem:[#allocation8 + $0x58] sm:$0xff] %v7503
    // Predicated region
    $region86: #{tpu_custom_call.1} parent=1 // pred_check
      _
    $region87: #{tpu_custom_call.1} parent=1 // pred_check_branch
      %7517 = sbr.rel (0) target = $region89
    $region88: #{tpu_custom_call.1} parent=1 // pred_region
      %7519 = vsyncadd [#allocation4], 0
      %s7520 = sshll.u32 [#allocation8], 4
      %s7521 = int_to_ptr.vmem [resolvable:$true] %s7520
      %s7522 = sshll.u32 %s18, 4
      %s7523 = int_to_ptr.hbm [resolvable:$true] %s7522
      %7528 = dma.vmem_to_hbm [thread:$0]  %s7521, 1536, %s7523, [#allocation4], 128, 128, 8
    $region89: #{tpu_custom_call.1} parent=1 // pred_fallthru
      _
    // Predicated region
    $region90: #{tpu_custom_call.1} parent=1 // pred_check
      _
    $region91: #{tpu_custom_call.1} parent=1 // pred_check_branch
      %7530 = sbr.rel (0) target = $region93
    $region92: #{tpu_custom_call.1} parent=1 // pred_region
      %7532 = dma.done [#allocation4], 1536
    $region93: #{tpu_custom_call.1} parent=1 // pred_fallthru
      _
    %7533 = vsyncpa [#allocation3], 1
    %7534 = vsyncpa [#allocation6], 1
    %7535 = vsyncpa [#allocation4], 1

</llo_original>
